<compile_context>
chip_gen: v6e
topology: v6e:2x2x1
jax: 0.10.0
libtpu: 0.0.40
codegen_flags: <defaults>
</compile_context>

<pallas_src>
import functools

import jax
import jax.numpy as jnp
import numpy as np
from jax.experimental import pallas as pl
from jax.experimental.pallas import tpu as pltpu


# Static network geometry (pinned by the module: fc4 expects 2592 = 32*9*9,
# which through the two valid convs pins the input to 4x84x84).
C_IN, H_IN, W_IN = 4, 84, 84
C1, K1, S1, OH1 = 16, 9, 7, 11          # conv1: 84x84 -> 11x11
C2, K2, S2, OH2 = 32, 3, 1, 9           # conv2: 11x11 -> 9x9
F_FLAT = C2 * OH2 * OH2                 # 2592
N_FC4 = 32
N_ACT = 2
K1_COLS = C_IN * K1 * K1                # 324
K1_PAD = 384                            # 324 -> 3*128
OUT_PAD = 128                           # lane-dense final store


# ----------------------------------------------------------------------------
# Fused kernel: conv1 -> relu -> conv2 -> relu -> flatten -> fc4 -> relu -> fc5
# ----------------------------------------------------------------------------
def _dqn_fused_kernel(p1_ref, w1_ref, s_ref, w2_ref, w4_ref, b4_ref,
                      w5_ref, b5_ref, out_ref, y2_scr, flat_scr, *, batch):
    f32 = jnp.float32

    # conv1 + relu1:  [B*121, 384] @ [384, 16]
    y1 = jnp.maximum(
        jnp.dot(p1_ref[...], w1_ref[...], preferred_element_type=f32), 0.0)

    # conv2 + relu2: 9 taps; each tap = (0/1 selection matmul gathering the
    # shifted rows of y1) followed by the [16,32] tap weight, accumulated.
    acc = jnp.zeros((batch * OH2 * OH2, C2), f32)
    for t in range(K2 * K2):
        g = jnp.dot(s_ref[t].astype(f32), y1, preferred_element_type=f32)
        acc = acc + jnp.dot(g, w2_ref[t], preferred_element_type=f32)
    y2_scr[...] = jnp.maximum(acc, 0.0)          # rows ordered (m, b)

    # flatten: flat[b, m*32 + o] = y2[(m, b), o].  The torch (C,H,W) flatten
    # order is folded into the pre-permuted fc4 weight, so these are plain
    # static block copies into a [B, 2592] VMEM scratch.
    for m in range(OH2 * OH2):
        flat_scr[:, m * C2:(m + 1) * C2] = y2_scr[m * batch:(m + 1) * batch, :]

    # fc4 + relu4
    h = jnp.maximum(
        jnp.dot(flat_scr[...], w4_ref[...], preferred_element_type=f32)
        + b4_ref[...], 0.0)

    # fc5, written as a lane-dense [B, 128] slab (wrapper slices [:, :2])
    out_ref[...] = (jnp.dot(h, w5_ref[...], preferred_element_type=f32)
                    + b5_ref[...]).astype(out_ref.dtype)


# ----------------------------------------------------------------------------
# XLA-side glue: im2col of the input (patch cols in (C, kh, kw) torch order).
# ----------------------------------------------------------------------------
def im2col(x_nchw, kh, kw, stride):
    B, C, H, W = x_nchw.shape
    oh = (H - kh) // stride + 1
    ow = (W - kw) // stride + 1
    patches = []
    for i in range(kh):
        for j in range(kw):
            patches.append(
                x_nchw[:, :, i:i + stride * oh:stride, j:j + stride * ow:stride])
    p = jnp.stack(patches, axis=2).reshape(B, C, kh, kw, oh, ow)
    p = p.transpose(0, 4, 5, 1, 2, 3)            # [B, oh, ow, C, kh, kw]
    return p.reshape(B * oh * ow, C * kh * kw), oh, ow


# ----------------------------------------------------------------------------
# One-time (init) construction of the gather matrices and kernel-ready weights.
# ----------------------------------------------------------------------------
def _build_gather_mats(batch):
    """S[t, m*B + b, b*121 + i'*11 + j'] = 1 where i'=i+kh, j'=j+kw,
    t = kh*3+kw, m = i*9+j.  Gathers conv2's im2col rows on the MXU."""
    r2 = np.arange(batch * OH2 * OH2)
    b2, m = r2 % batch, r2 // batch
    i, j = m // OH2, m % OH2
    r1 = np.arange(batch * OH1 * OH1)
    b1, rem = r1 // (OH1 * OH1), r1 % (OH1 * OH1)
    ip, jp = rem // OH1, rem % OH1
    s = np.zeros((K2 * K2, r2.size, r1.size), np.float32)
    for kh in range(K2):
        for kw in range(K2):
            s[kh * K2 + kw] = (
                (b1[None, :] == b2[:, None])
                & (ip[None, :] == (i + kh)[:, None])
                & (jp[None, :] == (j + kw)[:, None])).astype(np.float32)
    return jnp.asarray(s, dtype=jnp.bfloat16)    # 0/1 is exact in bf16


def init_raw_params(key):
    """Deterministic synthetic params in torch layouts."""
    k1, k2, k4w, k4b, k5w, k5b = jax.random.split(key, 6)

    def uinit(k, shape, fan_in):
        bound = 1.0 / np.sqrt(float(fan_in))
        return jax.random.uniform(k, shape, jnp.float32, -bound, bound)

    return dict(
        conv1_w=uinit(k1, (C1, C_IN, K1, K1), C_IN * K1 * K1),
        conv2_w=uinit(k2, (C2, C1, K2, K2), C1 * K2 * K2),
        fc4_w=uinit(k4w, (N_FC4, F_FLAT), F_FLAT),
        fc4_b=uinit(k4b, (N_FC4,), F_FLAT),
        fc5_w=uinit(k5w, (N_ACT, N_FC4), N_FC4),
        fc5_b=uinit(k5b, (N_ACT,), N_FC4),
    )


def prepare_params(raw, batch):
    """Pre-transpose / permute / pad every weight once, at init."""
    w1 = raw["conv1_w"].reshape(C1, K1_COLS).T                      # [324, 16]
    w1 = jnp.pad(w1, ((0, K1_PAD - K1_COLS), (0, 0)))               # [384, 16]
    w2 = raw["conv2_w"].transpose(2, 3, 1, 0).reshape(K2 * K2, C1, C2)
    # fc4: torch flat index f = o*81 + m  ->  kernel flat index m*32 + o
    w4 = raw["fc4_w"].reshape(N_FC4, C2, OH2 * OH2)                 # [n, o, m]
    w4 = w4.transpose(2, 1, 0).reshape(F_FLAT, N_FC4)               # [(m,o), n]
    b4 = raw["fc4_b"].reshape(1, N_FC4)
    w5 = jnp.pad(raw["fc5_w"].T, ((0, 0), (0, OUT_PAD - N_ACT)))    # [32, 128]
    b5 = jnp.pad(raw["fc5_b"].reshape(1, N_ACT), ((0, 0), (0, OUT_PAD - N_ACT)))
    return dict(w1=w1, w2=w2, w4=w4, b4=b4, w5=w5, b5=b5,
                S=_build_gather_mats(batch))


# ----------------------------------------------------------------------------
# Forward pass: one fused pallas_call.
# ----------------------------------------------------------------------------
def forward(params, x):
    B = x.shape[0]
    assert params["S"].shape[1] == B * OH2 * OH2, "params built for another batch"

    p1, _, _ = im2col(x, K1, K1, S1)                        # [B*121, 324]
    p1 = jnp.pad(p1, ((0, 0), (0, K1_PAD - K1_COLS)))       # [B*121, 384]

    m1, m2 = B * OH1 * OH1, B * OH2 * OH2
    flops = 2 * (m1 * K1_PAD * C1
                 + K2 * K2 * (m2 * m1 * C1 + m2 * C1 * C2)
                 + B * F_FLAT * N_FC4 + B * N_FC4 * OUT_PAD)
    bytes_accessed = (p1.size * 4 + params["w1"].size * 4 + params["S"].size * 2
                      + params["w2"].size * 4 + params["w4"].size * 4
                      + params["b4"].size * 4 + params["w5"].size * 4
                      + params["b5"].size * 4 + B * OUT_PAD * 4)

    out = pl.pallas_call(
        functools.partial(_dqn_fused_kernel, batch=B),
        out_shape=jax.ShapeDtypeStruct((B, OUT_PAD), jnp.float32),
        grid=(1,),
        in_specs=[
            pl.BlockSpec((m1, K1_PAD), lambda i: (0, 0)),            # p1
            pl.BlockSpec((K1_PAD, C1), lambda i: (0, 0)),            # w1
            pl.BlockSpec((K2 * K2, m2, m1), lambda i: (0, 0, 0)),    # S (bf16)
            pl.BlockSpec((K2 * K2, C1, C2), lambda i: (0, 0, 0)),    # w2
            pl.BlockSpec((F_FLAT, N_FC4), lambda i: (0, 0)),         # w4
            pl.BlockSpec((1, N_FC4), lambda i: (0, 0)),              # b4
            pl.BlockSpec((N_FC4, OUT_PAD), lambda i: (0, 0)),        # w5
            pl.BlockSpec((1, OUT_PAD), lambda i: (0, 0)),            # b5
        ],
        out_specs=pl.BlockSpec((B, OUT_PAD), lambda i: (0, 0)),
        scratch_shapes=[
            pltpu.VMEM((m2, C2), jnp.float32),        # y2, rows = (m, b)
            pltpu.VMEM((B, F_FLAT), jnp.float32),     # flattened activations
        ],
        cost_estimate=pl.CostEstimate(flops=int(flops), transcendentals=0,
                                      bytes_accessed=int(bytes_accessed)),
    )(p1, params["w1"], params["S"], params["w2"], params["w4"],
      params["b4"], params["w5"], params["b5"])
    return out[:, :N_ACT]


# ----------------------------------------------------------------------------
# Pure-JAX reference (torch semantics) for a correctness check.
# ----------------------------------------------------------------------------
def reference_forward(raw, x):
    hp = jax.lax.Precision.HIGHEST
    B = x.shape[0]
    p1, oh1, ow1 = im2col(x, K1, K1, S1)
    y1 = jnp.maximum(jnp.dot(p1, raw["conv1_w"].reshape(C1, -1).T, precision=hp), 0.0)
    y1 = y1.reshape(B, oh1, ow1, C1).transpose(0, 3, 1, 2)
    p2, oh2, ow2 = im2col(y1, K2, K2, S2)
    y2 = jnp.maximum(jnp.dot(p2, raw["conv2_w"].reshape(C2, -1).T, precision=hp), 0.0)
    y2 = y2.reshape(B, oh2, ow2, C2).transpose(0, 3, 1, 2)
    flat = y2.reshape(B, -1)
    h = jnp.maximum(jnp.dot(flat, raw["fc4_w"].T, precision=hp) + raw["fc4_b"], 0.0)
    return jnp.dot(h, raw["fc5_w"].T, precision=hp) + raw["fc5_b"]


if __name__ == "__main__":
    key = jax.random.PRNGKey(0)
    pkey, xkey = jax.random.split(key)
    B = 2
    raw = init_raw_params(pkey)
    params = prepare_params(raw, B)

    # Input consistent with the module: fc4 expects 2592 = 32*9*9 features,
    # which through the two valid convs pins the spatial size to 84x84.
    x = jax.random.uniform(xkey, (B, C_IN, H_IN, W_IN), jnp.float32)

    out = jax.block_until_ready(jax.jit(forward)(params, x))
    assert out.shape == (B, N_ACT) and out.dtype == jnp.float32

    ref = jax.block_until_ready(reference_forward(raw, x))
    max_err = float(jnp.max(jnp.abs(out - ref)))
    assert max_err < 5e-3, f"kernel mismatch vs reference: {max_err}"

    print("KERNEL_OK")
</pallas_src>

<mosaic_0001>
module attributes {stable_mosaic.version = 11 : i64} {
  func.func @_dqn_fused_kernel(%arg0: i32, %arg1: memref<242x384xf32, #tpu.memory_space<vmem>>, %arg2: memref<384x16xf32, #tpu.memory_space<vmem>>, %arg3: memref<9x162x242xbf16, #tpu.memory_space<vmem>>, %arg4: memref<9x16x32xf32, #tpu.memory_space<vmem>>, %arg5: memref<2592x32xf32, #tpu.memory_space<vmem>>, %arg6: memref<1x32xf32, #tpu.memory_space<vmem>>, %arg7: memref<32x128xf32, #tpu.memory_space<vmem>>, %arg8: memref<1x128xf32, #tpu.memory_space<vmem>>, %arg9: memref<2x128xf32, #tpu.memory_space<vmem>>, %arg10: memref<162x32xf32, #tpu.memory_space<vmem>>, %arg11: memref<2x2592xf32, #tpu.memory_space<vmem>>) attributes {dimension_semantics = [#tpu.dimension_semantics<arbitrary>], iteration_bounds = array<i64: 1>, scalar_prefetch = 0 : i64, scratch_operands = 2 : i64, tpu.core_type = #tpu.core_type<tc>, window_params = [{pipeline_mode = #tpu.pipeline_mode<synchronous>, transform_indices = @transform_0, window_bounds = array<i64: 242, 384>}, {pipeline_mode = #tpu.pipeline_mode<synchronous>, transform_indices = @transform_1, window_bounds = array<i64: 384, 16>}, {pipeline_mode = #tpu.pipeline_mode<synchronous>, transform_indices = @transform_2, window_bounds = array<i64: 9, 162, 242>}, {pipeline_mode = #tpu.pipeline_mode<synchronous>, transform_indices = @transform_3, window_bounds = array<i64: 9, 16, 32>}, {pipeline_mode = #tpu.pipeline_mode<synchronous>, transform_indices = @transform_4, window_bounds = array<i64: 2592, 32>}, {pipeline_mode = #tpu.pipeline_mode<synchronous>, transform_indices = @transform_5, window_bounds = array<i64: 1, 32>}, {pipeline_mode = #tpu.pipeline_mode<synchronous>, transform_indices = @transform_6, window_bounds = array<i64: 32, 128>}, {pipeline_mode = #tpu.pipeline_mode<synchronous>, transform_indices = @transform_7, window_bounds = array<i64: 1, 128>}, {pipeline_mode = #tpu.pipeline_mode<synchronous>, transform_indices = @transform_8, window_bounds = array<i64: 2, 128>}]} {
    %c0 = arith.constant 0 : index
    %c0_0 = arith.constant 0 : index
    %0 = vector.load %arg1[%c0, %c0_0] : memref<242x384xf32, #tpu.memory_space<vmem>>, vector<242x384xf32>
    %c0_1 = arith.constant 0 : index
    %c0_2 = arith.constant 0 : index
    %1 = vector.load %arg2[%c0_1, %c0_2] : memref<384x16xf32, #tpu.memory_space<vmem>>, vector<384x16xf32>
    %cst = arith.constant dense<0.000000e+00> : vector<242x16xf32>
    %2 = tpu.matmul %0, %1, %cst {dimension_numbers = #tpu.dot_dimension_numbers<[1], [0], [0], [1], [0, 0, 1, 1], [], []>} : vector<242x384xf32>, vector<384x16xf32>, vector<242x16xf32> -> vector<242x16xf32>
    %cst_3 = arith.constant 0.000000e+00 : f32
    %3 = vector.broadcast %cst_3 : f32 to vector<242x16xf32>
    %4 = arith.maximumf %2, %3 : vector<242x16xf32>
    %cst_4 = arith.constant 0.000000e+00 : f32
    %5 = vector.broadcast %cst_4 : f32 to vector<162x32xf32>
    %c0_5 = arith.constant 0 : index
    %c0_6 = arith.constant 0 : index
    %c0_7 = arith.constant 0 : index
    %6 = vector.load %arg3[%c0_5, %c0_6, %c0_7] : memref<9x162x242xbf16, #tpu.memory_space<vmem>>, vector<1x162x242xbf16>
    %7 = vector.shape_cast %6 : vector<1x162x242xbf16> to vector<162x242xbf16>
    %8 = arith.extf %7 : vector<162x242xbf16> to vector<162x242xf32>
    %cst_8 = arith.constant dense<0.000000e+00> : vector<162x16xf32>
    %9 = tpu.matmul %8, %4, %cst_8 {dimension_numbers = #tpu.dot_dimension_numbers<[1], [0], [0], [1], [0, 0, 1, 1], [], []>} : vector<162x242xf32>, vector<242x16xf32>, vector<162x16xf32> -> vector<162x16xf32>
    %c0_9 = arith.constant 0 : index
    %c0_10 = arith.constant 0 : index
    %c0_11 = arith.constant 0 : index
    %10 = vector.load %arg4[%c0_9, %c0_10, %c0_11] : memref<9x16x32xf32, #tpu.memory_space<vmem>>, vector<1x16x32xf32>
    %11 = vector.shape_cast %10 : vector<1x16x32xf32> to vector<16x32xf32>
    %cst_12 = arith.constant dense<0.000000e+00> : vector<162x32xf32>
    %12 = tpu.matmul %9, %11, %cst_12 {dimension_numbers = #tpu.dot_dimension_numbers<[1], [0], [0], [1], [0, 0, 1, 1], [], []>} : vector<162x16xf32>, vector<16x32xf32>, vector<162x32xf32> -> vector<162x32xf32>
    %13 = arith.addf %5, %12 : vector<162x32xf32>
    %c1 = arith.constant 1 : index
    %c0_13 = arith.constant 0 : index
    %c0_14 = arith.constant 0 : index
    %14 = vector.load %arg3[%c1, %c0_13, %c0_14] : memref<9x162x242xbf16, #tpu.memory_space<vmem>>, vector<1x162x242xbf16>
    %15 = vector.shape_cast %14 : vector<1x162x242xbf16> to vector<162x242xbf16>
    %16 = arith.extf %15 : vector<162x242xbf16> to vector<162x242xf32>
    %cst_15 = arith.constant dense<0.000000e+00> : vector<162x16xf32>
    %17 = tpu.matmul %16, %4, %cst_15 {dimension_numbers = #tpu.dot_dimension_numbers<[1], [0], [0], [1], [0, 0, 1, 1], [], []>} : vector<162x242xf32>, vector<242x16xf32>, vector<162x16xf32> -> vector<162x16xf32>
    %c1_16 = arith.constant 1 : index
    %c0_17 = arith.constant 0 : index
    %c0_18 = arith.constant 0 : index
    %18 = vector.load %arg4[%c1_16, %c0_17, %c0_18] : memref<9x16x32xf32, #tpu.memory_space<vmem>>, vector<1x16x32xf32>
    %19 = vector.shape_cast %18 : vector<1x16x32xf32> to vector<16x32xf32>
    %cst_19 = arith.constant dense<0.000000e+00> : vector<162x32xf32>
    %20 = tpu.matmul %17, %19, %cst_19 {dimension_numbers = #tpu.dot_dimension_numbers<[1], [0], [0], [1], [0, 0, 1, 1], [], []>} : vector<162x16xf32>, vector<16x32xf32>, vector<162x32xf32> -> vector<162x32xf32>
    %21 = arith.addf %13, %20 : vector<162x32xf32>
    %c2 = arith.constant 2 : index
    %c0_20 = arith.constant 0 : index
    %c0_21 = arith.constant 0 : index
    %22 = vector.load %arg3[%c2, %c0_20, %c0_21] : memref<9x162x242xbf16, #tpu.memory_space<vmem>>, vector<1x162x242xbf16>
    %23 = vector.shape_cast %22 : vector<1x162x242xbf16> to vector<162x242xbf16>
    %24 = arith.extf %23 : vector<162x242xbf16> to vector<162x242xf32>
    %cst_22 = arith.constant dense<0.000000e+00> : vector<162x16xf32>
    %25 = tpu.matmul %24, %4, %cst_22 {dimension_numbers = #tpu.dot_dimension_numbers<[1], [0], [0], [1], [0, 0, 1, 1], [], []>} : vector<162x242xf32>, vector<242x16xf32>, vector<162x16xf32> -> vector<162x16xf32>
    %c2_23 = arith.constant 2 : index
    %c0_24 = arith.constant 0 : index
    %c0_25 = arith.constant 0 : index
    %26 = vector.load %arg4[%c2_23, %c0_24, %c0_25] : memref<9x16x32xf32, #tpu.memory_space<vmem>>, vector<1x16x32xf32>
    %27 = vector.shape_cast %26 : vector<1x16x32xf32> to vector<16x32xf32>
    %cst_26 = arith.constant dense<0.000000e+00> : vector<162x32xf32>
    %28 = tpu.matmul %25, %27, %cst_26 {dimension_numbers = #tpu.dot_dimension_numbers<[1], [0], [0], [1], [0, 0, 1, 1], [], []>} : vector<162x16xf32>, vector<16x32xf32>, vector<162x32xf32> -> vector<162x32xf32>
    %29 = arith.addf %21, %28 : vector<162x32xf32>
    %c3 = arith.constant 3 : index
    %c0_27 = arith.constant 0 : index
    %c0_28 = arith.constant 0 : index
    %30 = vector.load %arg3[%c3, %c0_27, %c0_28] : memref<9x162x242xbf16, #tpu.memory_space<vmem>>, vector<1x162x242xbf16>
    %31 = vector.shape_cast %30 : vector<1x162x242xbf16> to vector<162x242xbf16>
    %32 = arith.extf %31 : vector<162x242xbf16> to vector<162x242xf32>
    %cst_29 = arith.constant dense<0.000000e+00> : vector<162x16xf32>
    %33 = tpu.matmul %32, %4, %cst_29 {dimension_numbers = #tpu.dot_dimension_numbers<[1], [0], [0], [1], [0, 0, 1, 1], [], []>} : vector<162x242xf32>, vector<242x16xf32>, vector<162x16xf32> -> vector<162x16xf32>
    %c3_30 = arith.constant 3 : index
    %c0_31 = arith.constant 0 : index
    %c0_32 = arith.constant 0 : index
    %34 = vector.load %arg4[%c3_30, %c0_31, %c0_32] : memref<9x16x32xf32, #tpu.memory_space<vmem>>, vector<1x16x32xf32>
    %35 = vector.shape_cast %34 : vector<1x16x32xf32> to vector<16x32xf32>
    %cst_33 = arith.constant dense<0.000000e+00> : vector<162x32xf32>
    %36 = tpu.matmul %33, %35, %cst_33 {dimension_numbers = #tpu.dot_dimension_numbers<[1], [0], [0], [1], [0, 0, 1, 1], [], []>} : vector<162x16xf32>, vector<16x32xf32>, vector<162x32xf32> -> vector<162x32xf32>
    %37 = arith.addf %29, %36 : vector<162x32xf32>
    %c4 = arith.constant 4 : index
    %c0_34 = arith.constant 0 : index
    %c0_35 = arith.constant 0 : index
    %38 = vector.load %arg3[%c4, %c0_34, %c0_35] : memref<9x162x242xbf16, #tpu.memory_space<vmem>>, vector<1x162x242xbf16>
    %39 = vector.shape_cast %38 : vector<1x162x242xbf16> to vector<162x242xbf16>
    %40 = arith.extf %39 : vector<162x242xbf16> to vector<162x242xf32>
    %cst_36 = arith.constant dense<0.000000e+00> : vector<162x16xf32>
    %41 = tpu.matmul %40, %4, %cst_36 {dimension_numbers = #tpu.dot_dimension_numbers<[1], [0], [0], [1], [0, 0, 1, 1], [], []>} : vector<162x242xf32>, vector<242x16xf32>, vector<162x16xf32> -> vector<162x16xf32>
    %c4_37 = arith.constant 4 : index
    %c0_38 = arith.constant 0 : index
    %c0_39 = arith.constant 0 : index
    %42 = vector.load %arg4[%c4_37, %c0_38, %c0_39] : memref<9x16x32xf32, #tpu.memory_space<vmem>>, vector<1x16x32xf32>
    %43 = vector.shape_cast %42 : vector<1x16x32xf32> to vector<16x32xf32>
    %cst_40 = arith.constant dense<0.000000e+00> : vector<162x32xf32>
    %44 = tpu.matmul %41, %43, %cst_40 {dimension_numbers = #tpu.dot_dimension_numbers<[1], [0], [0], [1], [0, 0, 1, 1], [], []>} : vector<162x16xf32>, vector<16x32xf32>, vector<162x32xf32> -> vector<162x32xf32>
    %45 = arith.addf %37, %44 : vector<162x32xf32>
    %c5 = arith.constant 5 : index
    %c0_41 = arith.constant 0 : index
    %c0_42 = arith.constant 0 : index
    %46 = vector.load %arg3[%c5, %c0_41, %c0_42] : memref<9x162x242xbf16, #tpu.memory_space<vmem>>, vector<1x162x242xbf16>
    %47 = vector.shape_cast %46 : vector<1x162x242xbf16> to vector<162x242xbf16>
    %48 = arith.extf %47 : vector<162x242xbf16> to vector<162x242xf32>
    %cst_43 = arith.constant dense<0.000000e+00> : vector<162x16xf32>
    %49 = tpu.matmul %48, %4, %cst_43 {dimension_numbers = #tpu.dot_dimension_numbers<[1], [0], [0], [1], [0, 0, 1, 1], [], []>} : vector<162x242xf32>, vector<242x16xf32>, vector<162x16xf32> -> vector<162x16xf32>
    %c5_44 = arith.constant 5 : index
    %c0_45 = arith.constant 0 : index
    %c0_46 = arith.constant 0 : index
    %50 = vector.load %arg4[%c5_44, %c0_45, %c0_46] : memref<9x16x32xf32, #tpu.memory_space<vmem>>, vector<1x16x32xf32>
    %51 = vector.shape_cast %50 : vector<1x16x32xf32> to vector<16x32xf32>
    %cst_47 = arith.constant dense<0.000000e+00> : vector<162x32xf32>
    %52 = tpu.matmul %49, %51, %cst_47 {dimension_numbers = #tpu.dot_dimension_numbers<[1], [0], [0], [1], [0, 0, 1, 1], [], []>} : vector<162x16xf32>, vector<16x32xf32>, vector<162x32xf32> -> vector<162x32xf32>
    %53 = arith.addf %45, %52 : vector<162x32xf32>
    %c6 = arith.constant 6 : index
    %c0_48 = arith.constant 0 : index
    %c0_49 = arith.constant 0 : index
    %54 = vector.load %arg3[%c6, %c0_48, %c0_49] : memref<9x162x242xbf16, #tpu.memory_space<vmem>>, vector<1x162x242xbf16>
    %55 = vector.shape_cast %54 : vector<1x162x242xbf16> to vector<162x242xbf16>
    %56 = arith.extf %55 : vector<162x242xbf16> to vector<162x242xf32>
    %cst_50 = arith.constant dense<0.000000e+00> : vector<162x16xf32>
    %57 = tpu.matmul %56, %4, %cst_50 {dimension_numbers = #tpu.dot_dimension_numbers<[1], [0], [0], [1], [0, 0, 1, 1], [], []>} : vector<162x242xf32>, vector<242x16xf32>, vector<162x16xf32> -> vector<162x16xf32>
    %c6_51 = arith.constant 6 : index
    %c0_52 = arith.constant 0 : index
    %c0_53 = arith.constant 0 : index
    %58 = vector.load %arg4[%c6_51, %c0_52, %c0_53] : memref<9x16x32xf32, #tpu.memory_space<vmem>>, vector<1x16x32xf32>
    %59 = vector.shape_cast %58 : vector<1x16x32xf32> to vector<16x32xf32>
    %cst_54 = arith.constant dense<0.000000e+00> : vector<162x32xf32>
    %60 = tpu.matmul %57, %59, %cst_54 {dimension_numbers = #tpu.dot_dimension_numbers<[1], [0], [0], [1], [0, 0, 1, 1], [], []>} : vector<162x16xf32>, vector<16x32xf32>, vector<162x32xf32> -> vector<162x32xf32>
    %61 = arith.addf %53, %60 : vector<162x32xf32>
    %c7 = arith.constant 7 : index
    %c0_55 = arith.constant 0 : index
    %c0_56 = arith.constant 0 : index
    %62 = vector.load %arg3[%c7, %c0_55, %c0_56] : memref<9x162x242xbf16, #tpu.memory_space<vmem>>, vector<1x162x242xbf16>
    %63 = vector.shape_cast %62 : vector<1x162x242xbf16> to vector<162x242xbf16>
    %64 = arith.extf %63 : vector<162x242xbf16> to vector<162x242xf32>
    %cst_57 = arith.constant dense<0.000000e+00> : vector<162x16xf32>
    %65 = tpu.matmul %64, %4, %cst_57 {dimension_numbers = #tpu.dot_dimension_numbers<[1], [0], [0], [1], [0, 0, 1, 1], [], []>} : vector<162x242xf32>, vector<242x16xf32>, vector<162x16xf32> -> vector<162x16xf32>
    %c7_58 = arith.constant 7 : index
    %c0_59 = arith.constant 0 : index
    %c0_60 = arith.constant 0 : index
    %66 = vector.load %arg4[%c7_58, %c0_59, %c0_60] : memref<9x16x32xf32, #tpu.memory_space<vmem>>, vector<1x16x32xf32>
    %67 = vector.shape_cast %66 : vector<1x16x32xf32> to vector<16x32xf32>
    %cst_61 = arith.constant dense<0.000000e+00> : vector<162x32xf32>
    %68 = tpu.matmul %65, %67, %cst_61 {dimension_numbers = #tpu.dot_dimension_numbers<[1], [0], [0], [1], [0, 0, 1, 1], [], []>} : vector<162x16xf32>, vector<16x32xf32>, vector<162x32xf32> -> vector<162x32xf32>
    %69 = arith.addf %61, %68 : vector<162x32xf32>
    %c8 = arith.constant 8 : index
    %c0_62 = arith.constant 0 : index
    %c0_63 = arith.constant 0 : index
    %70 = vector.load %arg3[%c8, %c0_62, %c0_63] : memref<9x162x242xbf16, #tpu.memory_space<vmem>>, vector<1x162x242xbf16>
    %71 = vector.shape_cast %70 : vector<1x162x242xbf16> to vector<162x242xbf16>
    %72 = arith.extf %71 : vector<162x242xbf16> to vector<162x242xf32>
    %cst_64 = arith.constant dense<0.000000e+00> : vector<162x16xf32>
    %73 = tpu.matmul %72, %4, %cst_64 {dimension_numbers = #tpu.dot_dimension_numbers<[1], [0], [0], [1], [0, 0, 1, 1], [], []>} : vector<162x242xf32>, vector<242x16xf32>, vector<162x16xf32> -> vector<162x16xf32>
    %c8_65 = arith.constant 8 : index
    %c0_66 = arith.constant 0 : index
    %c0_67 = arith.constant 0 : index
    %74 = vector.load %arg4[%c8_65, %c0_66, %c0_67] : memref<9x16x32xf32, #tpu.memory_space<vmem>>, vector<1x16x32xf32>
    %75 = vector.shape_cast %74 : vector<1x16x32xf32> to vector<16x32xf32>
    %cst_68 = arith.constant dense<0.000000e+00> : vector<162x32xf32>
    %76 = tpu.matmul %73, %75, %cst_68 {dimension_numbers = #tpu.dot_dimension_numbers<[1], [0], [0], [1], [0, 0, 1, 1], [], []>} : vector<162x16xf32>, vector<16x32xf32>, vector<162x32xf32> -> vector<162x32xf32>
    %77 = arith.addf %69, %76 : vector<162x32xf32>
    %cst_69 = arith.constant 0.000000e+00 : f32
    %78 = vector.broadcast %cst_69 : f32 to vector<162x32xf32>
    %79 = arith.maximumf %77, %78 : vector<162x32xf32>
    %c0_70 = arith.constant 0 : index
    %c0_71 = arith.constant 0 : index
    %80 = vector.load %arg10[%c0_70, %c0_71] : memref<162x32xf32, #tpu.memory_space<vmem>>, vector<162x32xf32>
    tpu.vector_store %arg10[%c0_70, %c0_71], %79 {strides = array<i32>} : memref<162x32xf32, #tpu.memory_space<vmem>>, vector<162x32xf32>,
    %c0_72 = arith.constant 0 : index
    %c0_73 = arith.constant 0 : index
    %81 = vector.load %arg10[%c0_72, %c0_73] : memref<162x32xf32, #tpu.memory_space<vmem>>, vector<2x32xf32>
    %c0_74 = arith.constant 0 : index
    %c0_75 = arith.constant 0 : index
    %82 = vector.load %arg11[%c0_74, %c0_75] : memref<2x2592xf32, #tpu.memory_space<vmem>>, vector<2x32xf32>
    tpu.vector_store %arg11[%c0_74, %c0_75], %81 {strides = array<i32>} : memref<2x2592xf32, #tpu.memory_space<vmem>>, vector<2x32xf32>,
    %c2_76 = arith.constant 2 : index
    %c0_77 = arith.constant 0 : index
    %83 = vector.load %arg10[%c2_76, %c0_77] : memref<162x32xf32, #tpu.memory_space<vmem>>, vector<2x32xf32>
    %c0_78 = arith.constant 0 : index
    %c32 = arith.constant 32 : index
    %84 = vector.load %arg11[%c0_78, %c32] : memref<2x2592xf32, #tpu.memory_space<vmem>>, vector<2x32xf32>
    tpu.vector_store %arg11[%c0_78, %c32], %83 {strides = array<i32>} : memref<2x2592xf32, #tpu.memory_space<vmem>>, vector<2x32xf32>,
    %c4_79 = arith.constant 4 : index
    %c0_80 = arith.constant 0 : index
    %85 = vector.load %arg10[%c4_79, %c0_80] : memref<162x32xf32, #tpu.memory_space<vmem>>, vector<2x32xf32>
    %c0_81 = arith.constant 0 : index
    %c64 = arith.constant 64 : index
    %86 = vector.load %arg11[%c0_81, %c64] : memref<2x2592xf32, #tpu.memory_space<vmem>>, vector<2x32xf32>
    tpu.vector_store %arg11[%c0_81, %c64], %85 {strides = array<i32>} : memref<2x2592xf32, #tpu.memory_space<vmem>>, vector<2x32xf32>,
    %c6_82 = arith.constant 6 : index
    %c0_83 = arith.constant 0 : index
    %87 = vector.load %arg10[%c6_82, %c0_83] : memref<162x32xf32, #tpu.memory_space<vmem>>, vector<2x32xf32>
    %c0_84 = arith.constant 0 : index
    %c96 = arith.constant 96 : index
    %88 = vector.load %arg11[%c0_84, %c96] : memref<2x2592xf32, #tpu.memory_space<vmem>>, vector<2x32xf32>
    tpu.vector_store %arg11[%c0_84, %c96], %87 {strides = array<i32>} : memref<2x2592xf32, #tpu.memory_space<vmem>>, vector<2x32xf32>,
    %c8_85 = arith.constant 8 : index
    %c0_86 = arith.constant 0 : index
    %89 = vector.load %arg10[%c8_85, %c0_86] : memref<162x32xf32, #tpu.memory_space<vmem>>, vector<2x32xf32>
    %c0_87 = arith.constant 0 : index
    %c128 = arith.constant 128 : index
    %90 = vector.load %arg11[%c0_87, %c128] : memref<2x2592xf32, #tpu.memory_space<vmem>>, vector<2x32xf32>
    tpu.vector_store %arg11[%c0_87, %c128], %89 {strides = array<i32>} : memref<2x2592xf32, #tpu.memory_space<vmem>>, vector<2x32xf32>,
    %c10 = arith.constant 10 : index
    %c0_88 = arith.constant 0 : index
    %91 = vector.load %arg10[%c10, %c0_88] : memref<162x32xf32, #tpu.memory_space<vmem>>, vector<2x32xf32>
    %c0_89 = arith.constant 0 : index
    %c160 = arith.constant 160 : index
    %92 = vector.load %arg11[%c0_89, %c160] : memref<2x2592xf32, #tpu.memory_space<vmem>>, vector<2x32xf32>
    tpu.vector_store %arg11[%c0_89, %c160], %91 {strides = array<i32>} : memref<2x2592xf32, #tpu.memory_space<vmem>>, vector<2x32xf32>,
    %c12 = arith.constant 12 : index
    %c0_90 = arith.constant 0 : index
    %93 = vector.load %arg10[%c12, %c0_90] : memref<162x32xf32, #tpu.memory_space<vmem>>, vector<2x32xf32>
    %c0_91 = arith.constant 0 : index
    %c192 = arith.constant 192 : index
    %94 = vector.load %arg11[%c0_91, %c192] : memref<2x2592xf32, #tpu.memory_space<vmem>>, vector<2x32xf32>
    tpu.vector_store %arg11[%c0_91, %c192], %93 {strides = array<i32>} : memref<2x2592xf32, #tpu.memory_space<vmem>>, vector<2x32xf32>,
    %c14 = arith.constant 14 : index
    %c0_92 = arith.constant 0 : index
    %95 = vector.load %arg10[%c14, %c0_92] : memref<162x32xf32, #tpu.memory_space<vmem>>, vector<2x32xf32>
    %c0_93 = arith.constant 0 : index
    %c224 = arith.constant 224 : index
    %96 = vector.load %arg11[%c0_93, %c224] : memref<2x2592xf32, #tpu.memory_space<vmem>>, vector<2x32xf32>
    tpu.vector_store %arg11[%c0_93, %c224], %95 {strides = array<i32>} : memref<2x2592xf32, #tpu.memory_space<vmem>>, vector<2x32xf32>,
    %c16 = arith.constant 16 : index
    %c0_94 = arith.constant 0 : index
    %97 = vector.load %arg10[%c16, %c0_94] : memref<162x32xf32, #tpu.memory_space<vmem>>, vector<2x32xf32>
    %c0_95 = arith.constant 0 : index
    %c256 = arith.constant 256 : index
    %98 = vector.load %arg11[%c0_95, %c256] : memref<2x2592xf32, #tpu.memory_space<vmem>>, vector<2x32xf32>
    tpu.vector_store %arg11[%c0_95, %c256], %97 {strides = array<i32>} : memref<2x2592xf32, #tpu.memory_space<vmem>>, vector<2x32xf32>,
    %c18 = arith.constant 18 : index
    %c0_96 = arith.constant 0 : index
    %99 = vector.load %arg10[%c18, %c0_96] : memref<162x32xf32, #tpu.memory_space<vmem>>, vector<2x32xf32>
    %c0_97 = arith.constant 0 : index
    %c288 = arith.constant 288 : index
    %100 = vector.load %arg11[%c0_97, %c288] : memref<2x2592xf32, #tpu.memory_space<vmem>>, vector<2x32xf32>
    tpu.vector_store %arg11[%c0_97, %c288], %99 {strides = array<i32>} : memref<2x2592xf32, #tpu.memory_space<vmem>>, vector<2x32xf32>,
    %c20 = arith.constant 20 : index
    %c0_98 = arith.constant 0 : index
    %101 = vector.load %arg10[%c20, %c0_98] : memref<162x32xf32, #tpu.memory_space<vmem>>, vector<2x32xf32>
    %c0_99 = arith.constant 0 : index
    %c320 = arith.constant 320 : index
    %102 = vector.load %arg11[%c0_99, %c320] : memref<2x2592xf32, #tpu.memory_space<vmem>>, vector<2x32xf32>
    tpu.vector_store %arg11[%c0_99, %c320], %101 {strides = array<i32>} : memref<2x2592xf32, #tpu.memory_space<vmem>>, vector<2x32xf32>,
    %c22 = arith.constant 22 : index
    %c0_100 = arith.constant 0 : index
    %103 = vector.load %arg10[%c22, %c0_100] : memref<162x32xf32, #tpu.memory_space<vmem>>, vector<2x32xf32>
    %c0_101 = arith.constant 0 : index
    %c352 = arith.constant 352 : index
    %104 = vector.load %arg11[%c0_101, %c352] : memref<2x2592xf32, #tpu.memory_space<vmem>>, vector<2x32xf32>
    tpu.vector_store %arg11[%c0_101, %c352], %103 {strides = array<i32>} : memref<2x2592xf32, #tpu.memory_space<vmem>>, vector<2x32xf32>,
    %c24 = arith.constant 24 : index
    %c0_102 = arith.constant 0 : index
    %105 = vector.load %arg10[%c24, %c0_102] : memref<162x32xf32, #tpu.memory_space<vmem>>, vector<2x32xf32>
    %c0_103 = arith.constant 0 : index
    %c384 = arith.constant 384 : index
    %106 = vector.load %arg11[%c0_103, %c384] : memref<2x2592xf32, #tpu.memory_space<vmem>>, vector<2x32xf32>
    tpu.vector_store %arg11[%c0_103, %c384], %105 {strides = array<i32>} : memref<2x2592xf32, #tpu.memory_space<vmem>>, vector<2x32xf32>,
    %c26 = arith.constant 26 : index
    %c0_104 = arith.constant 0 : index
    %107 = vector.load %arg10[%c26, %c0_104] : memref<162x32xf32, #tpu.memory_space<vmem>>, vector<2x32xf32>
    %c0_105 = arith.constant 0 : index
    %c416 = arith.constant 416 : index
    %108 = vector.load %arg11[%c0_105, %c416] : memref<2x2592xf32, #tpu.memory_space<vmem>>, vector<2x32xf32>
    tpu.vector_store %arg11[%c0_105, %c416], %107 {strides = array<i32>} : memref<2x2592xf32, #tpu.memory_space<vmem>>, vector<2x32xf32>,
    %c28 = arith.constant 28 : index
    %c0_106 = arith.constant 0 : index
    %109 = vector.load %arg10[%c28, %c0_106] : memref<162x32xf32, #tpu.memory_space<vmem>>, vector<2x32xf32>
    %c0_107 = arith.constant 0 : index
    %c448 = arith.constant 448 : index
    %110 = vector.load %arg11[%c0_107, %c448] : memref<2x2592xf32, #tpu.memory_space<vmem>>, vector<2x32xf32>
    tpu.vector_store %arg11[%c0_107, %c448], %109 {strides = array<i32>} : memref<2x2592xf32, #tpu.memory_space<vmem>>, vector<2x32xf32>,
    %c30 = arith.constant 30 : index
    %c0_108 = arith.constant 0 : index
    %111 = vector.load %arg10[%c30, %c0_108] : memref<162x32xf32, #tpu.memory_space<vmem>>, vector<2x32xf32>
    %c0_109 = arith.constant 0 : index
    %c480 = arith.constant 480 : index
    %112 = vector.load %arg11[%c0_109, %c480] : memref<2x2592xf32, #tpu.memory_space<vmem>>, vector<2x32xf32>
    tpu.vector_store %arg11[%c0_109, %c480], %111 {strides = array<i32>} : memref<2x2592xf32, #tpu.memory_space<vmem>>, vector<2x32xf32>,
    %c32_110 = arith.constant 32 : index
    %c0_111 = arith.constant 0 : index
    %113 = vector.load %arg10[%c32_110, %c0_111] : memref<162x32xf32, #tpu.memory_space<vmem>>, vector<2x32xf32>
    %c0_112 = arith.constant 0 : index
    %c512 = arith.constant 512 : index
    %114 = vector.load %arg11[%c0_112, %c512] : memref<2x2592xf32, #tpu.memory_space<vmem>>, vector<2x32xf32>
    tpu.vector_store %arg11[%c0_112, %c512], %113 {strides = array<i32>} : memref<2x2592xf32, #tpu.memory_space<vmem>>, vector<2x32xf32>,
    %c34 = arith.constant 34 : index
    %c0_113 = arith.constant 0 : index
    %115 = vector.load %arg10[%c34, %c0_113] : memref<162x32xf32, #tpu.memory_space<vmem>>, vector<2x32xf32>
    %c0_114 = arith.constant 0 : index
    %c544 = arith.constant 544 : index
    %116 = vector.load %arg11[%c0_114, %c544] : memref<2x2592xf32, #tpu.memory_space<vmem>>, vector<2x32xf32>
    tpu.vector_store %arg11[%c0_114, %c544], %115 {strides = array<i32>} : memref<2x2592xf32, #tpu.memory_space<vmem>>, vector<2x32xf32>,
    %c36 = arith.constant 36 : index
    %c0_115 = arith.constant 0 : index
    %117 = vector.load %arg10[%c36, %c0_115] : memref<162x32xf32, #tpu.memory_space<vmem>>, vector<2x32xf32>
    %c0_116 = arith.constant 0 : index
    %c576 = arith.constant 576 : index
    %118 = vector.load %arg11[%c0_116, %c576] : memref<2x2592xf32, #tpu.memory_space<vmem>>, vector<2x32xf32>
    tpu.vector_store %arg11[%c0_116, %c576], %117 {strides = array<i32>} : memref<2x2592xf32, #tpu.memory_space<vmem>>, vector<2x32xf32>,
    %c38 = arith.constant 38 : index
    %c0_117 = arith.constant 0 : index
    %119 = vector.load %arg10[%c38, %c0_117] : memref<162x32xf32, #tpu.memory_space<vmem>>, vector<2x32xf32>
    %c0_118 = arith.constant 0 : index
    %c608 = arith.constant 608 : index
    %120 = vector.load %arg11[%c0_118, %c608] : memref<2x2592xf32, #tpu.memory_space<vmem>>, vector<2x32xf32>
    tpu.vector_store %arg11[%c0_118, %c608], %119 {strides = array<i32>} : memref<2x2592xf32, #tpu.memory_space<vmem>>, vector<2x32xf32>,
    %c40 = arith.constant 40 : index
    %c0_119 = arith.constant 0 : index
    %121 = vector.load %arg10[%c40, %c0_119] : memref<162x32xf32, #tpu.memory_space<vmem>>, vector<2x32xf32>
    %c0_120 = arith.constant 0 : index
    %c640 = arith.constant 640 : index
    %122 = vector.load %arg11[%c0_120, %c640] : memref<2x2592xf32, #tpu.memory_space<vmem>>, vector<2x32xf32>
    tpu.vector_store %arg11[%c0_120, %c640], %121 {strides = array<i32>} : memref<2x2592xf32, #tpu.memory_space<vmem>>, vector<2x32xf32>,
    %c42 = arith.constant 42 : index
    %c0_121 = arith.constant 0 : index
    %123 = vector.load %arg10[%c42, %c0_121] : memref<162x32xf32, #tpu.memory_space<vmem>>, vector<2x32xf32>
    %c0_122 = arith.constant 0 : index
    %c672 = arith.constant 672 : index
    %124 = vector.load %arg11[%c0_122, %c672] : memref<2x2592xf32, #tpu.memory_space<vmem>>, vector<2x32xf32>
    tpu.vector_store %arg11[%c0_122, %c672], %123 {strides = array<i32>} : memref<2x2592xf32, #tpu.memory_space<vmem>>, vector<2x32xf32>,
    %c44 = arith.constant 44 : index
    %c0_123 = arith.constant 0 : index
    %125 = vector.load %arg10[%c44, %c0_123] : memref<162x32xf32, #tpu.memory_space<vmem>>, vector<2x32xf32>
    %c0_124 = arith.constant 0 : index
    %c704 = arith.constant 704 : index
    %126 = vector.load %arg11[%c0_124, %c704] : memref<2x2592xf32, #tpu.memory_space<vmem>>, vector<2x32xf32>
    tpu.vector_store %arg11[%c0_124, %c704], %125 {strides = array<i32>} : memref<2x2592xf32, #tpu.memory_space<vmem>>, vector<2x32xf32>,
    %c46 = arith.constant 46 : index
    %c0_125 = arith.constant 0 : index
    %127 = vector.load %arg10[%c46, %c0_125] : memref<162x32xf32, #tpu.memory_space<vmem>>, vector<2x32xf32>
    %c0_126 = arith.constant 0 : index
    %c736 = arith.constant 736 : index
    %128 = vector.load %arg11[%c0_126, %c736] : memref<2x2592xf32, #tpu.memory_space<vmem>>, vector<2x32xf32>
    tpu.vector_store %arg11[%c0_126, %c736], %127 {strides = array<i32>} : memref<2x2592xf32, #tpu.memory_space<vmem>>, vector<2x32xf32>,
    %c48 = arith.constant 48 : index
    %c0_127 = arith.constant 0 : index
    %129 = vector.load %arg10[%c48, %c0_127] : memref<162x32xf32, #tpu.memory_space<vmem>>, vector<2x32xf32>
    %c0_128 = arith.constant 0 : index
    %c768 = arith.constant 768 : index
    %130 = vector.load %arg11[%c0_128, %c768] : memref<2x2592xf32, #tpu.memory_space<vmem>>, vector<2x32xf32>
    tpu.vector_store %arg11[%c0_128, %c768], %129 {strides = array<i32>} : memref<2x2592xf32, #tpu.memory_space<vmem>>, vector<2x32xf32>,
    %c50 = arith.constant 50 : index
    %c0_129 = arith.constant 0 : index
    %131 = vector.load %arg10[%c50, %c0_129] : memref<162x32xf32, #tpu.memory_space<vmem>>, vector<2x32xf32>
    %c0_130 = arith.constant 0 : index
    %c800 = arith.constant 800 : index
    %132 = vector.load %arg11[%c0_130, %c800] : memref<2x2592xf32, #tpu.memory_space<vmem>>, vector<2x32xf32>
    tpu.vector_store %arg11[%c0_130, %c800], %131 {strides = array<i32>} : memref<2x2592xf32, #tpu.memory_space<vmem>>, vector<2x32xf32>,
    %c52 = arith.constant 52 : index
    %c0_131 = arith.constant 0 : index
    %133 = vector.load %arg10[%c52, %c0_131] : memref<162x32xf32, #tpu.memory_space<vmem>>, vector<2x32xf32>
    %c0_132 = arith.constant 0 : index
    %c832 = arith.constant 832 : index
    %134 = vector.load %arg11[%c0_132, %c832] : memref<2x2592xf32, #tpu.memory_space<vmem>>, vector<2x32xf32>
    tpu.vector_store %arg11[%c0_132, %c832], %133 {strides = array<i32>} : memref<2x2592xf32, #tpu.memory_space<vmem>>, vector<2x32xf32>,
    %c54 = arith.constant 54 : index
    %c0_133 = arith.constant 0 : index
    %135 = vector.load %arg10[%c54, %c0_133] : memref<162x32xf32, #tpu.memory_space<vmem>>, vector<2x32xf32>
    %c0_134 = arith.constant 0 : index
    %c864 = arith.constant 864 : index
    %136 = vector.load %arg11[%c0_134, %c864] : memref<2x2592xf32, #tpu.memory_space<vmem>>, vector<2x32xf32>
    tpu.vector_store %arg11[%c0_134, %c864], %135 {strides = array<i32>} : memref<2x2592xf32, #tpu.memory_space<vmem>>, vector<2x32xf32>,
    %c56 = arith.constant 56 : index
    %c0_135 = arith.constant 0 : index
    %137 = vector.load %arg10[%c56, %c0_135] : memref<162x32xf32, #tpu.memory_space<vmem>>, vector<2x32xf32>
    %c0_136 = arith.constant 0 : index
    %c896 = arith.constant 896 : index
    %138 = vector.load %arg11[%c0_136, %c896] : memref<2x2592xf32, #tpu.memory_space<vmem>>, vector<2x32xf32>
    tpu.vector_store %arg11[%c0_136, %c896], %137 {strides = array<i32>} : memref<2x2592xf32, #tpu.memory_space<vmem>>, vector<2x32xf32>,
    %c58 = arith.constant 58 : index
    %c0_137 = arith.constant 0 : index
    %139 = vector.load %arg10[%c58, %c0_137] : memref<162x32xf32, #tpu.memory_space<vmem>>, vector<2x32xf32>
    %c0_138 = arith.constant 0 : index
    %c928 = arith.constant 928 : index
    %140 = vector.load %arg11[%c0_138, %c928] : memref<2x2592xf32, #tpu.memory_space<vmem>>, vector<2x32xf32>
    tpu.vector_store %arg11[%c0_138, %c928], %139 {strides = array<i32>} : memref<2x2592xf32, #tpu.memory_space<vmem>>, vector<2x32xf32>,
    %c60 = arith.constant 60 : index
    %c0_139 = arith.constant 0 : index
    %141 = vector.load %arg10[%c60, %c0_139] : memref<162x32xf32, #tpu.memory_space<vmem>>, vector<2x32xf32>
    %c0_140 = arith.constant 0 : index
    %c960 = arith.constant 960 : index
    %142 = vector.load %arg11[%c0_140, %c960] : memref<2x2592xf32, #tpu.memory_space<vmem>>, vector<2x32xf32>
    tpu.vector_store %arg11[%c0_140, %c960], %141 {strides = array<i32>} : memref<2x2592xf32, #tpu.memory_space<vmem>>, vector<2x32xf32>,
    %c62 = arith.constant 62 : index
    %c0_141 = arith.constant 0 : index
    %143 = vector.load %arg10[%c62, %c0_141] : memref<162x32xf32, #tpu.memory_space<vmem>>, vector<2x32xf32>
    %c0_142 = arith.constant 0 : index
    %c992 = arith.constant 992 : index
    %144 = vector.load %arg11[%c0_142, %c992] : memref<2x2592xf32, #tpu.memory_space<vmem>>, vector<2x32xf32>
    tpu.vector_store %arg11[%c0_142, %c992], %143 {strides = array<i32>} : memref<2x2592xf32, #tpu.memory_space<vmem>>, vector<2x32xf32>,
    %c64_143 = arith.constant 64 : index
    %c0_144 = arith.constant 0 : index
    %145 = vector.load %arg10[%c64_143, %c0_144] : memref<162x32xf32, #tpu.memory_space<vmem>>, vector<2x32xf32>
    %c0_145 = arith.constant 0 : index
    %c1024 = arith.constant 1024 : index
    %146 = vector.load %arg11[%c0_145, %c1024] : memref<2x2592xf32, #tpu.memory_space<vmem>>, vector<2x32xf32>
    tpu.vector_store %arg11[%c0_145, %c1024], %145 {strides = array<i32>} : memref<2x2592xf32, #tpu.memory_space<vmem>>, vector<2x32xf32>,
    %c66 = arith.constant 66 : index
    %c0_146 = arith.constant 0 : index
    %147 = vector.load %arg10[%c66, %c0_146] : memref<162x32xf32, #tpu.memory_space<vmem>>, vector<2x32xf32>
    %c0_147 = arith.constant 0 : index
    %c1056 = arith.constant 1056 : index
    %148 = vector.load %arg11[%c0_147, %c1056] : memref<2x2592xf32, #tpu.memory_space<vmem>>, vector<2x32xf32>
    tpu.vector_store %arg11[%c0_147, %c1056], %147 {strides = array<i32>} : memref<2x2592xf32, #tpu.memory_space<vmem>>, vector<2x32xf32>,
    %c68 = arith.constant 68 : index
    %c0_148 = arith.constant 0 : index
    %149 = vector.load %arg10[%c68, %c0_148] : memref<162x32xf32, #tpu.memory_space<vmem>>, vector<2x32xf32>
    %c0_149 = arith.constant 0 : index
    %c1088 = arith.constant 1088 : index
    %150 = vector.load %arg11[%c0_149, %c1088] : memref<2x2592xf32, #tpu.memory_space<vmem>>, vector<2x32xf32>
    tpu.vector_store %arg11[%c0_149, %c1088], %149 {strides = array<i32>} : memref<2x2592xf32, #tpu.memory_space<vmem>>, vector<2x32xf32>,
    %c70 = arith.constant 70 : index
    %c0_150 = arith.constant 0 : index
    %151 = vector.load %arg10[%c70, %c0_150] : memref<162x32xf32, #tpu.memory_space<vmem>>, vector<2x32xf32>
    %c0_151 = arith.constant 0 : index
    %c1120 = arith.constant 1120 : index
    %152 = vector.load %arg11[%c0_151, %c1120] : memref<2x2592xf32, #tpu.memory_space<vmem>>, vector<2x32xf32>
    tpu.vector_store %arg11[%c0_151, %c1120], %151 {strides = array<i32>} : memref<2x2592xf32, #tpu.memory_space<vmem>>, vector<2x32xf32>,
    %c72 = arith.constant 72 : index
    %c0_152 = arith.constant 0 : index
    %153 = vector.load %arg10[%c72, %c0_152] : memref<162x32xf32, #tpu.memory_space<vmem>>, vector<2x32xf32>
    %c0_153 = arith.constant 0 : index
    %c1152 = arith.constant 1152 : index
    %154 = vector.load %arg11[%c0_153, %c1152] : memref<2x2592xf32, #tpu.memory_space<vmem>>, vector<2x32xf32>
    tpu.vector_store %arg11[%c0_153, %c1152], %153 {strides = array<i32>} : memref<2x2592xf32, #tpu.memory_space<vmem>>, vector<2x32xf32>,
    %c74 = arith.constant 74 : index
    %c0_154 = arith.constant 0 : index
    %155 = vector.load %arg10[%c74, %c0_154] : memref<162x32xf32, #tpu.memory_space<vmem>>, vector<2x32xf32>
    %c0_155 = arith.constant 0 : index
    %c1184 = arith.constant 1184 : index
    %156 = vector.load %arg11[%c0_155, %c1184] : memref<2x2592xf32, #tpu.memory_space<vmem>>, vector<2x32xf32>
    tpu.vector_store %arg11[%c0_155, %c1184], %155 {strides = array<i32>} : memref<2x2592xf32, #tpu.memory_space<vmem>>, vector<2x32xf32>,
    %c76 = arith.constant 76 : index
    %c0_156 = arith.constant 0 : index
    %157 = vector.load %arg10[%c76, %c0_156] : memref<162x32xf32, #tpu.memory_space<vmem>>, vector<2x32xf32>
    %c0_157 = arith.constant 0 : index
    %c1216 = arith.constant 1216 : index
    %158 = vector.load %arg11[%c0_157, %c1216] : memref<2x2592xf32, #tpu.memory_space<vmem>>, vector<2x32xf32>
    tpu.vector_store %arg11[%c0_157, %c1216], %157 {strides = array<i32>} : memref<2x2592xf32, #tpu.memory_space<vmem>>, vector<2x32xf32>,
    %c78 = arith.constant 78 : index
    %c0_158 = arith.constant 0 : index
    %159 = vector.load %arg10[%c78, %c0_158] : memref<162x32xf32, #tpu.memory_space<vmem>>, vector<2x32xf32>
    %c0_159 = arith.constant 0 : index
    %c1248 = arith.constant 1248 : index
    %160 = vector.load %arg11[%c0_159, %c1248] : memref<2x2592xf32, #tpu.memory_space<vmem>>, vector<2x32xf32>
    tpu.vector_store %arg11[%c0_159, %c1248], %159 {strides = array<i32>} : memref<2x2592xf32, #tpu.memory_space<vmem>>, vector<2x32xf32>,
    %c80 = arith.constant 80 : index
    %c0_160 = arith.constant 0 : index
    %161 = vector.load %arg10[%c80, %c0_160] : memref<162x32xf32, #tpu.memory_space<vmem>>, vector<2x32xf32>
    %c0_161 = arith.constant 0 : index
    %c1280 = arith.constant 1280 : index
    %162 = vector.load %arg11[%c0_161, %c1280] : memref<2x2592xf32, #tpu.memory_space<vmem>>, vector<2x32xf32>
    tpu.vector_store %arg11[%c0_161, %c1280], %161 {strides = array<i32>} : memref<2x2592xf32, #tpu.memory_space<vmem>>, vector<2x32xf32>,
    %c82 = arith.constant 82 : index
    %c0_162 = arith.constant 0 : index
    %163 = vector.load %arg10[%c82, %c0_162] : memref<162x32xf32, #tpu.memory_space<vmem>>, vector<2x32xf32>
    %c0_163 = arith.constant 0 : index
    %c1312 = arith.constant 1312 : index
    %164 = vector.load %arg11[%c0_163, %c1312] : memref<2x2592xf32, #tpu.memory_space<vmem>>, vector<2x32xf32>
    tpu.vector_store %arg11[%c0_163, %c1312], %163 {strides = array<i32>} : memref<2x2592xf32, #tpu.memory_space<vmem>>, vector<2x32xf32>,
    %c84 = arith.constant 84 : index
    %c0_164 = arith.constant 0 : index
    %165 = vector.load %arg10[%c84, %c0_164] : memref<162x32xf32, #tpu.memory_space<vmem>>, vector<2x32xf32>
    %c0_165 = arith.constant 0 : index
    %c1344 = arith.constant 1344 : index
    %166 = vector.load %arg11[%c0_165, %c1344] : memref<2x2592xf32, #tpu.memory_space<vmem>>, vector<2x32xf32>
    tpu.vector_store %arg11[%c0_165, %c1344], %165 {strides = array<i32>} : memref<2x2592xf32, #tpu.memory_space<vmem>>, vector<2x32xf32>,
    %c86 = arith.constant 86 : index
    %c0_166 = arith.constant 0 : index
    %167 = vector.load %arg10[%c86, %c0_166] : memref<162x32xf32, #tpu.memory_space<vmem>>, vector<2x32xf32>
    %c0_167 = arith.constant 0 : index
    %c1376 = arith.constant 1376 : index
    %168 = vector.load %arg11[%c0_167, %c1376] : memref<2x2592xf32, #tpu.memory_space<vmem>>, vector<2x32xf32>
    tpu.vector_store %arg11[%c0_167, %c1376], %167 {strides = array<i32>} : memref<2x2592xf32, #tpu.memory_space<vmem>>, vector<2x32xf32>,
    %c88 = arith.constant 88 : index
    %c0_168 = arith.constant 0 : index
    %169 = vector.load %arg10[%c88, %c0_168] : memref<162x32xf32, #tpu.memory_space<vmem>>, vector<2x32xf32>
    %c0_169 = arith.constant 0 : index
    %c1408 = arith.constant 1408 : index
    %170 = vector.load %arg11[%c0_169, %c1408] : memref<2x2592xf32, #tpu.memory_space<vmem>>, vector<2x32xf32>
    tpu.vector_store %arg11[%c0_169, %c1408], %169 {strides = array<i32>} : memref<2x2592xf32, #tpu.memory_space<vmem>>, vector<2x32xf32>,
    %c90 = arith.constant 90 : index
    %c0_170 = arith.constant 0 : index
    %171 = vector.load %arg10[%c90, %c0_170] : memref<162x32xf32, #tpu.memory_space<vmem>>, vector<2x32xf32>
    %c0_171 = arith.constant 0 : index
    %c1440 = arith.constant 1440 : index
    %172 = vector.load %arg11[%c0_171, %c1440] : memref<2x2592xf32, #tpu.memory_space<vmem>>, vector<2x32xf32>
    tpu.vector_store %arg11[%c0_171, %c1440], %171 {strides = array<i32>} : memref<2x2592xf32, #tpu.memory_space<vmem>>, vector<2x32xf32>,
    %c92 = arith.constant 92 : index
    %c0_172 = arith.constant 0 : index
    %173 = vector.load %arg10[%c92, %c0_172] : memref<162x32xf32, #tpu.memory_space<vmem>>, vector<2x32xf32>
    %c0_173 = arith.constant 0 : index
    %c1472 = arith.constant 1472 : index
    %174 = vector.load %arg11[%c0_173, %c1472] : memref<2x2592xf32, #tpu.memory_space<vmem>>, vector<2x32xf32>
    tpu.vector_store %arg11[%c0_173, %c1472], %173 {strides = array<i32>} : memref<2x2592xf32, #tpu.memory_space<vmem>>, vector<2x32xf32>,
    %c94 = arith.constant 94 : index
    %c0_174 = arith.constant 0 : index
    %175 = vector.load %arg10[%c94, %c0_174] : memref<162x32xf32, #tpu.memory_space<vmem>>, vector<2x32xf32>
    %c0_175 = arith.constant 0 : index
    %c1504 = arith.constant 1504 : index
    %176 = vector.load %arg11[%c0_175, %c1504] : memref<2x2592xf32, #tpu.memory_space<vmem>>, vector<2x32xf32>
    tpu.vector_store %arg11[%c0_175, %c1504], %175 {strides = array<i32>} : memref<2x2592xf32, #tpu.memory_space<vmem>>, vector<2x32xf32>,
    %c96_176 = arith.constant 96 : index
    %c0_177 = arith.constant 0 : index
    %177 = vector.load %arg10[%c96_176, %c0_177] : memref<162x32xf32, #tpu.memory_space<vmem>>, vector<2x32xf32>
    %c0_178 = arith.constant 0 : index
    %c1536 = arith.constant 1536 : index
    %178 = vector.load %arg11[%c0_178, %c1536] : memref<2x2592xf32, #tpu.memory_space<vmem>>, vector<2x32xf32>
    tpu.vector_store %arg11[%c0_178, %c1536], %177 {strides = array<i32>} : memref<2x2592xf32, #tpu.memory_space<vmem>>, vector<2x32xf32>,
    %c98 = arith.constant 98 : index
    %c0_179 = arith.constant 0 : index
    %179 = vector.load %arg10[%c98, %c0_179] : memref<162x32xf32, #tpu.memory_space<vmem>>, vector<2x32xf32>
    %c0_180 = arith.constant 0 : index
    %c1568 = arith.constant 1568 : index
    %180 = vector.load %arg11[%c0_180, %c1568] : memref<2x2592xf32, #tpu.memory_space<vmem>>, vector<2x32xf32>
    tpu.vector_store %arg11[%c0_180, %c1568], %179 {strides = array<i32>} : memref<2x2592xf32, #tpu.memory_space<vmem>>, vector<2x32xf32>,
    %c100 = arith.constant 100 : index
    %c0_181 = arith.constant 0 : index
    %181 = vector.load %arg10[%c100, %c0_181] : memref<162x32xf32, #tpu.memory_space<vmem>>, vector<2x32xf32>
    %c0_182 = arith.constant 0 : index
    %c1600 = arith.constant 1600 : index
    %182 = vector.load %arg11[%c0_182, %c1600] : memref<2x2592xf32, #tpu.memory_space<vmem>>, vector<2x32xf32>
    tpu.vector_store %arg11[%c0_182, %c1600], %181 {strides = array<i32>} : memref<2x2592xf32, #tpu.memory_space<vmem>>, vector<2x32xf32>,
    %c102 = arith.constant 102 : index
    %c0_183 = arith.constant 0 : index
    %183 = vector.load %arg10[%c102, %c0_183] : memref<162x32xf32, #tpu.memory_space<vmem>>, vector<2x32xf32>
    %c0_184 = arith.constant 0 : index
    %c1632 = arith.constant 1632 : index
    %184 = vector.load %arg11[%c0_184, %c1632] : memref<2x2592xf32, #tpu.memory_space<vmem>>, vector<2x32xf32>
    tpu.vector_store %arg11[%c0_184, %c1632], %183 {strides = array<i32>} : memref<2x2592xf32, #tpu.memory_space<vmem>>, vector<2x32xf32>,
    %c104 = arith.constant 104 : index
    %c0_185 = arith.constant 0 : index
    %185 = vector.load %arg10[%c104, %c0_185] : memref<162x32xf32, #tpu.memory_space<vmem>>, vector<2x32xf32>
    %c0_186 = arith.constant 0 : index
    %c1664 = arith.constant 1664 : index
    %186 = vector.load %arg11[%c0_186, %c1664] : memref<2x2592xf32, #tpu.memory_space<vmem>>, vector<2x32xf32>
    tpu.vector_store %arg11[%c0_186, %c1664], %185 {strides = array<i32>} : memref<2x2592xf32, #tpu.memory_space<vmem>>, vector<2x32xf32>,
    %c106 = arith.constant 106 : index
    %c0_187 = arith.constant 0 : index
    %187 = vector.load %arg10[%c106, %c0_187] : memref<162x32xf32, #tpu.memory_space<vmem>>, vector<2x32xf32>
    %c0_188 = arith.constant 0 : index
    %c1696 = arith.constant 1696 : index
    %188 = vector.load %arg11[%c0_188, %c1696] : memref<2x2592xf32, #tpu.memory_space<vmem>>, vector<2x32xf32>
    tpu.vector_store %arg11[%c0_188, %c1696], %187 {strides = array<i32>} : memref<2x2592xf32, #tpu.memory_space<vmem>>, vector<2x32xf32>,
    %c108 = arith.constant 108 : index
    %c0_189 = arith.constant 0 : index
    %189 = vector.load %arg10[%c108, %c0_189] : memref<162x32xf32, #tpu.memory_space<vmem>>, vector<2x32xf32>
    %c0_190 = arith.constant 0 : index
    %c1728 = arith.constant 1728 : index
    %190 = vector.load %arg11[%c0_190, %c1728] : memref<2x2592xf32, #tpu.memory_space<vmem>>, vector<2x32xf32>
    tpu.vector_store %arg11[%c0_190, %c1728], %189 {strides = array<i32>} : memref<2x2592xf32, #tpu.memory_space<vmem>>, vector<2x32xf32>,
    %c110 = arith.constant 110 : index
    %c0_191 = arith.constant 0 : index
    %191 = vector.load %arg10[%c110, %c0_191] : memref<162x32xf32, #tpu.memory_space<vmem>>, vector<2x32xf32>
    %c0_192 = arith.constant 0 : index
    %c1760 = arith.constant 1760 : index
    %192 = vector.load %arg11[%c0_192, %c1760] : memref<2x2592xf32, #tpu.memory_space<vmem>>, vector<2x32xf32>
    tpu.vector_store %arg11[%c0_192, %c1760], %191 {strides = array<i32>} : memref<2x2592xf32, #tpu.memory_space<vmem>>, vector<2x32xf32>,
    %c112 = arith.constant 112 : index
    %c0_193 = arith.constant 0 : index
    %193 = vector.load %arg10[%c112, %c0_193] : memref<162x32xf32, #tpu.memory_space<vmem>>, vector<2x32xf32>
    %c0_194 = arith.constant 0 : index
    %c1792 = arith.constant 1792 : index
    %194 = vector.load %arg11[%c0_194, %c1792] : memref<2x2592xf32, #tpu.memory_space<vmem>>, vector<2x32xf32>
    tpu.vector_store %arg11[%c0_194, %c1792], %193 {strides = array<i32>} : memref<2x2592xf32, #tpu.memory_space<vmem>>, vector<2x32xf32>,
    %c114 = arith.constant 114 : index
    %c0_195 = arith.constant 0 : index
    %195 = vector.load %arg10[%c114, %c0_195] : memref<162x32xf32, #tpu.memory_space<vmem>>, vector<2x32xf32>
    %c0_196 = arith.constant 0 : index
    %c1824 = arith.constant 1824 : index
    %196 = vector.load %arg11[%c0_196, %c1824] : memref<2x2592xf32, #tpu.memory_space<vmem>>, vector<2x32xf32>
    tpu.vector_store %arg11[%c0_196, %c1824], %195 {strides = array<i32>} : memref<2x2592xf32, #tpu.memory_space<vmem>>, vector<2x32xf32>,
    %c116 = arith.constant 116 : index
    %c0_197 = arith.constant 0 : index
    %197 = vector.load %arg10[%c116, %c0_197] : memref<162x32xf32, #tpu.memory_space<vmem>>, vector<2x32xf32>
    %c0_198 = arith.constant 0 : index
    %c1856 = arith.constant 1856 : index
    %198 = vector.load %arg11[%c0_198, %c1856] : memref<2x2592xf32, #tpu.memory_space<vmem>>, vector<2x32xf32>
    tpu.vector_store %arg11[%c0_198, %c1856], %197 {strides = array<i32>} : memref<2x2592xf32, #tpu.memory_space<vmem>>, vector<2x32xf32>,
    %c118 = arith.constant 118 : index
    %c0_199 = arith.constant 0 : index
    %199 = vector.load %arg10[%c118, %c0_199] : memref<162x32xf32, #tpu.memory_space<vmem>>, vector<2x32xf32>
    %c0_200 = arith.constant 0 : index
    %c1888 = arith.constant 1888 : index
    %200 = vector.load %arg11[%c0_200, %c1888] : memref<2x2592xf32, #tpu.memory_space<vmem>>, vector<2x32xf32>
    tpu.vector_store %arg11[%c0_200, %c1888], %199 {strides = array<i32>} : memref<2x2592xf32, #tpu.memory_space<vmem>>, vector<2x32xf32>,
    %c120 = arith.constant 120 : index
    %c0_201 = arith.constant 0 : index
    %201 = vector.load %arg10[%c120, %c0_201] : memref<162x32xf32, #tpu.memory_space<vmem>>, vector<2x32xf32>
    %c0_202 = arith.constant 0 : index
    %c1920 = arith.constant 1920 : index
    %202 = vector.load %arg11[%c0_202, %c1920] : memref<2x2592xf32, #tpu.memory_space<vmem>>, vector<2x32xf32>
    tpu.vector_store %arg11[%c0_202, %c1920], %201 {strides = array<i32>} : memref<2x2592xf32, #tpu.memory_space<vmem>>, vector<2x32xf32>,
    %c122 = arith.constant 122 : index
    %c0_203 = arith.constant 0 : index
    %203 = vector.load %arg10[%c122, %c0_203] : memref<162x32xf32, #tpu.memory_space<vmem>>, vector<2x32xf32>
    %c0_204 = arith.constant 0 : index
    %c1952 = arith.constant 1952 : index
    %204 = vector.load %arg11[%c0_204, %c1952] : memref<2x2592xf32, #tpu.memory_space<vmem>>, vector<2x32xf32>
    tpu.vector_store %arg11[%c0_204, %c1952], %203 {strides = array<i32>} : memref<2x2592xf32, #tpu.memory_space<vmem>>, vector<2x32xf32>,
    %c124 = arith.constant 124 : index
    %c0_205 = arith.constant 0 : index
    %205 = vector.load %arg10[%c124, %c0_205] : memref<162x32xf32, #tpu.memory_space<vmem>>, vector<2x32xf32>
    %c0_206 = arith.constant 0 : index
    %c1984 = arith.constant 1984 : index
    %206 = vector.load %arg11[%c0_206, %c1984] : memref<2x2592xf32, #tpu.memory_space<vmem>>, vector<2x32xf32>
    tpu.vector_store %arg11[%c0_206, %c1984], %205 {strides = array<i32>} : memref<2x2592xf32, #tpu.memory_space<vmem>>, vector<2x32xf32>,
    %c126 = arith.constant 126 : index
    %c0_207 = arith.constant 0 : index
    %207 = vector.load %arg10[%c126, %c0_207] : memref<162x32xf32, #tpu.memory_space<vmem>>, vector<2x32xf32>
    %c0_208 = arith.constant 0 : index
    %c2016 = arith.constant 2016 : index
    %208 = vector.load %arg11[%c0_208, %c2016] : memref<2x2592xf32, #tpu.memory_space<vmem>>, vector<2x32xf32>
    tpu.vector_store %arg11[%c0_208, %c2016], %207 {strides = array<i32>} : memref<2x2592xf32, #tpu.memory_space<vmem>>, vector<2x32xf32>,
    %c128_209 = arith.constant 128 : index
    %c0_210 = arith.constant 0 : index
    %209 = vector.load %arg10[%c128_209, %c0_210] : memref<162x32xf32, #tpu.memory_space<vmem>>, vector<2x32xf32>
    %c0_211 = arith.constant 0 : index
    %c2048 = arith.constant 2048 : index
    %210 = vector.load %arg11[%c0_211, %c2048] : memref<2x2592xf32, #tpu.memory_space<vmem>>, vector<2x32xf32>
    tpu.vector_store %arg11[%c0_211, %c2048], %209 {strides = array<i32>} : memref<2x2592xf32, #tpu.memory_space<vmem>>, vector<2x32xf32>,
    %c130 = arith.constant 130 : index
    %c0_212 = arith.constant 0 : index
    %211 = vector.load %arg10[%c130, %c0_212] : memref<162x32xf32, #tpu.memory_space<vmem>>, vector<2x32xf32>
    %c0_213 = arith.constant 0 : index
    %c2080 = arith.constant 2080 : index
    %212 = vector.load %arg11[%c0_213, %c2080] : memref<2x2592xf32, #tpu.memory_space<vmem>>, vector<2x32xf32>
    tpu.vector_store %arg11[%c0_213, %c2080], %211 {strides = array<i32>} : memref<2x2592xf32, #tpu.memory_space<vmem>>, vector<2x32xf32>,
    %c132 = arith.constant 132 : index
    %c0_214 = arith.constant 0 : index
    %213 = vector.load %arg10[%c132, %c0_214] : memref<162x32xf32, #tpu.memory_space<vmem>>, vector<2x32xf32>
    %c0_215 = arith.constant 0 : index
    %c2112 = arith.constant 2112 : index
    %214 = vector.load %arg11[%c0_215, %c2112] : memref<2x2592xf32, #tpu.memory_space<vmem>>, vector<2x32xf32>
    tpu.vector_store %arg11[%c0_215, %c2112], %213 {strides = array<i32>} : memref<2x2592xf32, #tpu.memory_space<vmem>>, vector<2x32xf32>,
    %c134 = arith.constant 134 : index
    %c0_216 = arith.constant 0 : index
    %215 = vector.load %arg10[%c134, %c0_216] : memref<162x32xf32, #tpu.memory_space<vmem>>, vector<2x32xf32>
    %c0_217 = arith.constant 0 : index
    %c2144 = arith.constant 2144 : index
    %216 = vector.load %arg11[%c0_217, %c2144] : memref<2x2592xf32, #tpu.memory_space<vmem>>, vector<2x32xf32>
    tpu.vector_store %arg11[%c0_217, %c2144], %215 {strides = array<i32>} : memref<2x2592xf32, #tpu.memory_space<vmem>>, vector<2x32xf32>,
    %c136 = arith.constant 136 : index
    %c0_218 = arith.constant 0 : index
    %217 = vector.load %arg10[%c136, %c0_218] : memref<162x32xf32, #tpu.memory_space<vmem>>, vector<2x32xf32>
    %c0_219 = arith.constant 0 : index
    %c2176 = arith.constant 2176 : index
    %218 = vector.load %arg11[%c0_219, %c2176] : memref<2x2592xf32, #tpu.memory_space<vmem>>, vector<2x32xf32>
    tpu.vector_store %arg11[%c0_219, %c2176], %217 {strides = array<i32>} : memref<2x2592xf32, #tpu.memory_space<vmem>>, vector<2x32xf32>,
    %c138 = arith.constant 138 : index
    %c0_220 = arith.constant 0 : index
    %219 = vector.load %arg10[%c138, %c0_220] : memref<162x32xf32, #tpu.memory_space<vmem>>, vector<2x32xf32>
    %c0_221 = arith.constant 0 : index
    %c2208 = arith.constant 2208 : index
    %220 = vector.load %arg11[%c0_221, %c2208] : memref<2x2592xf32, #tpu.memory_space<vmem>>, vector<2x32xf32>
    tpu.vector_store %arg11[%c0_221, %c2208], %219 {strides = array<i32>} : memref<2x2592xf32, #tpu.memory_space<vmem>>, vector<2x32xf32>,
    %c140 = arith.constant 140 : index
    %c0_222 = arith.constant 0 : index
    %221 = vector.load %arg10[%c140, %c0_222] : memref<162x32xf32, #tpu.memory_space<vmem>>, vector<2x32xf32>
    %c0_223 = arith.constant 0 : index
    %c2240 = arith.constant 2240 : index
    %222 = vector.load %arg11[%c0_223, %c2240] : memref<2x2592xf32, #tpu.memory_space<vmem>>, vector<2x32xf32>
    tpu.vector_store %arg11[%c0_223, %c2240], %221 {strides = array<i32>} : memref<2x2592xf32, #tpu.memory_space<vmem>>, vector<2x32xf32>,
    %c142 = arith.constant 142 : index
    %c0_224 = arith.constant 0 : index
    %223 = vector.load %arg10[%c142, %c0_224] : memref<162x32xf32, #tpu.memory_space<vmem>>, vector<2x32xf32>
    %c0_225 = arith.constant 0 : index
    %c2272 = arith.constant 2272 : index
    %224 = vector.load %arg11[%c0_225, %c2272] : memref<2x2592xf32, #tpu.memory_space<vmem>>, vector<2x32xf32>
    tpu.vector_store %arg11[%c0_225, %c2272], %223 {strides = array<i32>} : memref<2x2592xf32, #tpu.memory_space<vmem>>, vector<2x32xf32>,
    %c144 = arith.constant 144 : index
    %c0_226 = arith.constant 0 : index
    %225 = vector.load %arg10[%c144, %c0_226] : memref<162x32xf32, #tpu.memory_space<vmem>>, vector<2x32xf32>
    %c0_227 = arith.constant 0 : index
    %c2304 = arith.constant 2304 : index
    %226 = vector.load %arg11[%c0_227, %c2304] : memref<2x2592xf32, #tpu.memory_space<vmem>>, vector<2x32xf32>
    tpu.vector_store %arg11[%c0_227, %c2304], %225 {strides = array<i32>} : memref<2x2592xf32, #tpu.memory_space<vmem>>, vector<2x32xf32>,
    %c146 = arith.constant 146 : index
    %c0_228 = arith.constant 0 : index
    %227 = vector.load %arg10[%c146, %c0_228] : memref<162x32xf32, #tpu.memory_space<vmem>>, vector<2x32xf32>
    %c0_229 = arith.constant 0 : index
    %c2336 = arith.constant 2336 : index
    %228 = vector.load %arg11[%c0_229, %c2336] : memref<2x2592xf32, #tpu.memory_space<vmem>>, vector<2x32xf32>
    tpu.vector_store %arg11[%c0_229, %c2336], %227 {strides = array<i32>} : memref<2x2592xf32, #tpu.memory_space<vmem>>, vector<2x32xf32>,
    %c148 = arith.constant 148 : index
    %c0_230 = arith.constant 0 : index
    %229 = vector.load %arg10[%c148, %c0_230] : memref<162x32xf32, #tpu.memory_space<vmem>>, vector<2x32xf32>
    %c0_231 = arith.constant 0 : index
    %c2368 = arith.constant 2368 : index
    %230 = vector.load %arg11[%c0_231, %c2368] : memref<2x2592xf32, #tpu.memory_space<vmem>>, vector<2x32xf32>
    tpu.vector_store %arg11[%c0_231, %c2368], %229 {strides = array<i32>} : memref<2x2592xf32, #tpu.memory_space<vmem>>, vector<2x32xf32>,
    %c150 = arith.constant 150 : index
    %c0_232 = arith.constant 0 : index
    %231 = vector.load %arg10[%c150, %c0_232] : memref<162x32xf32, #tpu.memory_space<vmem>>, vector<2x32xf32>
    %c0_233 = arith.constant 0 : index
    %c2400 = arith.constant 2400 : index
    %232 = vector.load %arg11[%c0_233, %c2400] : memref<2x2592xf32, #tpu.memory_space<vmem>>, vector<2x32xf32>
    tpu.vector_store %arg11[%c0_233, %c2400], %231 {strides = array<i32>} : memref<2x2592xf32, #tpu.memory_space<vmem>>, vector<2x32xf32>,
    %c152 = arith.constant 152 : index
    %c0_234 = arith.constant 0 : index
    %233 = vector.load %arg10[%c152, %c0_234] : memref<162x32xf32, #tpu.memory_space<vmem>>, vector<2x32xf32>
    %c0_235 = arith.constant 0 : index
    %c2432 = arith.constant 2432 : index
    %234 = vector.load %arg11[%c0_235, %c2432] : memref<2x2592xf32, #tpu.memory_space<vmem>>, vector<2x32xf32>
    tpu.vector_store %arg11[%c0_235, %c2432], %233 {strides = array<i32>} : memref<2x2592xf32, #tpu.memory_space<vmem>>, vector<2x32xf32>,
    %c154 = arith.constant 154 : index
    %c0_236 = arith.constant 0 : index
    %235 = vector.load %arg10[%c154, %c0_236] : memref<162x32xf32, #tpu.memory_space<vmem>>, vector<2x32xf32>
    %c0_237 = arith.constant 0 : index
    %c2464 = arith.constant 2464 : index
    %236 = vector.load %arg11[%c0_237, %c2464] : memref<2x2592xf32, #tpu.memory_space<vmem>>, vector<2x32xf32>
    tpu.vector_store %arg11[%c0_237, %c2464], %235 {strides = array<i32>} : memref<2x2592xf32, #tpu.memory_space<vmem>>, vector<2x32xf32>,
    %c156 = arith.constant 156 : index
    %c0_238 = arith.constant 0 : index
    %237 = vector.load %arg10[%c156, %c0_238] : memref<162x32xf32, #tpu.memory_space<vmem>>, vector<2x32xf32>
    %c0_239 = arith.constant 0 : index
    %c2496 = arith.constant 2496 : index
    %238 = vector.load %arg11[%c0_239, %c2496] : memref<2x2592xf32, #tpu.memory_space<vmem>>, vector<2x32xf32>
    tpu.vector_store %arg11[%c0_239, %c2496], %237 {strides = array<i32>} : memref<2x2592xf32, #tpu.memory_space<vmem>>, vector<2x32xf32>,
    %c158 = arith.constant 158 : index
    %c0_240 = arith.constant 0 : index
    %239 = vector.load %arg10[%c158, %c0_240] : memref<162x32xf32, #tpu.memory_space<vmem>>, vector<2x32xf32>
    %c0_241 = arith.constant 0 : index
    %c2528 = arith.constant 2528 : index
    %240 = vector.load %arg11[%c0_241, %c2528] : memref<2x2592xf32, #tpu.memory_space<vmem>>, vector<2x32xf32>
    tpu.vector_store %arg11[%c0_241, %c2528], %239 {strides = array<i32>} : memref<2x2592xf32, #tpu.memory_space<vmem>>, vector<2x32xf32>,
    %c160_242 = arith.constant 160 : index
    %c0_243 = arith.constant 0 : index
    %241 = vector.load %arg10[%c160_242, %c0_243] : memref<162x32xf32, #tpu.memory_space<vmem>>, vector<2x32xf32>
    %c0_244 = arith.constant 0 : index
    %c2560 = arith.constant 2560 : index
    %242 = vector.load %arg11[%c0_244, %c2560] : memref<2x2592xf32, #tpu.memory_space<vmem>>, vector<2x32xf32>
    tpu.vector_store %arg11[%c0_244, %c2560], %241 {strides = array<i32>} : memref<2x2592xf32, #tpu.memory_space<vmem>>, vector<2x32xf32>,
    %c0_245 = arith.constant 0 : index
    %c0_246 = arith.constant 0 : index
    %243 = vector.load %arg11[%c0_245, %c0_246] : memref<2x2592xf32, #tpu.memory_space<vmem>>, vector<2x2592xf32>
    %c0_247 = arith.constant 0 : index
    %c0_248 = arith.constant 0 : index
    %244 = vector.load %arg5[%c0_247, %c0_248] : memref<2592x32xf32, #tpu.memory_space<vmem>>, vector<2592x32xf32>
    %cst_249 = arith.constant dense<0.000000e+00> : vector<2x32xf32>
    %245 = tpu.matmul %243, %244, %cst_249 {dimension_numbers = #tpu.dot_dimension_numbers<[1], [0], [0], [1], [0, 0, 1, 1], [], []>} : vector<2x2592xf32>, vector<2592x32xf32>, vector<2x32xf32> -> vector<2x32xf32>
    %c0_250 = arith.constant 0 : index
    %c0_251 = arith.constant 0 : index
    %246 = vector.load %arg6[%c0_250, %c0_251] : memref<1x32xf32, #tpu.memory_space<vmem>>, vector<1x32xf32>
    %247 = vector.broadcast %246 : vector<1x32xf32> to vector<2x32xf32>
    %248 = arith.addf %245, %247 : vector<2x32xf32>
    %cst_252 = arith.constant 0.000000e+00 : f32
    %249 = vector.broadcast %cst_252 : f32 to vector<2x32xf32>
    %250 = arith.maximumf %248, %249 : vector<2x32xf32>
    %c0_253 = arith.constant 0 : index
    %c0_254 = arith.constant 0 : index
    %251 = vector.load %arg7[%c0_253, %c0_254] : memref<32x128xf32, #tpu.memory_space<vmem>>, vector<32x128xf32>
    %cst_255 = arith.constant dense<0.000000e+00> : vector<2x128xf32>
    %252 = tpu.matmul %250, %251, %cst_255 {dimension_numbers = #tpu.dot_dimension_numbers<[1], [0], [0], [1], [0, 0, 1, 1], [], []>} : vector<2x32xf32>, vector<32x128xf32>, vector<2x128xf32> -> vector<2x128xf32>
    %c0_256 = arith.constant 0 : index
    %c0_257 = arith.constant 0 : index
    %253 = vector.load %arg8[%c0_256, %c0_257] : memref<1x128xf32, #tpu.memory_space<vmem>>, vector<1x128xf32>
    %254 = vector.broadcast %253 : vector<1x128xf32> to vector<2x128xf32>
    %255 = arith.addf %252, %254 : vector<2x128xf32>
    %c0_258 = arith.constant 0 : index
    %c0_259 = arith.constant 0 : index
    %256 = vector.load %arg9[%c0_258, %c0_259] : memref<2x128xf32, #tpu.memory_space<vmem>>, vector<2x128xf32>
    tpu.vector_store %arg9[%c0_258, %c0_259], %255 {strides = array<i32>} : memref<2x128xf32, #tpu.memory_space<vmem>>, vector<2x128xf32>,
    return
  }
  func.func @transform_0(%arg0: i32) -> (i32, i32) {
    %c0_i32 = arith.constant 0 : i32
    %c0_i32_0 = arith.constant 0 : i32
    %c0_i32_1 = arith.constant 0 : i32
    return %c0_i32, %c0_i32_0 : i32, i32
  }
  func.func @transform_1(%arg0: i32) -> (i32, i32) {
    %c0_i32 = arith.constant 0 : i32
    %c0_i32_0 = arith.constant 0 : i32
    %c0_i32_1 = arith.constant 0 : i32
    return %c0_i32, %c0_i32_0 : i32, i32
  }
  func.func @transform_2(%arg0: i32) -> (i32, i32, i32) {
    %c0_i32 = arith.constant 0 : i32
    %c0_i32_0 = arith.constant 0 : i32
    %c0_i32_1 = arith.constant 0 : i32
    %c0_i32_2 = arith.constant 0 : i32
    return %c0_i32, %c0_i32_0, %c0_i32_1 : i32, i32, i32
  }
  func.func @transform_3(%arg0: i32) -> (i32, i32, i32) {
    %c0_i32 = arith.constant 0 : i32
    %c0_i32_0 = arith.constant 0 : i32
    %c0_i32_1 = arith.constant 0 : i32
    %c0_i32_2 = arith.constant 0 : i32
    return %c0_i32, %c0_i32_0, %c0_i32_1 : i32, i32, i32
  }
  func.func @transform_4(%arg0: i32) -> (i32, i32) {
    %c0_i32 = arith.constant 0 : i32
    %c0_i32_0 = arith.constant 0 : i32
    %c0_i32_1 = arith.constant 0 : i32
    return %c0_i32, %c0_i32_0 : i32, i32
  }
  func.func @transform_5(%arg0: i32) -> (i32, i32) {
    %c0_i32 = arith.constant 0 : i32
    %c0_i32_0 = arith.constant 0 : i32
    %c0_i32_1 = arith.constant 0 : i32
    return %c0_i32, %c0_i32_0 : i32, i32
  }
  func.func @transform_6(%arg0: i32) -> (i32, i32) {
    %c0_i32 = arith.constant 0 : i32
    %c0_i32_0 = arith.constant 0 : i32
    %c0_i32_1 = arith.constant 0 : i32
    return %c0_i32, %c0_i32_0 : i32, i32
  }
  func.func @transform_7(%arg0: i32) -> (i32, i32) {
    %c0_i32 = arith.constant 0 : i32
    %c0_i32_0 = arith.constant 0 : i32
    %c0_i32_1 = arith.constant 0 : i32
    return %c0_i32, %c0_i32_0 : i32, i32
  }
  func.func @transform_8(%arg0: i32) -> (i32, i32) {
    %c0_i32 = arith.constant 0 : i32
    %c0_i32_0 = arith.constant 0 : i32
    %c0_i32_1 = arith.constant 0 : i32
    return %c0_i32, %c0_i32_0 : i32, i32
  }
}

</mosaic_0001>

<llo_original>
// kernel: forward.1
$region0: #{forward.1}
  #allocation0 [shape = 'u32[]', space=smem, size = 0x4, offset = 0x4, fixed_abs, tag = 'smem constant byte address 0x4 - core index']
  #allocation1 [shape = 'u32[144,128]{1,0:T(1,128)}', space=vmem, size = 0x12000, scoped, tag = 'internal scratch']
  #allocation2 [shape = 'f32[162,32]{1,0:T(8,128)}', space=vmem, size = 0x15000, scoped, tag = 'scratch operand']
  #allocation3 [shape = 'f32[2,2592]{1,0:T(2,128)}', space=vmem, size = 0x5400, scoped, tag = 'scratch operand']
  %s0 = inlined_call_operand.vmem [shape: f32[242,384], index: 0, kind: input, shape index: {}]
  %s1 = inlined_call_operand.vmem [shape: f32[384,16], index: 1, kind: input, shape index: {}]
  %s2 = inlined_call_operand.vmem [shape: bf16[9,162,242], index: 2, kind: input, shape index: {}]
  %s3 = inlined_call_operand.vmem [shape: f32[9,16,32], index: 3, kind: input, shape index: {}]
  %s4 = inlined_call_operand.vmem [shape: f32[2592,32], index: 4, kind: input, shape index: {}]
  %s5 = inlined_call_operand.vmem [shape: f32[1,32], index: 5, kind: input, shape index: {}]
  %s6 = inlined_call_operand.vmem [shape: f32[32,128], index: 6, kind: input, shape index: {}]
  %s7 = inlined_call_operand.vmem [shape: f32[1,128], index: 7, kind: input, shape index: {}]
  %s8 = inlined_call_operand.hbm [shape: f32[2,128], index: 8, kind: output, shape index: {}]
  %s9 = sld [smem:[#allocation0]]
  $region42: #{forward.1} parent=0
    _
  %s11 = ssub.s32 1, %s9
  %s12 = scalar_select 0, %s11, %s9
  $region1: #{forward.1} parent=0
    #allocation4 [shape = 'u8[1024]{0}', space=vmem, size = 0x400, scoped, tag = 'output window, operand 0, single buffered']
    #allocation5 [shape = 's32[1]{0}', space=sflag, size = 0x4, scoped, tag = 'scoped memory for forward.1']
    %13 = vsyncpa [#allocation5], 0
    // Predicated region
    $region2: #{forward.1} parent=1 // pred_check
      _
    $region3: #{forward.1} parent=1 // pred_check_branch
      %15 = sbr.rel (0) target = $region5
    $region4: #{forward.1} parent=1 // pred_region
      _
    $region5: #{forward.1} parent=1 // pred_fallthru
      _
    // Predicated region
    $region6: #{forward.1} parent=1 // pred_check
      _
    $region7: #{forward.1} parent=1 // pred_check_branch
      %17 = sbr.rel (0) target = $region9
    $region8: #{forward.1} parent=1 // pred_region
      _
    $region9: #{forward.1} parent=1 // pred_fallthru
      _
    // Predicated region
    $region10: #{forward.1} parent=1 // pred_check
      _
    $region11: #{forward.1} parent=1 // pred_check_branch
      %19 = sbr.rel (0) target = $region13
    $region12: #{forward.1} parent=1 // pred_region
      _
    $region13: #{forward.1} parent=1 // pred_fallthru
      _
    // Predicated region
    $region14: #{forward.1} parent=1 // pred_check
      _
    $region15: #{forward.1} parent=1 // pred_check_branch
      %21 = sbr.rel (0) target = $region17
    $region16: #{forward.1} parent=1 // pred_region
      _
    $region17: #{forward.1} parent=1 // pred_fallthru
      _
    // Predicated region
    $region18: #{forward.1} parent=1 // pred_check
      _
    $region19: #{forward.1} parent=1 // pred_check_branch
      %23 = sbr.rel (0) target = $region21
    $region20: #{forward.1} parent=1 // pred_region
      _
    $region21: #{forward.1} parent=1 // pred_fallthru
      _
    // Predicated region
    $region22: #{forward.1} parent=1 // pred_check
      _
    $region23: #{forward.1} parent=1 // pred_check_branch
      %25 = sbr.rel (0) target = $region25
    $region24: #{forward.1} parent=1 // pred_region
      _
    $region25: #{forward.1} parent=1 // pred_fallthru
      _
    // Predicated region
    $region26: #{forward.1} parent=1 // pred_check
      _
    $region27: #{forward.1} parent=1 // pred_check_branch
      %27 = sbr.rel (0) target = $region29
    $region28: #{forward.1} parent=1 // pred_region
      _
    $region29: #{forward.1} parent=1 // pred_fallthru
      _
    // Predicated region
    $region30: #{forward.1} parent=1 // pred_check
      _
    $region31: #{forward.1} parent=1 // pred_check_branch
      %29 = sbr.rel (0) target = $region33
    $region32: #{forward.1} parent=1 // pred_region
      _
    $region33: #{forward.1} parent=1 // pred_fallthru
      _
    %v30 = vld [vmem:[%s0] sm:$0xff]
    %v31 = vld [vmem:[%s0 + $0x8] sm:$0xff]
    %v32 = vld [vmem:[%s0 + $0x10] sm:$0xff]
    %v33 = vld [vmem:[%s0 + $0x18] sm:$0xff]
    %v34 = vld [vmem:[%s0 + $0x20] sm:$0xff]
    %v35 = vld [vmem:[%s0 + $0x28] sm:$0xff]
    %v36 = vld [vmem:[%s0 + $0x30] sm:$0xff]
    %v37 = vld [vmem:[%s0 + $0x38] sm:$0xff]
    %v38 = vld [vmem:[%s0 + $0x40] sm:$0xff]
    %v39 = vld [vmem:[%s0 + $0x48] sm:$0xff]
    %v40 = vld [vmem:[%s0 + $0x50] sm:$0xff]
    %v41 = vld [vmem:[%s0 + $0x58] sm:$0xff]
    %v42 = vld [vmem:[%s0 + $0x60] sm:$0xff]
    %v43 = vld [vmem:[%s0 + $0x68] sm:$0xff]
    %v44 = vld [vmem:[%s0 + $0x70] sm:$0xff]
    %v45 = vld [vmem:[%s0 + $0x78] sm:$0xff]
    %v46 = vld [vmem:[%s0 + $0x80] sm:$0xff]
    %v47 = vld [vmem:[%s0 + $0x88] sm:$0xff]
    %v48 = vld [vmem:[%s0 + $0x90] sm:$0xff]
    %v49 = vld [vmem:[%s0 + $0x98] sm:$0xff]
    %v50 = vld [vmem:[%s0 + $0xa0] sm:$0xff]
    %v51 = vld [vmem:[%s0 + $0xa8] sm:$0xff]
    %v52 = vld [vmem:[%s0 + $0xb0] sm:$0xff]
    %v53 = vld [vmem:[%s0 + $0xb8] sm:$0xff]
    %v54 = vld [vmem:[%s0 + $0xc0] sm:$0xff]
    %v55 = vld [vmem:[%s0 + $0xc8] sm:$0xff]
    %v56 = vld [vmem:[%s0 + $0xd0] sm:$0xff]
    %v57 = vld [vmem:[%s0 + $0xd8] sm:$0xff]
    %v58 = vld [vmem:[%s0 + $0xe0] sm:$0xff]
    %v59 = vld [vmem:[%s0 + $0xe8] sm:$0xff]
    %v60 = vld [vmem:[%s0 + $0xf0] sm:$0xff]
    %v61 = vld [vmem:[%s0 + $0xf8] sm:$0xff]
    %v62 = vld [vmem:[%s0 + $0x100] sm:$0xff]
    %v63 = vld [vmem:[%s0 + $0x108] sm:$0xff]
    %v64 = vld [vmem:[%s0 + $0x110] sm:$0xff]
    %v65 = vld [vmem:[%s0 + $0x118] sm:$0xff]
    %v66 = vld [vmem:[%s0 + $0x120] sm:$0xff]
    %v67 = vld [vmem:[%s0 + $0x128] sm:$0xff]
    %v68 = vld [vmem:[%s0 + $0x130] sm:$0xff]
    %v69 = vld [vmem:[%s0 + $0x138] sm:$0xff]
    %v70 = vld [vmem:[%s0 + $0x140] sm:$0xff]
    %v71 = vld [vmem:[%s0 + $0x148] sm:$0xff]
    %v72 = vld [vmem:[%s0 + $0x150] sm:$0xff]
    %v73 = vld [vmem:[%s0 + $0x158] sm:$0xff]
    %v74 = vld [vmem:[%s0 + $0x160] sm:$0xff]
    %v75 = vld [vmem:[%s0 + $0x168] sm:$0xff]
    %v76 = vld [vmem:[%s0 + $0x170] sm:$0xff]
    %v77 = vld [vmem:[%s0 + $0x178] sm:$0xff]
    %v78 = vld [vmem:[%s0 + $0x180] sm:$0xff]
    %v79 = vld [vmem:[%s0 + $0x188] sm:$0xff]
    %v80 = vld [vmem:[%s0 + $0x190] sm:$0xff]
    %v81 = vld [vmem:[%s0 + $0x198] sm:$0xff]
    %v82 = vld [vmem:[%s0 + $0x1a0] sm:$0xff]
    %v83 = vld [vmem:[%s0 + $0x1a8] sm:$0xff]
    %v84 = vld [vmem:[%s0 + $0x1b0] sm:$0xff]
    %v85 = vld [vmem:[%s0 + $0x1b8] sm:$0xff]
    %v86 = vld [vmem:[%s0 + $0x1c0] sm:$0xff]
    %v87 = vld [vmem:[%s0 + $0x1c8] sm:$0xff]
    %v88 = vld [vmem:[%s0 + $0x1d0] sm:$0xff]
    %v89 = vld [vmem:[%s0 + $0x1d8] sm:$0xff]
    %v90 = vld [vmem:[%s0 + $0x1e0] sm:$0xff]
    %v91 = vld [vmem:[%s0 + $0x1e8] sm:$0xff]
    %v92 = vld [vmem:[%s0 + $0x1f0] sm:$0xff]
    %v93 = vld [vmem:[%s0 + $0x1f8] sm:$0xff]
    %v94 = vld [vmem:[%s0 + $0x200] sm:$0xff]
    %v95 = vld [vmem:[%s0 + $0x208] sm:$0xff]
    %v96 = vld [vmem:[%s0 + $0x210] sm:$0xff]
    %v97 = vld [vmem:[%s0 + $0x218] sm:$0xff]
    %v98 = vld [vmem:[%s0 + $0x220] sm:$0xff]
    %v99 = vld [vmem:[%s0 + $0x228] sm:$0xff]
    %v100 = vld [vmem:[%s0 + $0x230] sm:$0xff]
    %v101 = vld [vmem:[%s0 + $0x238] sm:$0xff]
    %v102 = vld [vmem:[%s0 + $0x240] sm:$0xff]
    %v103 = vld [vmem:[%s0 + $0x248] sm:$0xff]
    %v104 = vld [vmem:[%s0 + $0x250] sm:$0xff]
    %v105 = vld [vmem:[%s0 + $0x258] sm:$0xff]
    %v106 = vld [vmem:[%s0 + $0x260] sm:$0xff]
    %v107 = vld [vmem:[%s0 + $0x268] sm:$0xff]
    %v108 = vld [vmem:[%s0 + $0x270] sm:$0xff]
    %v109 = vld [vmem:[%s0 + $0x278] sm:$0xff]
    %v110 = vld [vmem:[%s0 + $0x280] sm:$0xff]
    %v111 = vld [vmem:[%s0 + $0x288] sm:$0xff]
    %v112 = vld [vmem:[%s0 + $0x290] sm:$0xff]
    %v113 = vld [vmem:[%s0 + $0x298] sm:$0xff]
    %v114 = vld [vmem:[%s0 + $0x2a0] sm:$0xff]
    %v115 = vld [vmem:[%s0 + $0x2a8] sm:$0xff]
    %v116 = vld [vmem:[%s0 + $0x2b0] sm:$0xff]
    %v117 = vld [vmem:[%s0 + $0x2b8] sm:$0xff]
    %v118 = vld [vmem:[%s0 + $0x2c0] sm:$0xff]
    %v119 = vld [vmem:[%s0 + $0x2c8] sm:$0xff]
    %v120 = vld [vmem:[%s0 + $0x2d0] sm:$0x3]
    %v121 = vld [vmem:[%s0 + $0x2d8] sm:$0x3]
    %v122 = vld [vmem:[%s0 + $0x2e0] sm:$0x3]
    %v123 = vld [vmem:[%s1] sm:$0xff]
    %v124 = vld [vmem:[%s1 + $0x8] sm:$0xff]
    %v125 = vld [vmem:[%s1 + $0x10] sm:$0xff]
    %v126 = vld [vmem:[%s1 + $0x18] sm:$0xff]
    %v127 = vld [vmem:[%s1 + $0x20] sm:$0xff]
    %v128 = vld [vmem:[%s1 + $0x28] sm:$0xff]
    %v129 = vld [vmem:[%s1 + $0x30] sm:$0xff]
    %v130 = vld [vmem:[%s1 + $0x38] sm:$0xff]
    %v131 = vld [vmem:[%s1 + $0x40] sm:$0xff]
    %v132 = vld [vmem:[%s1 + $0x48] sm:$0xff]
    %v133 = vld [vmem:[%s1 + $0x50] sm:$0xff]
    %v134 = vld [vmem:[%s1 + $0x58] sm:$0xff]
    %v135 = vld [vmem:[%s1 + $0x60] sm:$0xff]
    %v136 = vld [vmem:[%s1 + $0x68] sm:$0xff]
    %v137 = vld [vmem:[%s1 + $0x70] sm:$0xff]
    %v138 = vld [vmem:[%s1 + $0x78] sm:$0xff]
    %v139 = vld [vmem:[%s1 + $0x80] sm:$0xff]
    %v140 = vld [vmem:[%s1 + $0x88] sm:$0xff]
    %v141 = vld [vmem:[%s1 + $0x90] sm:$0xff]
    %v142 = vld [vmem:[%s1 + $0x98] sm:$0xff]
    %v143 = vld [vmem:[%s1 + $0xa0] sm:$0xff]
    %v144 = vld [vmem:[%s1 + $0xa8] sm:$0xff]
    %v145 = vld [vmem:[%s1 + $0xb0] sm:$0xff]
    %v146 = vld [vmem:[%s1 + $0xb8] sm:$0xff]
    %v147 = vld [vmem:[%s1 + $0xc0] sm:$0xff]
    %v148 = vld [vmem:[%s1 + $0xc8] sm:$0xff]
    %v149 = vld [vmem:[%s1 + $0xd0] sm:$0xff]
    %v150 = vld [vmem:[%s1 + $0xd8] sm:$0xff]
    %v151 = vld [vmem:[%s1 + $0xe0] sm:$0xff]
    %v152 = vld [vmem:[%s1 + $0xe8] sm:$0xff]
    %v153 = vld [vmem:[%s1 + $0xf0] sm:$0xff]
    %v154 = vld [vmem:[%s1 + $0xf8] sm:$0xff]
    %v155 = vld [vmem:[%s1 + $0x100] sm:$0xff]
    %v156 = vld [vmem:[%s1 + $0x108] sm:$0xff]
    %v157 = vld [vmem:[%s1 + $0x110] sm:$0xff]
    %v158 = vld [vmem:[%s1 + $0x118] sm:$0xff]
    %v159 = vld [vmem:[%s1 + $0x120] sm:$0xff]
    %v160 = vld [vmem:[%s1 + $0x128] sm:$0xff]
    %v161 = vld [vmem:[%s1 + $0x130] sm:$0xff]
    %v162 = vld [vmem:[%s1 + $0x138] sm:$0xff]
    %v163 = vld [vmem:[%s1 + $0x140] sm:$0xff]
    %v164 = vld [vmem:[%s1 + $0x148] sm:$0xff]
    %v165 = vld [vmem:[%s1 + $0x150] sm:$0xff]
    %v166 = vld [vmem:[%s1 + $0x158] sm:$0xff]
    %v167 = vld [vmem:[%s1 + $0x160] sm:$0xff]
    %v168 = vld [vmem:[%s1 + $0x168] sm:$0xff]
    %v169 = vld [vmem:[%s1 + $0x170] sm:$0xff]
    %v170 = vld [vmem:[%s1 + $0x178] sm:$0xff]
    %171 = vmatprep.subr.mxu0 0.0
    %172 = vmatpush1.msra.mxu0 %v138
    %173 = vmatprep.subr.mxu0 0.0
    %174 = vmatpush1.msra.mxu0 %v137
    %175 = vmatprep.subr.mxu0 0.0
    %176 = vmatpush1.msra.mxu0 %v136
    %177 = vmatprep.subr.mxu0 0.0
    %178 = vmatpush1.msra.mxu0 %v135
    %179 = vmatprep.subr.mxu0 0.0
    %180 = vmatpush1.msra.mxu0 %v134
    %181 = vmatprep.subr.mxu0 0.0
    %182 = vmatpush1.msra.mxu0 %v133
    %183 = vmatprep.subr.mxu0 0.0
    %184 = vmatpush1.msra.mxu0 %v132
    %185 = vmatprep.subr.mxu0 0.0
    %186 = vmatpush1.msra.mxu0 %v131
    %187 = vmatprep.subr.mxu0 0.0
    %188 = vmatpush1.msra.mxu0 %v130
    %189 = vmatprep.subr.mxu0 0.0
    %190 = vmatpush1.msra.mxu0 %v129
    %191 = vmatprep.subr.mxu0 0.0
    %192 = vmatpush1.msra.mxu0 %v128
    %193 = vmatprep.subr.mxu0 0.0
    %194 = vmatpush1.msra.mxu0 %v127
    %195 = vmatprep.subr.mxu0 0.0
    %196 = vmatpush1.msra.mxu0 %v126
    %197 = vmatprep.subr.mxu0 0.0
    %198 = vmatpush1.msra.mxu0 %v125
    %199 = vmatprep.subr.mxu0 0.0
    %200 = vmatpush1.msra.mxu0 %v124
    %201 = vmatprep.subr.mxu0 0.0
    %202 = vmatpush1.msra.mxu0 %v123
    %203 = vmatprep.subr.mxu0 0.0
    %204 = vmatpush2.msra.mxu0 %v154
    %205 = vmatprep.subr.mxu0 0.0
    %206 = vmatpush2.msra.mxu0 %v153
    %207 = vmatprep.subr.mxu0 0.0
    %208 = vmatpush2.msra.mxu0 %v152
    %209 = vmatprep.subr.mxu0 0.0
    %210 = vmatpush2.msra.mxu0 %v151
    %211 = vmatprep.subr.mxu0 0.0
    %212 = vmatpush2.msra.mxu0 %v150
    %213 = vmatprep.subr.mxu0 0.0
    %214 = vmatpush2.msra.mxu0 %v149
    %215 = vmatprep.subr.mxu0 0.0
    %216 = vmatpush2.msra.mxu0 %v148
    %217 = vmatprep.subr.mxu0 0.0
    %218 = vmatpush2.msra.mxu0 %v147
    %219 = vmatprep.subr.mxu0 0.0
    %220 = vmatpush2.msra.mxu0 %v146
    %221 = vmatprep.subr.mxu0 0.0
    %222 = vmatpush2.msra.mxu0 %v145
    %223 = vmatprep.subr.mxu0 0.0
    %224 = vmatpush2.msra.mxu0 %v144
    %225 = vmatprep.subr.mxu0 0.0
    %226 = vmatpush2.msra.mxu0 %v143
    %227 = vmatprep.subr.mxu0 0.0
    %228 = vmatpush2.msra.mxu0 %v142
    %229 = vmatprep.subr.mxu0 0.0
    %230 = vmatpush2.msra.mxu0 %v141
    %231 = vmatprep.subr.mxu0 0.0
    %232 = vmatpush2.msra.mxu0 %v140
    %233 = vmatprep.subr.mxu0 0.0
    %234 = vmatpush2.msra.mxu0 %v139
    %235 = vmatprep.mubr.f32.mxu0 %v31
    %236 = vmatmul.mubr.f32.gmra.mxu0 %v30
    %v237 = vpop.f32.mrf.mxu0
    %v238 = vadd.f32 0.0, %v237
    %v239 = vpop.f32.mrf.mxu0
    %240 = vmatprep.mubr.f32.mxu0 %v34
    %241 = vmatmul.mubr.f32.gmra.mxu0 %v33
    %v242 = vpop.f32.mrf.mxu0
    %v243 = vadd.f32 0.0, %v242
    %v244 = vpop.f32.mrf.mxu0
    %245 = vmatprep.mubr.f32.mxu0 %v37
    %246 = vmatmul.mubr.f32.gmra.mxu0 %v36
    %v247 = vpop.f32.mrf.mxu0
    %v248 = vadd.f32 0.0, %v247
    %v249 = vpop.f32.mrf.mxu0
    %250 = vmatprep.mubr.f32.mxu0 %v40
    %251 = vmatmul.mubr.f32.gmra.mxu0 %v39
    %v252 = vpop.f32.mrf.mxu0
    %v253 = vadd.f32 0.0, %v252
    %v254 = vpop.f32.mrf.mxu0
    %255 = vmatprep.mubr.f32.mxu0 %v43
    %256 = vmatmul.mubr.f32.gmra.mxu0 %v42
    %v257 = vpop.f32.mrf.mxu0
    %v258 = vadd.f32 0.0, %v257
    %v259 = vpop.f32.mrf.mxu0
    %260 = vmatprep.mubr.f32.mxu0 %v46
    %261 = vmatmul.mubr.f32.gmra.mxu0 %v45
    %v262 = vpop.f32.mrf.mxu0
    %v263 = vadd.f32 0.0, %v262
    %v264 = vpop.f32.mrf.mxu0
    %265 = vmatprep.mubr.f32.mxu0 %v49
    %266 = vmatmul.mubr.f32.gmra.mxu0 %v48
    %v267 = vpop.f32.mrf.mxu0
    %v268 = vadd.f32 0.0, %v267
    %v269 = vpop.f32.mrf.mxu0
    %270 = vmatprep.mubr.f32.mxu0 %v52
    %271 = vmatmul.mubr.f32.gmra.mxu0 %v51
    %v272 = vpop.f32.mrf.mxu0
    %v273 = vadd.f32 0.0, %v272
    %v274 = vpop.f32.mrf.mxu0
    %275 = vmatprep.mubr.f32.mxu0 %v55
    %276 = vmatmul.mubr.f32.gmra.mxu0 %v54
    %v277 = vpop.f32.mrf.mxu0
    %v278 = vadd.f32 0.0, %v277
    %v279 = vpop.f32.mrf.mxu0
    %280 = vmatprep.mubr.f32.mxu0 %v58
    %281 = vmatmul.mubr.f32.gmra.mxu0 %v57
    %v282 = vpop.f32.mrf.mxu0
    %v283 = vadd.f32 0.0, %v282
    %v284 = vpop.f32.mrf.mxu0
    %285 = vmatprep.mubr.f32.mxu0 %v61
    %286 = vmatmul.mubr.f32.gmra.mxu0 %v60
    %v287 = vpop.f32.mrf.mxu0
    %v288 = vadd.f32 0.0, %v287
    %v289 = vpop.f32.mrf.mxu0
    %290 = vmatprep.mubr.f32.mxu0 %v64
    %291 = vmatmul.mubr.f32.gmra.mxu0 %v63
    %v292 = vpop.f32.mrf.mxu0
    %v293 = vadd.f32 0.0, %v292
    %v294 = vpop.f32.mrf.mxu0
    %295 = vmatprep.mubr.f32.mxu0 %v67
    %296 = vmatmul.mubr.f32.gmra.mxu0 %v66
    %v297 = vpop.f32.mrf.mxu0
    %v298 = vadd.f32 0.0, %v297
    %v299 = vpop.f32.mrf.mxu0
    %300 = vmatprep.mubr.f32.mxu0 %v70
    %301 = vmatmul.mubr.f32.gmra.mxu0 %v69
    %v302 = vpop.f32.mrf.mxu0
    %v303 = vadd.f32 0.0, %v302
    %v304 = vpop.f32.mrf.mxu0
    %305 = vmatprep.mubr.f32.mxu0 %v73
    %306 = vmatmul.mubr.f32.gmra.mxu0 %v72
    %v307 = vpop.f32.mrf.mxu0
    %v308 = vadd.f32 0.0, %v307
    %v309 = vpop.f32.mrf.mxu0
    %310 = vmatprep.mubr.f32.mxu0 %v76
    %311 = vmatmul.mubr.f32.gmra.mxu0 %v75
    %v312 = vpop.f32.mrf.mxu0
    %v313 = vadd.f32 0.0, %v312
    %v314 = vpop.f32.mrf.mxu0
    %315 = vmatprep.mubr.f32.mxu0 %v79
    %316 = vmatmul.mubr.f32.gmra.mxu0 %v78
    %v317 = vpop.f32.mrf.mxu0
    %v318 = vadd.f32 0.0, %v317
    %v319 = vpop.f32.mrf.mxu0
    %320 = vmatprep.mubr.f32.mxu0 %v82
    %321 = vmatmul.mubr.f32.gmra.mxu0 %v81
    %v322 = vpop.f32.mrf.mxu0
    %v323 = vadd.f32 0.0, %v322
    %v324 = vpop.f32.mrf.mxu0
    %325 = vmatprep.mubr.f32.mxu0 %v85
    %326 = vmatmul.mubr.f32.gmra.mxu0 %v84
    %v327 = vpop.f32.mrf.mxu0
    %v328 = vadd.f32 0.0, %v327
    %v329 = vpop.f32.mrf.mxu0
    %330 = vmatprep.mubr.f32.mxu0 %v88
    %331 = vmatmul.mubr.f32.gmra.mxu0 %v87
    %v332 = vpop.f32.mrf.mxu0
    %v333 = vadd.f32 0.0, %v332
    %v334 = vpop.f32.mrf.mxu0
    %335 = vmatprep.mubr.f32.mxu0 %v91
    %336 = vmatmul.mubr.f32.gmra.mxu0 %v90
    %v337 = vpop.f32.mrf.mxu0
    %v338 = vadd.f32 0.0, %v337
    %v339 = vpop.f32.mrf.mxu0
    %340 = vmatprep.mubr.f32.mxu0 %v94
    %341 = vmatmul.mubr.f32.gmra.mxu0 %v93
    %v342 = vpop.f32.mrf.mxu0
    %v343 = vadd.f32 0.0, %v342
    %v344 = vpop.f32.mrf.mxu0
    %345 = vmatprep.mubr.f32.mxu0 %v97
    %346 = vmatmul.mubr.f32.gmra.mxu0 %v96
    %v347 = vpop.f32.mrf.mxu0
    %v348 = vadd.f32 0.0, %v347
    %v349 = vpop.f32.mrf.mxu0
    %350 = vmatprep.mubr.f32.mxu0 %v100
    %351 = vmatmul.mubr.f32.gmra.mxu0 %v99
    %v352 = vpop.f32.mrf.mxu0
    %v353 = vadd.f32 0.0, %v352
    %v354 = vpop.f32.mrf.mxu0
    %355 = vmatprep.mubr.f32.mxu0 %v103
    %356 = vmatmul.mubr.f32.gmra.mxu0 %v102
    %v357 = vpop.f32.mrf.mxu0
    %v358 = vadd.f32 0.0, %v357
    %v359 = vpop.f32.mrf.mxu0
    %360 = vmatprep.mubr.f32.mxu0 %v106
    %361 = vmatmul.mubr.f32.gmra.mxu0 %v105
    %v362 = vpop.f32.mrf.mxu0
    %v363 = vadd.f32 0.0, %v362
    %v364 = vpop.f32.mrf.mxu0
    %365 = vmatprep.mubr.f32.mxu0 %v109
    %366 = vmatmul.mubr.f32.gmra.mxu0 %v108
    %v367 = vpop.f32.mrf.mxu0
    %v368 = vadd.f32 0.0, %v367
    %v369 = vpop.f32.mrf.mxu0
    %370 = vmatprep.mubr.f32.mxu0 %v112
    %371 = vmatmul.mubr.f32.gmra.mxu0 %v111
    %v372 = vpop.f32.mrf.mxu0
    %v373 = vadd.f32 0.0, %v372
    %v374 = vpop.f32.mrf.mxu0
    %375 = vmatprep.mubr.f32.mxu0 %v115
    %376 = vmatmul.mubr.f32.gmra.mxu0 %v114
    %v377 = vpop.f32.mrf.mxu0
    %v378 = vadd.f32 0.0, %v377
    %v379 = vpop.f32.mrf.mxu0
    %380 = vmatprep.mubr.f32.mxu0 %v118
    %381 = vmatmul.mubr.f32.gmra.mxu0 %v117
    %v382 = vpop.f32.mrf.mxu0
    %v383 = vadd.f32 0.0, %v382
    %v384 = vpop.f32.mrf.mxu0
    %385 = vmatprep.mubr.f32.mxu0 %v121
    %386 = vmatmul.mubr.f32.gmra.mxu0 %v120
    %v387 = vpop.f32.mrf.mxu0
    %v388 = vadd.f32 0.0, %v387
    %v389 = vpop.f32.mrf.mxu0
    %390 = vdwg.mxu0
    %391 = vmatprep.subr.mxu0 0.0
    %392 = vmatpush1.msra.mxu0 %v170
    %393 = vmatprep.subr.mxu0 0.0
    %394 = vmatpush1.msra.mxu0 %v169
    %395 = vmatprep.subr.mxu0 0.0
    %396 = vmatpush1.msra.mxu0 %v168
    %397 = vmatprep.subr.mxu0 0.0
    %398 = vmatpush1.msra.mxu0 %v167
    %399 = vmatprep.subr.mxu0 0.0
    %400 = vmatpush1.msra.mxu0 %v166
    %401 = vmatprep.subr.mxu0 0.0
    %402 = vmatpush1.msra.mxu0 %v165
    %403 = vmatprep.subr.mxu0 0.0
    %404 = vmatpush1.msra.mxu0 %v164
    %405 = vmatprep.subr.mxu0 0.0
    %406 = vmatpush1.msra.mxu0 %v163
    %407 = vmatprep.subr.mxu0 0.0
    %408 = vmatpush1.msra.mxu0 %v162
    %409 = vmatprep.subr.mxu0 0.0
    %410 = vmatpush1.msra.mxu0 %v161
    %411 = vmatprep.subr.mxu0 0.0
    %412 = vmatpush1.msra.mxu0 %v160
    %413 = vmatprep.subr.mxu0 0.0
    %414 = vmatpush1.msra.mxu0 %v159
    %415 = vmatprep.subr.mxu0 0.0
    %416 = vmatpush1.msra.mxu0 %v158
    %417 = vmatprep.subr.mxu0 0.0
    %418 = vmatpush1.msra.mxu0 %v157
    %419 = vmatprep.subr.mxu0 0.0
    %420 = vmatpush1.msra.mxu0 %v156
    %421 = vmatprep.subr.mxu0 0.0
    %422 = vmatpush1.msra.mxu0 %v155
    %423 = vmatprep.subr.mxu0 0.0
    %424 = vmatpush2.msra.mxu0 0.0
    %425 = vmatprep.subr.mxu0 0.0
    %426 = vmatpush2.msra.mxu0 0.0
    %427 = vmatprep.subr.mxu0 0.0
    %428 = vmatpush2.msra.mxu0 0.0
    %429 = vmatprep.subr.mxu0 0.0
    %430 = vmatpush2.msra.mxu0 0.0
    %431 = vmatprep.subr.mxu0 0.0
    %432 = vmatpush2.msra.mxu0 0.0
    %433 = vmatprep.subr.mxu0 0.0
    %434 = vmatpush2.msra.mxu0 0.0
    %435 = vmatprep.subr.mxu0 0.0
    %436 = vmatpush2.msra.mxu0 0.0
    %437 = vmatprep.subr.mxu0 0.0
    %438 = vmatpush2.msra.mxu0 0.0
    %439 = vmatprep.subr.mxu0 0.0
    %440 = vmatpush2.msra.mxu0 0.0
    %441 = vmatprep.subr.mxu0 0.0
    %442 = vmatpush2.msra.mxu0 0.0
    %443 = vmatprep.subr.mxu0 0.0
    %444 = vmatpush2.msra.mxu0 0.0
    %445 = vmatprep.subr.mxu0 0.0
    %446 = vmatpush2.msra.mxu0 0.0
    %447 = vmatprep.subr.mxu0 0.0
    %448 = vmatpush2.msra.mxu0 0.0
    %449 = vmatprep.subr.mxu0 0.0
    %450 = vmatpush2.msra.mxu0 0.0
    %451 = vmatprep.subr.mxu0 0.0
    %452 = vmatpush2.msra.mxu0 0.0
    %453 = vmatprep.subr.mxu0 0.0
    %454 = vmatpush2.msra.mxu0 0.0
    %455 = vmatprep.mubr.f32.mxu0 0.0
    %456 = vmatmul.mubr.f32.gmra.mxu0 %v32
    %v457 = vpop.f32.mrf.mxu0
    %v458 = vadd.f32 %v238, %v457
    %v459 = vpop.f32.mrf.mxu0
    %460 = vmatprep.mubr.f32.mxu0 0.0
    %461 = vmatmul.mubr.f32.gmra.mxu0 %v35
    %v462 = vpop.f32.mrf.mxu0
    %v463 = vadd.f32 %v243, %v462
    %v464 = vpop.f32.mrf.mxu0
    %465 = vmatprep.mubr.f32.mxu0 0.0
    %466 = vmatmul.mubr.f32.gmra.mxu0 %v38
    %v467 = vpop.f32.mrf.mxu0
    %v468 = vadd.f32 %v248, %v467
    %v469 = vpop.f32.mrf.mxu0
    %470 = vmatprep.mubr.f32.mxu0 0.0
    %471 = vmatmul.mubr.f32.gmra.mxu0 %v41
    %v472 = vpop.f32.mrf.mxu0
    %v473 = vadd.f32 %v253, %v472
    %v474 = vpop.f32.mrf.mxu0
    %475 = vmatprep.mubr.f32.mxu0 0.0
    %476 = vmatmul.mubr.f32.gmra.mxu0 %v44
    %v477 = vpop.f32.mrf.mxu0
    %v478 = vadd.f32 %v258, %v477
    %v479 = vpop.f32.mrf.mxu0
    %480 = vmatprep.mubr.f32.mxu0 0.0
    %481 = vmatmul.mubr.f32.gmra.mxu0 %v47
    %v482 = vpop.f32.mrf.mxu0
    %v483 = vadd.f32 %v263, %v482
    %v484 = vpop.f32.mrf.mxu0
    %485 = vmatprep.mubr.f32.mxu0 0.0
    %486 = vmatmul.mubr.f32.gmra.mxu0 %v50
    %v487 = vpop.f32.mrf.mxu0
    %v488 = vadd.f32 %v268, %v487
    %v489 = vpop.f32.mrf.mxu0
    %490 = vmatprep.mubr.f32.mxu0 0.0
    %491 = vmatmul.mubr.f32.gmra.mxu0 %v53
    %v492 = vpop.f32.mrf.mxu0
    %v493 = vadd.f32 %v273, %v492
    %v494 = vpop.f32.mrf.mxu0
    %495 = vmatprep.mubr.f32.mxu0 0.0
    %496 = vmatmul.mubr.f32.gmra.mxu0 %v56
    %v497 = vpop.f32.mrf.mxu0
    %v498 = vadd.f32 %v278, %v497
    %v499 = vpop.f32.mrf.mxu0
    %500 = vmatprep.mubr.f32.mxu0 0.0
    %501 = vmatmul.mubr.f32.gmra.mxu0 %v59
    %v502 = vpop.f32.mrf.mxu0
    %v503 = vadd.f32 %v283, %v502
    %v504 = vpop.f32.mrf.mxu0
    %505 = vmatprep.mubr.f32.mxu0 0.0
    %506 = vmatmul.mubr.f32.gmra.mxu0 %v62
    %v507 = vpop.f32.mrf.mxu0
    %v508 = vadd.f32 %v288, %v507
    %v509 = vpop.f32.mrf.mxu0
    %510 = vmatprep.mubr.f32.mxu0 0.0
    %511 = vmatmul.mubr.f32.gmra.mxu0 %v65
    %v512 = vpop.f32.mrf.mxu0
    %v513 = vadd.f32 %v293, %v512
    %v514 = vpop.f32.mrf.mxu0
    %515 = vmatprep.mubr.f32.mxu0 0.0
    %516 = vmatmul.mubr.f32.gmra.mxu0 %v68
    %v517 = vpop.f32.mrf.mxu0
    %v518 = vadd.f32 %v298, %v517
    %v519 = vpop.f32.mrf.mxu0
    %520 = vmatprep.mubr.f32.mxu0 0.0
    %521 = vmatmul.mubr.f32.gmra.mxu0 %v71
    %v522 = vpop.f32.mrf.mxu0
    %v523 = vadd.f32 %v303, %v522
    %v524 = vpop.f32.mrf.mxu0
    %525 = vmatprep.mubr.f32.mxu0 0.0
    %526 = vmatmul.mubr.f32.gmra.mxu0 %v74
    %v527 = vpop.f32.mrf.mxu0
    %v528 = vadd.f32 %v308, %v527
    %v529 = vpop.f32.mrf.mxu0
    %530 = vmatprep.mubr.f32.mxu0 0.0
    %531 = vmatmul.mubr.f32.gmra.mxu0 %v77
    %v532 = vpop.f32.mrf.mxu0
    %v533 = vadd.f32 %v313, %v532
    %v534 = vpop.f32.mrf.mxu0
    %535 = vmatprep.mubr.f32.mxu0 0.0
    %536 = vmatmul.mubr.f32.gmra.mxu0 %v80
    %v537 = vpop.f32.mrf.mxu0
    %v538 = vadd.f32 %v318, %v537
    %v539 = vpop.f32.mrf.mxu0
    %540 = vmatprep.mubr.f32.mxu0 0.0
    %541 = vmatmul.mubr.f32.gmra.mxu0 %v83
    %v542 = vpop.f32.mrf.mxu0
    %v543 = vadd.f32 %v323, %v542
    %v544 = vpop.f32.mrf.mxu0
    %545 = vmatprep.mubr.f32.mxu0 0.0
    %546 = vmatmul.mubr.f32.gmra.mxu0 %v86
    %v547 = vpop.f32.mrf.mxu0
    %v548 = vadd.f32 %v328, %v547
    %v549 = vpop.f32.mrf.mxu0
    %550 = vmatprep.mubr.f32.mxu0 0.0
    %551 = vmatmul.mubr.f32.gmra.mxu0 %v89
    %v552 = vpop.f32.mrf.mxu0
    %v553 = vadd.f32 %v333, %v552
    %v554 = vpop.f32.mrf.mxu0
    %555 = vmatprep.mubr.f32.mxu0 0.0
    %556 = vmatmul.mubr.f32.gmra.mxu0 %v92
    %v557 = vpop.f32.mrf.mxu0
    %v558 = vadd.f32 %v338, %v557
    %v559 = vpop.f32.mrf.mxu0
    %560 = vmatprep.mubr.f32.mxu0 0.0
    %561 = vmatmul.mubr.f32.gmra.mxu0 %v95
    %v562 = vpop.f32.mrf.mxu0
    %v563 = vadd.f32 %v343, %v562
    %v564 = vpop.f32.mrf.mxu0
    %565 = vmatprep.mubr.f32.mxu0 0.0
    %566 = vmatmul.mubr.f32.gmra.mxu0 %v98
    %v567 = vpop.f32.mrf.mxu0
    %v568 = vadd.f32 %v348, %v567
    %v569 = vpop.f32.mrf.mxu0
    %570 = vmatprep.mubr.f32.mxu0 0.0
    %571 = vmatmul.mubr.f32.gmra.mxu0 %v101
    %v572 = vpop.f32.mrf.mxu0
    %v573 = vadd.f32 %v353, %v572
    %v574 = vpop.f32.mrf.mxu0
    %575 = vmatprep.mubr.f32.mxu0 0.0
    %576 = vmatmul.mubr.f32.gmra.mxu0 %v104
    %v577 = vpop.f32.mrf.mxu0
    %v578 = vadd.f32 %v358, %v577
    %v579 = vpop.f32.mrf.mxu0
    %580 = vmatprep.mubr.f32.mxu0 0.0
    %581 = vmatmul.mubr.f32.gmra.mxu0 %v107
    %v582 = vpop.f32.mrf.mxu0
    %v583 = vadd.f32 %v363, %v582
    %v584 = vpop.f32.mrf.mxu0
    %585 = vmatprep.mubr.f32.mxu0 0.0
    %586 = vmatmul.mubr.f32.gmra.mxu0 %v110
    %v587 = vpop.f32.mrf.mxu0
    %v588 = vadd.f32 %v368, %v587
    %v589 = vpop.f32.mrf.mxu0
    %590 = vmatprep.mubr.f32.mxu0 0.0
    %591 = vmatmul.mubr.f32.gmra.mxu0 %v113
    %v592 = vpop.f32.mrf.mxu0
    %v593 = vadd.f32 %v373, %v592
    %v594 = vpop.f32.mrf.mxu0
    %595 = vmatprep.mubr.f32.mxu0 0.0
    %596 = vmatmul.mubr.f32.gmra.mxu0 %v116
    %v597 = vpop.f32.mrf.mxu0
    %v598 = vadd.f32 %v378, %v597
    %v599 = vpop.f32.mrf.mxu0
    %600 = vmatprep.mubr.f32.mxu0 0.0
    %601 = vmatmul.mubr.f32.gmra.mxu0 %v119
    %v602 = vpop.f32.mrf.mxu0
    %v603 = vadd.f32 %v383, %v602
    %v604 = vpop.f32.mrf.mxu0
    %605 = vmatprep.mubr.f32.mxu0 0.0
    %606 = vmatmul.mubr.f32.gmra.mxu0 %v122
    %v607 = vpop.f32.mrf.mxu0
    %v608 = vadd.f32 %v388, %v607
    %v609 = vpop.f32.mrf.mxu0
    %610 = vdwg.mxu0
    %v611 = vmax.f32 %v458, 0.0
    %v612 = vmax.f32 %v463, 0.0
    %v613 = vmax.f32 %v468, 0.0
    %v614 = vmax.f32 %v473, 0.0
    %v615 = vmax.f32 %v478, 0.0
    %v616 = vmax.f32 %v483, 0.0
    %v617 = vmax.f32 %v488, 0.0
    %v618 = vmax.f32 %v493, 0.0
    %v619 = vmax.f32 %v498, 0.0
    %v620 = vmax.f32 %v503, 0.0
    %v621 = vmax.f32 %v508, 0.0
    %v622 = vmax.f32 %v513, 0.0
    %v623 = vmax.f32 %v518, 0.0
    %v624 = vmax.f32 %v523, 0.0
    %v625 = vmax.f32 %v528, 0.0
    %v626 = vmax.f32 %v533, 0.0
    %v627 = vmax.f32 %v538, 0.0
    %v628 = vmax.f32 %v543, 0.0
    %v629 = vmax.f32 %v548, 0.0
    %v630 = vmax.f32 %v553, 0.0
    %v631 = vmax.f32 %v558, 0.0
    %v632 = vmax.f32 %v563, 0.0
    %v633 = vmax.f32 %v568, 0.0
    %v634 = vmax.f32 %v573, 0.0
    %v635 = vmax.f32 %v578, 0.0
    %v636 = vmax.f32 %v583, 0.0
    %v637 = vmax.f32 %v588, 0.0
    %v638 = vmax.f32 %v593, 0.0
    %v639 = vmax.f32 %v598, 0.0
    %v640 = vmax.f32 %v603, 0.0
    %v641 = vmax.f32 %v608, 0.0
    %v642 = vld [vmem:[%s2] sm:$0xff]
    %v643 = vld [vmem:[%s2 + $0x8] sm:$0xff]
    %v644 = vld [vmem:[%s2 + $0x10] sm:$0xff]
    %v645 = vld [vmem:[%s2 + $0x18] sm:$0xff]
    %v646 = vld [vmem:[%s2 + $0x20] sm:$0xff]
    %v647 = vld [vmem:[%s2 + $0x28] sm:$0xff]
    %v648 = vld [vmem:[%s2 + $0x30] sm:$0xff]
    %v649 = vld [vmem:[%s2 + $0x38] sm:$0xff]
    %v650 = vld [vmem:[%s2 + $0x40] sm:$0xff]
    %v651 = vld [vmem:[%s2 + $0x48] sm:$0xff]
    %v652 = vld [vmem:[%s2 + $0x50] sm:$0xff]
    %v653 = vld [vmem:[%s2 + $0x58] sm:$0xff]
    %v654 = vld [vmem:[%s2 + $0x60] sm:$0xff]
    %v655 = vld [vmem:[%s2 + $0x68] sm:$0xff]
    %v656 = vld [vmem:[%s2 + $0x70] sm:$0xff]
    %v657 = vld [vmem:[%s2 + $0x78] sm:$0xff]
    %v658 = vld [vmem:[%s2 + $0x80] sm:$0xff]
    %v659 = vld [vmem:[%s2 + $0x88] sm:$0xff]
    %v660 = vld [vmem:[%s2 + $0x90] sm:$0xff]
    %v661 = vld [vmem:[%s2 + $0x98] sm:$0xff]
    %v662 = vld [vmem:[%s2 + $0xa0] sm:$0x11]
    %v663 = vunpack.c.l.bf16 %v642
    %v664 = vunpack.c.h.bf16 %v642
    %v665 = vunpack.c.l.bf16 %v643
    %v666 = vunpack.c.h.bf16 %v643
    %v667 = vunpack.c.l.bf16 %v644
    %v668 = vunpack.c.h.bf16 %v644
    %v669 = vunpack.c.l.bf16 %v645
    %v670 = vunpack.c.h.bf16 %v645
    %v671 = vunpack.c.l.bf16 %v646
    %v672 = vunpack.c.h.bf16 %v646
    %v673 = vunpack.c.l.bf16 %v647
    %v674 = vunpack.c.h.bf16 %v647
    %v675 = vunpack.c.l.bf16 %v648
    %v676 = vunpack.c.h.bf16 %v648
    %v677 = vunpack.c.l.bf16 %v649
    %v678 = vunpack.c.h.bf16 %v649
    %v679 = vunpack.c.l.bf16 %v650
    %v680 = vunpack.c.h.bf16 %v650
    %v681 = vunpack.c.l.bf16 %v651
    %v682 = vunpack.c.h.bf16 %v651
    %v683 = vunpack.c.l.bf16 %v652
    %v684 = vunpack.c.h.bf16 %v652
    %v685 = vunpack.c.l.bf16 %v653
    %v686 = vunpack.c.h.bf16 %v653
    %v687 = vunpack.c.l.bf16 %v654
    %v688 = vunpack.c.h.bf16 %v654
    %v689 = vunpack.c.l.bf16 %v655
    %v690 = vunpack.c.h.bf16 %v655
    %v691 = vunpack.c.l.bf16 %v656
    %v692 = vunpack.c.h.bf16 %v656
    %v693 = vunpack.c.l.bf16 %v657
    %v694 = vunpack.c.h.bf16 %v657
    %v695 = vunpack.c.l.bf16 %v658
    %v696 = vunpack.c.h.bf16 %v658
    %v697 = vunpack.c.l.bf16 %v659
    %v698 = vunpack.c.h.bf16 %v659
    %v699 = vunpack.c.l.bf16 %v660
    %v700 = vunpack.c.h.bf16 %v660
    %v701 = vunpack.c.l.bf16 %v661
    %v702 = vunpack.c.h.bf16 %v661
    %v703 = vunpack.c.l.bf16 %v662
    %v704 = vunpack.c.h.bf16 %v662
    %vm705 = vcmask 932864
    %v707 = vsel %vm705, %v664, 0
    %v710 = vsel %vm705, %v666, 0
    %v713 = vsel %vm705, %v668, 0
    %v716 = vsel %vm705, %v670, 0
    %v719 = vsel %vm705, %v672, 0
    %v722 = vsel %vm705, %v674, 0
    %v725 = vsel %vm705, %v676, 0
    %v728 = vsel %vm705, %v678, 0
    %v731 = vsel %vm705, %v680, 0
    %v734 = vsel %vm705, %v682, 0
    %v737 = vsel %vm705, %v684, 0
    %v740 = vsel %vm705, %v686, 0
    %v743 = vsel %vm705, %v688, 0
    %v746 = vsel %vm705, %v690, 0
    %v749 = vsel %vm705, %v692, 0
    %v752 = vsel %vm705, %v694, 0
    %v755 = vsel %vm705, %v696, 0
    %v758 = vsel %vm705, %v698, 0
    %v761 = vsel %vm705, %v700, 0
    %v764 = vsel %vm705, %v702, 0
    %v767 = vsel %vm705, %v704, 0
    %vm769 = vcmask 1041408
    %v771 = vsel %vm769, %v641, 0
    %773 = vmatprep.subr.mxu0 0.0
    %774 = vmatpush1.msra.mxu0 %v626
    %775 = vmatprep.subr.mxu0 0.0
    %776 = vmatpush1.msra.mxu0 %v625
    %777 = vmatprep.subr.mxu0 0.0
    %778 = vmatpush1.msra.mxu0 %v624
    %779 = vmatprep.subr.mxu0 0.0
    %780 = vmatpush1.msra.mxu0 %v623
    %781 = vmatprep.subr.mxu0 0.0
    %782 = vmatpush1.msra.mxu0 %v622
    %783 = vmatprep.subr.mxu0 0.0
    %784 = vmatpush1.msra.mxu0 %v621
    %785 = vmatprep.subr.mxu0 0.0
    %786 = vmatpush1.msra.mxu0 %v620
    %787 = vmatprep.subr.mxu0 0.0
    %788 = vmatpush1.msra.mxu0 %v619
    %789 = vmatprep.subr.mxu0 0.0
    %790 = vmatpush1.msra.mxu0 %v618
    %791 = vmatprep.subr.mxu0 0.0
    %792 = vmatpush1.msra.mxu0 %v617
    %793 = vmatprep.subr.mxu0 0.0
    %794 = vmatpush1.msra.mxu0 %v616
    %795 = vmatprep.subr.mxu0 0.0
    %796 = vmatpush1.msra.mxu0 %v615
    %797 = vmatprep.subr.mxu0 0.0
    %798 = vmatpush1.msra.mxu0 %v614
    %799 = vmatprep.subr.mxu0 0.0
    %800 = vmatpush1.msra.mxu0 %v613
    %801 = vmatprep.subr.mxu0 0.0
    %802 = vmatpush1.msra.mxu0 %v612
    %803 = vmatprep.subr.mxu0 0.0
    %804 = vmatpush1.msra.mxu0 %v611
    %805 = vmatprep.subr.mxu0 0.0
    %806 = vmatpush2.msra.mxu0 0.0
    %807 = vmatprep.subr.mxu0 0.0
    %808 = vmatpush2.msra.mxu0 %v771
    %809 = vmatprep.subr.mxu0 0.0
    %810 = vmatpush2.msra.mxu0 %v640
    %811 = vmatprep.subr.mxu0 0.0
    %812 = vmatpush2.msra.mxu0 %v639
    %813 = vmatprep.subr.mxu0 0.0
    %814 = vmatpush2.msra.mxu0 %v638
    %815 = vmatprep.subr.mxu0 0.0
    %816 = vmatpush2.msra.mxu0 %v637
    %817 = vmatprep.subr.mxu0 0.0
    %818 = vmatpush2.msra.mxu0 %v636
    %819 = vmatprep.subr.mxu0 0.0
    %820 = vmatpush2.msra.mxu0 %v635
    %821 = vmatprep.subr.mxu0 0.0
    %822 = vmatpush2.msra.mxu0 %v634
    %823 = vmatprep.subr.mxu0 0.0
    %824 = vmatpush2.msra.mxu0 %v633
    %825 = vmatprep.subr.mxu0 0.0
    %826 = vmatpush2.msra.mxu0 %v632
    %827 = vmatprep.subr.mxu0 0.0
    %828 = vmatpush2.msra.mxu0 %v631
    %829 = vmatprep.subr.mxu0 0.0
    %830 = vmatpush2.msra.mxu0 %v630
    %831 = vmatprep.subr.mxu0 0.0
    %832 = vmatpush2.msra.mxu0 %v629
    %833 = vmatprep.subr.mxu0 0.0
    %834 = vmatpush2.msra.mxu0 %v628
    %835 = vmatprep.subr.mxu0 0.0
    %836 = vmatpush2.msra.mxu0 %v627
    %837 = vmatprep.mubr.f32.mxu0 %v707
    %838 = vmatmul.mubr.f32.gmra.mxu0 %v663
    %v839 = vpop.f32.mrf.mxu0
    %v840 = vadd.f32 0.0, %v839
    %v841 = vpop.f32.mrf.mxu0
    %842 = vmatprep.mubr.f32.mxu0 %v710
    %843 = vmatmul.mubr.f32.gmra.mxu0 %v665
    %v844 = vpop.f32.mrf.mxu0
    %v845 = vadd.f32 0.0, %v844
    %v846 = vpop.f32.mrf.mxu0
    %847 = vmatprep.mubr.f32.mxu0 %v713
    %848 = vmatmul.mubr.f32.gmra.mxu0 %v667
    %v849 = vpop.f32.mrf.mxu0
    %v850 = vadd.f32 0.0, %v849
    %v851 = vpop.f32.mrf.mxu0
    %852 = vmatprep.mubr.f32.mxu0 %v716
    %853 = vmatmul.mubr.f32.gmra.mxu0 %v669
    %v854 = vpop.f32.mrf.mxu0
    %v855 = vadd.f32 0.0, %v854
    %v856 = vpop.f32.mrf.mxu0
    %857 = vmatprep.mubr.f32.mxu0 %v719
    %858 = vmatmul.mubr.f32.gmra.mxu0 %v671
    %v859 = vpop.f32.mrf.mxu0
    %v860 = vadd.f32 0.0, %v859
    %v861 = vpop.f32.mrf.mxu0
    %862 = vmatprep.mubr.f32.mxu0 %v722
    %863 = vmatmul.mubr.f32.gmra.mxu0 %v673
    %v864 = vpop.f32.mrf.mxu0
    %v865 = vadd.f32 0.0, %v864
    %v866 = vpop.f32.mrf.mxu0
    %867 = vmatprep.mubr.f32.mxu0 %v725
    %868 = vmatmul.mubr.f32.gmra.mxu0 %v675
    %v869 = vpop.f32.mrf.mxu0
    %v870 = vadd.f32 0.0, %v869
    %v871 = vpop.f32.mrf.mxu0
    %872 = vmatprep.mubr.f32.mxu0 %v728
    %873 = vmatmul.mubr.f32.gmra.mxu0 %v677
    %v874 = vpop.f32.mrf.mxu0
    %v875 = vadd.f32 0.0, %v874
    %v876 = vpop.f32.mrf.mxu0
    %877 = vmatprep.mubr.f32.mxu0 %v731
    %878 = vmatmul.mubr.f32.gmra.mxu0 %v679
    %v879 = vpop.f32.mrf.mxu0
    %v880 = vadd.f32 0.0, %v879
    %v881 = vpop.f32.mrf.mxu0
    %882 = vmatprep.mubr.f32.mxu0 %v734
    %883 = vmatmul.mubr.f32.gmra.mxu0 %v681
    %v884 = vpop.f32.mrf.mxu0
    %v885 = vadd.f32 0.0, %v884
    %v886 = vpop.f32.mrf.mxu0
    %887 = vmatprep.mubr.f32.mxu0 %v737
    %888 = vmatmul.mubr.f32.gmra.mxu0 %v683
    %v889 = vpop.f32.mrf.mxu0
    %v890 = vadd.f32 0.0, %v889
    %v891 = vpop.f32.mrf.mxu0
    %892 = vmatprep.mubr.f32.mxu0 %v740
    %893 = vmatmul.mubr.f32.gmra.mxu0 %v685
    %v894 = vpop.f32.mrf.mxu0
    %v895 = vadd.f32 0.0, %v894
    %v896 = vpop.f32.mrf.mxu0
    %897 = vmatprep.mubr.f32.mxu0 %v743
    %898 = vmatmul.mubr.f32.gmra.mxu0 %v687
    %v899 = vpop.f32.mrf.mxu0
    %v900 = vadd.f32 0.0, %v899
    %v901 = vpop.f32.mrf.mxu0
    %902 = vmatprep.mubr.f32.mxu0 %v746
    %903 = vmatmul.mubr.f32.gmra.mxu0 %v689
    %v904 = vpop.f32.mrf.mxu0
    %v905 = vadd.f32 0.0, %v904
    %v906 = vpop.f32.mrf.mxu0
    %907 = vmatprep.mubr.f32.mxu0 %v749
    %908 = vmatmul.mubr.f32.gmra.mxu0 %v691
    %v909 = vpop.f32.mrf.mxu0
    %v910 = vadd.f32 0.0, %v909
    %v911 = vpop.f32.mrf.mxu0
    %912 = vmatprep.mubr.f32.mxu0 %v752
    %913 = vmatmul.mubr.f32.gmra.mxu0 %v693
    %v914 = vpop.f32.mrf.mxu0
    %v915 = vadd.f32 0.0, %v914
    %v916 = vpop.f32.mrf.mxu0
    %917 = vmatprep.mubr.f32.mxu0 %v755
    %918 = vmatmul.mubr.f32.gmra.mxu0 %v695
    %v919 = vpop.f32.mrf.mxu0
    %v920 = vadd.f32 0.0, %v919
    %v921 = vpop.f32.mrf.mxu0
    %922 = vmatprep.mubr.f32.mxu0 %v758
    %923 = vmatmul.mubr.f32.gmra.mxu0 %v697
    %v924 = vpop.f32.mrf.mxu0
    %v925 = vadd.f32 0.0, %v924
    %v926 = vpop.f32.mrf.mxu0
    %927 = vmatprep.mubr.f32.mxu0 %v761
    %928 = vmatmul.mubr.f32.gmra.mxu0 %v699
    %v929 = vpop.f32.mrf.mxu0
    %v930 = vadd.f32 0.0, %v929
    %v931 = vpop.f32.mrf.mxu0
    %932 = vmatprep.mubr.f32.mxu0 %v764
    %933 = vmatmul.mubr.f32.gmra.mxu0 %v701
    %v934 = vpop.f32.mrf.mxu0
    %v935 = vadd.f32 0.0, %v934
    %v936 = vpop.f32.mrf.mxu0
    %937 = vmatprep.mubr.f32.mxu0 %v767
    %938 = vmatmul.mubr.f32.gmra.mxu0 %v703
    %v939 = vpop.f32.mrf.mxu0
    %v940 = vadd.f32 0.0, %v939
    %v941 = vpop.f32.mrf.mxu0
    %942 = vdwg.mxu0
    %v943 = vld [vmem:[%s3] sm:$0xff]
    %v944 = vld [vmem:[%s3 + $0x8] sm:$0xff]
    %s945 = scalar_lea.vmem %s2, 168
    %v946 = vld [vmem:[%s945] sm:$0xff]
    %v947 = vld [vmem:[%s945 + $0x8] sm:$0xff]
    %v948 = vld [vmem:[%s945 + $0x10] sm:$0xff]
    %v949 = vld [vmem:[%s945 + $0x18] sm:$0xff]
    %v950 = vld [vmem:[%s945 + $0x20] sm:$0xff]
    %v951 = vld [vmem:[%s945 + $0x28] sm:$0xff]
    %v952 = vld [vmem:[%s945 + $0x30] sm:$0xff]
    %v953 = vld [vmem:[%s945 + $0x38] sm:$0xff]
    %v954 = vld [vmem:[%s945 + $0x40] sm:$0xff]
    %v955 = vld [vmem:[%s945 + $0x48] sm:$0xff]
    %v956 = vld [vmem:[%s945 + $0x50] sm:$0xff]
    %v957 = vld [vmem:[%s945 + $0x58] sm:$0xff]
    %v958 = vld [vmem:[%s945 + $0x60] sm:$0xff]
    %v959 = vld [vmem:[%s945 + $0x68] sm:$0xff]
    %v960 = vld [vmem:[%s945 + $0x70] sm:$0xff]
    %v961 = vld [vmem:[%s945 + $0x78] sm:$0xff]
    %v962 = vld [vmem:[%s945 + $0x80] sm:$0xff]
    %v963 = vld [vmem:[%s945 + $0x88] sm:$0xff]
    %v964 = vld [vmem:[%s945 + $0x90] sm:$0xff]
    %v965 = vld [vmem:[%s945 + $0x98] sm:$0xff]
    %v966 = vld [vmem:[%s945 + $0xa0] sm:$0x11]
    %v967 = vunpack.c.l.bf16 %v946
    %v968 = vunpack.c.h.bf16 %v946
    %v969 = vunpack.c.l.bf16 %v947
    %v970 = vunpack.c.h.bf16 %v947
    %v971 = vunpack.c.l.bf16 %v948
    %v972 = vunpack.c.h.bf16 %v948
    %v973 = vunpack.c.l.bf16 %v949
    %v974 = vunpack.c.h.bf16 %v949
    %v975 = vunpack.c.l.bf16 %v950
    %v976 = vunpack.c.h.bf16 %v950
    %v977 = vunpack.c.l.bf16 %v951
    %v978 = vunpack.c.h.bf16 %v951
    %v979 = vunpack.c.l.bf16 %v952
    %v980 = vunpack.c.h.bf16 %v952
    %v981 = vunpack.c.l.bf16 %v953
    %v982 = vunpack.c.h.bf16 %v953
    %v983 = vunpack.c.l.bf16 %v954
    %v984 = vunpack.c.h.bf16 %v954
    %v985 = vunpack.c.l.bf16 %v955
    %v986 = vunpack.c.h.bf16 %v955
    %v987 = vunpack.c.l.bf16 %v956
    %v988 = vunpack.c.h.bf16 %v956
    %v989 = vunpack.c.l.bf16 %v957
    %v990 = vunpack.c.h.bf16 %v957
    %v991 = vunpack.c.l.bf16 %v958
    %v992 = vunpack.c.h.bf16 %v958
    %v993 = vunpack.c.l.bf16 %v959
    %v994 = vunpack.c.h.bf16 %v959
    %v995 = vunpack.c.l.bf16 %v960
    %v996 = vunpack.c.h.bf16 %v960
    %v997 = vunpack.c.l.bf16 %v961
    %v998 = vunpack.c.h.bf16 %v961
    %v999 = vunpack.c.l.bf16 %v962
    %v1000 = vunpack.c.h.bf16 %v962
    %v1001 = vunpack.c.l.bf16 %v963
    %v1002 = vunpack.c.h.bf16 %v963
    %v1003 = vunpack.c.l.bf16 %v964
    %v1004 = vunpack.c.h.bf16 %v964
    %v1005 = vunpack.c.l.bf16 %v965
    %v1006 = vunpack.c.h.bf16 %v965
    %v1007 = vunpack.c.l.bf16 %v966
    %v1008 = vunpack.c.h.bf16 %v966
    %v1010 = vsel %vm705, %v968, 0
    %v1013 = vsel %vm705, %v970, 0
    %v1016 = vsel %vm705, %v972, 0
    %v1019 = vsel %vm705, %v974, 0
    %v1022 = vsel %vm705, %v976, 0
    %v1025 = vsel %vm705, %v978, 0
    %v1028 = vsel %vm705, %v980, 0
    %v1031 = vsel %vm705, %v982, 0
    %v1034 = vsel %vm705, %v984, 0
    %v1037 = vsel %vm705, %v986, 0
    %v1040 = vsel %vm705, %v988, 0
    %v1043 = vsel %vm705, %v990, 0
    %v1046 = vsel %vm705, %v992, 0
    %v1049 = vsel %vm705, %v994, 0
    %v1052 = vsel %vm705, %v996, 0
    %v1055 = vsel %vm705, %v998, 0
    %v1058 = vsel %vm705, %v1000, 0
    %v1061 = vsel %vm705, %v1002, 0
    %v1064 = vsel %vm705, %v1004, 0
    %v1067 = vsel %vm705, %v1006, 0
    %v1070 = vsel %vm705, %v1008, 0
    %1072 = vmatprep.subr.mxu0 0.0
    %1073 = vmatpush1.msra.mxu0 %v626
    %1074 = vmatprep.subr.mxu0 0.0
    %1075 = vmatpush1.msra.mxu0 %v625
    %1076 = vmatprep.subr.mxu0 0.0
    %1077 = vmatpush1.msra.mxu0 %v624
    %1078 = vmatprep.subr.mxu0 0.0
    %1079 = vmatpush1.msra.mxu0 %v623
    %1080 = vmatprep.subr.mxu0 0.0
    %1081 = vmatpush1.msra.mxu0 %v622
    %1082 = vmatprep.subr.mxu0 0.0
    %1083 = vmatpush1.msra.mxu0 %v621
    %1084 = vmatprep.subr.mxu0 0.0
    %1085 = vmatpush1.msra.mxu0 %v620
    %1086 = vmatprep.subr.mxu0 0.0
    %1087 = vmatpush1.msra.mxu0 %v619
    %1088 = vmatprep.subr.mxu0 0.0
    %1089 = vmatpush1.msra.mxu0 %v618
    %1090 = vmatprep.subr.mxu0 0.0
    %1091 = vmatpush1.msra.mxu0 %v617
    %1092 = vmatprep.subr.mxu0 0.0
    %1093 = vmatpush1.msra.mxu0 %v616
    %1094 = vmatprep.subr.mxu0 0.0
    %1095 = vmatpush1.msra.mxu0 %v615
    %1096 = vmatprep.subr.mxu0 0.0
    %1097 = vmatpush1.msra.mxu0 %v614
    %1098 = vmatprep.subr.mxu0 0.0
    %1099 = vmatpush1.msra.mxu0 %v613
    %1100 = vmatprep.subr.mxu0 0.0
    %1101 = vmatpush1.msra.mxu0 %v612
    %1102 = vmatprep.subr.mxu0 0.0
    %1103 = vmatpush1.msra.mxu0 %v611
    %1104 = vmatprep.subr.mxu0 0.0
    %1105 = vmatpush2.msra.mxu0 0.0
    %1106 = vmatprep.subr.mxu0 0.0
    %1107 = vmatpush2.msra.mxu0 %v771
    %1108 = vmatprep.subr.mxu0 0.0
    %1109 = vmatpush2.msra.mxu0 %v640
    %1110 = vmatprep.subr.mxu0 0.0
    %1111 = vmatpush2.msra.mxu0 %v639
    %1112 = vmatprep.subr.mxu0 0.0
    %1113 = vmatpush2.msra.mxu0 %v638
    %1114 = vmatprep.subr.mxu0 0.0
    %1115 = vmatpush2.msra.mxu0 %v637
    %1116 = vmatprep.subr.mxu0 0.0
    %1117 = vmatpush2.msra.mxu0 %v636
    %1118 = vmatprep.subr.mxu0 0.0
    %1119 = vmatpush2.msra.mxu0 %v635
    %1120 = vmatprep.subr.mxu0 0.0
    %1121 = vmatpush2.msra.mxu0 %v634
    %1122 = vmatprep.subr.mxu0 0.0
    %1123 = vmatpush2.msra.mxu0 %v633
    %1124 = vmatprep.subr.mxu0 0.0
    %1125 = vmatpush2.msra.mxu0 %v632
    %1126 = vmatprep.subr.mxu0 0.0
    %1127 = vmatpush2.msra.mxu0 %v631
    %1128 = vmatprep.subr.mxu0 0.0
    %1129 = vmatpush2.msra.mxu0 %v630
    %1130 = vmatprep.subr.mxu0 0.0
    %1131 = vmatpush2.msra.mxu0 %v629
    %1132 = vmatprep.subr.mxu0 0.0
    %1133 = vmatpush2.msra.mxu0 %v628
    %1134 = vmatprep.subr.mxu0 0.0
    %1135 = vmatpush2.msra.mxu0 %v627
    %1136 = vmatprep.mubr.f32.mxu0 %v1010
    %1137 = vmatmul.mubr.f32.gmra.mxu0 %v967
    %v1138 = vpop.f32.mrf.mxu0
    %v1139 = vadd.f32 0.0, %v1138
    %v1140 = vpop.f32.mrf.mxu0
    %1141 = vmatprep.mubr.f32.mxu0 %v1013
    %1142 = vmatmul.mubr.f32.gmra.mxu0 %v969
    %v1143 = vpop.f32.mrf.mxu0
    %v1144 = vadd.f32 0.0, %v1143
    %v1145 = vpop.f32.mrf.mxu0
    %1146 = vmatprep.mubr.f32.mxu0 %v1016
    %1147 = vmatmul.mubr.f32.gmra.mxu0 %v971
    %v1148 = vpop.f32.mrf.mxu0
    %v1149 = vadd.f32 0.0, %v1148
    %v1150 = vpop.f32.mrf.mxu0
    %1151 = vmatprep.mubr.f32.mxu0 %v1019
    %1152 = vmatmul.mubr.f32.gmra.mxu0 %v973
    %v1153 = vpop.f32.mrf.mxu0
    %v1154 = vadd.f32 0.0, %v1153
    %v1155 = vpop.f32.mrf.mxu0
    %1156 = vmatprep.mubr.f32.mxu0 %v1022
    %1157 = vmatmul.mubr.f32.gmra.mxu0 %v975
    %v1158 = vpop.f32.mrf.mxu0
    %v1159 = vadd.f32 0.0, %v1158
    %v1160 = vpop.f32.mrf.mxu0
    %1161 = vmatprep.mubr.f32.mxu0 %v1025
    %1162 = vmatmul.mubr.f32.gmra.mxu0 %v977
    %v1163 = vpop.f32.mrf.mxu0
    %v1164 = vadd.f32 0.0, %v1163
    %v1165 = vpop.f32.mrf.mxu0
    %1166 = vmatprep.mubr.f32.mxu0 %v1028
    %1167 = vmatmul.mubr.f32.gmra.mxu0 %v979
    %v1168 = vpop.f32.mrf.mxu0
    %v1169 = vadd.f32 0.0, %v1168
    %v1170 = vpop.f32.mrf.mxu0
    %1171 = vmatprep.mubr.f32.mxu0 %v1031
    %1172 = vmatmul.mubr.f32.gmra.mxu0 %v981
    %v1173 = vpop.f32.mrf.mxu0
    %v1174 = vadd.f32 0.0, %v1173
    %v1175 = vpop.f32.mrf.mxu0
    %1176 = vmatprep.mubr.f32.mxu0 %v1034
    %1177 = vmatmul.mubr.f32.gmra.mxu0 %v983
    %v1178 = vpop.f32.mrf.mxu0
    %v1179 = vadd.f32 0.0, %v1178
    %v1180 = vpop.f32.mrf.mxu0
    %1181 = vmatprep.mubr.f32.mxu0 %v1037
    %1182 = vmatmul.mubr.f32.gmra.mxu0 %v985
    %v1183 = vpop.f32.mrf.mxu0
    %v1184 = vadd.f32 0.0, %v1183
    %v1185 = vpop.f32.mrf.mxu0
    %1186 = vmatprep.mubr.f32.mxu0 %v1040
    %1187 = vmatmul.mubr.f32.gmra.mxu0 %v987
    %v1188 = vpop.f32.mrf.mxu0
    %v1189 = vadd.f32 0.0, %v1188
    %v1190 = vpop.f32.mrf.mxu0
    %1191 = vmatprep.mubr.f32.mxu0 %v1043
    %1192 = vmatmul.mubr.f32.gmra.mxu0 %v989
    %v1193 = vpop.f32.mrf.mxu0
    %v1194 = vadd.f32 0.0, %v1193
    %v1195 = vpop.f32.mrf.mxu0
    %1196 = vmatprep.mubr.f32.mxu0 %v1046
    %1197 = vmatmul.mubr.f32.gmra.mxu0 %v991
    %v1198 = vpop.f32.mrf.mxu0
    %v1199 = vadd.f32 0.0, %v1198
    %v1200 = vpop.f32.mrf.mxu0
    %1201 = vmatprep.mubr.f32.mxu0 %v1049
    %1202 = vmatmul.mubr.f32.gmra.mxu0 %v993
    %v1203 = vpop.f32.mrf.mxu0
    %v1204 = vadd.f32 0.0, %v1203
    %v1205 = vpop.f32.mrf.mxu0
    %1206 = vmatprep.mubr.f32.mxu0 %v1052
    %1207 = vmatmul.mubr.f32.gmra.mxu0 %v995
    %v1208 = vpop.f32.mrf.mxu0
    %v1209 = vadd.f32 0.0, %v1208
    %v1210 = vpop.f32.mrf.mxu0
    %1211 = vmatprep.mubr.f32.mxu0 %v1055
    %1212 = vmatmul.mubr.f32.gmra.mxu0 %v997
    %v1213 = vpop.f32.mrf.mxu0
    %v1214 = vadd.f32 0.0, %v1213
    %v1215 = vpop.f32.mrf.mxu0
    %1216 = vmatprep.mubr.f32.mxu0 %v1058
    %1217 = vmatmul.mubr.f32.gmra.mxu0 %v999
    %v1218 = vpop.f32.mrf.mxu0
    %v1219 = vadd.f32 0.0, %v1218
    %v1220 = vpop.f32.mrf.mxu0
    %1221 = vmatprep.mubr.f32.mxu0 %v1061
    %1222 = vmatmul.mubr.f32.gmra.mxu0 %v1001
    %v1223 = vpop.f32.mrf.mxu0
    %v1224 = vadd.f32 0.0, %v1223
    %v1225 = vpop.f32.mrf.mxu0
    %1226 = vmatprep.mubr.f32.mxu0 %v1064
    %1227 = vmatmul.mubr.f32.gmra.mxu0 %v1003
    %v1228 = vpop.f32.mrf.mxu0
    %v1229 = vadd.f32 0.0, %v1228
    %v1230 = vpop.f32.mrf.mxu0
    %1231 = vmatprep.mubr.f32.mxu0 %v1067
    %1232 = vmatmul.mubr.f32.gmra.mxu0 %v1005
    %v1233 = vpop.f32.mrf.mxu0
    %v1234 = vadd.f32 0.0, %v1233
    %v1235 = vpop.f32.mrf.mxu0
    %1236 = vmatprep.mubr.f32.mxu0 %v1070
    %1237 = vmatmul.mubr.f32.gmra.mxu0 %v1007
    %v1238 = vpop.f32.mrf.mxu0
    %v1239 = vadd.f32 0.0, %v1238
    %v1240 = vpop.f32.mrf.mxu0
    %1241 = vdwg.mxu0
    %s1242 = scalar_lea.vmem %s3, 16
    %v1243 = vld [vmem:[%s1242] sm:$0xff]
    %v1244 = vld [vmem:[%s1242 + $0x8] sm:$0xff]
    %vm1245 = vcmask 130048
    %v1247 = vsel %vm1245, %v1139, 0
    %v1250 = vsel %vm1245, %v1144, 0
    %v1253 = vsel %vm1245, %v1149, 0
    %v1256 = vsel %vm1245, %v1154, 0
    %v1259 = vsel %vm1245, %v1159, 0
    %v1262 = vsel %vm1245, %v1164, 0
    %v1265 = vsel %vm1245, %v1169, 0
    %v1268 = vsel %vm1245, %v1174, 0
    %v1271 = vsel %vm1245, %v1179, 0
    %v1274 = vsel %vm1245, %v1184, 0
    %v1277 = vsel %vm1245, %v1189, 0
    %v1280 = vsel %vm1245, %v1194, 0
    %v1283 = vsel %vm1245, %v1199, 0
    %v1286 = vsel %vm1245, %v1204, 0
    %v1289 = vsel %vm1245, %v1209, 0
    %v1292 = vsel %vm1245, %v1214, 0
    %v1295 = vsel %vm1245, %v1219, 0
    %v1298 = vsel %vm1245, %v1224, 0
    %v1301 = vsel %vm1245, %v1229, 0
    %v1304 = vsel %vm1245, %v1234, 0
    %v1307 = vsel %vm1245, %v1239, 0
    %1309 = vmatprep.subr.mxu0 0.0
    %1310 = vmatpush1.msra.mxu0 0.0
    %1311 = vmatprep.subr.mxu0 0.0
    %1312 = vmatpush1.msra.mxu0 0.0
    %1313 = vmatprep.subr.mxu0 0.0
    %1314 = vmatpush1.msra.mxu0 0.0
    %1315 = vmatprep.subr.mxu0 0.0
    %1316 = vmatpush1.msra.mxu0 0.0
    %1317 = vmatprep.subr.mxu0 0.0
    %1318 = vmatpush1.msra.mxu0 0.0
    %1319 = vmatprep.subr.mxu0 0.0
    %1320 = vmatpush1.msra.mxu0 0.0
    %1321 = vmatprep.subr.mxu0 0.0
    %1322 = vmatpush1.msra.mxu0 0.0
    %1323 = vmatprep.subr.mxu0 0.0
    %1324 = vmatpush1.msra.mxu0 0.0
    %1325 = vmatprep.subr.mxu0 0.0
    %1326 = vmatpush1.msra.mxu0 0.0
    %1327 = vmatprep.subr.mxu0 0.0
    %1328 = vmatpush1.msra.mxu0 0.0
    %1329 = vmatprep.subr.mxu0 0.0
    %1330 = vmatpush1.msra.mxu0 0.0
    %1331 = vmatprep.subr.mxu0 0.0
    %1332 = vmatpush1.msra.mxu0 0.0
    %1333 = vmatprep.subr.mxu0 0.0
    %1334 = vmatpush1.msra.mxu0 0.0
    %1335 = vmatprep.subr.mxu0 0.0
    %1336 = vmatpush1.msra.mxu0 0.0
    %1337 = vmatprep.subr.mxu0 0.0
    %1338 = vmatpush1.msra.mxu0 %v1244
    %1339 = vmatprep.subr.mxu0 0.0
    %1340 = vmatpush1.msra.mxu0 %v1243
    %1341 = vmatprep.subr.mxu0 0.0
    %1342 = vmatpush2.msra.mxu0 0.0
    %1343 = vmatprep.subr.mxu0 0.0
    %1344 = vmatpush2.msra.mxu0 0.0
    %1345 = vmatprep.subr.mxu0 0.0
    %1346 = vmatpush2.msra.mxu0 0.0
    %1347 = vmatprep.subr.mxu0 0.0
    %1348 = vmatpush2.msra.mxu0 0.0
    %1349 = vmatprep.subr.mxu0 0.0
    %1350 = vmatpush2.msra.mxu0 0.0
    %1351 = vmatprep.subr.mxu0 0.0
    %1352 = vmatpush2.msra.mxu0 0.0
    %1353 = vmatprep.subr.mxu0 0.0
    %1354 = vmatpush2.msra.mxu0 0.0
    %1355 = vmatprep.subr.mxu0 0.0
    %1356 = vmatpush2.msra.mxu0 0.0
    %1357 = vmatprep.subr.mxu0 0.0
    %1358 = vmatpush2.msra.mxu0 0.0
    %1359 = vmatprep.subr.mxu0 0.0
    %1360 = vmatpush2.msra.mxu0 0.0
    %1361 = vmatprep.subr.mxu0 0.0
    %1362 = vmatpush2.msra.mxu0 0.0
    %1363 = vmatprep.subr.mxu0 0.0
    %1364 = vmatpush2.msra.mxu0 0.0
    %1365 = vmatprep.subr.mxu0 0.0
    %1366 = vmatpush2.msra.mxu0 0.0
    %1367 = vmatprep.subr.mxu0 0.0
    %1368 = vmatpush2.msra.mxu0 0.0
    %1369 = vmatprep.subr.mxu0 0.0
    %1370 = vmatpush2.msra.mxu0 0.0
    %1371 = vmatprep.subr.mxu0 0.0
    %1372 = vmatpush2.msra.mxu0 0.0
    %1373 = vmatprep.mubr.f32.mxu0 0.0
    %1374 = vmatmul.mubr.f32.gmra.mxu0 %v1247
    %v1375 = vpop.f32.mrf.mxu0
    %v1376 = vadd.f32 0.0, %v1375
    %v1377 = vpop.f32.mrf.mxu0
    %1378 = vmatprep.mubr.f32.mxu0 0.0
    %1379 = vmatmul.mubr.f32.gmra.mxu0 %v1250
    %v1380 = vpop.f32.mrf.mxu0
    %v1381 = vadd.f32 0.0, %v1380
    %v1382 = vpop.f32.mrf.mxu0
    %1383 = vmatprep.mubr.f32.mxu0 0.0
    %1384 = vmatmul.mubr.f32.gmra.mxu0 %v1253
    %v1385 = vpop.f32.mrf.mxu0
    %v1386 = vadd.f32 0.0, %v1385
    %v1387 = vpop.f32.mrf.mxu0
    %1388 = vmatprep.mubr.f32.mxu0 0.0
    %1389 = vmatmul.mubr.f32.gmra.mxu0 %v1256
    %v1390 = vpop.f32.mrf.mxu0
    %v1391 = vadd.f32 0.0, %v1390
    %v1392 = vpop.f32.mrf.mxu0
    %1393 = vmatprep.mubr.f32.mxu0 0.0
    %1394 = vmatmul.mubr.f32.gmra.mxu0 %v1259
    %v1395 = vpop.f32.mrf.mxu0
    %v1396 = vadd.f32 0.0, %v1395
    %v1397 = vpop.f32.mrf.mxu0
    %1398 = vmatprep.mubr.f32.mxu0 0.0
    %1399 = vmatmul.mubr.f32.gmra.mxu0 %v1262
    %v1400 = vpop.f32.mrf.mxu0
    %v1401 = vadd.f32 0.0, %v1400
    %v1402 = vpop.f32.mrf.mxu0
    %1403 = vmatprep.mubr.f32.mxu0 0.0
    %1404 = vmatmul.mubr.f32.gmra.mxu0 %v1265
    %v1405 = vpop.f32.mrf.mxu0
    %v1406 = vadd.f32 0.0, %v1405
    %v1407 = vpop.f32.mrf.mxu0
    %1408 = vmatprep.mubr.f32.mxu0 0.0
    %1409 = vmatmul.mubr.f32.gmra.mxu0 %v1268
    %v1410 = vpop.f32.mrf.mxu0
    %v1411 = vadd.f32 0.0, %v1410
    %v1412 = vpop.f32.mrf.mxu0
    %1413 = vmatprep.mubr.f32.mxu0 0.0
    %1414 = vmatmul.mubr.f32.gmra.mxu0 %v1271
    %v1415 = vpop.f32.mrf.mxu0
    %v1416 = vadd.f32 0.0, %v1415
    %v1417 = vpop.f32.mrf.mxu0
    %1418 = vmatprep.mubr.f32.mxu0 0.0
    %1419 = vmatmul.mubr.f32.gmra.mxu0 %v1274
    %v1420 = vpop.f32.mrf.mxu0
    %v1421 = vadd.f32 0.0, %v1420
    %v1422 = vpop.f32.mrf.mxu0
    %1423 = vmatprep.mubr.f32.mxu0 0.0
    %1424 = vmatmul.mubr.f32.gmra.mxu0 %v1277
    %v1425 = vpop.f32.mrf.mxu0
    %v1426 = vadd.f32 0.0, %v1425
    %v1427 = vpop.f32.mrf.mxu0
    %1428 = vmatprep.mubr.f32.mxu0 0.0
    %1429 = vmatmul.mubr.f32.gmra.mxu0 %v1280
    %v1430 = vpop.f32.mrf.mxu0
    %v1431 = vadd.f32 0.0, %v1430
    %v1432 = vpop.f32.mrf.mxu0
    %1433 = vmatprep.mubr.f32.mxu0 0.0
    %1434 = vmatmul.mubr.f32.gmra.mxu0 %v1283
    %v1435 = vpop.f32.mrf.mxu0
    %v1436 = vadd.f32 0.0, %v1435
    %v1437 = vpop.f32.mrf.mxu0
    %1438 = vmatprep.mubr.f32.mxu0 0.0
    %1439 = vmatmul.mubr.f32.gmra.mxu0 %v1286
    %v1440 = vpop.f32.mrf.mxu0
    %v1441 = vadd.f32 0.0, %v1440
    %v1442 = vpop.f32.mrf.mxu0
    %1443 = vmatprep.mubr.f32.mxu0 0.0
    %1444 = vmatmul.mubr.f32.gmra.mxu0 %v1289
    %v1445 = vpop.f32.mrf.mxu0
    %v1446 = vadd.f32 0.0, %v1445
    %v1447 = vpop.f32.mrf.mxu0
    %1448 = vmatprep.mubr.f32.mxu0 0.0
    %1449 = vmatmul.mubr.f32.gmra.mxu0 %v1292
    %v1450 = vpop.f32.mrf.mxu0
    %v1451 = vadd.f32 0.0, %v1450
    %v1452 = vpop.f32.mrf.mxu0
    %1453 = vmatprep.mubr.f32.mxu0 0.0
    %1454 = vmatmul.mubr.f32.gmra.mxu0 %v1295
    %v1455 = vpop.f32.mrf.mxu0
    %v1456 = vadd.f32 0.0, %v1455
    %v1457 = vpop.f32.mrf.mxu0
    %1458 = vmatprep.mubr.f32.mxu0 0.0
    %1459 = vmatmul.mubr.f32.gmra.mxu0 %v1298
    %v1460 = vpop.f32.mrf.mxu0
    %v1461 = vadd.f32 0.0, %v1460
    %v1462 = vpop.f32.mrf.mxu0
    %1463 = vmatprep.mubr.f32.mxu0 0.0
    %1464 = vmatmul.mubr.f32.gmra.mxu0 %v1301
    %v1465 = vpop.f32.mrf.mxu0
    %v1466 = vadd.f32 0.0, %v1465
    %v1467 = vpop.f32.mrf.mxu0
    %1468 = vmatprep.mubr.f32.mxu0 0.0
    %1469 = vmatmul.mubr.f32.gmra.mxu0 %v1304
    %v1470 = vpop.f32.mrf.mxu0
    %v1471 = vadd.f32 0.0, %v1470
    %v1472 = vpop.f32.mrf.mxu0
    %1473 = vmatprep.mubr.f32.mxu0 0.0
    %1474 = vmatmul.mubr.f32.gmra.mxu0 %v1307
    %v1475 = vpop.f32.mrf.mxu0
    %v1476 = vadd.f32 0.0, %v1475
    %v1477 = vpop.f32.mrf.mxu0
    %1478 = vdwg.mxu0
    %v1480 = vsel %vm1245, %v840, 0
    %v1483 = vsel %vm1245, %v845, 0
    %v1486 = vsel %vm1245, %v850, 0
    %v1489 = vsel %vm1245, %v855, 0
    %v1492 = vsel %vm1245, %v860, 0
    %v1495 = vsel %vm1245, %v865, 0
    %v1498 = vsel %vm1245, %v870, 0
    %v1501 = vsel %vm1245, %v875, 0
    %v1504 = vsel %vm1245, %v880, 0
    %v1507 = vsel %vm1245, %v885, 0
    %v1510 = vsel %vm1245, %v890, 0
    %v1513 = vsel %vm1245, %v895, 0
    %v1516 = vsel %vm1245, %v900, 0
    %v1519 = vsel %vm1245, %v905, 0
    %v1522 = vsel %vm1245, %v910, 0
    %v1525 = vsel %vm1245, %v915, 0
    %v1528 = vsel %vm1245, %v920, 0
    %v1531 = vsel %vm1245, %v925, 0
    %v1534 = vsel %vm1245, %v930, 0
    %v1537 = vsel %vm1245, %v935, 0
    %v1540 = vsel %vm1245, %v940, 0
    %1542 = vmatprep.subr.mxu0 0.0
    %1543 = vmatpush1.msra.mxu0 0.0
    %1544 = vmatprep.subr.mxu0 0.0
    %1545 = vmatpush1.msra.mxu0 0.0
    %1546 = vmatprep.subr.mxu0 0.0
    %1547 = vmatpush1.msra.mxu0 0.0
    %1548 = vmatprep.subr.mxu0 0.0
    %1549 = vmatpush1.msra.mxu0 0.0
    %1550 = vmatprep.subr.mxu0 0.0
    %1551 = vmatpush1.msra.mxu0 0.0
    %1552 = vmatprep.subr.mxu0 0.0
    %1553 = vmatpush1.msra.mxu0 0.0
    %1554 = vmatprep.subr.mxu0 0.0
    %1555 = vmatpush1.msra.mxu0 0.0
    %1556 = vmatprep.subr.mxu0 0.0
    %1557 = vmatpush1.msra.mxu0 0.0
    %1558 = vmatprep.subr.mxu0 0.0
    %1559 = vmatpush1.msra.mxu0 0.0
    %1560 = vmatprep.subr.mxu0 0.0
    %1561 = vmatpush1.msra.mxu0 0.0
    %1562 = vmatprep.subr.mxu0 0.0
    %1563 = vmatpush1.msra.mxu0 0.0
    %1564 = vmatprep.subr.mxu0 0.0
    %1565 = vmatpush1.msra.mxu0 0.0
    %1566 = vmatprep.subr.mxu0 0.0
    %1567 = vmatpush1.msra.mxu0 0.0
    %1568 = vmatprep.subr.mxu0 0.0
    %1569 = vmatpush1.msra.mxu0 0.0
    %1570 = vmatprep.subr.mxu0 0.0
    %1571 = vmatpush1.msra.mxu0 %v944
    %1572 = vmatprep.subr.mxu0 0.0
    %1573 = vmatpush1.msra.mxu0 %v943
    %1574 = vmatprep.subr.mxu0 0.0
    %1575 = vmatpush2.msra.mxu0 0.0
    %1576 = vmatprep.subr.mxu0 0.0
    %1577 = vmatpush2.msra.mxu0 0.0
    %1578 = vmatprep.subr.mxu0 0.0
    %1579 = vmatpush2.msra.mxu0 0.0
    %1580 = vmatprep.subr.mxu0 0.0
    %1581 = vmatpush2.msra.mxu0 0.0
    %1582 = vmatprep.subr.mxu0 0.0
    %1583 = vmatpush2.msra.mxu0 0.0
    %1584 = vmatprep.subr.mxu0 0.0
    %1585 = vmatpush2.msra.mxu0 0.0
    %1586 = vmatprep.subr.mxu0 0.0
    %1587 = vmatpush2.msra.mxu0 0.0
    %1588 = vmatprep.subr.mxu0 0.0
    %1589 = vmatpush2.msra.mxu0 0.0
    %1590 = vmatprep.subr.mxu0 0.0
    %1591 = vmatpush2.msra.mxu0 0.0
    %1592 = vmatprep.subr.mxu0 0.0
    %1593 = vmatpush2.msra.mxu0 0.0
    %1594 = vmatprep.subr.mxu0 0.0
    %1595 = vmatpush2.msra.mxu0 0.0
    %1596 = vmatprep.subr.mxu0 0.0
    %1597 = vmatpush2.msra.mxu0 0.0
    %1598 = vmatprep.subr.mxu0 0.0
    %1599 = vmatpush2.msra.mxu0 0.0
    %1600 = vmatprep.subr.mxu0 0.0
    %1601 = vmatpush2.msra.mxu0 0.0
    %1602 = vmatprep.subr.mxu0 0.0
    %1603 = vmatpush2.msra.mxu0 0.0
    %1604 = vmatprep.subr.mxu0 0.0
    %1605 = vmatpush2.msra.mxu0 0.0
    %1606 = vmatprep.mubr.f32.mxu0 0.0
    %1607 = vmatmul.mubr.f32.gmra.mxu0 %v1480
    %v1608 = vpop.f32.mrf.mxu0
    %v1609 = vadd.f32 %v1376, %v1608
    %v1610 = vpop.f32.mrf.mxu0
    %1611 = vmatprep.mubr.f32.mxu0 0.0
    %1612 = vmatmul.mubr.f32.gmra.mxu0 %v1483
    %v1613 = vpop.f32.mrf.mxu0
    %v1614 = vadd.f32 %v1381, %v1613
    %v1615 = vpop.f32.mrf.mxu0
    %1616 = vmatprep.mubr.f32.mxu0 0.0
    %1617 = vmatmul.mubr.f32.gmra.mxu0 %v1486
    %v1618 = vpop.f32.mrf.mxu0
    %v1619 = vadd.f32 %v1386, %v1618
    %v1620 = vpop.f32.mrf.mxu0
    %1621 = vmatprep.mubr.f32.mxu0 0.0
    %1622 = vmatmul.mubr.f32.gmra.mxu0 %v1489
    %v1623 = vpop.f32.mrf.mxu0
    %v1624 = vadd.f32 %v1391, %v1623
    %v1625 = vpop.f32.mrf.mxu0
    %1626 = vmatprep.mubr.f32.mxu0 0.0
    %1627 = vmatmul.mubr.f32.gmra.mxu0 %v1492
    %v1628 = vpop.f32.mrf.mxu0
    %v1629 = vadd.f32 %v1396, %v1628
    %v1630 = vpop.f32.mrf.mxu0
    %1631 = vmatprep.mubr.f32.mxu0 0.0
    %1632 = vmatmul.mubr.f32.gmra.mxu0 %v1495
    %v1633 = vpop.f32.mrf.mxu0
    %v1634 = vadd.f32 %v1401, %v1633
    %v1635 = vpop.f32.mrf.mxu0
    %1636 = vmatprep.mubr.f32.mxu0 0.0
    %1637 = vmatmul.mubr.f32.gmra.mxu0 %v1498
    %v1638 = vpop.f32.mrf.mxu0
    %v1639 = vadd.f32 %v1406, %v1638
    %v1640 = vpop.f32.mrf.mxu0
    %1641 = vmatprep.mubr.f32.mxu0 0.0
    %1642 = vmatmul.mubr.f32.gmra.mxu0 %v1501
    %v1643 = vpop.f32.mrf.mxu0
    %v1644 = vadd.f32 %v1411, %v1643
    %v1645 = vpop.f32.mrf.mxu0
    %1646 = vmatprep.mubr.f32.mxu0 0.0
    %1647 = vmatmul.mubr.f32.gmra.mxu0 %v1504
    %v1648 = vpop.f32.mrf.mxu0
    %v1649 = vadd.f32 %v1416, %v1648
    %v1650 = vpop.f32.mrf.mxu0
    %1651 = vmatprep.mubr.f32.mxu0 0.0
    %1652 = vmatmul.mubr.f32.gmra.mxu0 %v1507
    %v1653 = vpop.f32.mrf.mxu0
    %v1654 = vadd.f32 %v1421, %v1653
    %v1655 = vpop.f32.mrf.mxu0
    %1656 = vmatprep.mubr.f32.mxu0 0.0
    %1657 = vmatmul.mubr.f32.gmra.mxu0 %v1510
    %v1658 = vpop.f32.mrf.mxu0
    %v1659 = vadd.f32 %v1426, %v1658
    %v1660 = vpop.f32.mrf.mxu0
    %1661 = vmatprep.mubr.f32.mxu0 0.0
    %1662 = vmatmul.mubr.f32.gmra.mxu0 %v1513
    %v1663 = vpop.f32.mrf.mxu0
    %v1664 = vadd.f32 %v1431, %v1663
    %v1665 = vpop.f32.mrf.mxu0
    %1666 = vmatprep.mubr.f32.mxu0 0.0
    %1667 = vmatmul.mubr.f32.gmra.mxu0 %v1516
    %v1668 = vpop.f32.mrf.mxu0
    %v1669 = vadd.f32 %v1436, %v1668
    %v1670 = vpop.f32.mrf.mxu0
    %1671 = vmatprep.mubr.f32.mxu0 0.0
    %1672 = vmatmul.mubr.f32.gmra.mxu0 %v1519
    %v1673 = vpop.f32.mrf.mxu0
    %v1674 = vadd.f32 %v1441, %v1673
    %v1675 = vpop.f32.mrf.mxu0
    %1676 = vmatprep.mubr.f32.mxu0 0.0
    %1677 = vmatmul.mubr.f32.gmra.mxu0 %v1522
    %v1678 = vpop.f32.mrf.mxu0
    %v1679 = vadd.f32 %v1446, %v1678
    %v1680 = vpop.f32.mrf.mxu0
    %1681 = vmatprep.mubr.f32.mxu0 0.0
    %1682 = vmatmul.mubr.f32.gmra.mxu0 %v1525
    %v1683 = vpop.f32.mrf.mxu0
    %v1684 = vadd.f32 %v1451, %v1683
    %v1685 = vpop.f32.mrf.mxu0
    %1686 = vmatprep.mubr.f32.mxu0 0.0
    %1687 = vmatmul.mubr.f32.gmra.mxu0 %v1528
    %v1688 = vpop.f32.mrf.mxu0
    %v1689 = vadd.f32 %v1456, %v1688
    %v1690 = vpop.f32.mrf.mxu0
    %1691 = vmatprep.mubr.f32.mxu0 0.0
    %1692 = vmatmul.mubr.f32.gmra.mxu0 %v1531
    %v1693 = vpop.f32.mrf.mxu0
    %v1694 = vadd.f32 %v1461, %v1693
    %v1695 = vpop.f32.mrf.mxu0
    %1696 = vmatprep.mubr.f32.mxu0 0.0
    %1697 = vmatmul.mubr.f32.gmra.mxu0 %v1534
    %v1698 = vpop.f32.mrf.mxu0
    %v1699 = vadd.f32 %v1466, %v1698
    %v1700 = vpop.f32.mrf.mxu0
    %1701 = vmatprep.mubr.f32.mxu0 0.0
    %1702 = vmatmul.mubr.f32.gmra.mxu0 %v1537
    %v1703 = vpop.f32.mrf.mxu0
    %v1704 = vadd.f32 %v1471, %v1703
    %v1705 = vpop.f32.mrf.mxu0
    %1706 = vmatprep.mubr.f32.mxu0 0.0
    %1707 = vmatmul.mubr.f32.gmra.mxu0 %v1540
    %v1708 = vpop.f32.mrf.mxu0
    %v1709 = vadd.f32 %v1476, %v1708
    %v1710 = vpop.f32.mrf.mxu0
    %1711 = vdwg.mxu0
    %s1712 = scalar_lea.vmem %s2, 336
    %v1713 = vld [vmem:[%s1712] sm:$0xff]
    %v1714 = vld [vmem:[%s1712 + $0x8] sm:$0xff]
    %v1715 = vld [vmem:[%s1712 + $0x10] sm:$0xff]
    %v1716 = vld [vmem:[%s1712 + $0x18] sm:$0xff]
    %v1717 = vld [vmem:[%s1712 + $0x20] sm:$0xff]
    %v1718 = vld [vmem:[%s1712 + $0x28] sm:$0xff]
    %v1719 = vld [vmem:[%s1712 + $0x30] sm:$0xff]
    %v1720 = vld [vmem:[%s1712 + $0x38] sm:$0xff]
    %v1721 = vld [vmem:[%s1712 + $0x40] sm:$0xff]
    %v1722 = vld [vmem:[%s1712 + $0x48] sm:$0xff]
    %v1723 = vld [vmem:[%s1712 + $0x50] sm:$0xff]
    %v1724 = vld [vmem:[%s1712 + $0x58] sm:$0xff]
    %v1725 = vld [vmem:[%s1712 + $0x60] sm:$0xff]
    %v1726 = vld [vmem:[%s1712 + $0x68] sm:$0xff]
    %v1727 = vld [vmem:[%s1712 + $0x70] sm:$0xff]
    %v1728 = vld [vmem:[%s1712 + $0x78] sm:$0xff]
    %v1729 = vld [vmem:[%s1712 + $0x80] sm:$0xff]
    %v1730 = vld [vmem:[%s1712 + $0x88] sm:$0xff]
    %v1731 = vld [vmem:[%s1712 + $0x90] sm:$0xff]
    %v1732 = vld [vmem:[%s1712 + $0x98] sm:$0xff]
    %v1733 = vld [vmem:[%s1712 + $0xa0] sm:$0x11]
    %v1734 = vunpack.c.l.bf16 %v1713
    %v1735 = vunpack.c.h.bf16 %v1713
    %v1736 = vunpack.c.l.bf16 %v1714
    %v1737 = vunpack.c.h.bf16 %v1714
    %v1738 = vunpack.c.l.bf16 %v1715
    %v1739 = vunpack.c.h.bf16 %v1715
    %v1740 = vunpack.c.l.bf16 %v1716
    %v1741 = vunpack.c.h.bf16 %v1716
    %v1742 = vunpack.c.l.bf16 %v1717
    %v1743 = vunpack.c.h.bf16 %v1717
    %v1744 = vunpack.c.l.bf16 %v1718
    %v1745 = vunpack.c.h.bf16 %v1718
    %v1746 = vunpack.c.l.bf16 %v1719
    %v1747 = vunpack.c.h.bf16 %v1719
    %v1748 = vunpack.c.l.bf16 %v1720
    %v1749 = vunpack.c.h.bf16 %v1720
    %v1750 = vunpack.c.l.bf16 %v1721
    %v1751 = vunpack.c.h.bf16 %v1721
    %v1752 = vunpack.c.l.bf16 %v1722
    %v1753 = vunpack.c.h.bf16 %v1722
    %v1754 = vunpack.c.l.bf16 %v1723
    %v1755 = vunpack.c.h.bf16 %v1723
    %v1756 = vunpack.c.l.bf16 %v1724
    %v1757 = vunpack.c.h.bf16 %v1724
    %v1758 = vunpack.c.l.bf16 %v1725
    %v1759 = vunpack.c.h.bf16 %v1725
    %v1760 = vunpack.c.l.bf16 %v1726
    %v1761 = vunpack.c.h.bf16 %v1726
    %v1762 = vunpack.c.l.bf16 %v1727
    %v1763 = vunpack.c.h.bf16 %v1727
    %v1764 = vunpack.c.l.bf16 %v1728
    %v1765 = vunpack.c.h.bf16 %v1728
    %v1766 = vunpack.c.l.bf16 %v1729
    %v1767 = vunpack.c.h.bf16 %v1729
    %v1768 = vunpack.c.l.bf16 %v1730
    %v1769 = vunpack.c.h.bf16 %v1730
    %v1770 = vunpack.c.l.bf16 %v1731
    %v1771 = vunpack.c.h.bf16 %v1731
    %v1772 = vunpack.c.l.bf16 %v1732
    %v1773 = vunpack.c.h.bf16 %v1732
    %v1774 = vunpack.c.l.bf16 %v1733
    %v1775 = vunpack.c.h.bf16 %v1733
    %v1777 = vsel %vm705, %v1735, 0
    %v1780 = vsel %vm705, %v1737, 0
    %v1783 = vsel %vm705, %v1739, 0
    %v1786 = vsel %vm705, %v1741, 0
    %v1789 = vsel %vm705, %v1743, 0
    %v1792 = vsel %vm705, %v1745, 0
    %v1795 = vsel %vm705, %v1747, 0
    %v1798 = vsel %vm705, %v1749, 0
    %v1801 = vsel %vm705, %v1751, 0
    %v1804 = vsel %vm705, %v1753, 0
    %v1807 = vsel %vm705, %v1755, 0
    %v1810 = vsel %vm705, %v1757, 0
    %v1813 = vsel %vm705, %v1759, 0
    %v1816 = vsel %vm705, %v1761, 0
    %v1819 = vsel %vm705, %v1763, 0
    %v1822 = vsel %vm705, %v1765, 0
    %v1825 = vsel %vm705, %v1767, 0
    %v1828 = vsel %vm705, %v1769, 0
    %v1831 = vsel %vm705, %v1771, 0
    %v1834 = vsel %vm705, %v1773, 0
    %v1837 = vsel %vm705, %v1775, 0
    %1839 = vmatprep.subr.mxu0 0.0
    %1840 = vmatpush1.msra.mxu0 %v626
    %1841 = vmatprep.subr.mxu0 0.0
    %1842 = vmatpush1.msra.mxu0 %v625
    %1843 = vmatprep.subr.mxu0 0.0
    %1844 = vmatpush1.msra.mxu0 %v624
    %1845 = vmatprep.subr.mxu0 0.0
    %1846 = vmatpush1.msra.mxu0 %v623
    %1847 = vmatprep.subr.mxu0 0.0
    %1848 = vmatpush1.msra.mxu0 %v622
    %1849 = vmatprep.subr.mxu0 0.0
    %1850 = vmatpush1.msra.mxu0 %v621
    %1851 = vmatprep.subr.mxu0 0.0
    %1852 = vmatpush1.msra.mxu0 %v620
    %1853 = vmatprep.subr.mxu0 0.0
    %1854 = vmatpush1.msra.mxu0 %v619
    %1855 = vmatprep.subr.mxu0 0.0
    %1856 = vmatpush1.msra.mxu0 %v618
    %1857 = vmatprep.subr.mxu0 0.0
    %1858 = vmatpush1.msra.mxu0 %v617
    %1859 = vmatprep.subr.mxu0 0.0
    %1860 = vmatpush1.msra.mxu0 %v616
    %1861 = vmatprep.subr.mxu0 0.0
    %1862 = vmatpush1.msra.mxu0 %v615
    %1863 = vmatprep.subr.mxu0 0.0
    %1864 = vmatpush1.msra.mxu0 %v614
    %1865 = vmatprep.subr.mxu0 0.0
    %1866 = vmatpush1.msra.mxu0 %v613
    %1867 = vmatprep.subr.mxu0 0.0
    %1868 = vmatpush1.msra.mxu0 %v612
    %1869 = vmatprep.subr.mxu0 0.0
    %1870 = vmatpush1.msra.mxu0 %v611
    %1871 = vmatprep.subr.mxu0 0.0
    %1872 = vmatpush2.msra.mxu0 0.0
    %1873 = vmatprep.subr.mxu0 0.0
    %1874 = vmatpush2.msra.mxu0 %v771
    %1875 = vmatprep.subr.mxu0 0.0
    %1876 = vmatpush2.msra.mxu0 %v640
    %1877 = vmatprep.subr.mxu0 0.0
    %1878 = vmatpush2.msra.mxu0 %v639
    %1879 = vmatprep.subr.mxu0 0.0
    %1880 = vmatpush2.msra.mxu0 %v638
    %1881 = vmatprep.subr.mxu0 0.0
    %1882 = vmatpush2.msra.mxu0 %v637
    %1883 = vmatprep.subr.mxu0 0.0
    %1884 = vmatpush2.msra.mxu0 %v636
    %1885 = vmatprep.subr.mxu0 0.0
    %1886 = vmatpush2.msra.mxu0 %v635
    %1887 = vmatprep.subr.mxu0 0.0
    %1888 = vmatpush2.msra.mxu0 %v634
    %1889 = vmatprep.subr.mxu0 0.0
    %1890 = vmatpush2.msra.mxu0 %v633
    %1891 = vmatprep.subr.mxu0 0.0
    %1892 = vmatpush2.msra.mxu0 %v632
    %1893 = vmatprep.subr.mxu0 0.0
    %1894 = vmatpush2.msra.mxu0 %v631
    %1895 = vmatprep.subr.mxu0 0.0
    %1896 = vmatpush2.msra.mxu0 %v630
    %1897 = vmatprep.subr.mxu0 0.0
    %1898 = vmatpush2.msra.mxu0 %v629
    %1899 = vmatprep.subr.mxu0 0.0
    %1900 = vmatpush2.msra.mxu0 %v628
    %1901 = vmatprep.subr.mxu0 0.0
    %1902 = vmatpush2.msra.mxu0 %v627
    %1903 = vmatprep.mubr.f32.mxu0 %v1777
    %1904 = vmatmul.mubr.f32.gmra.mxu0 %v1734
    %v1905 = vpop.f32.mrf.mxu0
    %v1906 = vadd.f32 0.0, %v1905
    %v1907 = vpop.f32.mrf.mxu0
    %1908 = vmatprep.mubr.f32.mxu0 %v1780
    %1909 = vmatmul.mubr.f32.gmra.mxu0 %v1736
    %v1910 = vpop.f32.mrf.mxu0
    %v1911 = vadd.f32 0.0, %v1910
    %v1912 = vpop.f32.mrf.mxu0
    %1913 = vmatprep.mubr.f32.mxu0 %v1783
    %1914 = vmatmul.mubr.f32.gmra.mxu0 %v1738
    %v1915 = vpop.f32.mrf.mxu0
    %v1916 = vadd.f32 0.0, %v1915
    %v1917 = vpop.f32.mrf.mxu0
    %1918 = vmatprep.mubr.f32.mxu0 %v1786
    %1919 = vmatmul.mubr.f32.gmra.mxu0 %v1740
    %v1920 = vpop.f32.mrf.mxu0
    %v1921 = vadd.f32 0.0, %v1920
    %v1922 = vpop.f32.mrf.mxu0
    %1923 = vmatprep.mubr.f32.mxu0 %v1789
    %1924 = vmatmul.mubr.f32.gmra.mxu0 %v1742
    %v1925 = vpop.f32.mrf.mxu0
    %v1926 = vadd.f32 0.0, %v1925
    %v1927 = vpop.f32.mrf.mxu0
    %1928 = vmatprep.mubr.f32.mxu0 %v1792
    %1929 = vmatmul.mubr.f32.gmra.mxu0 %v1744
    %v1930 = vpop.f32.mrf.mxu0
    %v1931 = vadd.f32 0.0, %v1930
    %v1932 = vpop.f32.mrf.mxu0
    %1933 = vmatprep.mubr.f32.mxu0 %v1795
    %1934 = vmatmul.mubr.f32.gmra.mxu0 %v1746
    %v1935 = vpop.f32.mrf.mxu0
    %v1936 = vadd.f32 0.0, %v1935
    %v1937 = vpop.f32.mrf.mxu0
    %1938 = vmatprep.mubr.f32.mxu0 %v1798
    %1939 = vmatmul.mubr.f32.gmra.mxu0 %v1748
    %v1940 = vpop.f32.mrf.mxu0
    %v1941 = vadd.f32 0.0, %v1940
    %v1942 = vpop.f32.mrf.mxu0
    %1943 = vmatprep.mubr.f32.mxu0 %v1801
    %1944 = vmatmul.mubr.f32.gmra.mxu0 %v1750
    %v1945 = vpop.f32.mrf.mxu0
    %v1946 = vadd.f32 0.0, %v1945
    %v1947 = vpop.f32.mrf.mxu0
    %1948 = vmatprep.mubr.f32.mxu0 %v1804
    %1949 = vmatmul.mubr.f32.gmra.mxu0 %v1752
    %v1950 = vpop.f32.mrf.mxu0
    %v1951 = vadd.f32 0.0, %v1950
    %v1952 = vpop.f32.mrf.mxu0
    %1953 = vmatprep.mubr.f32.mxu0 %v1807
    %1954 = vmatmul.mubr.f32.gmra.mxu0 %v1754
    %v1955 = vpop.f32.mrf.mxu0
    %v1956 = vadd.f32 0.0, %v1955
    %v1957 = vpop.f32.mrf.mxu0
    %1958 = vmatprep.mubr.f32.mxu0 %v1810
    %1959 = vmatmul.mubr.f32.gmra.mxu0 %v1756
    %v1960 = vpop.f32.mrf.mxu0
    %v1961 = vadd.f32 0.0, %v1960
    %v1962 = vpop.f32.mrf.mxu0
    %1963 = vmatprep.mubr.f32.mxu0 %v1813
    %1964 = vmatmul.mubr.f32.gmra.mxu0 %v1758
    %v1965 = vpop.f32.mrf.mxu0
    %v1966 = vadd.f32 0.0, %v1965
    %v1967 = vpop.f32.mrf.mxu0
    %1968 = vmatprep.mubr.f32.mxu0 %v1816
    %1969 = vmatmul.mubr.f32.gmra.mxu0 %v1760
    %v1970 = vpop.f32.mrf.mxu0
    %v1971 = vadd.f32 0.0, %v1970
    %v1972 = vpop.f32.mrf.mxu0
    %1973 = vmatprep.mubr.f32.mxu0 %v1819
    %1974 = vmatmul.mubr.f32.gmra.mxu0 %v1762
    %v1975 = vpop.f32.mrf.mxu0
    %v1976 = vadd.f32 0.0, %v1975
    %v1977 = vpop.f32.mrf.mxu0
    %1978 = vmatprep.mubr.f32.mxu0 %v1822
    %1979 = vmatmul.mubr.f32.gmra.mxu0 %v1764
    %v1980 = vpop.f32.mrf.mxu0
    %v1981 = vadd.f32 0.0, %v1980
    %v1982 = vpop.f32.mrf.mxu0
    %1983 = vmatprep.mubr.f32.mxu0 %v1825
    %1984 = vmatmul.mubr.f32.gmra.mxu0 %v1766
    %v1985 = vpop.f32.mrf.mxu0
    %v1986 = vadd.f32 0.0, %v1985
    %v1987 = vpop.f32.mrf.mxu0
    %1988 = vmatprep.mubr.f32.mxu0 %v1828
    %1989 = vmatmul.mubr.f32.gmra.mxu0 %v1768
    %v1990 = vpop.f32.mrf.mxu0
    %v1991 = vadd.f32 0.0, %v1990
    %v1992 = vpop.f32.mrf.mxu0
    %1993 = vmatprep.mubr.f32.mxu0 %v1831
    %1994 = vmatmul.mubr.f32.gmra.mxu0 %v1770
    %v1995 = vpop.f32.mrf.mxu0
    %v1996 = vadd.f32 0.0, %v1995
    %v1997 = vpop.f32.mrf.mxu0
    %1998 = vmatprep.mubr.f32.mxu0 %v1834
    %1999 = vmatmul.mubr.f32.gmra.mxu0 %v1772
    %v2000 = vpop.f32.mrf.mxu0
    %v2001 = vadd.f32 0.0, %v2000
    %v2002 = vpop.f32.mrf.mxu0
    %2003 = vmatprep.mubr.f32.mxu0 %v1837
    %2004 = vmatmul.mubr.f32.gmra.mxu0 %v1774
    %v2005 = vpop.f32.mrf.mxu0
    %v2006 = vadd.f32 0.0, %v2005
    %v2007 = vpop.f32.mrf.mxu0
    %2008 = vdwg.mxu0
    %s2009 = scalar_lea.vmem %s3, 32
    %v2010 = vld [vmem:[%s2009] sm:$0xff]
    %v2011 = vld [vmem:[%s2009 + $0x8] sm:$0xff]
    %v2013 = vsel %vm1245, %v1906, 0
    %v2016 = vsel %vm1245, %v1911, 0
    %v2019 = vsel %vm1245, %v1916, 0
    %v2022 = vsel %vm1245, %v1921, 0
    %v2025 = vsel %vm1245, %v1926, 0
    %v2028 = vsel %vm1245, %v1931, 0
    %v2031 = vsel %vm1245, %v1936, 0
    %v2034 = vsel %vm1245, %v1941, 0
    %v2037 = vsel %vm1245, %v1946, 0
    %v2040 = vsel %vm1245, %v1951, 0
    %v2043 = vsel %vm1245, %v1956, 0
    %v2046 = vsel %vm1245, %v1961, 0
    %v2049 = vsel %vm1245, %v1966, 0
    %v2052 = vsel %vm1245, %v1971, 0
    %v2055 = vsel %vm1245, %v1976, 0
    %v2058 = vsel %vm1245, %v1981, 0
    %v2061 = vsel %vm1245, %v1986, 0
    %v2064 = vsel %vm1245, %v1991, 0
    %v2067 = vsel %vm1245, %v1996, 0
    %v2070 = vsel %vm1245, %v2001, 0
    %v2073 = vsel %vm1245, %v2006, 0
    %2075 = vmatprep.subr.mxu0 0.0
    %2076 = vmatpush1.msra.mxu0 0.0
    %2077 = vmatprep.subr.mxu0 0.0
    %2078 = vmatpush1.msra.mxu0 0.0
    %2079 = vmatprep.subr.mxu0 0.0
    %2080 = vmatpush1.msra.mxu0 0.0
    %2081 = vmatprep.subr.mxu0 0.0
    %2082 = vmatpush1.msra.mxu0 0.0
    %2083 = vmatprep.subr.mxu0 0.0
    %2084 = vmatpush1.msra.mxu0 0.0
    %2085 = vmatprep.subr.mxu0 0.0
    %2086 = vmatpush1.msra.mxu0 0.0
    %2087 = vmatprep.subr.mxu0 0.0
    %2088 = vmatpush1.msra.mxu0 0.0
    %2089 = vmatprep.subr.mxu0 0.0
    %2090 = vmatpush1.msra.mxu0 0.0
    %2091 = vmatprep.subr.mxu0 0.0
    %2092 = vmatpush1.msra.mxu0 0.0
    %2093 = vmatprep.subr.mxu0 0.0
    %2094 = vmatpush1.msra.mxu0 0.0
    %2095 = vmatprep.subr.mxu0 0.0
    %2096 = vmatpush1.msra.mxu0 0.0
    %2097 = vmatprep.subr.mxu0 0.0
    %2098 = vmatpush1.msra.mxu0 0.0
    %2099 = vmatprep.subr.mxu0 0.0
    %2100 = vmatpush1.msra.mxu0 0.0
    %2101 = vmatprep.subr.mxu0 0.0
    %2102 = vmatpush1.msra.mxu0 0.0
    %2103 = vmatprep.subr.mxu0 0.0
    %2104 = vmatpush1.msra.mxu0 %v2011
    %2105 = vmatprep.subr.mxu0 0.0
    %2106 = vmatpush1.msra.mxu0 %v2010
    %2107 = vmatprep.subr.mxu0 0.0
    %2108 = vmatpush2.msra.mxu0 0.0
    %2109 = vmatprep.subr.mxu0 0.0
    %2110 = vmatpush2.msra.mxu0 0.0
    %2111 = vmatprep.subr.mxu0 0.0
    %2112 = vmatpush2.msra.mxu0 0.0
    %2113 = vmatprep.subr.mxu0 0.0
    %2114 = vmatpush2.msra.mxu0 0.0
    %2115 = vmatprep.subr.mxu0 0.0
    %2116 = vmatpush2.msra.mxu0 0.0
    %2117 = vmatprep.subr.mxu0 0.0
    %2118 = vmatpush2.msra.mxu0 0.0
    %2119 = vmatprep.subr.mxu0 0.0
    %2120 = vmatpush2.msra.mxu0 0.0
    %2121 = vmatprep.subr.mxu0 0.0
    %2122 = vmatpush2.msra.mxu0 0.0
    %2123 = vmatprep.subr.mxu0 0.0
    %2124 = vmatpush2.msra.mxu0 0.0
    %2125 = vmatprep.subr.mxu0 0.0
    %2126 = vmatpush2.msra.mxu0 0.0
    %2127 = vmatprep.subr.mxu0 0.0
    %2128 = vmatpush2.msra.mxu0 0.0
    %2129 = vmatprep.subr.mxu0 0.0
    %2130 = vmatpush2.msra.mxu0 0.0
    %2131 = vmatprep.subr.mxu0 0.0
    %2132 = vmatpush2.msra.mxu0 0.0
    %2133 = vmatprep.subr.mxu0 0.0
    %2134 = vmatpush2.msra.mxu0 0.0
    %2135 = vmatprep.subr.mxu0 0.0
    %2136 = vmatpush2.msra.mxu0 0.0
    %2137 = vmatprep.subr.mxu0 0.0
    %2138 = vmatpush2.msra.mxu0 0.0
    %2139 = vmatprep.mubr.f32.mxu0 0.0
    %2140 = vmatmul.mubr.f32.gmra.mxu0 %v2013
    %v2141 = vpop.f32.mrf.mxu0
    %v2142 = vadd.f32 0.0, %v2141
    %v2143 = vpop.f32.mrf.mxu0
    %2144 = vmatprep.mubr.f32.mxu0 0.0
    %2145 = vmatmul.mubr.f32.gmra.mxu0 %v2016
    %v2146 = vpop.f32.mrf.mxu0
    %v2147 = vadd.f32 0.0, %v2146
    %v2148 = vpop.f32.mrf.mxu0
    %2149 = vmatprep.mubr.f32.mxu0 0.0
    %2150 = vmatmul.mubr.f32.gmra.mxu0 %v2019
    %v2151 = vpop.f32.mrf.mxu0
    %v2152 = vadd.f32 0.0, %v2151
    %v2153 = vpop.f32.mrf.mxu0
    %2154 = vmatprep.mubr.f32.mxu0 0.0
    %2155 = vmatmul.mubr.f32.gmra.mxu0 %v2022
    %v2156 = vpop.f32.mrf.mxu0
    %v2157 = vadd.f32 0.0, %v2156
    %v2158 = vpop.f32.mrf.mxu0
    %2159 = vmatprep.mubr.f32.mxu0 0.0
    %2160 = vmatmul.mubr.f32.gmra.mxu0 %v2025
    %v2161 = vpop.f32.mrf.mxu0
    %v2162 = vadd.f32 0.0, %v2161
    %v2163 = vpop.f32.mrf.mxu0
    %2164 = vmatprep.mubr.f32.mxu0 0.0
    %2165 = vmatmul.mubr.f32.gmra.mxu0 %v2028
    %v2166 = vpop.f32.mrf.mxu0
    %v2167 = vadd.f32 0.0, %v2166
    %v2168 = vpop.f32.mrf.mxu0
    %2169 = vmatprep.mubr.f32.mxu0 0.0
    %2170 = vmatmul.mubr.f32.gmra.mxu0 %v2031
    %v2171 = vpop.f32.mrf.mxu0
    %v2172 = vadd.f32 0.0, %v2171
    %v2173 = vpop.f32.mrf.mxu0
    %2174 = vmatprep.mubr.f32.mxu0 0.0
    %2175 = vmatmul.mubr.f32.gmra.mxu0 %v2034
    %v2176 = vpop.f32.mrf.mxu0
    %v2177 = vadd.f32 0.0, %v2176
    %v2178 = vpop.f32.mrf.mxu0
    %2179 = vmatprep.mubr.f32.mxu0 0.0
    %2180 = vmatmul.mubr.f32.gmra.mxu0 %v2037
    %v2181 = vpop.f32.mrf.mxu0
    %v2182 = vadd.f32 0.0, %v2181
    %v2183 = vpop.f32.mrf.mxu0
    %2184 = vmatprep.mubr.f32.mxu0 0.0
    %2185 = vmatmul.mubr.f32.gmra.mxu0 %v2040
    %v2186 = vpop.f32.mrf.mxu0
    %v2187 = vadd.f32 0.0, %v2186
    %v2188 = vpop.f32.mrf.mxu0
    %2189 = vmatprep.mubr.f32.mxu0 0.0
    %2190 = vmatmul.mubr.f32.gmra.mxu0 %v2043
    %v2191 = vpop.f32.mrf.mxu0
    %v2192 = vadd.f32 0.0, %v2191
    %v2193 = vpop.f32.mrf.mxu0
    %2194 = vmatprep.mubr.f32.mxu0 0.0
    %2195 = vmatmul.mubr.f32.gmra.mxu0 %v2046
    %v2196 = vpop.f32.mrf.mxu0
    %v2197 = vadd.f32 0.0, %v2196
    %v2198 = vpop.f32.mrf.mxu0
    %2199 = vmatprep.mubr.f32.mxu0 0.0
    %2200 = vmatmul.mubr.f32.gmra.mxu0 %v2049
    %v2201 = vpop.f32.mrf.mxu0
    %v2202 = vadd.f32 0.0, %v2201
    %v2203 = vpop.f32.mrf.mxu0
    %2204 = vmatprep.mubr.f32.mxu0 0.0
    %2205 = vmatmul.mubr.f32.gmra.mxu0 %v2052
    %v2206 = vpop.f32.mrf.mxu0
    %v2207 = vadd.f32 0.0, %v2206
    %v2208 = vpop.f32.mrf.mxu0
    %2209 = vmatprep.mubr.f32.mxu0 0.0
    %2210 = vmatmul.mubr.f32.gmra.mxu0 %v2055
    %v2211 = vpop.f32.mrf.mxu0
    %v2212 = vadd.f32 0.0, %v2211
    %v2213 = vpop.f32.mrf.mxu0
    %2214 = vmatprep.mubr.f32.mxu0 0.0
    %2215 = vmatmul.mubr.f32.gmra.mxu0 %v2058
    %v2216 = vpop.f32.mrf.mxu0
    %v2217 = vadd.f32 0.0, %v2216
    %v2218 = vpop.f32.mrf.mxu0
    %2219 = vmatprep.mubr.f32.mxu0 0.0
    %2220 = vmatmul.mubr.f32.gmra.mxu0 %v2061
    %v2221 = vpop.f32.mrf.mxu0
    %v2222 = vadd.f32 0.0, %v2221
    %v2223 = vpop.f32.mrf.mxu0
    %2224 = vmatprep.mubr.f32.mxu0 0.0
    %2225 = vmatmul.mubr.f32.gmra.mxu0 %v2064
    %v2226 = vpop.f32.mrf.mxu0
    %v2227 = vadd.f32 0.0, %v2226
    %v2228 = vpop.f32.mrf.mxu0
    %2229 = vmatprep.mubr.f32.mxu0 0.0
    %2230 = vmatmul.mubr.f32.gmra.mxu0 %v2067
    %v2231 = vpop.f32.mrf.mxu0
    %v2232 = vadd.f32 0.0, %v2231
    %v2233 = vpop.f32.mrf.mxu0
    %2234 = vmatprep.mubr.f32.mxu0 0.0
    %2235 = vmatmul.mubr.f32.gmra.mxu0 %v2070
    %v2236 = vpop.f32.mrf.mxu0
    %v2237 = vadd.f32 0.0, %v2236
    %v2238 = vpop.f32.mrf.mxu0
    %2239 = vmatprep.mubr.f32.mxu0 0.0
    %2240 = vmatmul.mubr.f32.gmra.mxu0 %v2073
    %v2241 = vpop.f32.mrf.mxu0
    %v2242 = vadd.f32 0.0, %v2241
    %v2243 = vpop.f32.mrf.mxu0
    %2244 = vdwg.mxu0
    %v2245 = vadd.f32 %v1609, %v2142
    %v2246 = vadd.f32 %v1614, %v2147
    %v2247 = vadd.f32 %v1619, %v2152
    %v2248 = vadd.f32 %v1624, %v2157
    %v2249 = vadd.f32 %v1629, %v2162
    %v2250 = vadd.f32 %v1634, %v2167
    %v2251 = vadd.f32 %v1639, %v2172
    %v2252 = vadd.f32 %v1644, %v2177
    %v2253 = vadd.f32 %v1649, %v2182
    %v2254 = vadd.f32 %v1654, %v2187
    %v2255 = vadd.f32 %v1659, %v2192
    %v2256 = vadd.f32 %v1664, %v2197
    %v2257 = vadd.f32 %v1669, %v2202
    %v2258 = vadd.f32 %v1674, %v2207
    %v2259 = vadd.f32 %v1679, %v2212
    %v2260 = vadd.f32 %v1684, %v2217
    %v2261 = vadd.f32 %v1689, %v2222
    %v2262 = vadd.f32 %v1694, %v2227
    %v2263 = vadd.f32 %v1699, %v2232
    %v2264 = vadd.f32 %v1704, %v2237
    %v2265 = vadd.f32 %v1709, %v2242
    %s2266 = scalar_lea.vmem %s2, 504
    %v2267 = vld [vmem:[%s2266] sm:$0xff]
    %v2268 = vld [vmem:[%s2266 + $0x8] sm:$0xff]
    %v2269 = vld [vmem:[%s2266 + $0x10] sm:$0xff]
    %v2270 = vld [vmem:[%s2266 + $0x18] sm:$0xff]
    %v2271 = vld [vmem:[%s2266 + $0x20] sm:$0xff]
    %v2272 = vld [vmem:[%s2266 + $0x28] sm:$0xff]
    %v2273 = vld [vmem:[%s2266 + $0x30] sm:$0xff]
    %v2274 = vld [vmem:[%s2266 + $0x38] sm:$0xff]
    %v2275 = vld [vmem:[%s2266 + $0x40] sm:$0xff]
    %v2276 = vld [vmem:[%s2266 + $0x48] sm:$0xff]
    %v2277 = vld [vmem:[%s2266 + $0x50] sm:$0xff]
    %v2278 = vld [vmem:[%s2266 + $0x58] sm:$0xff]
    %v2279 = vld [vmem:[%s2266 + $0x60] sm:$0xff]
    %v2280 = vld [vmem:[%s2266 + $0x68] sm:$0xff]
    %v2281 = vld [vmem:[%s2266 + $0x70] sm:$0xff]
    %v2282 = vld [vmem:[%s2266 + $0x78] sm:$0xff]
    %v2283 = vld [vmem:[%s2266 + $0x80] sm:$0xff]
    %v2284 = vld [vmem:[%s2266 + $0x88] sm:$0xff]
    %v2285 = vld [vmem:[%s2266 + $0x90] sm:$0xff]
    %v2286 = vld [vmem:[%s2266 + $0x98] sm:$0xff]
    %v2287 = vld [vmem:[%s2266 + $0xa0] sm:$0x11]
    %v2288 = vunpack.c.l.bf16 %v2267
    %v2289 = vunpack.c.h.bf16 %v2267
    %v2290 = vunpack.c.l.bf16 %v2268
    %v2291 = vunpack.c.h.bf16 %v2268
    %v2292 = vunpack.c.l.bf16 %v2269
    %v2293 = vunpack.c.h.bf16 %v2269
    %v2294 = vunpack.c.l.bf16 %v2270
    %v2295 = vunpack.c.h.bf16 %v2270
    %v2296 = vunpack.c.l.bf16 %v2271
    %v2297 = vunpack.c.h.bf16 %v2271
    %v2298 = vunpack.c.l.bf16 %v2272
    %v2299 = vunpack.c.h.bf16 %v2272
    %v2300 = vunpack.c.l.bf16 %v2273
    %v2301 = vunpack.c.h.bf16 %v2273
    %v2302 = vunpack.c.l.bf16 %v2274
    %v2303 = vunpack.c.h.bf16 %v2274
    %v2304 = vunpack.c.l.bf16 %v2275
    %v2305 = vunpack.c.h.bf16 %v2275
    %v2306 = vunpack.c.l.bf16 %v2276
    %v2307 = vunpack.c.h.bf16 %v2276
    %v2308 = vunpack.c.l.bf16 %v2277
    %v2309 = vunpack.c.h.bf16 %v2277
    %v2310 = vunpack.c.l.bf16 %v2278
    %v2311 = vunpack.c.h.bf16 %v2278
    %v2312 = vunpack.c.l.bf16 %v2279
    %v2313 = vunpack.c.h.bf16 %v2279
    %v2314 = vunpack.c.l.bf16 %v2280
    %v2315 = vunpack.c.h.bf16 %v2280
    %v2316 = vunpack.c.l.bf16 %v2281
    %v2317 = vunpack.c.h.bf16 %v2281
    %v2318 = vunpack.c.l.bf16 %v2282
    %v2319 = vunpack.c.h.bf16 %v2282
    %v2320 = vunpack.c.l.bf16 %v2283
    %v2321 = vunpack.c.h.bf16 %v2283
    %v2322 = vunpack.c.l.bf16 %v2284
    %v2323 = vunpack.c.h.bf16 %v2284
    %v2324 = vunpack.c.l.bf16 %v2285
    %v2325 = vunpack.c.h.bf16 %v2285
    %v2326 = vunpack.c.l.bf16 %v2286
    %v2327 = vunpack.c.h.bf16 %v2286
    %v2328 = vunpack.c.l.bf16 %v2287
    %v2329 = vunpack.c.h.bf16 %v2287
    %v2331 = vsel %vm705, %v2289, 0
    %v2334 = vsel %vm705, %v2291, 0
    %v2337 = vsel %vm705, %v2293, 0
    %v2340 = vsel %vm705, %v2295, 0
    %v2343 = vsel %vm705, %v2297, 0
    %v2346 = vsel %vm705, %v2299, 0
    %v2349 = vsel %vm705, %v2301, 0
    %v2352 = vsel %vm705, %v2303, 0
    %v2355 = vsel %vm705, %v2305, 0
    %v2358 = vsel %vm705, %v2307, 0
    %v2361 = vsel %vm705, %v2309, 0
    %v2364 = vsel %vm705, %v2311, 0
    %v2367 = vsel %vm705, %v2313, 0
    %v2370 = vsel %vm705, %v2315, 0
    %v2373 = vsel %vm705, %v2317, 0
    %v2376 = vsel %vm705, %v2319, 0
    %v2379 = vsel %vm705, %v2321, 0
    %v2382 = vsel %vm705, %v2323, 0
    %v2385 = vsel %vm705, %v2325, 0
    %v2388 = vsel %vm705, %v2327, 0
    %v2391 = vsel %vm705, %v2329, 0
    %2393 = vmatprep.subr.mxu0 0.0
    %2394 = vmatpush1.msra.mxu0 %v626
    %2395 = vmatprep.subr.mxu0 0.0
    %2396 = vmatpush1.msra.mxu0 %v625
    %2397 = vmatprep.subr.mxu0 0.0
    %2398 = vmatpush1.msra.mxu0 %v624
    %2399 = vmatprep.subr.mxu0 0.0
    %2400 = vmatpush1.msra.mxu0 %v623
    %2401 = vmatprep.subr.mxu0 0.0
    %2402 = vmatpush1.msra.mxu0 %v622
    %2403 = vmatprep.subr.mxu0 0.0
    %2404 = vmatpush1.msra.mxu0 %v621
    %2405 = vmatprep.subr.mxu0 0.0
    %2406 = vmatpush1.msra.mxu0 %v620
    %2407 = vmatprep.subr.mxu0 0.0
    %2408 = vmatpush1.msra.mxu0 %v619
    %2409 = vmatprep.subr.mxu0 0.0
    %2410 = vmatpush1.msra.mxu0 %v618
    %2411 = vmatprep.subr.mxu0 0.0
    %2412 = vmatpush1.msra.mxu0 %v617
    %2413 = vmatprep.subr.mxu0 0.0
    %2414 = vmatpush1.msra.mxu0 %v616
    %2415 = vmatprep.subr.mxu0 0.0
    %2416 = vmatpush1.msra.mxu0 %v615
    %2417 = vmatprep.subr.mxu0 0.0
    %2418 = vmatpush1.msra.mxu0 %v614
    %2419 = vmatprep.subr.mxu0 0.0
    %2420 = vmatpush1.msra.mxu0 %v613
    %2421 = vmatprep.subr.mxu0 0.0
    %2422 = vmatpush1.msra.mxu0 %v612
    %2423 = vmatprep.subr.mxu0 0.0
    %2424 = vmatpush1.msra.mxu0 %v611
    %2425 = vmatprep.subr.mxu0 0.0
    %2426 = vmatpush2.msra.mxu0 0.0
    %2427 = vmatprep.subr.mxu0 0.0
    %2428 = vmatpush2.msra.mxu0 %v771
    %2429 = vmatprep.subr.mxu0 0.0
    %2430 = vmatpush2.msra.mxu0 %v640
    %2431 = vmatprep.subr.mxu0 0.0
    %2432 = vmatpush2.msra.mxu0 %v639
    %2433 = vmatprep.subr.mxu0 0.0
    %2434 = vmatpush2.msra.mxu0 %v638
    %2435 = vmatprep.subr.mxu0 0.0
    %2436 = vmatpush2.msra.mxu0 %v637
    %2437 = vmatprep.subr.mxu0 0.0
    %2438 = vmatpush2.msra.mxu0 %v636
    %2439 = vmatprep.subr.mxu0 0.0
    %2440 = vmatpush2.msra.mxu0 %v635
    %2441 = vmatprep.subr.mxu0 0.0
    %2442 = vmatpush2.msra.mxu0 %v634
    %2443 = vmatprep.subr.mxu0 0.0
    %2444 = vmatpush2.msra.mxu0 %v633
    %2445 = vmatprep.subr.mxu0 0.0
    %2446 = vmatpush2.msra.mxu0 %v632
    %2447 = vmatprep.subr.mxu0 0.0
    %2448 = vmatpush2.msra.mxu0 %v631
    %2449 = vmatprep.subr.mxu0 0.0
    %2450 = vmatpush2.msra.mxu0 %v630
    %2451 = vmatprep.subr.mxu0 0.0
    %2452 = vmatpush2.msra.mxu0 %v629
    %2453 = vmatprep.subr.mxu0 0.0
    %2454 = vmatpush2.msra.mxu0 %v628
    %2455 = vmatprep.subr.mxu0 0.0
    %2456 = vmatpush2.msra.mxu0 %v627
    %2457 = vmatprep.mubr.f32.mxu0 %v2331
    %2458 = vmatmul.mubr.f32.gmra.mxu0 %v2288
    %v2459 = vpop.f32.mrf.mxu0
    %v2460 = vadd.f32 0.0, %v2459
    %v2461 = vpop.f32.mrf.mxu0
    %2462 = vmatprep.mubr.f32.mxu0 %v2334
    %2463 = vmatmul.mubr.f32.gmra.mxu0 %v2290
    %v2464 = vpop.f32.mrf.mxu0
    %v2465 = vadd.f32 0.0, %v2464
    %v2466 = vpop.f32.mrf.mxu0
    %2467 = vmatprep.mubr.f32.mxu0 %v2337
    %2468 = vmatmul.mubr.f32.gmra.mxu0 %v2292
    %v2469 = vpop.f32.mrf.mxu0
    %v2470 = vadd.f32 0.0, %v2469
    %v2471 = vpop.f32.mrf.mxu0
    %2472 = vmatprep.mubr.f32.mxu0 %v2340
    %2473 = vmatmul.mubr.f32.gmra.mxu0 %v2294
    %v2474 = vpop.f32.mrf.mxu0
    %v2475 = vadd.f32 0.0, %v2474
    %v2476 = vpop.f32.mrf.mxu0
    %2477 = vmatprep.mubr.f32.mxu0 %v2343
    %2478 = vmatmul.mubr.f32.gmra.mxu0 %v2296
    %v2479 = vpop.f32.mrf.mxu0
    %v2480 = vadd.f32 0.0, %v2479
    %v2481 = vpop.f32.mrf.mxu0
    %2482 = vmatprep.mubr.f32.mxu0 %v2346
    %2483 = vmatmul.mubr.f32.gmra.mxu0 %v2298
    %v2484 = vpop.f32.mrf.mxu0
    %v2485 = vadd.f32 0.0, %v2484
    %v2486 = vpop.f32.mrf.mxu0
    %2487 = vmatprep.mubr.f32.mxu0 %v2349
    %2488 = vmatmul.mubr.f32.gmra.mxu0 %v2300
    %v2489 = vpop.f32.mrf.mxu0
    %v2490 = vadd.f32 0.0, %v2489
    %v2491 = vpop.f32.mrf.mxu0
    %2492 = vmatprep.mubr.f32.mxu0 %v2352
    %2493 = vmatmul.mubr.f32.gmra.mxu0 %v2302
    %v2494 = vpop.f32.mrf.mxu0
    %v2495 = vadd.f32 0.0, %v2494
    %v2496 = vpop.f32.mrf.mxu0
    %2497 = vmatprep.mubr.f32.mxu0 %v2355
    %2498 = vmatmul.mubr.f32.gmra.mxu0 %v2304
    %v2499 = vpop.f32.mrf.mxu0
    %v2500 = vadd.f32 0.0, %v2499
    %v2501 = vpop.f32.mrf.mxu0
    %2502 = vmatprep.mubr.f32.mxu0 %v2358
    %2503 = vmatmul.mubr.f32.gmra.mxu0 %v2306
    %v2504 = vpop.f32.mrf.mxu0
    %v2505 = vadd.f32 0.0, %v2504
    %v2506 = vpop.f32.mrf.mxu0
    %2507 = vmatprep.mubr.f32.mxu0 %v2361
    %2508 = vmatmul.mubr.f32.gmra.mxu0 %v2308
    %v2509 = vpop.f32.mrf.mxu0
    %v2510 = vadd.f32 0.0, %v2509
    %v2511 = vpop.f32.mrf.mxu0
    %2512 = vmatprep.mubr.f32.mxu0 %v2364
    %2513 = vmatmul.mubr.f32.gmra.mxu0 %v2310
    %v2514 = vpop.f32.mrf.mxu0
    %v2515 = vadd.f32 0.0, %v2514
    %v2516 = vpop.f32.mrf.mxu0
    %2517 = vmatprep.mubr.f32.mxu0 %v2367
    %2518 = vmatmul.mubr.f32.gmra.mxu0 %v2312
    %v2519 = vpop.f32.mrf.mxu0
    %v2520 = vadd.f32 0.0, %v2519
    %v2521 = vpop.f32.mrf.mxu0
    %2522 = vmatprep.mubr.f32.mxu0 %v2370
    %2523 = vmatmul.mubr.f32.gmra.mxu0 %v2314
    %v2524 = vpop.f32.mrf.mxu0
    %v2525 = vadd.f32 0.0, %v2524
    %v2526 = vpop.f32.mrf.mxu0
    %2527 = vmatprep.mubr.f32.mxu0 %v2373
    %2528 = vmatmul.mubr.f32.gmra.mxu0 %v2316
    %v2529 = vpop.f32.mrf.mxu0
    %v2530 = vadd.f32 0.0, %v2529
    %v2531 = vpop.f32.mrf.mxu0
    %2532 = vmatprep.mubr.f32.mxu0 %v2376
    %2533 = vmatmul.mubr.f32.gmra.mxu0 %v2318
    %v2534 = vpop.f32.mrf.mxu0
    %v2535 = vadd.f32 0.0, %v2534
    %v2536 = vpop.f32.mrf.mxu0
    %2537 = vmatprep.mubr.f32.mxu0 %v2379
    %2538 = vmatmul.mubr.f32.gmra.mxu0 %v2320
    %v2539 = vpop.f32.mrf.mxu0
    %v2540 = vadd.f32 0.0, %v2539
    %v2541 = vpop.f32.mrf.mxu0
    %2542 = vmatprep.mubr.f32.mxu0 %v2382
    %2543 = vmatmul.mubr.f32.gmra.mxu0 %v2322
    %v2544 = vpop.f32.mrf.mxu0
    %v2545 = vadd.f32 0.0, %v2544
    %v2546 = vpop.f32.mrf.mxu0
    %2547 = vmatprep.mubr.f32.mxu0 %v2385
    %2548 = vmatmul.mubr.f32.gmra.mxu0 %v2324
    %v2549 = vpop.f32.mrf.mxu0
    %v2550 = vadd.f32 0.0, %v2549
    %v2551 = vpop.f32.mrf.mxu0
    %2552 = vmatprep.mubr.f32.mxu0 %v2388
    %2553 = vmatmul.mubr.f32.gmra.mxu0 %v2326
    %v2554 = vpop.f32.mrf.mxu0
    %v2555 = vadd.f32 0.0, %v2554
    %v2556 = vpop.f32.mrf.mxu0
    %2557 = vmatprep.mubr.f32.mxu0 %v2391
    %2558 = vmatmul.mubr.f32.gmra.mxu0 %v2328
    %v2559 = vpop.f32.mrf.mxu0
    %v2560 = vadd.f32 0.0, %v2559
    %v2561 = vpop.f32.mrf.mxu0
    %2562 = vdwg.mxu0
    %s2563 = scalar_lea.vmem %s3, 48
    %v2564 = vld [vmem:[%s2563] sm:$0xff]
    %v2565 = vld [vmem:[%s2563 + $0x8] sm:$0xff]
    %v2567 = vsel %vm1245, %v2460, 0
    %v2570 = vsel %vm1245, %v2465, 0
    %v2573 = vsel %vm1245, %v2470, 0
    %v2576 = vsel %vm1245, %v2475, 0
    %v2579 = vsel %vm1245, %v2480, 0
    %v2582 = vsel %vm1245, %v2485, 0
    %v2585 = vsel %vm1245, %v2490, 0
    %v2588 = vsel %vm1245, %v2495, 0
    %v2591 = vsel %vm1245, %v2500, 0
    %v2594 = vsel %vm1245, %v2505, 0
    %v2597 = vsel %vm1245, %v2510, 0
    %v2600 = vsel %vm1245, %v2515, 0
    %v2603 = vsel %vm1245, %v2520, 0
    %v2606 = vsel %vm1245, %v2525, 0
    %v2609 = vsel %vm1245, %v2530, 0
    %v2612 = vsel %vm1245, %v2535, 0
    %v2615 = vsel %vm1245, %v2540, 0
    %v2618 = vsel %vm1245, %v2545, 0
    %v2621 = vsel %vm1245, %v2550, 0
    %v2624 = vsel %vm1245, %v2555, 0
    %v2627 = vsel %vm1245, %v2560, 0
    %2629 = vmatprep.subr.mxu0 0.0
    %2630 = vmatpush1.msra.mxu0 0.0
    %2631 = vmatprep.subr.mxu0 0.0
    %2632 = vmatpush1.msra.mxu0 0.0
    %2633 = vmatprep.subr.mxu0 0.0
    %2634 = vmatpush1.msra.mxu0 0.0
    %2635 = vmatprep.subr.mxu0 0.0
    %2636 = vmatpush1.msra.mxu0 0.0
    %2637 = vmatprep.subr.mxu0 0.0
    %2638 = vmatpush1.msra.mxu0 0.0
    %2639 = vmatprep.subr.mxu0 0.0
    %2640 = vmatpush1.msra.mxu0 0.0
    %2641 = vmatprep.subr.mxu0 0.0
    %2642 = vmatpush1.msra.mxu0 0.0
    %2643 = vmatprep.subr.mxu0 0.0
    %2644 = vmatpush1.msra.mxu0 0.0
    %2645 = vmatprep.subr.mxu0 0.0
    %2646 = vmatpush1.msra.mxu0 0.0
    %2647 = vmatprep.subr.mxu0 0.0
    %2648 = vmatpush1.msra.mxu0 0.0
    %2649 = vmatprep.subr.mxu0 0.0
    %2650 = vmatpush1.msra.mxu0 0.0
    %2651 = vmatprep.subr.mxu0 0.0
    %2652 = vmatpush1.msra.mxu0 0.0
    %2653 = vmatprep.subr.mxu0 0.0
    %2654 = vmatpush1.msra.mxu0 0.0
    %2655 = vmatprep.subr.mxu0 0.0
    %2656 = vmatpush1.msra.mxu0 0.0
    %2657 = vmatprep.subr.mxu0 0.0
    %2658 = vmatpush1.msra.mxu0 %v2565
    %2659 = vmatprep.subr.mxu0 0.0
    %2660 = vmatpush1.msra.mxu0 %v2564
    %2661 = vmatprep.subr.mxu0 0.0
    %2662 = vmatpush2.msra.mxu0 0.0
    %2663 = vmatprep.subr.mxu0 0.0
    %2664 = vmatpush2.msra.mxu0 0.0
    %2665 = vmatprep.subr.mxu0 0.0
    %2666 = vmatpush2.msra.mxu0 0.0
    %2667 = vmatprep.subr.mxu0 0.0
    %2668 = vmatpush2.msra.mxu0 0.0
    %2669 = vmatprep.subr.mxu0 0.0
    %2670 = vmatpush2.msra.mxu0 0.0
    %2671 = vmatprep.subr.mxu0 0.0
    %2672 = vmatpush2.msra.mxu0 0.0
    %2673 = vmatprep.subr.mxu0 0.0
    %2674 = vmatpush2.msra.mxu0 0.0
    %2675 = vmatprep.subr.mxu0 0.0
    %2676 = vmatpush2.msra.mxu0 0.0
    %2677 = vmatprep.subr.mxu0 0.0
    %2678 = vmatpush2.msra.mxu0 0.0
    %2679 = vmatprep.subr.mxu0 0.0
    %2680 = vmatpush2.msra.mxu0 0.0
    %2681 = vmatprep.subr.mxu0 0.0
    %2682 = vmatpush2.msra.mxu0 0.0
    %2683 = vmatprep.subr.mxu0 0.0
    %2684 = vmatpush2.msra.mxu0 0.0
    %2685 = vmatprep.subr.mxu0 0.0
    %2686 = vmatpush2.msra.mxu0 0.0
    %2687 = vmatprep.subr.mxu0 0.0
    %2688 = vmatpush2.msra.mxu0 0.0
    %2689 = vmatprep.subr.mxu0 0.0
    %2690 = vmatpush2.msra.mxu0 0.0
    %2691 = vmatprep.subr.mxu0 0.0
    %2692 = vmatpush2.msra.mxu0 0.0
    %2693 = vmatprep.mubr.f32.mxu0 0.0
    %2694 = vmatmul.mubr.f32.gmra.mxu0 %v2567
    %v2695 = vpop.f32.mrf.mxu0
    %v2696 = vadd.f32 0.0, %v2695
    %v2697 = vpop.f32.mrf.mxu0
    %2698 = vmatprep.mubr.f32.mxu0 0.0
    %2699 = vmatmul.mubr.f32.gmra.mxu0 %v2570
    %v2700 = vpop.f32.mrf.mxu0
    %v2701 = vadd.f32 0.0, %v2700
    %v2702 = vpop.f32.mrf.mxu0
    %2703 = vmatprep.mubr.f32.mxu0 0.0
    %2704 = vmatmul.mubr.f32.gmra.mxu0 %v2573
    %v2705 = vpop.f32.mrf.mxu0
    %v2706 = vadd.f32 0.0, %v2705
    %v2707 = vpop.f32.mrf.mxu0
    %2708 = vmatprep.mubr.f32.mxu0 0.0
    %2709 = vmatmul.mubr.f32.gmra.mxu0 %v2576
    %v2710 = vpop.f32.mrf.mxu0
    %v2711 = vadd.f32 0.0, %v2710
    %v2712 = vpop.f32.mrf.mxu0
    %2713 = vmatprep.mubr.f32.mxu0 0.0
    %2714 = vmatmul.mubr.f32.gmra.mxu0 %v2579
    %v2715 = vpop.f32.mrf.mxu0
    %v2716 = vadd.f32 0.0, %v2715
    %v2717 = vpop.f32.mrf.mxu0
    %2718 = vmatprep.mubr.f32.mxu0 0.0
    %2719 = vmatmul.mubr.f32.gmra.mxu0 %v2582
    %v2720 = vpop.f32.mrf.mxu0
    %v2721 = vadd.f32 0.0, %v2720
    %v2722 = vpop.f32.mrf.mxu0
    %2723 = vmatprep.mubr.f32.mxu0 0.0
    %2724 = vmatmul.mubr.f32.gmra.mxu0 %v2585
    %v2725 = vpop.f32.mrf.mxu0
    %v2726 = vadd.f32 0.0, %v2725
    %v2727 = vpop.f32.mrf.mxu0
    %2728 = vmatprep.mubr.f32.mxu0 0.0
    %2729 = vmatmul.mubr.f32.gmra.mxu0 %v2588
    %v2730 = vpop.f32.mrf.mxu0
    %v2731 = vadd.f32 0.0, %v2730
    %v2732 = vpop.f32.mrf.mxu0
    %2733 = vmatprep.mubr.f32.mxu0 0.0
    %2734 = vmatmul.mubr.f32.gmra.mxu0 %v2591
    %v2735 = vpop.f32.mrf.mxu0
    %v2736 = vadd.f32 0.0, %v2735
    %v2737 = vpop.f32.mrf.mxu0
    %2738 = vmatprep.mubr.f32.mxu0 0.0
    %2739 = vmatmul.mubr.f32.gmra.mxu0 %v2594
    %v2740 = vpop.f32.mrf.mxu0
    %v2741 = vadd.f32 0.0, %v2740
    %v2742 = vpop.f32.mrf.mxu0
    %2743 = vmatprep.mubr.f32.mxu0 0.0
    %2744 = vmatmul.mubr.f32.gmra.mxu0 %v2597
    %v2745 = vpop.f32.mrf.mxu0
    %v2746 = vadd.f32 0.0, %v2745
    %v2747 = vpop.f32.mrf.mxu0
    %2748 = vmatprep.mubr.f32.mxu0 0.0
    %2749 = vmatmul.mubr.f32.gmra.mxu0 %v2600
    %v2750 = vpop.f32.mrf.mxu0
    %v2751 = vadd.f32 0.0, %v2750
    %v2752 = vpop.f32.mrf.mxu0
    %2753 = vmatprep.mubr.f32.mxu0 0.0
    %2754 = vmatmul.mubr.f32.gmra.mxu0 %v2603
    %v2755 = vpop.f32.mrf.mxu0
    %v2756 = vadd.f32 0.0, %v2755
    %v2757 = vpop.f32.mrf.mxu0
    %2758 = vmatprep.mubr.f32.mxu0 0.0
    %2759 = vmatmul.mubr.f32.gmra.mxu0 %v2606
    %v2760 = vpop.f32.mrf.mxu0
    %v2761 = vadd.f32 0.0, %v2760
    %v2762 = vpop.f32.mrf.mxu0
    %2763 = vmatprep.mubr.f32.mxu0 0.0
    %2764 = vmatmul.mubr.f32.gmra.mxu0 %v2609
    %v2765 = vpop.f32.mrf.mxu0
    %v2766 = vadd.f32 0.0, %v2765
    %v2767 = vpop.f32.mrf.mxu0
    %2768 = vmatprep.mubr.f32.mxu0 0.0
    %2769 = vmatmul.mubr.f32.gmra.mxu0 %v2612
    %v2770 = vpop.f32.mrf.mxu0
    %v2771 = vadd.f32 0.0, %v2770
    %v2772 = vpop.f32.mrf.mxu0
    %2773 = vmatprep.mubr.f32.mxu0 0.0
    %2774 = vmatmul.mubr.f32.gmra.mxu0 %v2615
    %v2775 = vpop.f32.mrf.mxu0
    %v2776 = vadd.f32 0.0, %v2775
    %v2777 = vpop.f32.mrf.mxu0
    %2778 = vmatprep.mubr.f32.mxu0 0.0
    %2779 = vmatmul.mubr.f32.gmra.mxu0 %v2618
    %v2780 = vpop.f32.mrf.mxu0
    %v2781 = vadd.f32 0.0, %v2780
    %v2782 = vpop.f32.mrf.mxu0
    %2783 = vmatprep.mubr.f32.mxu0 0.0
    %2784 = vmatmul.mubr.f32.gmra.mxu0 %v2621
    %v2785 = vpop.f32.mrf.mxu0
    %v2786 = vadd.f32 0.0, %v2785
    %v2787 = vpop.f32.mrf.mxu0
    %2788 = vmatprep.mubr.f32.mxu0 0.0
    %2789 = vmatmul.mubr.f32.gmra.mxu0 %v2624
    %v2790 = vpop.f32.mrf.mxu0
    %v2791 = vadd.f32 0.0, %v2790
    %v2792 = vpop.f32.mrf.mxu0
    %2793 = vmatprep.mubr.f32.mxu0 0.0
    %2794 = vmatmul.mubr.f32.gmra.mxu0 %v2627
    %v2795 = vpop.f32.mrf.mxu0
    %v2796 = vadd.f32 0.0, %v2795
    %v2797 = vpop.f32.mrf.mxu0
    %2798 = vdwg.mxu0
    %v2799 = vadd.f32 %v2245, %v2696
    %v2800 = vadd.f32 %v2246, %v2701
    %v2801 = vadd.f32 %v2247, %v2706
    %v2802 = vadd.f32 %v2248, %v2711
    %v2803 = vadd.f32 %v2249, %v2716
    %v2804 = vadd.f32 %v2250, %v2721
    %v2805 = vadd.f32 %v2251, %v2726
    %v2806 = vadd.f32 %v2252, %v2731
    %v2807 = vadd.f32 %v2253, %v2736
    %v2808 = vadd.f32 %v2254, %v2741
    %v2809 = vadd.f32 %v2255, %v2746
    %v2810 = vadd.f32 %v2256, %v2751
    %v2811 = vadd.f32 %v2257, %v2756
    %v2812 = vadd.f32 %v2258, %v2761
    %v2813 = vadd.f32 %v2259, %v2766
    %v2814 = vadd.f32 %v2260, %v2771
    %v2815 = vadd.f32 %v2261, %v2776
    %v2816 = vadd.f32 %v2262, %v2781
    %v2817 = vadd.f32 %v2263, %v2786
    %v2818 = vadd.f32 %v2264, %v2791
    %v2819 = vadd.f32 %v2265, %v2796
    %s2820 = scalar_lea.vmem %s2, 672
    %v2821 = vld [vmem:[%s2820] sm:$0xff]
    %v2822 = vld [vmem:[%s2820 + $0x8] sm:$0xff]
    %v2823 = vld [vmem:[%s2820 + $0x10] sm:$0xff]
    %v2824 = vld [vmem:[%s2820 + $0x18] sm:$0xff]
    %v2825 = vld [vmem:[%s2820 + $0x20] sm:$0xff]
    %v2826 = vld [vmem:[%s2820 + $0x28] sm:$0xff]
    %v2827 = vld [vmem:[%s2820 + $0x30] sm:$0xff]
    %v2828 = vld [vmem:[%s2820 + $0x38] sm:$0xff]
    %v2829 = vld [vmem:[%s2820 + $0x40] sm:$0xff]
    %v2830 = vld [vmem:[%s2820 + $0x48] sm:$0xff]
    %v2831 = vld [vmem:[%s2820 + $0x50] sm:$0xff]
    %v2832 = vld [vmem:[%s2820 + $0x58] sm:$0xff]
    %v2833 = vld [vmem:[%s2820 + $0x60] sm:$0xff]
    %v2834 = vld [vmem:[%s2820 + $0x68] sm:$0xff]
    %v2835 = vld [vmem:[%s2820 + $0x70] sm:$0xff]
    %v2836 = vld [vmem:[%s2820 + $0x78] sm:$0xff]
    %v2837 = vld [vmem:[%s2820 + $0x80] sm:$0xff]
    %v2838 = vld [vmem:[%s2820 + $0x88] sm:$0xff]
    %v2839 = vld [vmem:[%s2820 + $0x90] sm:$0xff]
    %v2840 = vld [vmem:[%s2820 + $0x98] sm:$0xff]
    %v2841 = vld [vmem:[%s2820 + $0xa0] sm:$0x11]
    %v2842 = vunpack.c.l.bf16 %v2821
    %v2843 = vunpack.c.h.bf16 %v2821
    %v2844 = vunpack.c.l.bf16 %v2822
    %v2845 = vunpack.c.h.bf16 %v2822
    %v2846 = vunpack.c.l.bf16 %v2823
    %v2847 = vunpack.c.h.bf16 %v2823
    %v2848 = vunpack.c.l.bf16 %v2824
    %v2849 = vunpack.c.h.bf16 %v2824
    %v2850 = vunpack.c.l.bf16 %v2825
    %v2851 = vunpack.c.h.bf16 %v2825
    %v2852 = vunpack.c.l.bf16 %v2826
    %v2853 = vunpack.c.h.bf16 %v2826
    %v2854 = vunpack.c.l.bf16 %v2827
    %v2855 = vunpack.c.h.bf16 %v2827
    %v2856 = vunpack.c.l.bf16 %v2828
    %v2857 = vunpack.c.h.bf16 %v2828
    %v2858 = vunpack.c.l.bf16 %v2829
    %v2859 = vunpack.c.h.bf16 %v2829
    %v2860 = vunpack.c.l.bf16 %v2830
    %v2861 = vunpack.c.h.bf16 %v2830
    %v2862 = vunpack.c.l.bf16 %v2831
    %v2863 = vunpack.c.h.bf16 %v2831
    %v2864 = vunpack.c.l.bf16 %v2832
    %v2865 = vunpack.c.h.bf16 %v2832
    %v2866 = vunpack.c.l.bf16 %v2833
    %v2867 = vunpack.c.h.bf16 %v2833
    %v2868 = vunpack.c.l.bf16 %v2834
    %v2869 = vunpack.c.h.bf16 %v2834
    %v2870 = vunpack.c.l.bf16 %v2835
    %v2871 = vunpack.c.h.bf16 %v2835
    %v2872 = vunpack.c.l.bf16 %v2836
    %v2873 = vunpack.c.h.bf16 %v2836
    %v2874 = vunpack.c.l.bf16 %v2837
    %v2875 = vunpack.c.h.bf16 %v2837
    %v2876 = vunpack.c.l.bf16 %v2838
    %v2877 = vunpack.c.h.bf16 %v2838
    %v2878 = vunpack.c.l.bf16 %v2839
    %v2879 = vunpack.c.h.bf16 %v2839
    %v2880 = vunpack.c.l.bf16 %v2840
    %v2881 = vunpack.c.h.bf16 %v2840
    %v2882 = vunpack.c.l.bf16 %v2841
    %v2883 = vunpack.c.h.bf16 %v2841
    %v2885 = vsel %vm705, %v2843, 0
    %v2888 = vsel %vm705, %v2845, 0
    %v2891 = vsel %vm705, %v2847, 0
    %v2894 = vsel %vm705, %v2849, 0
    %v2897 = vsel %vm705, %v2851, 0
    %v2900 = vsel %vm705, %v2853, 0
    %v2903 = vsel %vm705, %v2855, 0
    %v2906 = vsel %vm705, %v2857, 0
    %v2909 = vsel %vm705, %v2859, 0
    %v2912 = vsel %vm705, %v2861, 0
    %v2915 = vsel %vm705, %v2863, 0
    %v2918 = vsel %vm705, %v2865, 0
    %v2921 = vsel %vm705, %v2867, 0
    %v2924 = vsel %vm705, %v2869, 0
    %v2927 = vsel %vm705, %v2871, 0
    %v2930 = vsel %vm705, %v2873, 0
    %v2933 = vsel %vm705, %v2875, 0
    %v2936 = vsel %vm705, %v2877, 0
    %v2939 = vsel %vm705, %v2879, 0
    %v2942 = vsel %vm705, %v2881, 0
    %v2945 = vsel %vm705, %v2883, 0
    %2947 = vmatprep.subr.mxu0 0.0
    %2948 = vmatpush1.msra.mxu0 %v626
    %2949 = vmatprep.subr.mxu0 0.0
    %2950 = vmatpush1.msra.mxu0 %v625
    %2951 = vmatprep.subr.mxu0 0.0
    %2952 = vmatpush1.msra.mxu0 %v624
    %2953 = vmatprep.subr.mxu0 0.0
    %2954 = vmatpush1.msra.mxu0 %v623
    %2955 = vmatprep.subr.mxu0 0.0
    %2956 = vmatpush1.msra.mxu0 %v622
    %2957 = vmatprep.subr.mxu0 0.0
    %2958 = vmatpush1.msra.mxu0 %v621
    %2959 = vmatprep.subr.mxu0 0.0
    %2960 = vmatpush1.msra.mxu0 %v620
    %2961 = vmatprep.subr.mxu0 0.0
    %2962 = vmatpush1.msra.mxu0 %v619
    %2963 = vmatprep.subr.mxu0 0.0
    %2964 = vmatpush1.msra.mxu0 %v618
    %2965 = vmatprep.subr.mxu0 0.0
    %2966 = vmatpush1.msra.mxu0 %v617
    %2967 = vmatprep.subr.mxu0 0.0
    %2968 = vmatpush1.msra.mxu0 %v616
    %2969 = vmatprep.subr.mxu0 0.0
    %2970 = vmatpush1.msra.mxu0 %v615
    %2971 = vmatprep.subr.mxu0 0.0
    %2972 = vmatpush1.msra.mxu0 %v614
    %2973 = vmatprep.subr.mxu0 0.0
    %2974 = vmatpush1.msra.mxu0 %v613
    %2975 = vmatprep.subr.mxu0 0.0
    %2976 = vmatpush1.msra.mxu0 %v612
    %2977 = vmatprep.subr.mxu0 0.0
    %2978 = vmatpush1.msra.mxu0 %v611
    %2979 = vmatprep.subr.mxu0 0.0
    %2980 = vmatpush2.msra.mxu0 0.0
    %2981 = vmatprep.subr.mxu0 0.0
    %2982 = vmatpush2.msra.mxu0 %v771
    %2983 = vmatprep.subr.mxu0 0.0
    %2984 = vmatpush2.msra.mxu0 %v640
    %2985 = vmatprep.subr.mxu0 0.0
    %2986 = vmatpush2.msra.mxu0 %v639
    %2987 = vmatprep.subr.mxu0 0.0
    %2988 = vmatpush2.msra.mxu0 %v638
    %2989 = vmatprep.subr.mxu0 0.0
    %2990 = vmatpush2.msra.mxu0 %v637
    %2991 = vmatprep.subr.mxu0 0.0
    %2992 = vmatpush2.msra.mxu0 %v636
    %2993 = vmatprep.subr.mxu0 0.0
    %2994 = vmatpush2.msra.mxu0 %v635
    %2995 = vmatprep.subr.mxu0 0.0
    %2996 = vmatpush2.msra.mxu0 %v634
    %2997 = vmatprep.subr.mxu0 0.0
    %2998 = vmatpush2.msra.mxu0 %v633
    %2999 = vmatprep.subr.mxu0 0.0
    %3000 = vmatpush2.msra.mxu0 %v632
    %3001 = vmatprep.subr.mxu0 0.0
    %3002 = vmatpush2.msra.mxu0 %v631
    %3003 = vmatprep.subr.mxu0 0.0
    %3004 = vmatpush2.msra.mxu0 %v630
    %3005 = vmatprep.subr.mxu0 0.0
    %3006 = vmatpush2.msra.mxu0 %v629
    %3007 = vmatprep.subr.mxu0 0.0
    %3008 = vmatpush2.msra.mxu0 %v628
    %3009 = vmatprep.subr.mxu0 0.0
    %3010 = vmatpush2.msra.mxu0 %v627
    %3011 = vmatprep.mubr.f32.mxu0 %v2885
    %3012 = vmatmul.mubr.f32.gmra.mxu0 %v2842
    %v3013 = vpop.f32.mrf.mxu0
    %v3014 = vadd.f32 0.0, %v3013
    %v3015 = vpop.f32.mrf.mxu0
    %3016 = vmatprep.mubr.f32.mxu0 %v2888
    %3017 = vmatmul.mubr.f32.gmra.mxu0 %v2844
    %v3018 = vpop.f32.mrf.mxu0
    %v3019 = vadd.f32 0.0, %v3018
    %v3020 = vpop.f32.mrf.mxu0
    %3021 = vmatprep.mubr.f32.mxu0 %v2891
    %3022 = vmatmul.mubr.f32.gmra.mxu0 %v2846
    %v3023 = vpop.f32.mrf.mxu0
    %v3024 = vadd.f32 0.0, %v3023
    %v3025 = vpop.f32.mrf.mxu0
    %3026 = vmatprep.mubr.f32.mxu0 %v2894
    %3027 = vmatmul.mubr.f32.gmra.mxu0 %v2848
    %v3028 = vpop.f32.mrf.mxu0
    %v3029 = vadd.f32 0.0, %v3028
    %v3030 = vpop.f32.mrf.mxu0
    %3031 = vmatprep.mubr.f32.mxu0 %v2897
    %3032 = vmatmul.mubr.f32.gmra.mxu0 %v2850
    %v3033 = vpop.f32.mrf.mxu0
    %v3034 = vadd.f32 0.0, %v3033
    %v3035 = vpop.f32.mrf.mxu0
    %3036 = vmatprep.mubr.f32.mxu0 %v2900
    %3037 = vmatmul.mubr.f32.gmra.mxu0 %v2852
    %v3038 = vpop.f32.mrf.mxu0
    %v3039 = vadd.f32 0.0, %v3038
    %v3040 = vpop.f32.mrf.mxu0
    %3041 = vmatprep.mubr.f32.mxu0 %v2903
    %3042 = vmatmul.mubr.f32.gmra.mxu0 %v2854
    %v3043 = vpop.f32.mrf.mxu0
    %v3044 = vadd.f32 0.0, %v3043
    %v3045 = vpop.f32.mrf.mxu0
    %3046 = vmatprep.mubr.f32.mxu0 %v2906
    %3047 = vmatmul.mubr.f32.gmra.mxu0 %v2856
    %v3048 = vpop.f32.mrf.mxu0
    %v3049 = vadd.f32 0.0, %v3048
    %v3050 = vpop.f32.mrf.mxu0
    %3051 = vmatprep.mubr.f32.mxu0 %v2909
    %3052 = vmatmul.mubr.f32.gmra.mxu0 %v2858
    %v3053 = vpop.f32.mrf.mxu0
    %v3054 = vadd.f32 0.0, %v3053
    %v3055 = vpop.f32.mrf.mxu0
    %3056 = vmatprep.mubr.f32.mxu0 %v2912
    %3057 = vmatmul.mubr.f32.gmra.mxu0 %v2860
    %v3058 = vpop.f32.mrf.mxu0
    %v3059 = vadd.f32 0.0, %v3058
    %v3060 = vpop.f32.mrf.mxu0
    %3061 = vmatprep.mubr.f32.mxu0 %v2915
    %3062 = vmatmul.mubr.f32.gmra.mxu0 %v2862
    %v3063 = vpop.f32.mrf.mxu0
    %v3064 = vadd.f32 0.0, %v3063
    %v3065 = vpop.f32.mrf.mxu0
    %3066 = vmatprep.mubr.f32.mxu0 %v2918
    %3067 = vmatmul.mubr.f32.gmra.mxu0 %v2864
    %v3068 = vpop.f32.mrf.mxu0
    %v3069 = vadd.f32 0.0, %v3068
    %v3070 = vpop.f32.mrf.mxu0
    %3071 = vmatprep.mubr.f32.mxu0 %v2921
    %3072 = vmatmul.mubr.f32.gmra.mxu0 %v2866
    %v3073 = vpop.f32.mrf.mxu0
    %v3074 = vadd.f32 0.0, %v3073
    %v3075 = vpop.f32.mrf.mxu0
    %3076 = vmatprep.mubr.f32.mxu0 %v2924
    %3077 = vmatmul.mubr.f32.gmra.mxu0 %v2868
    %v3078 = vpop.f32.mrf.mxu0
    %v3079 = vadd.f32 0.0, %v3078
    %v3080 = vpop.f32.mrf.mxu0
    %3081 = vmatprep.mubr.f32.mxu0 %v2927
    %3082 = vmatmul.mubr.f32.gmra.mxu0 %v2870
    %v3083 = vpop.f32.mrf.mxu0
    %v3084 = vadd.f32 0.0, %v3083
    %v3085 = vpop.f32.mrf.mxu0
    %3086 = vmatprep.mubr.f32.mxu0 %v2930
    %3087 = vmatmul.mubr.f32.gmra.mxu0 %v2872
    %v3088 = vpop.f32.mrf.mxu0
    %v3089 = vadd.f32 0.0, %v3088
    %v3090 = vpop.f32.mrf.mxu0
    %3091 = vmatprep.mubr.f32.mxu0 %v2933
    %3092 = vmatmul.mubr.f32.gmra.mxu0 %v2874
    %v3093 = vpop.f32.mrf.mxu0
    %v3094 = vadd.f32 0.0, %v3093
    %v3095 = vpop.f32.mrf.mxu0
    %3096 = vmatprep.mubr.f32.mxu0 %v2936
    %3097 = vmatmul.mubr.f32.gmra.mxu0 %v2876
    %v3098 = vpop.f32.mrf.mxu0
    %v3099 = vadd.f32 0.0, %v3098
    %v3100 = vpop.f32.mrf.mxu0
    %3101 = vmatprep.mubr.f32.mxu0 %v2939
    %3102 = vmatmul.mubr.f32.gmra.mxu0 %v2878
    %v3103 = vpop.f32.mrf.mxu0
    %v3104 = vadd.f32 0.0, %v3103
    %v3105 = vpop.f32.mrf.mxu0
    %3106 = vmatprep.mubr.f32.mxu0 %v2942
    %3107 = vmatmul.mubr.f32.gmra.mxu0 %v2880
    %v3108 = vpop.f32.mrf.mxu0
    %v3109 = vadd.f32 0.0, %v3108
    %v3110 = vpop.f32.mrf.mxu0
    %3111 = vmatprep.mubr.f32.mxu0 %v2945
    %3112 = vmatmul.mubr.f32.gmra.mxu0 %v2882
    %v3113 = vpop.f32.mrf.mxu0
    %v3114 = vadd.f32 0.0, %v3113
    %v3115 = vpop.f32.mrf.mxu0
    %3116 = vdwg.mxu0
    %s3117 = scalar_lea.vmem %s3, 64
    %v3118 = vld [vmem:[%s3117] sm:$0xff]
    %v3119 = vld [vmem:[%s3117 + $0x8] sm:$0xff]
    %v3121 = vsel %vm1245, %v3014, 0
    %v3124 = vsel %vm1245, %v3019, 0
    %v3127 = vsel %vm1245, %v3024, 0
    %v3130 = vsel %vm1245, %v3029, 0
    %v3133 = vsel %vm1245, %v3034, 0
    %v3136 = vsel %vm1245, %v3039, 0
    %v3139 = vsel %vm1245, %v3044, 0
    %v3142 = vsel %vm1245, %v3049, 0
    %v3145 = vsel %vm1245, %v3054, 0
    %v3148 = vsel %vm1245, %v3059, 0
    %v3151 = vsel %vm1245, %v3064, 0
    %v3154 = vsel %vm1245, %v3069, 0
    %v3157 = vsel %vm1245, %v3074, 0
    %v3160 = vsel %vm1245, %v3079, 0
    %v3163 = vsel %vm1245, %v3084, 0
    %v3166 = vsel %vm1245, %v3089, 0
    %v3169 = vsel %vm1245, %v3094, 0
    %v3172 = vsel %vm1245, %v3099, 0
    %v3175 = vsel %vm1245, %v3104, 0
    %v3178 = vsel %vm1245, %v3109, 0
    %v3181 = vsel %vm1245, %v3114, 0
    %3183 = vmatprep.subr.mxu0 0.0
    %3184 = vmatpush1.msra.mxu0 0.0
    %3185 = vmatprep.subr.mxu0 0.0
    %3186 = vmatpush1.msra.mxu0 0.0
    %3187 = vmatprep.subr.mxu0 0.0
    %3188 = vmatpush1.msra.mxu0 0.0
    %3189 = vmatprep.subr.mxu0 0.0
    %3190 = vmatpush1.msra.mxu0 0.0
    %3191 = vmatprep.subr.mxu0 0.0
    %3192 = vmatpush1.msra.mxu0 0.0
    %3193 = vmatprep.subr.mxu0 0.0
    %3194 = vmatpush1.msra.mxu0 0.0
    %3195 = vmatprep.subr.mxu0 0.0
    %3196 = vmatpush1.msra.mxu0 0.0
    %3197 = vmatprep.subr.mxu0 0.0
    %3198 = vmatpush1.msra.mxu0 0.0
    %3199 = vmatprep.subr.mxu0 0.0
    %3200 = vmatpush1.msra.mxu0 0.0
    %3201 = vmatprep.subr.mxu0 0.0
    %3202 = vmatpush1.msra.mxu0 0.0
    %3203 = vmatprep.subr.mxu0 0.0
    %3204 = vmatpush1.msra.mxu0 0.0
    %3205 = vmatprep.subr.mxu0 0.0
    %3206 = vmatpush1.msra.mxu0 0.0
    %3207 = vmatprep.subr.mxu0 0.0
    %3208 = vmatpush1.msra.mxu0 0.0
    %3209 = vmatprep.subr.mxu0 0.0
    %3210 = vmatpush1.msra.mxu0 0.0
    %3211 = vmatprep.subr.mxu0 0.0
    %3212 = vmatpush1.msra.mxu0 %v3119
    %3213 = vmatprep.subr.mxu0 0.0
    %3214 = vmatpush1.msra.mxu0 %v3118
    %3215 = vmatprep.subr.mxu0 0.0
    %3216 = vmatpush2.msra.mxu0 0.0
    %3217 = vmatprep.subr.mxu0 0.0
    %3218 = vmatpush2.msra.mxu0 0.0
    %3219 = vmatprep.subr.mxu0 0.0
    %3220 = vmatpush2.msra.mxu0 0.0
    %3221 = vmatprep.subr.mxu0 0.0
    %3222 = vmatpush2.msra.mxu0 0.0
    %3223 = vmatprep.subr.mxu0 0.0
    %3224 = vmatpush2.msra.mxu0 0.0
    %3225 = vmatprep.subr.mxu0 0.0
    %3226 = vmatpush2.msra.mxu0 0.0
    %3227 = vmatprep.subr.mxu0 0.0
    %3228 = vmatpush2.msra.mxu0 0.0
    %3229 = vmatprep.subr.mxu0 0.0
    %3230 = vmatpush2.msra.mxu0 0.0
    %3231 = vmatprep.subr.mxu0 0.0
    %3232 = vmatpush2.msra.mxu0 0.0
    %3233 = vmatprep.subr.mxu0 0.0
    %3234 = vmatpush2.msra.mxu0 0.0
    %3235 = vmatprep.subr.mxu0 0.0
    %3236 = vmatpush2.msra.mxu0 0.0
    %3237 = vmatprep.subr.mxu0 0.0
    %3238 = vmatpush2.msra.mxu0 0.0
    %3239 = vmatprep.subr.mxu0 0.0
    %3240 = vmatpush2.msra.mxu0 0.0
    %3241 = vmatprep.subr.mxu0 0.0
    %3242 = vmatpush2.msra.mxu0 0.0
    %3243 = vmatprep.subr.mxu0 0.0
    %3244 = vmatpush2.msra.mxu0 0.0
    %3245 = vmatprep.subr.mxu0 0.0
    %3246 = vmatpush2.msra.mxu0 0.0
    %3247 = vmatprep.mubr.f32.mxu0 0.0
    %3248 = vmatmul.mubr.f32.gmra.mxu0 %v3121
    %v3249 = vpop.f32.mrf.mxu0
    %v3250 = vadd.f32 0.0, %v3249
    %v3251 = vpop.f32.mrf.mxu0
    %3252 = vmatprep.mubr.f32.mxu0 0.0
    %3253 = vmatmul.mubr.f32.gmra.mxu0 %v3124
    %v3254 = vpop.f32.mrf.mxu0
    %v3255 = vadd.f32 0.0, %v3254
    %v3256 = vpop.f32.mrf.mxu0
    %3257 = vmatprep.mubr.f32.mxu0 0.0
    %3258 = vmatmul.mubr.f32.gmra.mxu0 %v3127
    %v3259 = vpop.f32.mrf.mxu0
    %v3260 = vadd.f32 0.0, %v3259
    %v3261 = vpop.f32.mrf.mxu0
    %3262 = vmatprep.mubr.f32.mxu0 0.0
    %3263 = vmatmul.mubr.f32.gmra.mxu0 %v3130
    %v3264 = vpop.f32.mrf.mxu0
    %v3265 = vadd.f32 0.0, %v3264
    %v3266 = vpop.f32.mrf.mxu0
    %3267 = vmatprep.mubr.f32.mxu0 0.0
    %3268 = vmatmul.mubr.f32.gmra.mxu0 %v3133
    %v3269 = vpop.f32.mrf.mxu0
    %v3270 = vadd.f32 0.0, %v3269
    %v3271 = vpop.f32.mrf.mxu0
    %3272 = vmatprep.mubr.f32.mxu0 0.0
    %3273 = vmatmul.mubr.f32.gmra.mxu0 %v3136
    %v3274 = vpop.f32.mrf.mxu0
    %v3275 = vadd.f32 0.0, %v3274
    %v3276 = vpop.f32.mrf.mxu0
    %3277 = vmatprep.mubr.f32.mxu0 0.0
    %3278 = vmatmul.mubr.f32.gmra.mxu0 %v3139
    %v3279 = vpop.f32.mrf.mxu0
    %v3280 = vadd.f32 0.0, %v3279
    %v3281 = vpop.f32.mrf.mxu0
    %3282 = vmatprep.mubr.f32.mxu0 0.0
    %3283 = vmatmul.mubr.f32.gmra.mxu0 %v3142
    %v3284 = vpop.f32.mrf.mxu0
    %v3285 = vadd.f32 0.0, %v3284
    %v3286 = vpop.f32.mrf.mxu0
    %3287 = vmatprep.mubr.f32.mxu0 0.0
    %3288 = vmatmul.mubr.f32.gmra.mxu0 %v3145
    %v3289 = vpop.f32.mrf.mxu0
    %v3290 = vadd.f32 0.0, %v3289
    %v3291 = vpop.f32.mrf.mxu0
    %3292 = vmatprep.mubr.f32.mxu0 0.0
    %3293 = vmatmul.mubr.f32.gmra.mxu0 %v3148
    %v3294 = vpop.f32.mrf.mxu0
    %v3295 = vadd.f32 0.0, %v3294
    %v3296 = vpop.f32.mrf.mxu0
    %3297 = vmatprep.mubr.f32.mxu0 0.0
    %3298 = vmatmul.mubr.f32.gmra.mxu0 %v3151
    %v3299 = vpop.f32.mrf.mxu0
    %v3300 = vadd.f32 0.0, %v3299
    %v3301 = vpop.f32.mrf.mxu0
    %3302 = vmatprep.mubr.f32.mxu0 0.0
    %3303 = vmatmul.mubr.f32.gmra.mxu0 %v3154
    %v3304 = vpop.f32.mrf.mxu0
    %v3305 = vadd.f32 0.0, %v3304
    %v3306 = vpop.f32.mrf.mxu0
    %3307 = vmatprep.mubr.f32.mxu0 0.0
    %3308 = vmatmul.mubr.f32.gmra.mxu0 %v3157
    %v3309 = vpop.f32.mrf.mxu0
    %v3310 = vadd.f32 0.0, %v3309
    %v3311 = vpop.f32.mrf.mxu0
    %3312 = vmatprep.mubr.f32.mxu0 0.0
    %3313 = vmatmul.mubr.f32.gmra.mxu0 %v3160
    %v3314 = vpop.f32.mrf.mxu0
    %v3315 = vadd.f32 0.0, %v3314
    %v3316 = vpop.f32.mrf.mxu0
    %3317 = vmatprep.mubr.f32.mxu0 0.0
    %3318 = vmatmul.mubr.f32.gmra.mxu0 %v3163
    %v3319 = vpop.f32.mrf.mxu0
    %v3320 = vadd.f32 0.0, %v3319
    %v3321 = vpop.f32.mrf.mxu0
    %3322 = vmatprep.mubr.f32.mxu0 0.0
    %3323 = vmatmul.mubr.f32.gmra.mxu0 %v3166
    %v3324 = vpop.f32.mrf.mxu0
    %v3325 = vadd.f32 0.0, %v3324
    %v3326 = vpop.f32.mrf.mxu0
    %3327 = vmatprep.mubr.f32.mxu0 0.0
    %3328 = vmatmul.mubr.f32.gmra.mxu0 %v3169
    %v3329 = vpop.f32.mrf.mxu0
    %v3330 = vadd.f32 0.0, %v3329
    %v3331 = vpop.f32.mrf.mxu0
    %3332 = vmatprep.mubr.f32.mxu0 0.0
    %3333 = vmatmul.mubr.f32.gmra.mxu0 %v3172
    %v3334 = vpop.f32.mrf.mxu0
    %v3335 = vadd.f32 0.0, %v3334
    %v3336 = vpop.f32.mrf.mxu0
    %3337 = vmatprep.mubr.f32.mxu0 0.0
    %3338 = vmatmul.mubr.f32.gmra.mxu0 %v3175
    %v3339 = vpop.f32.mrf.mxu0
    %v3340 = vadd.f32 0.0, %v3339
    %v3341 = vpop.f32.mrf.mxu0
    %3342 = vmatprep.mubr.f32.mxu0 0.0
    %3343 = vmatmul.mubr.f32.gmra.mxu0 %v3178
    %v3344 = vpop.f32.mrf.mxu0
    %v3345 = vadd.f32 0.0, %v3344
    %v3346 = vpop.f32.mrf.mxu0
    %3347 = vmatprep.mubr.f32.mxu0 0.0
    %3348 = vmatmul.mubr.f32.gmra.mxu0 %v3181
    %v3349 = vpop.f32.mrf.mxu0
    %v3350 = vadd.f32 0.0, %v3349
    %v3351 = vpop.f32.mrf.mxu0
    %3352 = vdwg.mxu0
    %v3353 = vadd.f32 %v2799, %v3250
    %v3354 = vadd.f32 %v2800, %v3255
    %v3355 = vadd.f32 %v2801, %v3260
    %v3356 = vadd.f32 %v2802, %v3265
    %v3357 = vadd.f32 %v2803, %v3270
    %v3358 = vadd.f32 %v2804, %v3275
    %v3359 = vadd.f32 %v2805, %v3280
    %v3360 = vadd.f32 %v2806, %v3285
    %v3361 = vadd.f32 %v2807, %v3290
    %v3362 = vadd.f32 %v2808, %v3295
    %v3363 = vadd.f32 %v2809, %v3300
    %v3364 = vadd.f32 %v2810, %v3305
    %v3365 = vadd.f32 %v2811, %v3310
    %v3366 = vadd.f32 %v2812, %v3315
    %v3367 = vadd.f32 %v2813, %v3320
    %v3368 = vadd.f32 %v2814, %v3325
    %v3369 = vadd.f32 %v2815, %v3330
    %v3370 = vadd.f32 %v2816, %v3335
    %v3371 = vadd.f32 %v2817, %v3340
    %v3372 = vadd.f32 %v2818, %v3345
    %v3373 = vadd.f32 %v2819, %v3350
    %s3374 = scalar_lea.vmem %s2, 840
    %v3375 = vld [vmem:[%s3374] sm:$0xff]
    %v3376 = vld [vmem:[%s3374 + $0x8] sm:$0xff]
    %v3377 = vld [vmem:[%s3374 + $0x10] sm:$0xff]
    %v3378 = vld [vmem:[%s3374 + $0x18] sm:$0xff]
    %v3379 = vld [vmem:[%s3374 + $0x20] sm:$0xff]
    %v3380 = vld [vmem:[%s3374 + $0x28] sm:$0xff]
    %v3381 = vld [vmem:[%s3374 + $0x30] sm:$0xff]
    %v3382 = vld [vmem:[%s3374 + $0x38] sm:$0xff]
    %v3383 = vld [vmem:[%s3374 + $0x40] sm:$0xff]
    %v3384 = vld [vmem:[%s3374 + $0x48] sm:$0xff]
    %v3385 = vld [vmem:[%s3374 + $0x50] sm:$0xff]
    %v3386 = vld [vmem:[%s3374 + $0x58] sm:$0xff]
    %v3387 = vld [vmem:[%s3374 + $0x60] sm:$0xff]
    %v3388 = vld [vmem:[%s3374 + $0x68] sm:$0xff]
    %v3389 = vld [vmem:[%s3374 + $0x70] sm:$0xff]
    %v3390 = vld [vmem:[%s3374 + $0x78] sm:$0xff]
    %v3391 = vld [vmem:[%s3374 + $0x80] sm:$0xff]
    %v3392 = vld [vmem:[%s3374 + $0x88] sm:$0xff]
    %v3393 = vld [vmem:[%s3374 + $0x90] sm:$0xff]
    %v3394 = vld [vmem:[%s3374 + $0x98] sm:$0xff]
    %v3395 = vld [vmem:[%s3374 + $0xa0] sm:$0x11]
    %v3396 = vunpack.c.l.bf16 %v3375
    %v3397 = vunpack.c.h.bf16 %v3375
    %v3398 = vunpack.c.l.bf16 %v3376
    %v3399 = vunpack.c.h.bf16 %v3376
    %v3400 = vunpack.c.l.bf16 %v3377
    %v3401 = vunpack.c.h.bf16 %v3377
    %v3402 = vunpack.c.l.bf16 %v3378
    %v3403 = vunpack.c.h.bf16 %v3378
    %v3404 = vunpack.c.l.bf16 %v3379
    %v3405 = vunpack.c.h.bf16 %v3379
    %v3406 = vunpack.c.l.bf16 %v3380
    %v3407 = vunpack.c.h.bf16 %v3380
    %v3408 = vunpack.c.l.bf16 %v3381
    %v3409 = vunpack.c.h.bf16 %v3381
    %v3410 = vunpack.c.l.bf16 %v3382
    %v3411 = vunpack.c.h.bf16 %v3382
    %v3412 = vunpack.c.l.bf16 %v3383
    %v3413 = vunpack.c.h.bf16 %v3383
    %v3414 = vunpack.c.l.bf16 %v3384
    %v3415 = vunpack.c.h.bf16 %v3384
    %v3416 = vunpack.c.l.bf16 %v3385
    %v3417 = vunpack.c.h.bf16 %v3385
    %v3418 = vunpack.c.l.bf16 %v3386
    %v3419 = vunpack.c.h.bf16 %v3386
    %v3420 = vunpack.c.l.bf16 %v3387
    %v3421 = vunpack.c.h.bf16 %v3387
    %v3422 = vunpack.c.l.bf16 %v3388
    %v3423 = vunpack.c.h.bf16 %v3388
    %v3424 = vunpack.c.l.bf16 %v3389
    %v3425 = vunpack.c.h.bf16 %v3389
    %v3426 = vunpack.c.l.bf16 %v3390
    %v3427 = vunpack.c.h.bf16 %v3390
    %v3428 = vunpack.c.l.bf16 %v3391
    %v3429 = vunpack.c.h.bf16 %v3391
    %v3430 = vunpack.c.l.bf16 %v3392
    %v3431 = vunpack.c.h.bf16 %v3392
    %v3432 = vunpack.c.l.bf16 %v3393
    %v3433 = vunpack.c.h.bf16 %v3393
    %v3434 = vunpack.c.l.bf16 %v3394
    %v3435 = vunpack.c.h.bf16 %v3394
    %v3436 = vunpack.c.l.bf16 %v3395
    %v3437 = vunpack.c.h.bf16 %v3395
    %v3439 = vsel %vm705, %v3397, 0
    %v3442 = vsel %vm705, %v3399, 0
    %v3445 = vsel %vm705, %v3401, 0
    %v3448 = vsel %vm705, %v3403, 0
    %v3451 = vsel %vm705, %v3405, 0
    %v3454 = vsel %vm705, %v3407, 0
    %v3457 = vsel %vm705, %v3409, 0
    %v3460 = vsel %vm705, %v3411, 0
    %v3463 = vsel %vm705, %v3413, 0
    %v3466 = vsel %vm705, %v3415, 0
    %v3469 = vsel %vm705, %v3417, 0
    %v3472 = vsel %vm705, %v3419, 0
    %v3475 = vsel %vm705, %v3421, 0
    %v3478 = vsel %vm705, %v3423, 0
    %v3481 = vsel %vm705, %v3425, 0
    %v3484 = vsel %vm705, %v3427, 0
    %v3487 = vsel %vm705, %v3429, 0
    %v3490 = vsel %vm705, %v3431, 0
    %v3493 = vsel %vm705, %v3433, 0
    %v3496 = vsel %vm705, %v3435, 0
    %v3499 = vsel %vm705, %v3437, 0
    %3501 = vmatprep.subr.mxu0 0.0
    %3502 = vmatpush1.msra.mxu0 %v626
    %3503 = vmatprep.subr.mxu0 0.0
    %3504 = vmatpush1.msra.mxu0 %v625
    %3505 = vmatprep.subr.mxu0 0.0
    %3506 = vmatpush1.msra.mxu0 %v624
    %3507 = vmatprep.subr.mxu0 0.0
    %3508 = vmatpush1.msra.mxu0 %v623
    %3509 = vmatprep.subr.mxu0 0.0
    %3510 = vmatpush1.msra.mxu0 %v622
    %3511 = vmatprep.subr.mxu0 0.0
    %3512 = vmatpush1.msra.mxu0 %v621
    %3513 = vmatprep.subr.mxu0 0.0
    %3514 = vmatpush1.msra.mxu0 %v620
    %3515 = vmatprep.subr.mxu0 0.0
    %3516 = vmatpush1.msra.mxu0 %v619
    %3517 = vmatprep.subr.mxu0 0.0
    %3518 = vmatpush1.msra.mxu0 %v618
    %3519 = vmatprep.subr.mxu0 0.0
    %3520 = vmatpush1.msra.mxu0 %v617
    %3521 = vmatprep.subr.mxu0 0.0
    %3522 = vmatpush1.msra.mxu0 %v616
    %3523 = vmatprep.subr.mxu0 0.0
    %3524 = vmatpush1.msra.mxu0 %v615
    %3525 = vmatprep.subr.mxu0 0.0
    %3526 = vmatpush1.msra.mxu0 %v614
    %3527 = vmatprep.subr.mxu0 0.0
    %3528 = vmatpush1.msra.mxu0 %v613
    %3529 = vmatprep.subr.mxu0 0.0
    %3530 = vmatpush1.msra.mxu0 %v612
    %3531 = vmatprep.subr.mxu0 0.0
    %3532 = vmatpush1.msra.mxu0 %v611
    %3533 = vmatprep.subr.mxu0 0.0
    %3534 = vmatpush2.msra.mxu0 0.0
    %3535 = vmatprep.subr.mxu0 0.0
    %3536 = vmatpush2.msra.mxu0 %v771
    %3537 = vmatprep.subr.mxu0 0.0
    %3538 = vmatpush2.msra.mxu0 %v640
    %3539 = vmatprep.subr.mxu0 0.0
    %3540 = vmatpush2.msra.mxu0 %v639
    %3541 = vmatprep.subr.mxu0 0.0
    %3542 = vmatpush2.msra.mxu0 %v638
    %3543 = vmatprep.subr.mxu0 0.0
    %3544 = vmatpush2.msra.mxu0 %v637
    %3545 = vmatprep.subr.mxu0 0.0
    %3546 = vmatpush2.msra.mxu0 %v636
    %3547 = vmatprep.subr.mxu0 0.0
    %3548 = vmatpush2.msra.mxu0 %v635
    %3549 = vmatprep.subr.mxu0 0.0
    %3550 = vmatpush2.msra.mxu0 %v634
    %3551 = vmatprep.subr.mxu0 0.0
    %3552 = vmatpush2.msra.mxu0 %v633
    %3553 = vmatprep.subr.mxu0 0.0
    %3554 = vmatpush2.msra.mxu0 %v632
    %3555 = vmatprep.subr.mxu0 0.0
    %3556 = vmatpush2.msra.mxu0 %v631
    %3557 = vmatprep.subr.mxu0 0.0
    %3558 = vmatpush2.msra.mxu0 %v630
    %3559 = vmatprep.subr.mxu0 0.0
    %3560 = vmatpush2.msra.mxu0 %v629
    %3561 = vmatprep.subr.mxu0 0.0
    %3562 = vmatpush2.msra.mxu0 %v628
    %3563 = vmatprep.subr.mxu0 0.0
    %3564 = vmatpush2.msra.mxu0 %v627
    %3565 = vmatprep.mubr.f32.mxu0 %v3439
    %3566 = vmatmul.mubr.f32.gmra.mxu0 %v3396
    %v3567 = vpop.f32.mrf.mxu0
    %v3568 = vadd.f32 0.0, %v3567
    %v3569 = vpop.f32.mrf.mxu0
    %3570 = vmatprep.mubr.f32.mxu0 %v3442
    %3571 = vmatmul.mubr.f32.gmra.mxu0 %v3398
    %v3572 = vpop.f32.mrf.mxu0
    %v3573 = vadd.f32 0.0, %v3572
    %v3574 = vpop.f32.mrf.mxu0
    %3575 = vmatprep.mubr.f32.mxu0 %v3445
    %3576 = vmatmul.mubr.f32.gmra.mxu0 %v3400
    %v3577 = vpop.f32.mrf.mxu0
    %v3578 = vadd.f32 0.0, %v3577
    %v3579 = vpop.f32.mrf.mxu0
    %3580 = vmatprep.mubr.f32.mxu0 %v3448
    %3581 = vmatmul.mubr.f32.gmra.mxu0 %v3402
    %v3582 = vpop.f32.mrf.mxu0
    %v3583 = vadd.f32 0.0, %v3582
    %v3584 = vpop.f32.mrf.mxu0
    %3585 = vmatprep.mubr.f32.mxu0 %v3451
    %3586 = vmatmul.mubr.f32.gmra.mxu0 %v3404
    %v3587 = vpop.f32.mrf.mxu0
    %v3588 = vadd.f32 0.0, %v3587
    %v3589 = vpop.f32.mrf.mxu0
    %3590 = vmatprep.mubr.f32.mxu0 %v3454
    %3591 = vmatmul.mubr.f32.gmra.mxu0 %v3406
    %v3592 = vpop.f32.mrf.mxu0
    %v3593 = vadd.f32 0.0, %v3592
    %v3594 = vpop.f32.mrf.mxu0
    %3595 = vmatprep.mubr.f32.mxu0 %v3457
    %3596 = vmatmul.mubr.f32.gmra.mxu0 %v3408
    %v3597 = vpop.f32.mrf.mxu0
    %v3598 = vadd.f32 0.0, %v3597
    %v3599 = vpop.f32.mrf.mxu0
    %3600 = vmatprep.mubr.f32.mxu0 %v3460
    %3601 = vmatmul.mubr.f32.gmra.mxu0 %v3410
    %v3602 = vpop.f32.mrf.mxu0
    %v3603 = vadd.f32 0.0, %v3602
    %v3604 = vpop.f32.mrf.mxu0
    %3605 = vmatprep.mubr.f32.mxu0 %v3463
    %3606 = vmatmul.mubr.f32.gmra.mxu0 %v3412
    %v3607 = vpop.f32.mrf.mxu0
    %v3608 = vadd.f32 0.0, %v3607
    %v3609 = vpop.f32.mrf.mxu0
    %3610 = vmatprep.mubr.f32.mxu0 %v3466
    %3611 = vmatmul.mubr.f32.gmra.mxu0 %v3414
    %v3612 = vpop.f32.mrf.mxu0
    %v3613 = vadd.f32 0.0, %v3612
    %v3614 = vpop.f32.mrf.mxu0
    %3615 = vmatprep.mubr.f32.mxu0 %v3469
    %3616 = vmatmul.mubr.f32.gmra.mxu0 %v3416
    %v3617 = vpop.f32.mrf.mxu0
    %v3618 = vadd.f32 0.0, %v3617
    %v3619 = vpop.f32.mrf.mxu0
    %3620 = vmatprep.mubr.f32.mxu0 %v3472
    %3621 = vmatmul.mubr.f32.gmra.mxu0 %v3418
    %v3622 = vpop.f32.mrf.mxu0
    %v3623 = vadd.f32 0.0, %v3622
    %v3624 = vpop.f32.mrf.mxu0
    %3625 = vmatprep.mubr.f32.mxu0 %v3475
    %3626 = vmatmul.mubr.f32.gmra.mxu0 %v3420
    %v3627 = vpop.f32.mrf.mxu0
    %v3628 = vadd.f32 0.0, %v3627
    %v3629 = vpop.f32.mrf.mxu0
    %3630 = vmatprep.mubr.f32.mxu0 %v3478
    %3631 = vmatmul.mubr.f32.gmra.mxu0 %v3422
    %v3632 = vpop.f32.mrf.mxu0
    %v3633 = vadd.f32 0.0, %v3632
    %v3634 = vpop.f32.mrf.mxu0
    %3635 = vmatprep.mubr.f32.mxu0 %v3481
    %3636 = vmatmul.mubr.f32.gmra.mxu0 %v3424
    %v3637 = vpop.f32.mrf.mxu0
    %v3638 = vadd.f32 0.0, %v3637
    %v3639 = vpop.f32.mrf.mxu0
    %3640 = vmatprep.mubr.f32.mxu0 %v3484
    %3641 = vmatmul.mubr.f32.gmra.mxu0 %v3426
    %v3642 = vpop.f32.mrf.mxu0
    %v3643 = vadd.f32 0.0, %v3642
    %v3644 = vpop.f32.mrf.mxu0
    %3645 = vmatprep.mubr.f32.mxu0 %v3487
    %3646 = vmatmul.mubr.f32.gmra.mxu0 %v3428
    %v3647 = vpop.f32.mrf.mxu0
    %v3648 = vadd.f32 0.0, %v3647
    %v3649 = vpop.f32.mrf.mxu0
    %3650 = vmatprep.mubr.f32.mxu0 %v3490
    %3651 = vmatmul.mubr.f32.gmra.mxu0 %v3430
    %v3652 = vpop.f32.mrf.mxu0
    %v3653 = vadd.f32 0.0, %v3652
    %v3654 = vpop.f32.mrf.mxu0
    %3655 = vmatprep.mubr.f32.mxu0 %v3493
    %3656 = vmatmul.mubr.f32.gmra.mxu0 %v3432
    %v3657 = vpop.f32.mrf.mxu0
    %v3658 = vadd.f32 0.0, %v3657
    %v3659 = vpop.f32.mrf.mxu0
    %3660 = vmatprep.mubr.f32.mxu0 %v3496
    %3661 = vmatmul.mubr.f32.gmra.mxu0 %v3434
    %v3662 = vpop.f32.mrf.mxu0
    %v3663 = vadd.f32 0.0, %v3662
    %v3664 = vpop.f32.mrf.mxu0
    %3665 = vmatprep.mubr.f32.mxu0 %v3499
    %3666 = vmatmul.mubr.f32.gmra.mxu0 %v3436
    %v3667 = vpop.f32.mrf.mxu0
    %v3668 = vadd.f32 0.0, %v3667
    %v3669 = vpop.f32.mrf.mxu0
    %3670 = vdwg.mxu0
    %s3671 = scalar_lea.vmem %s3, 80
    %v3672 = vld [vmem:[%s3671] sm:$0xff]
    %v3673 = vld [vmem:[%s3671 + $0x8] sm:$0xff]
    %v3675 = vsel %vm1245, %v3568, 0
    %v3678 = vsel %vm1245, %v3573, 0
    %v3681 = vsel %vm1245, %v3578, 0
    %v3684 = vsel %vm1245, %v3583, 0
    %v3687 = vsel %vm1245, %v3588, 0
    %v3690 = vsel %vm1245, %v3593, 0
    %v3693 = vsel %vm1245, %v3598, 0
    %v3696 = vsel %vm1245, %v3603, 0
    %v3699 = vsel %vm1245, %v3608, 0
    %v3702 = vsel %vm1245, %v3613, 0
    %v3705 = vsel %vm1245, %v3618, 0
    %v3708 = vsel %vm1245, %v3623, 0
    %v3711 = vsel %vm1245, %v3628, 0
    %v3714 = vsel %vm1245, %v3633, 0
    %v3717 = vsel %vm1245, %v3638, 0
    %v3720 = vsel %vm1245, %v3643, 0
    %v3723 = vsel %vm1245, %v3648, 0
    %v3726 = vsel %vm1245, %v3653, 0
    %v3729 = vsel %vm1245, %v3658, 0
    %v3732 = vsel %vm1245, %v3663, 0
    %v3735 = vsel %vm1245, %v3668, 0
    %3737 = vmatprep.subr.mxu0 0.0
    %3738 = vmatpush1.msra.mxu0 0.0
    %3739 = vmatprep.subr.mxu0 0.0
    %3740 = vmatpush1.msra.mxu0 0.0
    %3741 = vmatprep.subr.mxu0 0.0
    %3742 = vmatpush1.msra.mxu0 0.0
    %3743 = vmatprep.subr.mxu0 0.0
    %3744 = vmatpush1.msra.mxu0 0.0
    %3745 = vmatprep.subr.mxu0 0.0
    %3746 = vmatpush1.msra.mxu0 0.0
    %3747 = vmatprep.subr.mxu0 0.0
    %3748 = vmatpush1.msra.mxu0 0.0
    %3749 = vmatprep.subr.mxu0 0.0
    %3750 = vmatpush1.msra.mxu0 0.0
    %3751 = vmatprep.subr.mxu0 0.0
    %3752 = vmatpush1.msra.mxu0 0.0
    %3753 = vmatprep.subr.mxu0 0.0
    %3754 = vmatpush1.msra.mxu0 0.0
    %3755 = vmatprep.subr.mxu0 0.0
    %3756 = vmatpush1.msra.mxu0 0.0
    %3757 = vmatprep.subr.mxu0 0.0
    %3758 = vmatpush1.msra.mxu0 0.0
    %3759 = vmatprep.subr.mxu0 0.0
    %3760 = vmatpush1.msra.mxu0 0.0
    %3761 = vmatprep.subr.mxu0 0.0
    %3762 = vmatpush1.msra.mxu0 0.0
    %3763 = vmatprep.subr.mxu0 0.0
    %3764 = vmatpush1.msra.mxu0 0.0
    %3765 = vmatprep.subr.mxu0 0.0
    %3766 = vmatpush1.msra.mxu0 %v3673
    %3767 = vmatprep.subr.mxu0 0.0
    %3768 = vmatpush1.msra.mxu0 %v3672
    %3769 = vmatprep.subr.mxu0 0.0
    %3770 = vmatpush2.msra.mxu0 0.0
    %3771 = vmatprep.subr.mxu0 0.0
    %3772 = vmatpush2.msra.mxu0 0.0
    %3773 = vmatprep.subr.mxu0 0.0
    %3774 = vmatpush2.msra.mxu0 0.0
    %3775 = vmatprep.subr.mxu0 0.0
    %3776 = vmatpush2.msra.mxu0 0.0
    %3777 = vmatprep.subr.mxu0 0.0
    %3778 = vmatpush2.msra.mxu0 0.0
    %3779 = vmatprep.subr.mxu0 0.0
    %3780 = vmatpush2.msra.mxu0 0.0
    %3781 = vmatprep.subr.mxu0 0.0
    %3782 = vmatpush2.msra.mxu0 0.0
    %3783 = vmatprep.subr.mxu0 0.0
    %3784 = vmatpush2.msra.mxu0 0.0
    %3785 = vmatprep.subr.mxu0 0.0
    %3786 = vmatpush2.msra.mxu0 0.0
    %3787 = vmatprep.subr.mxu0 0.0
    %3788 = vmatpush2.msra.mxu0 0.0
    %3789 = vmatprep.subr.mxu0 0.0
    %3790 = vmatpush2.msra.mxu0 0.0
    %3791 = vmatprep.subr.mxu0 0.0
    %3792 = vmatpush2.msra.mxu0 0.0
    %3793 = vmatprep.subr.mxu0 0.0
    %3794 = vmatpush2.msra.mxu0 0.0
    %3795 = vmatprep.subr.mxu0 0.0
    %3796 = vmatpush2.msra.mxu0 0.0
    %3797 = vmatprep.subr.mxu0 0.0
    %3798 = vmatpush2.msra.mxu0 0.0
    %3799 = vmatprep.subr.mxu0 0.0
    %3800 = vmatpush2.msra.mxu0 0.0
    %3801 = vmatprep.mubr.f32.mxu0 0.0
    %3802 = vmatmul.mubr.f32.gmra.mxu0 %v3675
    %v3803 = vpop.f32.mrf.mxu0
    %v3804 = vadd.f32 0.0, %v3803
    %v3805 = vpop.f32.mrf.mxu0
    %3806 = vmatprep.mubr.f32.mxu0 0.0
    %3807 = vmatmul.mubr.f32.gmra.mxu0 %v3678
    %v3808 = vpop.f32.mrf.mxu0
    %v3809 = vadd.f32 0.0, %v3808
    %v3810 = vpop.f32.mrf.mxu0
    %3811 = vmatprep.mubr.f32.mxu0 0.0
    %3812 = vmatmul.mubr.f32.gmra.mxu0 %v3681
    %v3813 = vpop.f32.mrf.mxu0
    %v3814 = vadd.f32 0.0, %v3813
    %v3815 = vpop.f32.mrf.mxu0
    %3816 = vmatprep.mubr.f32.mxu0 0.0
    %3817 = vmatmul.mubr.f32.gmra.mxu0 %v3684
    %v3818 = vpop.f32.mrf.mxu0
    %v3819 = vadd.f32 0.0, %v3818
    %v3820 = vpop.f32.mrf.mxu0
    %3821 = vmatprep.mubr.f32.mxu0 0.0
    %3822 = vmatmul.mubr.f32.gmra.mxu0 %v3687
    %v3823 = vpop.f32.mrf.mxu0
    %v3824 = vadd.f32 0.0, %v3823
    %v3825 = vpop.f32.mrf.mxu0
    %3826 = vmatprep.mubr.f32.mxu0 0.0
    %3827 = vmatmul.mubr.f32.gmra.mxu0 %v3690
    %v3828 = vpop.f32.mrf.mxu0
    %v3829 = vadd.f32 0.0, %v3828
    %v3830 = vpop.f32.mrf.mxu0
    %3831 = vmatprep.mubr.f32.mxu0 0.0
    %3832 = vmatmul.mubr.f32.gmra.mxu0 %v3693
    %v3833 = vpop.f32.mrf.mxu0
    %v3834 = vadd.f32 0.0, %v3833
    %v3835 = vpop.f32.mrf.mxu0
    %3836 = vmatprep.mubr.f32.mxu0 0.0
    %3837 = vmatmul.mubr.f32.gmra.mxu0 %v3696
    %v3838 = vpop.f32.mrf.mxu0
    %v3839 = vadd.f32 0.0, %v3838
    %v3840 = vpop.f32.mrf.mxu0
    %3841 = vmatprep.mubr.f32.mxu0 0.0
    %3842 = vmatmul.mubr.f32.gmra.mxu0 %v3699
    %v3843 = vpop.f32.mrf.mxu0
    %v3844 = vadd.f32 0.0, %v3843
    %v3845 = vpop.f32.mrf.mxu0
    %3846 = vmatprep.mubr.f32.mxu0 0.0
    %3847 = vmatmul.mubr.f32.gmra.mxu0 %v3702
    %v3848 = vpop.f32.mrf.mxu0
    %v3849 = vadd.f32 0.0, %v3848
    %v3850 = vpop.f32.mrf.mxu0
    %3851 = vmatprep.mubr.f32.mxu0 0.0
    %3852 = vmatmul.mubr.f32.gmra.mxu0 %v3705
    %v3853 = vpop.f32.mrf.mxu0
    %v3854 = vadd.f32 0.0, %v3853
    %v3855 = vpop.f32.mrf.mxu0
    %3856 = vmatprep.mubr.f32.mxu0 0.0
    %3857 = vmatmul.mubr.f32.gmra.mxu0 %v3708
    %v3858 = vpop.f32.mrf.mxu0
    %v3859 = vadd.f32 0.0, %v3858
    %v3860 = vpop.f32.mrf.mxu0
    %3861 = vmatprep.mubr.f32.mxu0 0.0
    %3862 = vmatmul.mubr.f32.gmra.mxu0 %v3711
    %v3863 = vpop.f32.mrf.mxu0
    %v3864 = vadd.f32 0.0, %v3863
    %v3865 = vpop.f32.mrf.mxu0
    %3866 = vmatprep.mubr.f32.mxu0 0.0
    %3867 = vmatmul.mubr.f32.gmra.mxu0 %v3714
    %v3868 = vpop.f32.mrf.mxu0
    %v3869 = vadd.f32 0.0, %v3868
    %v3870 = vpop.f32.mrf.mxu0
    %3871 = vmatprep.mubr.f32.mxu0 0.0
    %3872 = vmatmul.mubr.f32.gmra.mxu0 %v3717
    %v3873 = vpop.f32.mrf.mxu0
    %v3874 = vadd.f32 0.0, %v3873
    %v3875 = vpop.f32.mrf.mxu0
    %3876 = vmatprep.mubr.f32.mxu0 0.0
    %3877 = vmatmul.mubr.f32.gmra.mxu0 %v3720
    %v3878 = vpop.f32.mrf.mxu0
    %v3879 = vadd.f32 0.0, %v3878
    %v3880 = vpop.f32.mrf.mxu0
    %3881 = vmatprep.mubr.f32.mxu0 0.0
    %3882 = vmatmul.mubr.f32.gmra.mxu0 %v3723
    %v3883 = vpop.f32.mrf.mxu0
    %v3884 = vadd.f32 0.0, %v3883
    %v3885 = vpop.f32.mrf.mxu0
    %3886 = vmatprep.mubr.f32.mxu0 0.0
    %3887 = vmatmul.mubr.f32.gmra.mxu0 %v3726
    %v3888 = vpop.f32.mrf.mxu0
    %v3889 = vadd.f32 0.0, %v3888
    %v3890 = vpop.f32.mrf.mxu0
    %3891 = vmatprep.mubr.f32.mxu0 0.0
    %3892 = vmatmul.mubr.f32.gmra.mxu0 %v3729
    %v3893 = vpop.f32.mrf.mxu0
    %v3894 = vadd.f32 0.0, %v3893
    %v3895 = vpop.f32.mrf.mxu0
    %3896 = vmatprep.mubr.f32.mxu0 0.0
    %3897 = vmatmul.mubr.f32.gmra.mxu0 %v3732
    %v3898 = vpop.f32.mrf.mxu0
    %v3899 = vadd.f32 0.0, %v3898
    %v3900 = vpop.f32.mrf.mxu0
    %3901 = vmatprep.mubr.f32.mxu0 0.0
    %3902 = vmatmul.mubr.f32.gmra.mxu0 %v3735
    %v3903 = vpop.f32.mrf.mxu0
    %v3904 = vadd.f32 0.0, %v3903
    %v3905 = vpop.f32.mrf.mxu0
    %3906 = vdwg.mxu0
    %v3907 = vadd.f32 %v3353, %v3804
    %v3908 = vadd.f32 %v3354, %v3809
    %v3909 = vadd.f32 %v3355, %v3814
    %v3910 = vadd.f32 %v3356, %v3819
    %v3911 = vadd.f32 %v3357, %v3824
    %v3912 = vadd.f32 %v3358, %v3829
    %v3913 = vadd.f32 %v3359, %v3834
    %v3914 = vadd.f32 %v3360, %v3839
    %v3915 = vadd.f32 %v3361, %v3844
    %v3916 = vadd.f32 %v3362, %v3849
    %v3917 = vadd.f32 %v3363, %v3854
    %v3918 = vadd.f32 %v3364, %v3859
    %v3919 = vadd.f32 %v3365, %v3864
    %v3920 = vadd.f32 %v3366, %v3869
    %v3921 = vadd.f32 %v3367, %v3874
    %v3922 = vadd.f32 %v3368, %v3879
    %v3923 = vadd.f32 %v3369, %v3884
    %v3924 = vadd.f32 %v3370, %v3889
    %v3925 = vadd.f32 %v3371, %v3894
    %v3926 = vadd.f32 %v3372, %v3899
    %v3927 = vadd.f32 %v3373, %v3904
    %s3928 = scalar_lea.vmem %s2, 1008
    %v3929 = vld [vmem:[%s3928] sm:$0xff]
    %v3930 = vld [vmem:[%s3928 + $0x8] sm:$0xff]
    %v3931 = vld [vmem:[%s3928 + $0x10] sm:$0xff]
    %v3932 = vld [vmem:[%s3928 + $0x18] sm:$0xff]
    %v3933 = vld [vmem:[%s3928 + $0x20] sm:$0xff]
    %v3934 = vld [vmem:[%s3928 + $0x28] sm:$0xff]
    %v3935 = vld [vmem:[%s3928 + $0x30] sm:$0xff]
    %v3936 = vld [vmem:[%s3928 + $0x38] sm:$0xff]
    %v3937 = vld [vmem:[%s3928 + $0x40] sm:$0xff]
    %v3938 = vld [vmem:[%s3928 + $0x48] sm:$0xff]
    %v3939 = vld [vmem:[%s3928 + $0x50] sm:$0xff]
    %v3940 = vld [vmem:[%s3928 + $0x58] sm:$0xff]
    %v3941 = vld [vmem:[%s3928 + $0x60] sm:$0xff]
    %v3942 = vld [vmem:[%s3928 + $0x68] sm:$0xff]
    %v3943 = vld [vmem:[%s3928 + $0x70] sm:$0xff]
    %v3944 = vld [vmem:[%s3928 + $0x78] sm:$0xff]
    %v3945 = vld [vmem:[%s3928 + $0x80] sm:$0xff]
    %v3946 = vld [vmem:[%s3928 + $0x88] sm:$0xff]
    %v3947 = vld [vmem:[%s3928 + $0x90] sm:$0xff]
    %v3948 = vld [vmem:[%s3928 + $0x98] sm:$0xff]
    %v3949 = vld [vmem:[%s3928 + $0xa0] sm:$0x11]
    %v3950 = vunpack.c.l.bf16 %v3929
    %v3951 = vunpack.c.h.bf16 %v3929
    %v3952 = vunpack.c.l.bf16 %v3930
    %v3953 = vunpack.c.h.bf16 %v3930
    %v3954 = vunpack.c.l.bf16 %v3931
    %v3955 = vunpack.c.h.bf16 %v3931
    %v3956 = vunpack.c.l.bf16 %v3932
    %v3957 = vunpack.c.h.bf16 %v3932
    %v3958 = vunpack.c.l.bf16 %v3933
    %v3959 = vunpack.c.h.bf16 %v3933
    %v3960 = vunpack.c.l.bf16 %v3934
    %v3961 = vunpack.c.h.bf16 %v3934
    %v3962 = vunpack.c.l.bf16 %v3935
    %v3963 = vunpack.c.h.bf16 %v3935
    %v3964 = vunpack.c.l.bf16 %v3936
    %v3965 = vunpack.c.h.bf16 %v3936
    %v3966 = vunpack.c.l.bf16 %v3937
    %v3967 = vunpack.c.h.bf16 %v3937
    %v3968 = vunpack.c.l.bf16 %v3938
    %v3969 = vunpack.c.h.bf16 %v3938
    %v3970 = vunpack.c.l.bf16 %v3939
    %v3971 = vunpack.c.h.bf16 %v3939
    %v3972 = vunpack.c.l.bf16 %v3940
    %v3973 = vunpack.c.h.bf16 %v3940
    %v3974 = vunpack.c.l.bf16 %v3941
    %v3975 = vunpack.c.h.bf16 %v3941
    %v3976 = vunpack.c.l.bf16 %v3942
    %v3977 = vunpack.c.h.bf16 %v3942
    %v3978 = vunpack.c.l.bf16 %v3943
    %v3979 = vunpack.c.h.bf16 %v3943
    %v3980 = vunpack.c.l.bf16 %v3944
    %v3981 = vunpack.c.h.bf16 %v3944
    %v3982 = vunpack.c.l.bf16 %v3945
    %v3983 = vunpack.c.h.bf16 %v3945
    %v3984 = vunpack.c.l.bf16 %v3946
    %v3985 = vunpack.c.h.bf16 %v3946
    %v3986 = vunpack.c.l.bf16 %v3947
    %v3987 = vunpack.c.h.bf16 %v3947
    %v3988 = vunpack.c.l.bf16 %v3948
    %v3989 = vunpack.c.h.bf16 %v3948
    %v3990 = vunpack.c.l.bf16 %v3949
    %v3991 = vunpack.c.h.bf16 %v3949
    %v3993 = vsel %vm705, %v3951, 0
    %v3996 = vsel %vm705, %v3953, 0
    %v3999 = vsel %vm705, %v3955, 0
    %v4002 = vsel %vm705, %v3957, 0
    %v4005 = vsel %vm705, %v3959, 0
    %v4008 = vsel %vm705, %v3961, 0
    %v4011 = vsel %vm705, %v3963, 0
    %v4014 = vsel %vm705, %v3965, 0
    %v4017 = vsel %vm705, %v3967, 0
    %v4020 = vsel %vm705, %v3969, 0
    %v4023 = vsel %vm705, %v3971, 0
    %v4026 = vsel %vm705, %v3973, 0
    %v4029 = vsel %vm705, %v3975, 0
    %v4032 = vsel %vm705, %v3977, 0
    %v4035 = vsel %vm705, %v3979, 0
    %v4038 = vsel %vm705, %v3981, 0
    %v4041 = vsel %vm705, %v3983, 0
    %v4044 = vsel %vm705, %v3985, 0
    %v4047 = vsel %vm705, %v3987, 0
    %v4050 = vsel %vm705, %v3989, 0
    %v4053 = vsel %vm705, %v3991, 0
    %4055 = vmatprep.subr.mxu0 0.0
    %4056 = vmatpush1.msra.mxu0 %v626
    %4057 = vmatprep.subr.mxu0 0.0
    %4058 = vmatpush1.msra.mxu0 %v625
    %4059 = vmatprep.subr.mxu0 0.0
    %4060 = vmatpush1.msra.mxu0 %v624
    %4061 = vmatprep.subr.mxu0 0.0
    %4062 = vmatpush1.msra.mxu0 %v623
    %4063 = vmatprep.subr.mxu0 0.0
    %4064 = vmatpush1.msra.mxu0 %v622
    %4065 = vmatprep.subr.mxu0 0.0
    %4066 = vmatpush1.msra.mxu0 %v621
    %4067 = vmatprep.subr.mxu0 0.0
    %4068 = vmatpush1.msra.mxu0 %v620
    %4069 = vmatprep.subr.mxu0 0.0
    %4070 = vmatpush1.msra.mxu0 %v619
    %4071 = vmatprep.subr.mxu0 0.0
    %4072 = vmatpush1.msra.mxu0 %v618
    %4073 = vmatprep.subr.mxu0 0.0
    %4074 = vmatpush1.msra.mxu0 %v617
    %4075 = vmatprep.subr.mxu0 0.0
    %4076 = vmatpush1.msra.mxu0 %v616
    %4077 = vmatprep.subr.mxu0 0.0
    %4078 = vmatpush1.msra.mxu0 %v615
    %4079 = vmatprep.subr.mxu0 0.0
    %4080 = vmatpush1.msra.mxu0 %v614
    %4081 = vmatprep.subr.mxu0 0.0
    %4082 = vmatpush1.msra.mxu0 %v613
    %4083 = vmatprep.subr.mxu0 0.0
    %4084 = vmatpush1.msra.mxu0 %v612
    %4085 = vmatprep.subr.mxu0 0.0
    %4086 = vmatpush1.msra.mxu0 %v611
    %4087 = vmatprep.subr.mxu0 0.0
    %4088 = vmatpush2.msra.mxu0 0.0
    %4089 = vmatprep.subr.mxu0 0.0
    %4090 = vmatpush2.msra.mxu0 %v771
    %4091 = vmatprep.subr.mxu0 0.0
    %4092 = vmatpush2.msra.mxu0 %v640
    %4093 = vmatprep.subr.mxu0 0.0
    %4094 = vmatpush2.msra.mxu0 %v639
    %4095 = vmatprep.subr.mxu0 0.0
    %4096 = vmatpush2.msra.mxu0 %v638
    %4097 = vmatprep.subr.mxu0 0.0
    %4098 = vmatpush2.msra.mxu0 %v637
    %4099 = vmatprep.subr.mxu0 0.0
    %4100 = vmatpush2.msra.mxu0 %v636
    %4101 = vmatprep.subr.mxu0 0.0
    %4102 = vmatpush2.msra.mxu0 %v635
    %4103 = vmatprep.subr.mxu0 0.0
    %4104 = vmatpush2.msra.mxu0 %v634
    %4105 = vmatprep.subr.mxu0 0.0
    %4106 = vmatpush2.msra.mxu0 %v633
    %4107 = vmatprep.subr.mxu0 0.0
    %4108 = vmatpush2.msra.mxu0 %v632
    %4109 = vmatprep.subr.mxu0 0.0
    %4110 = vmatpush2.msra.mxu0 %v631
    %4111 = vmatprep.subr.mxu0 0.0
    %4112 = vmatpush2.msra.mxu0 %v630
    %4113 = vmatprep.subr.mxu0 0.0
    %4114 = vmatpush2.msra.mxu0 %v629
    %4115 = vmatprep.subr.mxu0 0.0
    %4116 = vmatpush2.msra.mxu0 %v628
    %4117 = vmatprep.subr.mxu0 0.0
    %4118 = vmatpush2.msra.mxu0 %v627
    %4119 = vmatprep.mubr.f32.mxu0 %v3993
    %4120 = vmatmul.mubr.f32.gmra.mxu0 %v3950
    %v4121 = vpop.f32.mrf.mxu0
    %v4122 = vadd.f32 0.0, %v4121
    %v4123 = vpop.f32.mrf.mxu0
    %4124 = vmatprep.mubr.f32.mxu0 %v3996
    %4125 = vmatmul.mubr.f32.gmra.mxu0 %v3952
    %v4126 = vpop.f32.mrf.mxu0
    %v4127 = vadd.f32 0.0, %v4126
    %v4128 = vpop.f32.mrf.mxu0
    %4129 = vmatprep.mubr.f32.mxu0 %v3999
    %4130 = vmatmul.mubr.f32.gmra.mxu0 %v3954
    %v4131 = vpop.f32.mrf.mxu0
    %v4132 = vadd.f32 0.0, %v4131
    %v4133 = vpop.f32.mrf.mxu0
    %4134 = vmatprep.mubr.f32.mxu0 %v4002
    %4135 = vmatmul.mubr.f32.gmra.mxu0 %v3956
    %v4136 = vpop.f32.mrf.mxu0
    %v4137 = vadd.f32 0.0, %v4136
    %v4138 = vpop.f32.mrf.mxu0
    %4139 = vmatprep.mubr.f32.mxu0 %v4005
    %4140 = vmatmul.mubr.f32.gmra.mxu0 %v3958
    %v4141 = vpop.f32.mrf.mxu0
    %v4142 = vadd.f32 0.0, %v4141
    %v4143 = vpop.f32.mrf.mxu0
    %4144 = vmatprep.mubr.f32.mxu0 %v4008
    %4145 = vmatmul.mubr.f32.gmra.mxu0 %v3960
    %v4146 = vpop.f32.mrf.mxu0
    %v4147 = vadd.f32 0.0, %v4146
    %v4148 = vpop.f32.mrf.mxu0
    %4149 = vmatprep.mubr.f32.mxu0 %v4011
    %4150 = vmatmul.mubr.f32.gmra.mxu0 %v3962
    %v4151 = vpop.f32.mrf.mxu0
    %v4152 = vadd.f32 0.0, %v4151
    %v4153 = vpop.f32.mrf.mxu0
    %4154 = vmatprep.mubr.f32.mxu0 %v4014
    %4155 = vmatmul.mubr.f32.gmra.mxu0 %v3964
    %v4156 = vpop.f32.mrf.mxu0
    %v4157 = vadd.f32 0.0, %v4156
    %v4158 = vpop.f32.mrf.mxu0
    %4159 = vmatprep.mubr.f32.mxu0 %v4017
    %4160 = vmatmul.mubr.f32.gmra.mxu0 %v3966
    %v4161 = vpop.f32.mrf.mxu0
    %v4162 = vadd.f32 0.0, %v4161
    %v4163 = vpop.f32.mrf.mxu0
    %4164 = vmatprep.mubr.f32.mxu0 %v4020
    %4165 = vmatmul.mubr.f32.gmra.mxu0 %v3968
    %v4166 = vpop.f32.mrf.mxu0
    %v4167 = vadd.f32 0.0, %v4166
    %v4168 = vpop.f32.mrf.mxu0
    %4169 = vmatprep.mubr.f32.mxu0 %v4023
    %4170 = vmatmul.mubr.f32.gmra.mxu0 %v3970
    %v4171 = vpop.f32.mrf.mxu0
    %v4172 = vadd.f32 0.0, %v4171
    %v4173 = vpop.f32.mrf.mxu0
    %4174 = vmatprep.mubr.f32.mxu0 %v4026
    %4175 = vmatmul.mubr.f32.gmra.mxu0 %v3972
    %v4176 = vpop.f32.mrf.mxu0
    %v4177 = vadd.f32 0.0, %v4176
    %v4178 = vpop.f32.mrf.mxu0
    %4179 = vmatprep.mubr.f32.mxu0 %v4029
    %4180 = vmatmul.mubr.f32.gmra.mxu0 %v3974
    %v4181 = vpop.f32.mrf.mxu0
    %v4182 = vadd.f32 0.0, %v4181
    %v4183 = vpop.f32.mrf.mxu0
    %4184 = vmatprep.mubr.f32.mxu0 %v4032
    %4185 = vmatmul.mubr.f32.gmra.mxu0 %v3976
    %v4186 = vpop.f32.mrf.mxu0
    %v4187 = vadd.f32 0.0, %v4186
    %v4188 = vpop.f32.mrf.mxu0
    %4189 = vmatprep.mubr.f32.mxu0 %v4035
    %4190 = vmatmul.mubr.f32.gmra.mxu0 %v3978
    %v4191 = vpop.f32.mrf.mxu0
    %v4192 = vadd.f32 0.0, %v4191
    %v4193 = vpop.f32.mrf.mxu0
    %4194 = vmatprep.mubr.f32.mxu0 %v4038
    %4195 = vmatmul.mubr.f32.gmra.mxu0 %v3980
    %v4196 = vpop.f32.mrf.mxu0
    %v4197 = vadd.f32 0.0, %v4196
    %v4198 = vpop.f32.mrf.mxu0
    %4199 = vmatprep.mubr.f32.mxu0 %v4041
    %4200 = vmatmul.mubr.f32.gmra.mxu0 %v3982
    %v4201 = vpop.f32.mrf.mxu0
    %v4202 = vadd.f32 0.0, %v4201
    %v4203 = vpop.f32.mrf.mxu0
    %4204 = vmatprep.mubr.f32.mxu0 %v4044
    %4205 = vmatmul.mubr.f32.gmra.mxu0 %v3984
    %v4206 = vpop.f32.mrf.mxu0
    %v4207 = vadd.f32 0.0, %v4206
    %v4208 = vpop.f32.mrf.mxu0
    %4209 = vmatprep.mubr.f32.mxu0 %v4047
    %4210 = vmatmul.mubr.f32.gmra.mxu0 %v3986
    %v4211 = vpop.f32.mrf.mxu0
    %v4212 = vadd.f32 0.0, %v4211
    %v4213 = vpop.f32.mrf.mxu0
    %4214 = vmatprep.mubr.f32.mxu0 %v4050
    %4215 = vmatmul.mubr.f32.gmra.mxu0 %v3988
    %v4216 = vpop.f32.mrf.mxu0
    %v4217 = vadd.f32 0.0, %v4216
    %v4218 = vpop.f32.mrf.mxu0
    %4219 = vmatprep.mubr.f32.mxu0 %v4053
    %4220 = vmatmul.mubr.f32.gmra.mxu0 %v3990
    %v4221 = vpop.f32.mrf.mxu0
    %v4222 = vadd.f32 0.0, %v4221
    %v4223 = vpop.f32.mrf.mxu0
    %4224 = vdwg.mxu0
    %s4225 = scalar_lea.vmem %s3, 96
    %v4226 = vld [vmem:[%s4225] sm:$0xff]
    %v4227 = vld [vmem:[%s4225 + $0x8] sm:$0xff]
    %v4229 = vsel %vm1245, %v4122, 0
    %v4232 = vsel %vm1245, %v4127, 0
    %v4235 = vsel %vm1245, %v4132, 0
    %v4238 = vsel %vm1245, %v4137, 0
    %v4241 = vsel %vm1245, %v4142, 0
    %v4244 = vsel %vm1245, %v4147, 0
    %v4247 = vsel %vm1245, %v4152, 0
    %v4250 = vsel %vm1245, %v4157, 0
    %v4253 = vsel %vm1245, %v4162, 0
    %v4256 = vsel %vm1245, %v4167, 0
    %v4259 = vsel %vm1245, %v4172, 0
    %v4262 = vsel %vm1245, %v4177, 0
    %v4265 = vsel %vm1245, %v4182, 0
    %v4268 = vsel %vm1245, %v4187, 0
    %v4271 = vsel %vm1245, %v4192, 0
    %v4274 = vsel %vm1245, %v4197, 0
    %v4277 = vsel %vm1245, %v4202, 0
    %v4280 = vsel %vm1245, %v4207, 0
    %v4283 = vsel %vm1245, %v4212, 0
    %v4286 = vsel %vm1245, %v4217, 0
    %v4289 = vsel %vm1245, %v4222, 0
    %4291 = vmatprep.subr.mxu0 0.0
    %4292 = vmatpush1.msra.mxu0 0.0
    %4293 = vmatprep.subr.mxu0 0.0
    %4294 = vmatpush1.msra.mxu0 0.0
    %4295 = vmatprep.subr.mxu0 0.0
    %4296 = vmatpush1.msra.mxu0 0.0
    %4297 = vmatprep.subr.mxu0 0.0
    %4298 = vmatpush1.msra.mxu0 0.0
    %4299 = vmatprep.subr.mxu0 0.0
    %4300 = vmatpush1.msra.mxu0 0.0
    %4301 = vmatprep.subr.mxu0 0.0
    %4302 = vmatpush1.msra.mxu0 0.0
    %4303 = vmatprep.subr.mxu0 0.0
    %4304 = vmatpush1.msra.mxu0 0.0
    %4305 = vmatprep.subr.mxu0 0.0
    %4306 = vmatpush1.msra.mxu0 0.0
    %4307 = vmatprep.subr.mxu0 0.0
    %4308 = vmatpush1.msra.mxu0 0.0
    %4309 = vmatprep.subr.mxu0 0.0
    %4310 = vmatpush1.msra.mxu0 0.0
    %4311 = vmatprep.subr.mxu0 0.0
    %4312 = vmatpush1.msra.mxu0 0.0
    %4313 = vmatprep.subr.mxu0 0.0
    %4314 = vmatpush1.msra.mxu0 0.0
    %4315 = vmatprep.subr.mxu0 0.0
    %4316 = vmatpush1.msra.mxu0 0.0
    %4317 = vmatprep.subr.mxu0 0.0
    %4318 = vmatpush1.msra.mxu0 0.0
    %4319 = vmatprep.subr.mxu0 0.0
    %4320 = vmatpush1.msra.mxu0 %v4227
    %4321 = vmatprep.subr.mxu0 0.0
    %4322 = vmatpush1.msra.mxu0 %v4226
    %4323 = vmatprep.subr.mxu0 0.0
    %4324 = vmatpush2.msra.mxu0 0.0
    %4325 = vmatprep.subr.mxu0 0.0
    %4326 = vmatpush2.msra.mxu0 0.0
    %4327 = vmatprep.subr.mxu0 0.0
    %4328 = vmatpush2.msra.mxu0 0.0
    %4329 = vmatprep.subr.mxu0 0.0
    %4330 = vmatpush2.msra.mxu0 0.0
    %4331 = vmatprep.subr.mxu0 0.0
    %4332 = vmatpush2.msra.mxu0 0.0
    %4333 = vmatprep.subr.mxu0 0.0
    %4334 = vmatpush2.msra.mxu0 0.0
    %4335 = vmatprep.subr.mxu0 0.0
    %4336 = vmatpush2.msra.mxu0 0.0
    %4337 = vmatprep.subr.mxu0 0.0
    %4338 = vmatpush2.msra.mxu0 0.0
    %4339 = vmatprep.subr.mxu0 0.0
    %4340 = vmatpush2.msra.mxu0 0.0
    %4341 = vmatprep.subr.mxu0 0.0
    %4342 = vmatpush2.msra.mxu0 0.0
    %4343 = vmatprep.subr.mxu0 0.0
    %4344 = vmatpush2.msra.mxu0 0.0
    %4345 = vmatprep.subr.mxu0 0.0
    %4346 = vmatpush2.msra.mxu0 0.0
    %4347 = vmatprep.subr.mxu0 0.0
    %4348 = vmatpush2.msra.mxu0 0.0
    %4349 = vmatprep.subr.mxu0 0.0
    %4350 = vmatpush2.msra.mxu0 0.0
    %4351 = vmatprep.subr.mxu0 0.0
    %4352 = vmatpush2.msra.mxu0 0.0
    %4353 = vmatprep.subr.mxu0 0.0
    %4354 = vmatpush2.msra.mxu0 0.0
    %4355 = vmatprep.mubr.f32.mxu0 0.0
    %4356 = vmatmul.mubr.f32.gmra.mxu0 %v4229
    %v4357 = vpop.f32.mrf.mxu0
    %v4358 = vadd.f32 0.0, %v4357
    %v4359 = vpop.f32.mrf.mxu0
    %4360 = vmatprep.mubr.f32.mxu0 0.0
    %4361 = vmatmul.mubr.f32.gmra.mxu0 %v4232
    %v4362 = vpop.f32.mrf.mxu0
    %v4363 = vadd.f32 0.0, %v4362
    %v4364 = vpop.f32.mrf.mxu0
    %4365 = vmatprep.mubr.f32.mxu0 0.0
    %4366 = vmatmul.mubr.f32.gmra.mxu0 %v4235
    %v4367 = vpop.f32.mrf.mxu0
    %v4368 = vadd.f32 0.0, %v4367
    %v4369 = vpop.f32.mrf.mxu0
    %4370 = vmatprep.mubr.f32.mxu0 0.0
    %4371 = vmatmul.mubr.f32.gmra.mxu0 %v4238
    %v4372 = vpop.f32.mrf.mxu0
    %v4373 = vadd.f32 0.0, %v4372
    %v4374 = vpop.f32.mrf.mxu0
    %4375 = vmatprep.mubr.f32.mxu0 0.0
    %4376 = vmatmul.mubr.f32.gmra.mxu0 %v4241
    %v4377 = vpop.f32.mrf.mxu0
    %v4378 = vadd.f32 0.0, %v4377
    %v4379 = vpop.f32.mrf.mxu0
    %4380 = vmatprep.mubr.f32.mxu0 0.0
    %4381 = vmatmul.mubr.f32.gmra.mxu0 %v4244
    %v4382 = vpop.f32.mrf.mxu0
    %v4383 = vadd.f32 0.0, %v4382
    %v4384 = vpop.f32.mrf.mxu0
    %4385 = vmatprep.mubr.f32.mxu0 0.0
    %4386 = vmatmul.mubr.f32.gmra.mxu0 %v4247
    %v4387 = vpop.f32.mrf.mxu0
    %v4388 = vadd.f32 0.0, %v4387
    %v4389 = vpop.f32.mrf.mxu0
    %4390 = vmatprep.mubr.f32.mxu0 0.0
    %4391 = vmatmul.mubr.f32.gmra.mxu0 %v4250
    %v4392 = vpop.f32.mrf.mxu0
    %v4393 = vadd.f32 0.0, %v4392
    %v4394 = vpop.f32.mrf.mxu0
    %4395 = vmatprep.mubr.f32.mxu0 0.0
    %4396 = vmatmul.mubr.f32.gmra.mxu0 %v4253
    %v4397 = vpop.f32.mrf.mxu0
    %v4398 = vadd.f32 0.0, %v4397
    %v4399 = vpop.f32.mrf.mxu0
    %4400 = vmatprep.mubr.f32.mxu0 0.0
    %4401 = vmatmul.mubr.f32.gmra.mxu0 %v4256
    %v4402 = vpop.f32.mrf.mxu0
    %v4403 = vadd.f32 0.0, %v4402
    %v4404 = vpop.f32.mrf.mxu0
    %4405 = vmatprep.mubr.f32.mxu0 0.0
    %4406 = vmatmul.mubr.f32.gmra.mxu0 %v4259
    %v4407 = vpop.f32.mrf.mxu0
    %v4408 = vadd.f32 0.0, %v4407
    %v4409 = vpop.f32.mrf.mxu0
    %4410 = vmatprep.mubr.f32.mxu0 0.0
    %4411 = vmatmul.mubr.f32.gmra.mxu0 %v4262
    %v4412 = vpop.f32.mrf.mxu0
    %v4413 = vadd.f32 0.0, %v4412
    %v4414 = vpop.f32.mrf.mxu0
    %4415 = vmatprep.mubr.f32.mxu0 0.0
    %4416 = vmatmul.mubr.f32.gmra.mxu0 %v4265
    %v4417 = vpop.f32.mrf.mxu0
    %v4418 = vadd.f32 0.0, %v4417
    %v4419 = vpop.f32.mrf.mxu0
    %4420 = vmatprep.mubr.f32.mxu0 0.0
    %4421 = vmatmul.mubr.f32.gmra.mxu0 %v4268
    %v4422 = vpop.f32.mrf.mxu0
    %v4423 = vadd.f32 0.0, %v4422
    %v4424 = vpop.f32.mrf.mxu0
    %4425 = vmatprep.mubr.f32.mxu0 0.0
    %4426 = vmatmul.mubr.f32.gmra.mxu0 %v4271
    %v4427 = vpop.f32.mrf.mxu0
    %v4428 = vadd.f32 0.0, %v4427
    %v4429 = vpop.f32.mrf.mxu0
    %4430 = vmatprep.mubr.f32.mxu0 0.0
    %4431 = vmatmul.mubr.f32.gmra.mxu0 %v4274
    %v4432 = vpop.f32.mrf.mxu0
    %v4433 = vadd.f32 0.0, %v4432
    %v4434 = vpop.f32.mrf.mxu0
    %4435 = vmatprep.mubr.f32.mxu0 0.0
    %4436 = vmatmul.mubr.f32.gmra.mxu0 %v4277
    %v4437 = vpop.f32.mrf.mxu0
    %v4438 = vadd.f32 0.0, %v4437
    %v4439 = vpop.f32.mrf.mxu0
    %4440 = vmatprep.mubr.f32.mxu0 0.0
    %4441 = vmatmul.mubr.f32.gmra.mxu0 %v4280
    %v4442 = vpop.f32.mrf.mxu0
    %v4443 = vadd.f32 0.0, %v4442
    %v4444 = vpop.f32.mrf.mxu0
    %4445 = vmatprep.mubr.f32.mxu0 0.0
    %4446 = vmatmul.mubr.f32.gmra.mxu0 %v4283
    %v4447 = vpop.f32.mrf.mxu0
    %v4448 = vadd.f32 0.0, %v4447
    %v4449 = vpop.f32.mrf.mxu0
    %4450 = vmatprep.mubr.f32.mxu0 0.0
    %4451 = vmatmul.mubr.f32.gmra.mxu0 %v4286
    %v4452 = vpop.f32.mrf.mxu0
    %v4453 = vadd.f32 0.0, %v4452
    %v4454 = vpop.f32.mrf.mxu0
    %4455 = vmatprep.mubr.f32.mxu0 0.0
    %4456 = vmatmul.mubr.f32.gmra.mxu0 %v4289
    %v4457 = vpop.f32.mrf.mxu0
    %v4458 = vadd.f32 0.0, %v4457
    %v4459 = vpop.f32.mrf.mxu0
    %4460 = vdwg.mxu0
    %v4461 = vadd.f32 %v3907, %v4358
    %v4462 = vadd.f32 %v3908, %v4363
    %v4463 = vadd.f32 %v3909, %v4368
    %v4464 = vadd.f32 %v3910, %v4373
    %v4465 = vadd.f32 %v3911, %v4378
    %v4466 = vadd.f32 %v3912, %v4383
    %v4467 = vadd.f32 %v3913, %v4388
    %v4468 = vadd.f32 %v3914, %v4393
    %v4469 = vadd.f32 %v3915, %v4398
    %v4470 = vadd.f32 %v3916, %v4403
    %v4471 = vadd.f32 %v3917, %v4408
    %v4472 = vadd.f32 %v3918, %v4413
    %v4473 = vadd.f32 %v3919, %v4418
    %v4474 = vadd.f32 %v3920, %v4423
    %v4475 = vadd.f32 %v3921, %v4428
    %v4476 = vadd.f32 %v3922, %v4433
    %v4477 = vadd.f32 %v3923, %v4438
    %v4478 = vadd.f32 %v3924, %v4443
    %v4479 = vadd.f32 %v3925, %v4448
    %v4480 = vadd.f32 %v3926, %v4453
    %v4481 = vadd.f32 %v3927, %v4458
    %s4482 = scalar_lea.vmem %s2, 1176
    %v4483 = vld [vmem:[%s4482] sm:$0xff]
    %v4484 = vld [vmem:[%s4482 + $0x8] sm:$0xff]
    %v4485 = vld [vmem:[%s4482 + $0x10] sm:$0xff]
    %v4486 = vld [vmem:[%s4482 + $0x18] sm:$0xff]
    %v4487 = vld [vmem:[%s4482 + $0x20] sm:$0xff]
    %v4488 = vld [vmem:[%s4482 + $0x28] sm:$0xff]
    %v4489 = vld [vmem:[%s4482 + $0x30] sm:$0xff]
    %v4490 = vld [vmem:[%s4482 + $0x38] sm:$0xff]
    %v4491 = vld [vmem:[%s4482 + $0x40] sm:$0xff]
    %v4492 = vld [vmem:[%s4482 + $0x48] sm:$0xff]
    %v4493 = vld [vmem:[%s4482 + $0x50] sm:$0xff]
    %v4494 = vld [vmem:[%s4482 + $0x58] sm:$0xff]
    %v4495 = vld [vmem:[%s4482 + $0x60] sm:$0xff]
    %v4496 = vld [vmem:[%s4482 + $0x68] sm:$0xff]
    %v4497 = vld [vmem:[%s4482 + $0x70] sm:$0xff]
    %v4498 = vld [vmem:[%s4482 + $0x78] sm:$0xff]
    %v4499 = vld [vmem:[%s4482 + $0x80] sm:$0xff]
    %v4500 = vld [vmem:[%s4482 + $0x88] sm:$0xff]
    %v4501 = vld [vmem:[%s4482 + $0x90] sm:$0xff]
    %v4502 = vld [vmem:[%s4482 + $0x98] sm:$0xff]
    %v4503 = vld [vmem:[%s4482 + $0xa0] sm:$0x11]
    %v4504 = vunpack.c.l.bf16 %v4483
    %v4505 = vunpack.c.h.bf16 %v4483
    %v4506 = vunpack.c.l.bf16 %v4484
    %v4507 = vunpack.c.h.bf16 %v4484
    %v4508 = vunpack.c.l.bf16 %v4485
    %v4509 = vunpack.c.h.bf16 %v4485
    %v4510 = vunpack.c.l.bf16 %v4486
    %v4511 = vunpack.c.h.bf16 %v4486
    %v4512 = vunpack.c.l.bf16 %v4487
    %v4513 = vunpack.c.h.bf16 %v4487
    %v4514 = vunpack.c.l.bf16 %v4488
    %v4515 = vunpack.c.h.bf16 %v4488
    %v4516 = vunpack.c.l.bf16 %v4489
    %v4517 = vunpack.c.h.bf16 %v4489
    %v4518 = vunpack.c.l.bf16 %v4490
    %v4519 = vunpack.c.h.bf16 %v4490
    %v4520 = vunpack.c.l.bf16 %v4491
    %v4521 = vunpack.c.h.bf16 %v4491
    %v4522 = vunpack.c.l.bf16 %v4492
    %v4523 = vunpack.c.h.bf16 %v4492
    %v4524 = vunpack.c.l.bf16 %v4493
    %v4525 = vunpack.c.h.bf16 %v4493
    %v4526 = vunpack.c.l.bf16 %v4494
    %v4527 = vunpack.c.h.bf16 %v4494
    %v4528 = vunpack.c.l.bf16 %v4495
    %v4529 = vunpack.c.h.bf16 %v4495
    %v4530 = vunpack.c.l.bf16 %v4496
    %v4531 = vunpack.c.h.bf16 %v4496
    %v4532 = vunpack.c.l.bf16 %v4497
    %v4533 = vunpack.c.h.bf16 %v4497
    %v4534 = vunpack.c.l.bf16 %v4498
    %v4535 = vunpack.c.h.bf16 %v4498
    %v4536 = vunpack.c.l.bf16 %v4499
    %v4537 = vunpack.c.h.bf16 %v4499
    %v4538 = vunpack.c.l.bf16 %v4500
    %v4539 = vunpack.c.h.bf16 %v4500
    %v4540 = vunpack.c.l.bf16 %v4501
    %v4541 = vunpack.c.h.bf16 %v4501
    %v4542 = vunpack.c.l.bf16 %v4502
    %v4543 = vunpack.c.h.bf16 %v4502
    %v4544 = vunpack.c.l.bf16 %v4503
    %v4545 = vunpack.c.h.bf16 %v4503
    %v4547 = vsel %vm705, %v4505, 0
    %v4550 = vsel %vm705, %v4507, 0
    %v4553 = vsel %vm705, %v4509, 0
    %v4556 = vsel %vm705, %v4511, 0
    %v4559 = vsel %vm705, %v4513, 0
    %v4562 = vsel %vm705, %v4515, 0
    %v4565 = vsel %vm705, %v4517, 0
    %v4568 = vsel %vm705, %v4519, 0
    %v4571 = vsel %vm705, %v4521, 0
    %v4574 = vsel %vm705, %v4523, 0
    %v4577 = vsel %vm705, %v4525, 0
    %v4580 = vsel %vm705, %v4527, 0
    %v4583 = vsel %vm705, %v4529, 0
    %v4586 = vsel %vm705, %v4531, 0
    %v4589 = vsel %vm705, %v4533, 0
    %v4592 = vsel %vm705, %v4535, 0
    %v4595 = vsel %vm705, %v4537, 0
    %v4598 = vsel %vm705, %v4539, 0
    %v4601 = vsel %vm705, %v4541, 0
    %v4604 = vsel %vm705, %v4543, 0
    %v4607 = vsel %vm705, %v4545, 0
    %4609 = vmatprep.subr.mxu0 0.0
    %4610 = vmatpush1.msra.mxu0 %v626
    %4611 = vmatprep.subr.mxu0 0.0
    %4612 = vmatpush1.msra.mxu0 %v625
    %4613 = vmatprep.subr.mxu0 0.0
    %4614 = vmatpush1.msra.mxu0 %v624
    %4615 = vmatprep.subr.mxu0 0.0
    %4616 = vmatpush1.msra.mxu0 %v623
    %4617 = vmatprep.subr.mxu0 0.0
    %4618 = vmatpush1.msra.mxu0 %v622
    %4619 = vmatprep.subr.mxu0 0.0
    %4620 = vmatpush1.msra.mxu0 %v621
    %4621 = vmatprep.subr.mxu0 0.0
    %4622 = vmatpush1.msra.mxu0 %v620
    %4623 = vmatprep.subr.mxu0 0.0
    %4624 = vmatpush1.msra.mxu0 %v619
    %4625 = vmatprep.subr.mxu0 0.0
    %4626 = vmatpush1.msra.mxu0 %v618
    %4627 = vmatprep.subr.mxu0 0.0
    %4628 = vmatpush1.msra.mxu0 %v617
    %4629 = vmatprep.subr.mxu0 0.0
    %4630 = vmatpush1.msra.mxu0 %v616
    %4631 = vmatprep.subr.mxu0 0.0
    %4632 = vmatpush1.msra.mxu0 %v615
    %4633 = vmatprep.subr.mxu0 0.0
    %4634 = vmatpush1.msra.mxu0 %v614
    %4635 = vmatprep.subr.mxu0 0.0
    %4636 = vmatpush1.msra.mxu0 %v613
    %4637 = vmatprep.subr.mxu0 0.0
    %4638 = vmatpush1.msra.mxu0 %v612
    %4639 = vmatprep.subr.mxu0 0.0
    %4640 = vmatpush1.msra.mxu0 %v611
    %4641 = vmatprep.subr.mxu0 0.0
    %4642 = vmatpush2.msra.mxu0 0.0
    %4643 = vmatprep.subr.mxu0 0.0
    %4644 = vmatpush2.msra.mxu0 %v771
    %4645 = vmatprep.subr.mxu0 0.0
    %4646 = vmatpush2.msra.mxu0 %v640
    %4647 = vmatprep.subr.mxu0 0.0
    %4648 = vmatpush2.msra.mxu0 %v639
    %4649 = vmatprep.subr.mxu0 0.0
    %4650 = vmatpush2.msra.mxu0 %v638
    %4651 = vmatprep.subr.mxu0 0.0
    %4652 = vmatpush2.msra.mxu0 %v637
    %4653 = vmatprep.subr.mxu0 0.0
    %4654 = vmatpush2.msra.mxu0 %v636
    %4655 = vmatprep.subr.mxu0 0.0
    %4656 = vmatpush2.msra.mxu0 %v635
    %4657 = vmatprep.subr.mxu0 0.0
    %4658 = vmatpush2.msra.mxu0 %v634
    %4659 = vmatprep.subr.mxu0 0.0
    %4660 = vmatpush2.msra.mxu0 %v633
    %4661 = vmatprep.subr.mxu0 0.0
    %4662 = vmatpush2.msra.mxu0 %v632
    %4663 = vmatprep.subr.mxu0 0.0
    %4664 = vmatpush2.msra.mxu0 %v631
    %4665 = vmatprep.subr.mxu0 0.0
    %4666 = vmatpush2.msra.mxu0 %v630
    %4667 = vmatprep.subr.mxu0 0.0
    %4668 = vmatpush2.msra.mxu0 %v629
    %4669 = vmatprep.subr.mxu0 0.0
    %4670 = vmatpush2.msra.mxu0 %v628
    %4671 = vmatprep.subr.mxu0 0.0
    %4672 = vmatpush2.msra.mxu0 %v627
    %4673 = vmatprep.mubr.f32.mxu0 %v4547
    %4674 = vmatmul.mubr.f32.gmra.mxu0 %v4504
    %v4675 = vpop.f32.mrf.mxu0
    %v4676 = vadd.f32 0.0, %v4675
    %v4677 = vpop.f32.mrf.mxu0
    %4678 = vmatprep.mubr.f32.mxu0 %v4550
    %4679 = vmatmul.mubr.f32.gmra.mxu0 %v4506
    %v4680 = vpop.f32.mrf.mxu0
    %v4681 = vadd.f32 0.0, %v4680
    %v4682 = vpop.f32.mrf.mxu0
    %4683 = vmatprep.mubr.f32.mxu0 %v4553
    %4684 = vmatmul.mubr.f32.gmra.mxu0 %v4508
    %v4685 = vpop.f32.mrf.mxu0
    %v4686 = vadd.f32 0.0, %v4685
    %v4687 = vpop.f32.mrf.mxu0
    %4688 = vmatprep.mubr.f32.mxu0 %v4556
    %4689 = vmatmul.mubr.f32.gmra.mxu0 %v4510
    %v4690 = vpop.f32.mrf.mxu0
    %v4691 = vadd.f32 0.0, %v4690
    %v4692 = vpop.f32.mrf.mxu0
    %4693 = vmatprep.mubr.f32.mxu0 %v4559
    %4694 = vmatmul.mubr.f32.gmra.mxu0 %v4512
    %v4695 = vpop.f32.mrf.mxu0
    %v4696 = vadd.f32 0.0, %v4695
    %v4697 = vpop.f32.mrf.mxu0
    %4698 = vmatprep.mubr.f32.mxu0 %v4562
    %4699 = vmatmul.mubr.f32.gmra.mxu0 %v4514
    %v4700 = vpop.f32.mrf.mxu0
    %v4701 = vadd.f32 0.0, %v4700
    %v4702 = vpop.f32.mrf.mxu0
    %4703 = vmatprep.mubr.f32.mxu0 %v4565
    %4704 = vmatmul.mubr.f32.gmra.mxu0 %v4516
    %v4705 = vpop.f32.mrf.mxu0
    %v4706 = vadd.f32 0.0, %v4705
    %v4707 = vpop.f32.mrf.mxu0
    %4708 = vmatprep.mubr.f32.mxu0 %v4568
    %4709 = vmatmul.mubr.f32.gmra.mxu0 %v4518
    %v4710 = vpop.f32.mrf.mxu0
    %v4711 = vadd.f32 0.0, %v4710
    %v4712 = vpop.f32.mrf.mxu0
    %4713 = vmatprep.mubr.f32.mxu0 %v4571
    %4714 = vmatmul.mubr.f32.gmra.mxu0 %v4520
    %v4715 = vpop.f32.mrf.mxu0
    %v4716 = vadd.f32 0.0, %v4715
    %v4717 = vpop.f32.mrf.mxu0
    %4718 = vmatprep.mubr.f32.mxu0 %v4574
    %4719 = vmatmul.mubr.f32.gmra.mxu0 %v4522
    %v4720 = vpop.f32.mrf.mxu0
    %v4721 = vadd.f32 0.0, %v4720
    %v4722 = vpop.f32.mrf.mxu0
    %4723 = vmatprep.mubr.f32.mxu0 %v4577
    %4724 = vmatmul.mubr.f32.gmra.mxu0 %v4524
    %v4725 = vpop.f32.mrf.mxu0
    %v4726 = vadd.f32 0.0, %v4725
    %v4727 = vpop.f32.mrf.mxu0
    %4728 = vmatprep.mubr.f32.mxu0 %v4580
    %4729 = vmatmul.mubr.f32.gmra.mxu0 %v4526
    %v4730 = vpop.f32.mrf.mxu0
    %v4731 = vadd.f32 0.0, %v4730
    %v4732 = vpop.f32.mrf.mxu0
    %4733 = vmatprep.mubr.f32.mxu0 %v4583
    %4734 = vmatmul.mubr.f32.gmra.mxu0 %v4528
    %v4735 = vpop.f32.mrf.mxu0
    %v4736 = vadd.f32 0.0, %v4735
    %v4737 = vpop.f32.mrf.mxu0
    %4738 = vmatprep.mubr.f32.mxu0 %v4586
    %4739 = vmatmul.mubr.f32.gmra.mxu0 %v4530
    %v4740 = vpop.f32.mrf.mxu0
    %v4741 = vadd.f32 0.0, %v4740
    %v4742 = vpop.f32.mrf.mxu0
    %4743 = vmatprep.mubr.f32.mxu0 %v4589
    %4744 = vmatmul.mubr.f32.gmra.mxu0 %v4532
    %v4745 = vpop.f32.mrf.mxu0
    %v4746 = vadd.f32 0.0, %v4745
    %v4747 = vpop.f32.mrf.mxu0
    %4748 = vmatprep.mubr.f32.mxu0 %v4592
    %4749 = vmatmul.mubr.f32.gmra.mxu0 %v4534
    %v4750 = vpop.f32.mrf.mxu0
    %v4751 = vadd.f32 0.0, %v4750
    %v4752 = vpop.f32.mrf.mxu0
    %4753 = vmatprep.mubr.f32.mxu0 %v4595
    %4754 = vmatmul.mubr.f32.gmra.mxu0 %v4536
    %v4755 = vpop.f32.mrf.mxu0
    %v4756 = vadd.f32 0.0, %v4755
    %v4757 = vpop.f32.mrf.mxu0
    %4758 = vmatprep.mubr.f32.mxu0 %v4598
    %4759 = vmatmul.mubr.f32.gmra.mxu0 %v4538
    %v4760 = vpop.f32.mrf.mxu0
    %v4761 = vadd.f32 0.0, %v4760
    %v4762 = vpop.f32.mrf.mxu0
    %4763 = vmatprep.mubr.f32.mxu0 %v4601
    %4764 = vmatmul.mubr.f32.gmra.mxu0 %v4540
    %v4765 = vpop.f32.mrf.mxu0
    %v4766 = vadd.f32 0.0, %v4765
    %v4767 = vpop.f32.mrf.mxu0
    %4768 = vmatprep.mubr.f32.mxu0 %v4604
    %4769 = vmatmul.mubr.f32.gmra.mxu0 %v4542
    %v4770 = vpop.f32.mrf.mxu0
    %v4771 = vadd.f32 0.0, %v4770
    %v4772 = vpop.f32.mrf.mxu0
    %4773 = vmatprep.mubr.f32.mxu0 %v4607
    %4774 = vmatmul.mubr.f32.gmra.mxu0 %v4544
    %v4775 = vpop.f32.mrf.mxu0
    %v4776 = vadd.f32 0.0, %v4775
    %v4777 = vpop.f32.mrf.mxu0
    %4778 = vdwg.mxu0
    %s4779 = scalar_lea.vmem %s3, 112
    %v4780 = vld [vmem:[%s4779] sm:$0xff]
    %v4781 = vld [vmem:[%s4779 + $0x8] sm:$0xff]
    %v4783 = vsel %vm1245, %v4676, 0
    %v4786 = vsel %vm1245, %v4681, 0
    %v4789 = vsel %vm1245, %v4686, 0
    %v4792 = vsel %vm1245, %v4691, 0
    %v4795 = vsel %vm1245, %v4696, 0
    %v4798 = vsel %vm1245, %v4701, 0
    %v4801 = vsel %vm1245, %v4706, 0
    %v4804 = vsel %vm1245, %v4711, 0
    %v4807 = vsel %vm1245, %v4716, 0
    %v4810 = vsel %vm1245, %v4721, 0
    %v4813 = vsel %vm1245, %v4726, 0
    %v4816 = vsel %vm1245, %v4731, 0
    %v4819 = vsel %vm1245, %v4736, 0
    %v4822 = vsel %vm1245, %v4741, 0
    %v4825 = vsel %vm1245, %v4746, 0
    %v4828 = vsel %vm1245, %v4751, 0
    %v4831 = vsel %vm1245, %v4756, 0
    %v4834 = vsel %vm1245, %v4761, 0
    %v4837 = vsel %vm1245, %v4766, 0
    %v4840 = vsel %vm1245, %v4771, 0
    %v4843 = vsel %vm1245, %v4776, 0
    %4845 = vmatprep.subr.mxu0 0.0
    %4846 = vmatpush1.msra.mxu0 0.0
    %4847 = vmatprep.subr.mxu0 0.0
    %4848 = vmatpush1.msra.mxu0 0.0
    %4849 = vmatprep.subr.mxu0 0.0
    %4850 = vmatpush1.msra.mxu0 0.0
    %4851 = vmatprep.subr.mxu0 0.0
    %4852 = vmatpush1.msra.mxu0 0.0
    %4853 = vmatprep.subr.mxu0 0.0
    %4854 = vmatpush1.msra.mxu0 0.0
    %4855 = vmatprep.subr.mxu0 0.0
    %4856 = vmatpush1.msra.mxu0 0.0
    %4857 = vmatprep.subr.mxu0 0.0
    %4858 = vmatpush1.msra.mxu0 0.0
    %4859 = vmatprep.subr.mxu0 0.0
    %4860 = vmatpush1.msra.mxu0 0.0
    %4861 = vmatprep.subr.mxu0 0.0
    %4862 = vmatpush1.msra.mxu0 0.0
    %4863 = vmatprep.subr.mxu0 0.0
    %4864 = vmatpush1.msra.mxu0 0.0
    %4865 = vmatprep.subr.mxu0 0.0
    %4866 = vmatpush1.msra.mxu0 0.0
    %4867 = vmatprep.subr.mxu0 0.0
    %4868 = vmatpush1.msra.mxu0 0.0
    %4869 = vmatprep.subr.mxu0 0.0
    %4870 = vmatpush1.msra.mxu0 0.0
    %4871 = vmatprep.subr.mxu0 0.0
    %4872 = vmatpush1.msra.mxu0 0.0
    %4873 = vmatprep.subr.mxu0 0.0
    %4874 = vmatpush1.msra.mxu0 %v4781
    %4875 = vmatprep.subr.mxu0 0.0
    %4876 = vmatpush1.msra.mxu0 %v4780
    %4877 = vmatprep.subr.mxu0 0.0
    %4878 = vmatpush2.msra.mxu0 0.0
    %4879 = vmatprep.subr.mxu0 0.0
    %4880 = vmatpush2.msra.mxu0 0.0
    %4881 = vmatprep.subr.mxu0 0.0
    %4882 = vmatpush2.msra.mxu0 0.0
    %4883 = vmatprep.subr.mxu0 0.0
    %4884 = vmatpush2.msra.mxu0 0.0
    %4885 = vmatprep.subr.mxu0 0.0
    %4886 = vmatpush2.msra.mxu0 0.0
    %4887 = vmatprep.subr.mxu0 0.0
    %4888 = vmatpush2.msra.mxu0 0.0
    %4889 = vmatprep.subr.mxu0 0.0
    %4890 = vmatpush2.msra.mxu0 0.0
    %4891 = vmatprep.subr.mxu0 0.0
    %4892 = vmatpush2.msra.mxu0 0.0
    %4893 = vmatprep.subr.mxu0 0.0
    %4894 = vmatpush2.msra.mxu0 0.0
    %4895 = vmatprep.subr.mxu0 0.0
    %4896 = vmatpush2.msra.mxu0 0.0
    %4897 = vmatprep.subr.mxu0 0.0
    %4898 = vmatpush2.msra.mxu0 0.0
    %4899 = vmatprep.subr.mxu0 0.0
    %4900 = vmatpush2.msra.mxu0 0.0
    %4901 = vmatprep.subr.mxu0 0.0
    %4902 = vmatpush2.msra.mxu0 0.0
    %4903 = vmatprep.subr.mxu0 0.0
    %4904 = vmatpush2.msra.mxu0 0.0
    %4905 = vmatprep.subr.mxu0 0.0
    %4906 = vmatpush2.msra.mxu0 0.0
    %4907 = vmatprep.subr.mxu0 0.0
    %4908 = vmatpush2.msra.mxu0 0.0
    %4909 = vmatprep.mubr.f32.mxu0 0.0
    %4910 = vmatmul.mubr.f32.gmra.mxu0 %v4783
    %v4911 = vpop.f32.mrf.mxu0
    %v4912 = vadd.f32 0.0, %v4911
    %v4913 = vpop.f32.mrf.mxu0
    %4914 = vmatprep.mubr.f32.mxu0 0.0
    %4915 = vmatmul.mubr.f32.gmra.mxu0 %v4786
    %v4916 = vpop.f32.mrf.mxu0
    %v4917 = vadd.f32 0.0, %v4916
    %v4918 = vpop.f32.mrf.mxu0
    %4919 = vmatprep.mubr.f32.mxu0 0.0
    %4920 = vmatmul.mubr.f32.gmra.mxu0 %v4789
    %v4921 = vpop.f32.mrf.mxu0
    %v4922 = vadd.f32 0.0, %v4921
    %v4923 = vpop.f32.mrf.mxu0
    %4924 = vmatprep.mubr.f32.mxu0 0.0
    %4925 = vmatmul.mubr.f32.gmra.mxu0 %v4792
    %v4926 = vpop.f32.mrf.mxu0
    %v4927 = vadd.f32 0.0, %v4926
    %v4928 = vpop.f32.mrf.mxu0
    %4929 = vmatprep.mubr.f32.mxu0 0.0
    %4930 = vmatmul.mubr.f32.gmra.mxu0 %v4795
    %v4931 = vpop.f32.mrf.mxu0
    %v4932 = vadd.f32 0.0, %v4931
    %v4933 = vpop.f32.mrf.mxu0
    %4934 = vmatprep.mubr.f32.mxu0 0.0
    %4935 = vmatmul.mubr.f32.gmra.mxu0 %v4798
    %v4936 = vpop.f32.mrf.mxu0
    %v4937 = vadd.f32 0.0, %v4936
    %v4938 = vpop.f32.mrf.mxu0
    %4939 = vmatprep.mubr.f32.mxu0 0.0
    %4940 = vmatmul.mubr.f32.gmra.mxu0 %v4801
    %v4941 = vpop.f32.mrf.mxu0
    %v4942 = vadd.f32 0.0, %v4941
    %v4943 = vpop.f32.mrf.mxu0
    %4944 = vmatprep.mubr.f32.mxu0 0.0
    %4945 = vmatmul.mubr.f32.gmra.mxu0 %v4804
    %v4946 = vpop.f32.mrf.mxu0
    %v4947 = vadd.f32 0.0, %v4946
    %v4948 = vpop.f32.mrf.mxu0
    %4949 = vmatprep.mubr.f32.mxu0 0.0
    %4950 = vmatmul.mubr.f32.gmra.mxu0 %v4807
    %v4951 = vpop.f32.mrf.mxu0
    %v4952 = vadd.f32 0.0, %v4951
    %v4953 = vpop.f32.mrf.mxu0
    %4954 = vmatprep.mubr.f32.mxu0 0.0
    %4955 = vmatmul.mubr.f32.gmra.mxu0 %v4810
    %v4956 = vpop.f32.mrf.mxu0
    %v4957 = vadd.f32 0.0, %v4956
    %v4958 = vpop.f32.mrf.mxu0
    %4959 = vmatprep.mubr.f32.mxu0 0.0
    %4960 = vmatmul.mubr.f32.gmra.mxu0 %v4813
    %v4961 = vpop.f32.mrf.mxu0
    %v4962 = vadd.f32 0.0, %v4961
    %v4963 = vpop.f32.mrf.mxu0
    %4964 = vmatprep.mubr.f32.mxu0 0.0
    %4965 = vmatmul.mubr.f32.gmra.mxu0 %v4816
    %v4966 = vpop.f32.mrf.mxu0
    %v4967 = vadd.f32 0.0, %v4966
    %v4968 = vpop.f32.mrf.mxu0
    %4969 = vmatprep.mubr.f32.mxu0 0.0
    %4970 = vmatmul.mubr.f32.gmra.mxu0 %v4819
    %v4971 = vpop.f32.mrf.mxu0
    %v4972 = vadd.f32 0.0, %v4971
    %v4973 = vpop.f32.mrf.mxu0
    %4974 = vmatprep.mubr.f32.mxu0 0.0
    %4975 = vmatmul.mubr.f32.gmra.mxu0 %v4822
    %v4976 = vpop.f32.mrf.mxu0
    %v4977 = vadd.f32 0.0, %v4976
    %v4978 = vpop.f32.mrf.mxu0
    %4979 = vmatprep.mubr.f32.mxu0 0.0
    %4980 = vmatmul.mubr.f32.gmra.mxu0 %v4825
    %v4981 = vpop.f32.mrf.mxu0
    %v4982 = vadd.f32 0.0, %v4981
    %v4983 = vpop.f32.mrf.mxu0
    %4984 = vmatprep.mubr.f32.mxu0 0.0
    %4985 = vmatmul.mubr.f32.gmra.mxu0 %v4828
    %v4986 = vpop.f32.mrf.mxu0
    %v4987 = vadd.f32 0.0, %v4986
    %v4988 = vpop.f32.mrf.mxu0
    %4989 = vmatprep.mubr.f32.mxu0 0.0
    %4990 = vmatmul.mubr.f32.gmra.mxu0 %v4831
    %v4991 = vpop.f32.mrf.mxu0
    %v4992 = vadd.f32 0.0, %v4991
    %v4993 = vpop.f32.mrf.mxu0
    %4994 = vmatprep.mubr.f32.mxu0 0.0
    %4995 = vmatmul.mubr.f32.gmra.mxu0 %v4834
    %v4996 = vpop.f32.mrf.mxu0
    %v4997 = vadd.f32 0.0, %v4996
    %v4998 = vpop.f32.mrf.mxu0
    %4999 = vmatprep.mubr.f32.mxu0 0.0
    %5000 = vmatmul.mubr.f32.gmra.mxu0 %v4837
    %v5001 = vpop.f32.mrf.mxu0
    %v5002 = vadd.f32 0.0, %v5001
    %v5003 = vpop.f32.mrf.mxu0
    %5004 = vmatprep.mubr.f32.mxu0 0.0
    %5005 = vmatmul.mubr.f32.gmra.mxu0 %v4840
    %v5006 = vpop.f32.mrf.mxu0
    %v5007 = vadd.f32 0.0, %v5006
    %v5008 = vpop.f32.mrf.mxu0
    %5009 = vmatprep.mubr.f32.mxu0 0.0
    %5010 = vmatmul.mubr.f32.gmra.mxu0 %v4843
    %v5011 = vpop.f32.mrf.mxu0
    %v5012 = vadd.f32 0.0, %v5011
    %v5013 = vpop.f32.mrf.mxu0
    %5014 = vdwg.mxu0
    %v5015 = vadd.f32 %v4461, %v4912
    %v5016 = vadd.f32 %v4462, %v4917
    %v5017 = vadd.f32 %v4463, %v4922
    %v5018 = vadd.f32 %v4464, %v4927
    %v5019 = vadd.f32 %v4465, %v4932
    %v5020 = vadd.f32 %v4466, %v4937
    %v5021 = vadd.f32 %v4467, %v4942
    %v5022 = vadd.f32 %v4468, %v4947
    %v5023 = vadd.f32 %v4469, %v4952
    %v5024 = vadd.f32 %v4470, %v4957
    %v5025 = vadd.f32 %v4471, %v4962
    %v5026 = vadd.f32 %v4472, %v4967
    %v5027 = vadd.f32 %v4473, %v4972
    %v5028 = vadd.f32 %v4474, %v4977
    %v5029 = vadd.f32 %v4475, %v4982
    %v5030 = vadd.f32 %v4476, %v4987
    %v5031 = vadd.f32 %v4477, %v4992
    %v5032 = vadd.f32 %v4478, %v4997
    %v5033 = vadd.f32 %v4479, %v5002
    %v5034 = vadd.f32 %v4480, %v5007
    %v5035 = vadd.f32 %v4481, %v5012
    %s5036 = scalar_lea.vmem %s2, 1344
    %v5037 = vld [vmem:[%s5036] sm:$0xff]
    %v5038 = vld [vmem:[%s5036 + $0x8] sm:$0xff]
    %v5039 = vld [vmem:[%s5036 + $0x10] sm:$0xff]
    %v5040 = vld [vmem:[%s5036 + $0x18] sm:$0xff]
    %v5041 = vld [vmem:[%s5036 + $0x20] sm:$0xff]
    %v5042 = vld [vmem:[%s5036 + $0x28] sm:$0xff]
    %v5043 = vld [vmem:[%s5036 + $0x30] sm:$0xff]
    %v5044 = vld [vmem:[%s5036 + $0x38] sm:$0xff]
    %v5045 = vld [vmem:[%s5036 + $0x40] sm:$0xff]
    %v5046 = vld [vmem:[%s5036 + $0x48] sm:$0xff]
    %v5047 = vld [vmem:[%s5036 + $0x50] sm:$0xff]
    %v5048 = vld [vmem:[%s5036 + $0x58] sm:$0xff]
    %v5049 = vld [vmem:[%s5036 + $0x60] sm:$0xff]
    %v5050 = vld [vmem:[%s5036 + $0x68] sm:$0xff]
    %v5051 = vld [vmem:[%s5036 + $0x70] sm:$0xff]
    %v5052 = vld [vmem:[%s5036 + $0x78] sm:$0xff]
    %v5053 = vld [vmem:[%s5036 + $0x80] sm:$0xff]
    %v5054 = vld [vmem:[%s5036 + $0x88] sm:$0xff]
    %v5055 = vld [vmem:[%s5036 + $0x90] sm:$0xff]
    %v5056 = vld [vmem:[%s5036 + $0x98] sm:$0xff]
    %v5057 = vld [vmem:[%s5036 + $0xa0] sm:$0x11]
    %v5058 = vunpack.c.l.bf16 %v5037
    %v5059 = vunpack.c.h.bf16 %v5037
    %v5060 = vunpack.c.l.bf16 %v5038
    %v5061 = vunpack.c.h.bf16 %v5038
    %v5062 = vunpack.c.l.bf16 %v5039
    %v5063 = vunpack.c.h.bf16 %v5039
    %v5064 = vunpack.c.l.bf16 %v5040
    %v5065 = vunpack.c.h.bf16 %v5040
    %v5066 = vunpack.c.l.bf16 %v5041
    %v5067 = vunpack.c.h.bf16 %v5041
    %v5068 = vunpack.c.l.bf16 %v5042
    %v5069 = vunpack.c.h.bf16 %v5042
    %v5070 = vunpack.c.l.bf16 %v5043
    %v5071 = vunpack.c.h.bf16 %v5043
    %v5072 = vunpack.c.l.bf16 %v5044
    %v5073 = vunpack.c.h.bf16 %v5044
    %v5074 = vunpack.c.l.bf16 %v5045
    %v5075 = vunpack.c.h.bf16 %v5045
    %v5076 = vunpack.c.l.bf16 %v5046
    %v5077 = vunpack.c.h.bf16 %v5046
    %v5078 = vunpack.c.l.bf16 %v5047
    %v5079 = vunpack.c.h.bf16 %v5047
    %v5080 = vunpack.c.l.bf16 %v5048
    %v5081 = vunpack.c.h.bf16 %v5048
    %v5082 = vunpack.c.l.bf16 %v5049
    %v5083 = vunpack.c.h.bf16 %v5049
    %v5084 = vunpack.c.l.bf16 %v5050
    %v5085 = vunpack.c.h.bf16 %v5050
    %v5086 = vunpack.c.l.bf16 %v5051
    %v5087 = vunpack.c.h.bf16 %v5051
    %v5088 = vunpack.c.l.bf16 %v5052
    %v5089 = vunpack.c.h.bf16 %v5052
    %v5090 = vunpack.c.l.bf16 %v5053
    %v5091 = vunpack.c.h.bf16 %v5053
    %v5092 = vunpack.c.l.bf16 %v5054
    %v5093 = vunpack.c.h.bf16 %v5054
    %v5094 = vunpack.c.l.bf16 %v5055
    %v5095 = vunpack.c.h.bf16 %v5055
    %v5096 = vunpack.c.l.bf16 %v5056
    %v5097 = vunpack.c.h.bf16 %v5056
    %v5098 = vunpack.c.l.bf16 %v5057
    %v5099 = vunpack.c.h.bf16 %v5057
    %v5101 = vsel %vm705, %v5059, 0
    %v5104 = vsel %vm705, %v5061, 0
    %v5107 = vsel %vm705, %v5063, 0
    %v5110 = vsel %vm705, %v5065, 0
    %v5113 = vsel %vm705, %v5067, 0
    %v5116 = vsel %vm705, %v5069, 0
    %v5119 = vsel %vm705, %v5071, 0
    %v5122 = vsel %vm705, %v5073, 0
    %v5125 = vsel %vm705, %v5075, 0
    %v5128 = vsel %vm705, %v5077, 0
    %v5131 = vsel %vm705, %v5079, 0
    %v5134 = vsel %vm705, %v5081, 0
    %v5137 = vsel %vm705, %v5083, 0
    %v5140 = vsel %vm705, %v5085, 0
    %v5143 = vsel %vm705, %v5087, 0
    %v5146 = vsel %vm705, %v5089, 0
    %v5149 = vsel %vm705, %v5091, 0
    %v5152 = vsel %vm705, %v5093, 0
    %v5155 = vsel %vm705, %v5095, 0
    %v5158 = vsel %vm705, %v5097, 0
    %v5161 = vsel %vm705, %v5099, 0
    %5163 = vmatprep.subr.mxu0 0.0
    %5164 = vmatpush1.msra.mxu0 %v626
    %5165 = vmatprep.subr.mxu0 0.0
    %5166 = vmatpush1.msra.mxu0 %v625
    %5167 = vmatprep.subr.mxu0 0.0
    %5168 = vmatpush1.msra.mxu0 %v624
    %5169 = vmatprep.subr.mxu0 0.0
    %5170 = vmatpush1.msra.mxu0 %v623
    %5171 = vmatprep.subr.mxu0 0.0
    %5172 = vmatpush1.msra.mxu0 %v622
    %5173 = vmatprep.subr.mxu0 0.0
    %5174 = vmatpush1.msra.mxu0 %v621
    %5175 = vmatprep.subr.mxu0 0.0
    %5176 = vmatpush1.msra.mxu0 %v620
    %5177 = vmatprep.subr.mxu0 0.0
    %5178 = vmatpush1.msra.mxu0 %v619
    %5179 = vmatprep.subr.mxu0 0.0
    %5180 = vmatpush1.msra.mxu0 %v618
    %5181 = vmatprep.subr.mxu0 0.0
    %5182 = vmatpush1.msra.mxu0 %v617
    %5183 = vmatprep.subr.mxu0 0.0
    %5184 = vmatpush1.msra.mxu0 %v616
    %5185 = vmatprep.subr.mxu0 0.0
    %5186 = vmatpush1.msra.mxu0 %v615
    %5187 = vmatprep.subr.mxu0 0.0
    %5188 = vmatpush1.msra.mxu0 %v614
    %5189 = vmatprep.subr.mxu0 0.0
    %5190 = vmatpush1.msra.mxu0 %v613
    %5191 = vmatprep.subr.mxu0 0.0
    %5192 = vmatpush1.msra.mxu0 %v612
    %5193 = vmatprep.subr.mxu0 0.0
    %5194 = vmatpush1.msra.mxu0 %v611
    %5195 = vmatprep.subr.mxu0 0.0
    %5196 = vmatpush2.msra.mxu0 0.0
    %5197 = vmatprep.subr.mxu0 0.0
    %5198 = vmatpush2.msra.mxu0 %v771
    %5199 = vmatprep.subr.mxu0 0.0
    %5200 = vmatpush2.msra.mxu0 %v640
    %5201 = vmatprep.subr.mxu0 0.0
    %5202 = vmatpush2.msra.mxu0 %v639
    %5203 = vmatprep.subr.mxu0 0.0
    %5204 = vmatpush2.msra.mxu0 %v638
    %5205 = vmatprep.subr.mxu0 0.0
    %5206 = vmatpush2.msra.mxu0 %v637
    %5207 = vmatprep.subr.mxu0 0.0
    %5208 = vmatpush2.msra.mxu0 %v636
    %5209 = vmatprep.subr.mxu0 0.0
    %5210 = vmatpush2.msra.mxu0 %v635
    %5211 = vmatprep.subr.mxu0 0.0
    %5212 = vmatpush2.msra.mxu0 %v634
    %5213 = vmatprep.subr.mxu0 0.0
    %5214 = vmatpush2.msra.mxu0 %v633
    %5215 = vmatprep.subr.mxu0 0.0
    %5216 = vmatpush2.msra.mxu0 %v632
    %5217 = vmatprep.subr.mxu0 0.0
    %5218 = vmatpush2.msra.mxu0 %v631
    %5219 = vmatprep.subr.mxu0 0.0
    %5220 = vmatpush2.msra.mxu0 %v630
    %5221 = vmatprep.subr.mxu0 0.0
    %5222 = vmatpush2.msra.mxu0 %v629
    %5223 = vmatprep.subr.mxu0 0.0
    %5224 = vmatpush2.msra.mxu0 %v628
    %5225 = vmatprep.subr.mxu0 0.0
    %5226 = vmatpush2.msra.mxu0 %v627
    %5227 = vmatprep.mubr.f32.mxu0 %v5101
    %5228 = vmatmul.mubr.f32.gmra.mxu0 %v5058
    %v5229 = vpop.f32.mrf.mxu0
    %v5230 = vadd.f32 0.0, %v5229
    %v5231 = vpop.f32.mrf.mxu0
    %5232 = vmatprep.mubr.f32.mxu0 %v5104
    %5233 = vmatmul.mubr.f32.gmra.mxu0 %v5060
    %v5234 = vpop.f32.mrf.mxu0
    %v5235 = vadd.f32 0.0, %v5234
    %v5236 = vpop.f32.mrf.mxu0
    %5237 = vmatprep.mubr.f32.mxu0 %v5107
    %5238 = vmatmul.mubr.f32.gmra.mxu0 %v5062
    %v5239 = vpop.f32.mrf.mxu0
    %v5240 = vadd.f32 0.0, %v5239
    %v5241 = vpop.f32.mrf.mxu0
    %5242 = vmatprep.mubr.f32.mxu0 %v5110
    %5243 = vmatmul.mubr.f32.gmra.mxu0 %v5064
    %v5244 = vpop.f32.mrf.mxu0
    %v5245 = vadd.f32 0.0, %v5244
    %v5246 = vpop.f32.mrf.mxu0
    %5247 = vmatprep.mubr.f32.mxu0 %v5113
    %5248 = vmatmul.mubr.f32.gmra.mxu0 %v5066
    %v5249 = vpop.f32.mrf.mxu0
    %v5250 = vadd.f32 0.0, %v5249
    %v5251 = vpop.f32.mrf.mxu0
    %5252 = vmatprep.mubr.f32.mxu0 %v5116
    %5253 = vmatmul.mubr.f32.gmra.mxu0 %v5068
    %v5254 = vpop.f32.mrf.mxu0
    %v5255 = vadd.f32 0.0, %v5254
    %v5256 = vpop.f32.mrf.mxu0
    %5257 = vmatprep.mubr.f32.mxu0 %v5119
    %5258 = vmatmul.mubr.f32.gmra.mxu0 %v5070
    %v5259 = vpop.f32.mrf.mxu0
    %v5260 = vadd.f32 0.0, %v5259
    %v5261 = vpop.f32.mrf.mxu0
    %5262 = vmatprep.mubr.f32.mxu0 %v5122
    %5263 = vmatmul.mubr.f32.gmra.mxu0 %v5072
    %v5264 = vpop.f32.mrf.mxu0
    %v5265 = vadd.f32 0.0, %v5264
    %v5266 = vpop.f32.mrf.mxu0
    %5267 = vmatprep.mubr.f32.mxu0 %v5125
    %5268 = vmatmul.mubr.f32.gmra.mxu0 %v5074
    %v5269 = vpop.f32.mrf.mxu0
    %v5270 = vadd.f32 0.0, %v5269
    %v5271 = vpop.f32.mrf.mxu0
    %5272 = vmatprep.mubr.f32.mxu0 %v5128
    %5273 = vmatmul.mubr.f32.gmra.mxu0 %v5076
    %v5274 = vpop.f32.mrf.mxu0
    %v5275 = vadd.f32 0.0, %v5274
    %v5276 = vpop.f32.mrf.mxu0
    %5277 = vmatprep.mubr.f32.mxu0 %v5131
    %5278 = vmatmul.mubr.f32.gmra.mxu0 %v5078
    %v5279 = vpop.f32.mrf.mxu0
    %v5280 = vadd.f32 0.0, %v5279
    %v5281 = vpop.f32.mrf.mxu0
    %5282 = vmatprep.mubr.f32.mxu0 %v5134
    %5283 = vmatmul.mubr.f32.gmra.mxu0 %v5080
    %v5284 = vpop.f32.mrf.mxu0
    %v5285 = vadd.f32 0.0, %v5284
    %v5286 = vpop.f32.mrf.mxu0
    %5287 = vmatprep.mubr.f32.mxu0 %v5137
    %5288 = vmatmul.mubr.f32.gmra.mxu0 %v5082
    %v5289 = vpop.f32.mrf.mxu0
    %v5290 = vadd.f32 0.0, %v5289
    %v5291 = vpop.f32.mrf.mxu0
    %5292 = vmatprep.mubr.f32.mxu0 %v5140
    %5293 = vmatmul.mubr.f32.gmra.mxu0 %v5084
    %v5294 = vpop.f32.mrf.mxu0
    %v5295 = vadd.f32 0.0, %v5294
    %v5296 = vpop.f32.mrf.mxu0
    %5297 = vmatprep.mubr.f32.mxu0 %v5143
    %5298 = vmatmul.mubr.f32.gmra.mxu0 %v5086
    %v5299 = vpop.f32.mrf.mxu0
    %v5300 = vadd.f32 0.0, %v5299
    %v5301 = vpop.f32.mrf.mxu0
    %5302 = vmatprep.mubr.f32.mxu0 %v5146
    %5303 = vmatmul.mubr.f32.gmra.mxu0 %v5088
    %v5304 = vpop.f32.mrf.mxu0
    %v5305 = vadd.f32 0.0, %v5304
    %v5306 = vpop.f32.mrf.mxu0
    %5307 = vmatprep.mubr.f32.mxu0 %v5149
    %5308 = vmatmul.mubr.f32.gmra.mxu0 %v5090
    %v5309 = vpop.f32.mrf.mxu0
    %v5310 = vadd.f32 0.0, %v5309
    %v5311 = vpop.f32.mrf.mxu0
    %5312 = vmatprep.mubr.f32.mxu0 %v5152
    %5313 = vmatmul.mubr.f32.gmra.mxu0 %v5092
    %v5314 = vpop.f32.mrf.mxu0
    %v5315 = vadd.f32 0.0, %v5314
    %v5316 = vpop.f32.mrf.mxu0
    %5317 = vmatprep.mubr.f32.mxu0 %v5155
    %5318 = vmatmul.mubr.f32.gmra.mxu0 %v5094
    %v5319 = vpop.f32.mrf.mxu0
    %v5320 = vadd.f32 0.0, %v5319
    %v5321 = vpop.f32.mrf.mxu0
    %5322 = vmatprep.mubr.f32.mxu0 %v5158
    %5323 = vmatmul.mubr.f32.gmra.mxu0 %v5096
    %v5324 = vpop.f32.mrf.mxu0
    %v5325 = vadd.f32 0.0, %v5324
    %v5326 = vpop.f32.mrf.mxu0
    %5327 = vmatprep.mubr.f32.mxu0 %v5161
    %5328 = vmatmul.mubr.f32.gmra.mxu0 %v5098
    %v5329 = vpop.f32.mrf.mxu0
    %v5330 = vadd.f32 0.0, %v5329
    %v5331 = vpop.f32.mrf.mxu0
    %5332 = vdwg.mxu0
    %s5333 = scalar_lea.vmem %s3, 128
    %v5334 = vld [vmem:[%s5333] sm:$0xff]
    %v5335 = vld [vmem:[%s5333 + $0x8] sm:$0xff]
    %v5337 = vsel %vm1245, %v5230, 0
    %v5340 = vsel %vm1245, %v5235, 0
    %v5343 = vsel %vm1245, %v5240, 0
    %v5346 = vsel %vm1245, %v5245, 0
    %v5349 = vsel %vm1245, %v5250, 0
    %v5352 = vsel %vm1245, %v5255, 0
    %v5355 = vsel %vm1245, %v5260, 0
    %v5358 = vsel %vm1245, %v5265, 0
    %v5361 = vsel %vm1245, %v5270, 0
    %v5364 = vsel %vm1245, %v5275, 0
    %v5367 = vsel %vm1245, %v5280, 0
    %v5370 = vsel %vm1245, %v5285, 0
    %v5373 = vsel %vm1245, %v5290, 0
    %v5376 = vsel %vm1245, %v5295, 0
    %v5379 = vsel %vm1245, %v5300, 0
    %v5382 = vsel %vm1245, %v5305, 0
    %v5385 = vsel %vm1245, %v5310, 0
    %v5388 = vsel %vm1245, %v5315, 0
    %v5391 = vsel %vm1245, %v5320, 0
    %v5394 = vsel %vm1245, %v5325, 0
    %v5397 = vsel %vm1245, %v5330, 0
    %5399 = vmatprep.subr.mxu0 0.0
    %5400 = vmatpush1.msra.mxu0 0.0
    %5401 = vmatprep.subr.mxu0 0.0
    %5402 = vmatpush1.msra.mxu0 0.0
    %5403 = vmatprep.subr.mxu0 0.0
    %5404 = vmatpush1.msra.mxu0 0.0
    %5405 = vmatprep.subr.mxu0 0.0
    %5406 = vmatpush1.msra.mxu0 0.0
    %5407 = vmatprep.subr.mxu0 0.0
    %5408 = vmatpush1.msra.mxu0 0.0
    %5409 = vmatprep.subr.mxu0 0.0
    %5410 = vmatpush1.msra.mxu0 0.0
    %5411 = vmatprep.subr.mxu0 0.0
    %5412 = vmatpush1.msra.mxu0 0.0
    %5413 = vmatprep.subr.mxu0 0.0
    %5414 = vmatpush1.msra.mxu0 0.0
    %5415 = vmatprep.subr.mxu0 0.0
    %5416 = vmatpush1.msra.mxu0 0.0
    %5417 = vmatprep.subr.mxu0 0.0
    %5418 = vmatpush1.msra.mxu0 0.0
    %5419 = vmatprep.subr.mxu0 0.0
    %5420 = vmatpush1.msra.mxu0 0.0
    %5421 = vmatprep.subr.mxu0 0.0
    %5422 = vmatpush1.msra.mxu0 0.0
    %5423 = vmatprep.subr.mxu0 0.0
    %5424 = vmatpush1.msra.mxu0 0.0
    %5425 = vmatprep.subr.mxu0 0.0
    %5426 = vmatpush1.msra.mxu0 0.0
    %5427 = vmatprep.subr.mxu0 0.0
    %5428 = vmatpush1.msra.mxu0 %v5335
    %5429 = vmatprep.subr.mxu0 0.0
    %5430 = vmatpush1.msra.mxu0 %v5334
    %5431 = vmatprep.subr.mxu0 0.0
    %5432 = vmatpush2.msra.mxu0 0.0
    %5433 = vmatprep.subr.mxu0 0.0
    %5434 = vmatpush2.msra.mxu0 0.0
    %5435 = vmatprep.subr.mxu0 0.0
    %5436 = vmatpush2.msra.mxu0 0.0
    %5437 = vmatprep.subr.mxu0 0.0
    %5438 = vmatpush2.msra.mxu0 0.0
    %5439 = vmatprep.subr.mxu0 0.0
    %5440 = vmatpush2.msra.mxu0 0.0
    %5441 = vmatprep.subr.mxu0 0.0
    %5442 = vmatpush2.msra.mxu0 0.0
    %5443 = vmatprep.subr.mxu0 0.0
    %5444 = vmatpush2.msra.mxu0 0.0
    %5445 = vmatprep.subr.mxu0 0.0
    %5446 = vmatpush2.msra.mxu0 0.0
    %5447 = vmatprep.subr.mxu0 0.0
    %5448 = vmatpush2.msra.mxu0 0.0
    %5449 = vmatprep.subr.mxu0 0.0
    %5450 = vmatpush2.msra.mxu0 0.0
    %5451 = vmatprep.subr.mxu0 0.0
    %5452 = vmatpush2.msra.mxu0 0.0
    %5453 = vmatprep.subr.mxu0 0.0
    %5454 = vmatpush2.msra.mxu0 0.0
    %5455 = vmatprep.subr.mxu0 0.0
    %5456 = vmatpush2.msra.mxu0 0.0
    %5457 = vmatprep.subr.mxu0 0.0
    %5458 = vmatpush2.msra.mxu0 0.0
    %5459 = vmatprep.subr.mxu0 0.0
    %5460 = vmatpush2.msra.mxu0 0.0
    %5461 = vmatprep.subr.mxu0 0.0
    %5462 = vmatpush2.msra.mxu0 0.0
    %5463 = vmatprep.mubr.f32.mxu0 0.0
    %5464 = vmatmul.mubr.f32.gmra.mxu0 %v5337
    %v5465 = vpop.f32.mrf.mxu0
    %v5466 = vadd.f32 0.0, %v5465
    %v5467 = vpop.f32.mrf.mxu0
    %5468 = vmatprep.mubr.f32.mxu0 0.0
    %5469 = vmatmul.mubr.f32.gmra.mxu0 %v5340
    %v5470 = vpop.f32.mrf.mxu0
    %v5471 = vadd.f32 0.0, %v5470
    %v5472 = vpop.f32.mrf.mxu0
    %5473 = vmatprep.mubr.f32.mxu0 0.0
    %5474 = vmatmul.mubr.f32.gmra.mxu0 %v5343
    %v5475 = vpop.f32.mrf.mxu0
    %v5476 = vadd.f32 0.0, %v5475
    %v5477 = vpop.f32.mrf.mxu0
    %5478 = vmatprep.mubr.f32.mxu0 0.0
    %5479 = vmatmul.mubr.f32.gmra.mxu0 %v5346
    %v5480 = vpop.f32.mrf.mxu0
    %v5481 = vadd.f32 0.0, %v5480
    %v5482 = vpop.f32.mrf.mxu0
    %5483 = vmatprep.mubr.f32.mxu0 0.0
    %5484 = vmatmul.mubr.f32.gmra.mxu0 %v5349
    %v5485 = vpop.f32.mrf.mxu0
    %v5486 = vadd.f32 0.0, %v5485
    %v5487 = vpop.f32.mrf.mxu0
    %5488 = vmatprep.mubr.f32.mxu0 0.0
    %5489 = vmatmul.mubr.f32.gmra.mxu0 %v5352
    %v5490 = vpop.f32.mrf.mxu0
    %v5491 = vadd.f32 0.0, %v5490
    %v5492 = vpop.f32.mrf.mxu0
    %5493 = vmatprep.mubr.f32.mxu0 0.0
    %5494 = vmatmul.mubr.f32.gmra.mxu0 %v5355
    %v5495 = vpop.f32.mrf.mxu0
    %v5496 = vadd.f32 0.0, %v5495
    %v5497 = vpop.f32.mrf.mxu0
    %5498 = vmatprep.mubr.f32.mxu0 0.0
    %5499 = vmatmul.mubr.f32.gmra.mxu0 %v5358
    %v5500 = vpop.f32.mrf.mxu0
    %v5501 = vadd.f32 0.0, %v5500
    %v5502 = vpop.f32.mrf.mxu0
    %5503 = vmatprep.mubr.f32.mxu0 0.0
    %5504 = vmatmul.mubr.f32.gmra.mxu0 %v5361
    %v5505 = vpop.f32.mrf.mxu0
    %v5506 = vadd.f32 0.0, %v5505
    %v5507 = vpop.f32.mrf.mxu0
    %5508 = vmatprep.mubr.f32.mxu0 0.0
    %5509 = vmatmul.mubr.f32.gmra.mxu0 %v5364
    %v5510 = vpop.f32.mrf.mxu0
    %v5511 = vadd.f32 0.0, %v5510
    %v5512 = vpop.f32.mrf.mxu0
    %5513 = vmatprep.mubr.f32.mxu0 0.0
    %5514 = vmatmul.mubr.f32.gmra.mxu0 %v5367
    %v5515 = vpop.f32.mrf.mxu0
    %v5516 = vadd.f32 0.0, %v5515
    %v5517 = vpop.f32.mrf.mxu0
    %5518 = vmatprep.mubr.f32.mxu0 0.0
    %5519 = vmatmul.mubr.f32.gmra.mxu0 %v5370
    %v5520 = vpop.f32.mrf.mxu0
    %v5521 = vadd.f32 0.0, %v5520
    %v5522 = vpop.f32.mrf.mxu0
    %5523 = vmatprep.mubr.f32.mxu0 0.0
    %5524 = vmatmul.mubr.f32.gmra.mxu0 %v5373
    %v5525 = vpop.f32.mrf.mxu0
    %v5526 = vadd.f32 0.0, %v5525
    %v5527 = vpop.f32.mrf.mxu0
    %5528 = vmatprep.mubr.f32.mxu0 0.0
    %5529 = vmatmul.mubr.f32.gmra.mxu0 %v5376
    %v5530 = vpop.f32.mrf.mxu0
    %v5531 = vadd.f32 0.0, %v5530
    %v5532 = vpop.f32.mrf.mxu0
    %5533 = vmatprep.mubr.f32.mxu0 0.0
    %5534 = vmatmul.mubr.f32.gmra.mxu0 %v5379
    %v5535 = vpop.f32.mrf.mxu0
    %v5536 = vadd.f32 0.0, %v5535
    %v5537 = vpop.f32.mrf.mxu0
    %5538 = vmatprep.mubr.f32.mxu0 0.0
    %5539 = vmatmul.mubr.f32.gmra.mxu0 %v5382
    %v5540 = vpop.f32.mrf.mxu0
    %v5541 = vadd.f32 0.0, %v5540
    %v5542 = vpop.f32.mrf.mxu0
    %5543 = vmatprep.mubr.f32.mxu0 0.0
    %5544 = vmatmul.mubr.f32.gmra.mxu0 %v5385
    %v5545 = vpop.f32.mrf.mxu0
    %v5546 = vadd.f32 0.0, %v5545
    %v5547 = vpop.f32.mrf.mxu0
    %5548 = vmatprep.mubr.f32.mxu0 0.0
    %5549 = vmatmul.mubr.f32.gmra.mxu0 %v5388
    %v5550 = vpop.f32.mrf.mxu0
    %v5551 = vadd.f32 0.0, %v5550
    %v5552 = vpop.f32.mrf.mxu0
    %5553 = vmatprep.mubr.f32.mxu0 0.0
    %5554 = vmatmul.mubr.f32.gmra.mxu0 %v5391
    %v5555 = vpop.f32.mrf.mxu0
    %v5556 = vadd.f32 0.0, %v5555
    %v5557 = vpop.f32.mrf.mxu0
    %5558 = vmatprep.mubr.f32.mxu0 0.0
    %5559 = vmatmul.mubr.f32.gmra.mxu0 %v5394
    %v5560 = vpop.f32.mrf.mxu0
    %v5561 = vadd.f32 0.0, %v5560
    %v5562 = vpop.f32.mrf.mxu0
    %5563 = vmatprep.mubr.f32.mxu0 0.0
    %5564 = vmatmul.mubr.f32.gmra.mxu0 %v5397
    %v5565 = vpop.f32.mrf.mxu0
    %v5566 = vadd.f32 0.0, %v5565
    %v5567 = vpop.f32.mrf.mxu0
    %5568 = vdwg.mxu0
    %v5569 = vadd.f32 %v5015, %v5466
    %v5570 = vadd.f32 %v5016, %v5471
    %v5571 = vadd.f32 %v5017, %v5476
    %v5572 = vadd.f32 %v5018, %v5481
    %v5573 = vadd.f32 %v5019, %v5486
    %v5574 = vadd.f32 %v5020, %v5491
    %v5575 = vadd.f32 %v5021, %v5496
    %v5576 = vadd.f32 %v5022, %v5501
    %v5577 = vadd.f32 %v5023, %v5506
    %v5578 = vadd.f32 %v5024, %v5511
    %v5579 = vadd.f32 %v5025, %v5516
    %v5580 = vadd.f32 %v5026, %v5521
    %v5581 = vadd.f32 %v5027, %v5526
    %v5582 = vadd.f32 %v5028, %v5531
    %v5583 = vadd.f32 %v5029, %v5536
    %v5584 = vadd.f32 %v5030, %v5541
    %v5585 = vadd.f32 %v5031, %v5546
    %v5586 = vadd.f32 %v5032, %v5551
    %v5587 = vadd.f32 %v5033, %v5556
    %v5588 = vadd.f32 %v5034, %v5561
    %v5589 = vadd.f32 %v5035, %v5566
    %v5590 = vmax.f32 %v5569, 0.0
    %v5591 = vmax.f32 %v5570, 0.0
    %v5592 = vmax.f32 %v5571, 0.0
    %v5593 = vmax.f32 %v5572, 0.0
    %v5594 = vmax.f32 %v5573, 0.0
    %v5595 = vmax.f32 %v5574, 0.0
    %v5596 = vmax.f32 %v5575, 0.0
    %v5597 = vmax.f32 %v5576, 0.0
    %v5598 = vmax.f32 %v5577, 0.0
    %v5599 = vmax.f32 %v5578, 0.0
    %v5600 = vmax.f32 %v5579, 0.0
    %v5601 = vmax.f32 %v5580, 0.0
    %v5602 = vmax.f32 %v5581, 0.0
    %v5603 = vmax.f32 %v5582, 0.0
    %v5604 = vmax.f32 %v5583, 0.0
    %v5605 = vmax.f32 %v5584, 0.0
    %v5606 = vmax.f32 %v5585, 0.0
    %v5607 = vmax.f32 %v5586, 0.0
    %v5608 = vmax.f32 %v5587, 0.0
    %v5609 = vmax.f32 %v5588, 0.0
    %v5610 = vmax.f32 %v5589, 0.0
    %vm5611 = vcmask 261120
    %5612 = vst.msk [vmem:[#allocation2] sm:$0xff] %vm5611, %v5590
    %5613 = vst.msk [vmem:[#allocation2 + $0x8] sm:$0xff] %vm5611, %v5591
    %5614 = vst.msk [vmem:[#allocation2 + $0x10] sm:$0xff] %vm5611, %v5592
    %5615 = vst.msk [vmem:[#allocation2 + $0x18] sm:$0xff] %vm5611, %v5593
    %5616 = vst.msk [vmem:[#allocation2 + $0x20] sm:$0xff] %vm5611, %v5594
    %5617 = vst.msk [vmem:[#allocation2 + $0x28] sm:$0xff] %vm5611, %v5595
    %5618 = vst.msk [vmem:[#allocation2 + $0x30] sm:$0xff] %vm5611, %v5596
    %5619 = vst.msk [vmem:[#allocation2 + $0x38] sm:$0xff] %vm5611, %v5597
    %5620 = vst.msk [vmem:[#allocation2 + $0x40] sm:$0xff] %vm5611, %v5598
    %5621 = vst.msk [vmem:[#allocation2 + $0x48] sm:$0xff] %vm5611, %v5599
    %5622 = vst.msk [vmem:[#allocation2 + $0x50] sm:$0xff] %vm5611, %v5600
    %5623 = vst.msk [vmem:[#allocation2 + $0x58] sm:$0xff] %vm5611, %v5601
    %5624 = vst.msk [vmem:[#allocation2 + $0x60] sm:$0xff] %vm5611, %v5602
    %5625 = vst.msk [vmem:[#allocation2 + $0x68] sm:$0xff] %vm5611, %v5603
    %5626 = vst.msk [vmem:[#allocation2 + $0x70] sm:$0xff] %vm5611, %v5604
    %5627 = vst.msk [vmem:[#allocation2 + $0x78] sm:$0xff] %vm5611, %v5605
    %5628 = vst.msk [vmem:[#allocation2 + $0x80] sm:$0xff] %vm5611, %v5606
    %5629 = vst.msk [vmem:[#allocation2 + $0x88] sm:$0xff] %vm5611, %v5607
    %5630 = vst.msk [vmem:[#allocation2 + $0x90] sm:$0xff] %vm5611, %v5608
    %5631 = vst.msk [vmem:[#allocation2 + $0x98] sm:$0xff] %vm5611, %v5609
    %vm5632 = vcmask 254976
    %5633 = vst.msk [vmem:[#allocation2 + $0xa0] sm:$0x3] %vm5632, %v5610
    %v5634 = vld [vmem:[#allocation2] sm:$0x3]
    %5635 = vst.msk [vmem:[#allocation3] sm:$0x3] %vm5632, %v5634
    %v5636 = vld [vmem:[#allocation2 + $0x2] sm:$0x3]
    %v5639 = vunpack.c.l.s4 1983009808
    %v5640 = vunpack.c.0.s8 %v5639
    %v5641 = vlaneseq
    %v5642 = vshrl.u32 %v5641, 7
    %v5643 = vsub.s32 %v5640, %v5642
    %v5644 = vrot.slane %v5636, %v5643
    %5645 = vrot.lane.b32.xlu0 %v5644, 32
    %v5646 = vpop.permute.xlu0 %5645
    %vm5648 = vcmask 517376
    %5649 = vst.msk [vmem:[#allocation3] sm:$0x3] %vm5648, %v5646
    %v5650 = vld [vmem:[#allocation2 + $0x4] sm:$0x3]
    %v5653 = vunpack.c.l.s4 1983009808
    %v5654 = vunpack.c.0.s8 %v5653
    %v5655 = vlaneseq
    %v5656 = vshrl.u32 %v5655, 7
    %v5657 = vsub.s32 %v5654, %v5656
    %v5658 = vrot.slane %v5650, %v5657
    %5659 = vrot.lane.b32.xlu0 %v5658, 64
    %v5660 = vpop.permute.xlu0 %5659
    %vm5662 = vcmask 779776
    %5663 = vst.msk [vmem:[#allocation3] sm:$0x3] %vm5662, %v5660
    %v5664 = vld [vmem:[#allocation2 + $0x6] sm:$0x3]
    %v5667 = vunpack.c.l.s4 1983009808
    %v5668 = vunpack.c.0.s8 %v5667
    %v5669 = vlaneseq
    %v5670 = vshrl.u32 %v5669, 7
    %v5671 = vsub.s32 %v5668, %v5670
    %v5672 = vrot.slane %v5664, %v5671
    %5673 = vrot.lane.b32.xlu0 %v5672, 96
    %v5674 = vpop.permute.xlu0 %5673
    %vm5676 = vcmask 1042176
    %5677 = vst.msk [vmem:[#allocation3] sm:$0x3] %vm5676, %v5674
    %v5678 = vld [vmem:[#allocation2 + $0x8] sm:$0x3]
    %5679 = vst.msk [vmem:[#allocation3 + $0x2] sm:$0x3] %vm5632, %v5678
    %v5680 = vld [vmem:[#allocation2 + $0xa] sm:$0x3]
    %v5683 = vunpack.c.l.s4 1983009808
    %v5684 = vunpack.c.0.s8 %v5683
    %v5685 = vlaneseq
    %v5686 = vshrl.u32 %v5685, 7
    %v5687 = vsub.s32 %v5684, %v5686
    %v5688 = vrot.slane %v5680, %v5687
    %5689 = vrot.lane.b32.xlu0 %v5688, 32
    %v5690 = vpop.permute.xlu0 %5689
    %5692 = vst.msk [vmem:[#allocation3 + $0x2] sm:$0x3] %vm5648, %v5690
    %v5693 = vld [vmem:[#allocation2 + $0xc] sm:$0x3]
    %v5696 = vunpack.c.l.s4 1983009808
    %v5697 = vunpack.c.0.s8 %v5696
    %v5698 = vlaneseq
    %v5699 = vshrl.u32 %v5698, 7
    %v5700 = vsub.s32 %v5697, %v5699
    %v5701 = vrot.slane %v5693, %v5700
    %5702 = vrot.lane.b32.xlu0 %v5701, 64
    %v5703 = vpop.permute.xlu0 %5702
    %5705 = vst.msk [vmem:[#allocation3 + $0x2] sm:$0x3] %vm5662, %v5703
    %v5706 = vld [vmem:[#allocation2 + $0xe] sm:$0x3]
    %v5709 = vunpack.c.l.s4 1983009808
    %v5710 = vunpack.c.0.s8 %v5709
    %v5711 = vlaneseq
    %v5712 = vshrl.u32 %v5711, 7
    %v5713 = vsub.s32 %v5710, %v5712
    %v5714 = vrot.slane %v5706, %v5713
    %5715 = vrot.lane.b32.xlu0 %v5714, 96
    %v5716 = vpop.permute.xlu0 %5715
    %5718 = vst.msk [vmem:[#allocation3 + $0x2] sm:$0x3] %vm5676, %v5716
    %v5719 = vld [vmem:[#allocation2 + $0x10] sm:$0x3]
    %5720 = vst.msk [vmem:[#allocation3 + $0x4] sm:$0x3] %vm5632, %v5719
    %v5721 = vld [vmem:[#allocation2 + $0x12] sm:$0x3]
    %v5724 = vunpack.c.l.s4 1983009808
    %v5725 = vunpack.c.0.s8 %v5724
    %v5726 = vlaneseq
    %v5727 = vshrl.u32 %v5726, 7
    %v5728 = vsub.s32 %v5725, %v5727
    %v5729 = vrot.slane %v5721, %v5728
    %5730 = vrot.lane.b32.xlu0 %v5729, 32
    %v5731 = vpop.permute.xlu0 %5730
    %5733 = vst.msk [vmem:[#allocation3 + $0x4] sm:$0x3] %vm5648, %v5731
    %v5734 = vld [vmem:[#allocation2 + $0x14] sm:$0x3]
    %v5737 = vunpack.c.l.s4 1983009808
    %v5738 = vunpack.c.0.s8 %v5737
    %v5739 = vlaneseq
    %v5740 = vshrl.u32 %v5739, 7
    %v5741 = vsub.s32 %v5738, %v5740
    %v5742 = vrot.slane %v5734, %v5741
    %5743 = vrot.lane.b32.xlu0 %v5742, 64
    %v5744 = vpop.permute.xlu0 %5743
    %5746 = vst.msk [vmem:[#allocation3 + $0x4] sm:$0x3] %vm5662, %v5744
    %v5747 = vld [vmem:[#allocation2 + $0x16] sm:$0x3]
    %v5750 = vunpack.c.l.s4 1983009808
    %v5751 = vunpack.c.0.s8 %v5750
    %v5752 = vlaneseq
    %v5753 = vshrl.u32 %v5752, 7
    %v5754 = vsub.s32 %v5751, %v5753
    %v5755 = vrot.slane %v5747, %v5754
    %5756 = vrot.lane.b32.xlu0 %v5755, 96
    %v5757 = vpop.permute.xlu0 %5756
    %5759 = vst.msk [vmem:[#allocation3 + $0x4] sm:$0x3] %vm5676, %v5757
    %v5760 = vld [vmem:[#allocation2 + $0x18] sm:$0x3]
    %5761 = vst.msk [vmem:[#allocation3 + $0x6] sm:$0x3] %vm5632, %v5760
    %v5762 = vld [vmem:[#allocation2 + $0x1a] sm:$0x3]
    %v5765 = vunpack.c.l.s4 1983009808
    %v5766 = vunpack.c.0.s8 %v5765
    %v5767 = vlaneseq
    %v5768 = vshrl.u32 %v5767, 7
    %v5769 = vsub.s32 %v5766, %v5768
    %v5770 = vrot.slane %v5762, %v5769
    %5771 = vrot.lane.b32.xlu0 %v5770, 32
    %v5772 = vpop.permute.xlu0 %5771
    %5774 = vst.msk [vmem:[#allocation3 + $0x6] sm:$0x3] %vm5648, %v5772
    %v5775 = vld [vmem:[#allocation2 + $0x1c] sm:$0x3]
    %v5778 = vunpack.c.l.s4 1983009808
    %v5779 = vunpack.c.0.s8 %v5778
    %v5780 = vlaneseq
    %v5781 = vshrl.u32 %v5780, 7
    %v5782 = vsub.s32 %v5779, %v5781
    %v5783 = vrot.slane %v5775, %v5782
    %5784 = vrot.lane.b32.xlu0 %v5783, 64
    %v5785 = vpop.permute.xlu0 %5784
    %5787 = vst.msk [vmem:[#allocation3 + $0x6] sm:$0x3] %vm5662, %v5785
    %v5788 = vld [vmem:[#allocation2 + $0x1e] sm:$0x3]
    %v5791 = vunpack.c.l.s4 1983009808
    %v5792 = vunpack.c.0.s8 %v5791
    %v5793 = vlaneseq
    %v5794 = vshrl.u32 %v5793, 7
    %v5795 = vsub.s32 %v5792, %v5794
    %v5796 = vrot.slane %v5788, %v5795
    %5797 = vrot.lane.b32.xlu0 %v5796, 96
    %v5798 = vpop.permute.xlu0 %5797
    %5800 = vst.msk [vmem:[#allocation3 + $0x6] sm:$0x3] %vm5676, %v5798
    %v5801 = vld [vmem:[#allocation2 + $0x20] sm:$0x3]
    %5802 = vst.msk [vmem:[#allocation3 + $0x8] sm:$0x3] %vm5632, %v5801
    %v5803 = vld [vmem:[#allocation2 + $0x22] sm:$0x3]
    %v5806 = vunpack.c.l.s4 1983009808
    %v5807 = vunpack.c.0.s8 %v5806
    %v5808 = vlaneseq
    %v5809 = vshrl.u32 %v5808, 7
    %v5810 = vsub.s32 %v5807, %v5809
    %v5811 = vrot.slane %v5803, %v5810
    %5812 = vrot.lane.b32.xlu0 %v5811, 32
    %v5813 = vpop.permute.xlu0 %5812
    %5815 = vst.msk [vmem:[#allocation3 + $0x8] sm:$0x3] %vm5648, %v5813
    %v5816 = vld [vmem:[#allocation2 + $0x24] sm:$0x3]
    %v5819 = vunpack.c.l.s4 1983009808
    %v5820 = vunpack.c.0.s8 %v5819
    %v5821 = vlaneseq
    %v5822 = vshrl.u32 %v5821, 7
    %v5823 = vsub.s32 %v5820, %v5822
    %v5824 = vrot.slane %v5816, %v5823
    %5825 = vrot.lane.b32.xlu0 %v5824, 64
    %v5826 = vpop.permute.xlu0 %5825
    %5828 = vst.msk [vmem:[#allocation3 + $0x8] sm:$0x3] %vm5662, %v5826
    %v5829 = vld [vmem:[#allocation2 + $0x26] sm:$0x3]
    %v5832 = vunpack.c.l.s4 1983009808
    %v5833 = vunpack.c.0.s8 %v5832
    %v5834 = vlaneseq
    %v5835 = vshrl.u32 %v5834, 7
    %v5836 = vsub.s32 %v5833, %v5835
    %v5837 = vrot.slane %v5829, %v5836
    %5838 = vrot.lane.b32.xlu0 %v5837, 96
    %v5839 = vpop.permute.xlu0 %5838
    %5841 = vst.msk [vmem:[#allocation3 + $0x8] sm:$0x3] %vm5676, %v5839
    %v5842 = vld [vmem:[#allocation2 + $0x28] sm:$0x3]
    %5843 = vst.msk [vmem:[#allocation3 + $0xa] sm:$0x3] %vm5632, %v5842
    %v5844 = vld [vmem:[#allocation2 + $0x2a] sm:$0x3]
    %v5847 = vunpack.c.l.s4 1983009808
    %v5848 = vunpack.c.0.s8 %v5847
    %v5849 = vlaneseq
    %v5850 = vshrl.u32 %v5849, 7
    %v5851 = vsub.s32 %v5848, %v5850
    %v5852 = vrot.slane %v5844, %v5851
    %5853 = vrot.lane.b32.xlu0 %v5852, 32
    %v5854 = vpop.permute.xlu0 %5853
    %5856 = vst.msk [vmem:[#allocation3 + $0xa] sm:$0x3] %vm5648, %v5854
    %v5857 = vld [vmem:[#allocation2 + $0x2c] sm:$0x3]
    %v5860 = vunpack.c.l.s4 1983009808
    %v5861 = vunpack.c.0.s8 %v5860
    %v5862 = vlaneseq
    %v5863 = vshrl.u32 %v5862, 7
    %v5864 = vsub.s32 %v5861, %v5863
    %v5865 = vrot.slane %v5857, %v5864
    %5866 = vrot.lane.b32.xlu0 %v5865, 64
    %v5867 = vpop.permute.xlu0 %5866
    %5869 = vst.msk [vmem:[#allocation3 + $0xa] sm:$0x3] %vm5662, %v5867
    %v5870 = vld [vmem:[#allocation2 + $0x2e] sm:$0x3]
    %v5873 = vunpack.c.l.s4 1983009808
    %v5874 = vunpack.c.0.s8 %v5873
    %v5875 = vlaneseq
    %v5876 = vshrl.u32 %v5875, 7
    %v5877 = vsub.s32 %v5874, %v5876
    %v5878 = vrot.slane %v5870, %v5877
    %5879 = vrot.lane.b32.xlu0 %v5878, 96
    %v5880 = vpop.permute.xlu0 %5879
    %5882 = vst.msk [vmem:[#allocation3 + $0xa] sm:$0x3] %vm5676, %v5880
    %v5883 = vld [vmem:[#allocation2 + $0x30] sm:$0x3]
    %5884 = vst.msk [vmem:[#allocation3 + $0xc] sm:$0x3] %vm5632, %v5883
    %v5885 = vld [vmem:[#allocation2 + $0x32] sm:$0x3]
    %v5888 = vunpack.c.l.s4 1983009808
    %v5889 = vunpack.c.0.s8 %v5888
    %v5890 = vlaneseq
    %v5891 = vshrl.u32 %v5890, 7
    %v5892 = vsub.s32 %v5889, %v5891
    %v5893 = vrot.slane %v5885, %v5892
    %5894 = vrot.lane.b32.xlu0 %v5893, 32
    %v5895 = vpop.permute.xlu0 %5894
    %5897 = vst.msk [vmem:[#allocation3 + $0xc] sm:$0x3] %vm5648, %v5895
    %v5898 = vld [vmem:[#allocation2 + $0x34] sm:$0x3]
    %v5901 = vunpack.c.l.s4 1983009808
    %v5902 = vunpack.c.0.s8 %v5901
    %v5903 = vlaneseq
    %v5904 = vshrl.u32 %v5903, 7
    %v5905 = vsub.s32 %v5902, %v5904
    %v5906 = vrot.slane %v5898, %v5905
    %5907 = vrot.lane.b32.xlu0 %v5906, 64
    %v5908 = vpop.permute.xlu0 %5907
    %5910 = vst.msk [vmem:[#allocation3 + $0xc] sm:$0x3] %vm5662, %v5908
    %v5911 = vld [vmem:[#allocation2 + $0x36] sm:$0x3]
    %v5914 = vunpack.c.l.s4 1983009808
    %v5915 = vunpack.c.0.s8 %v5914
    %v5916 = vlaneseq
    %v5917 = vshrl.u32 %v5916, 7
    %v5918 = vsub.s32 %v5915, %v5917
    %v5919 = vrot.slane %v5911, %v5918
    %5920 = vrot.lane.b32.xlu0 %v5919, 96
    %v5921 = vpop.permute.xlu0 %5920
    %5923 = vst.msk [vmem:[#allocation3 + $0xc] sm:$0x3] %vm5676, %v5921
    %v5924 = vld [vmem:[#allocation2 + $0x38] sm:$0x3]
    %5925 = vst.msk [vmem:[#allocation3 + $0xe] sm:$0x3] %vm5632, %v5924
    %v5926 = vld [vmem:[#allocation2 + $0x3a] sm:$0x3]
    %v5929 = vunpack.c.l.s4 1983009808
    %v5930 = vunpack.c.0.s8 %v5929
    %v5931 = vlaneseq
    %v5932 = vshrl.u32 %v5931, 7
    %v5933 = vsub.s32 %v5930, %v5932
    %v5934 = vrot.slane %v5926, %v5933
    %5935 = vrot.lane.b32.xlu0 %v5934, 32
    %v5936 = vpop.permute.xlu0 %5935
    %5938 = vst.msk [vmem:[#allocation3 + $0xe] sm:$0x3] %vm5648, %v5936
    %v5939 = vld [vmem:[#allocation2 + $0x3c] sm:$0x3]
    %v5942 = vunpack.c.l.s4 1983009808
    %v5943 = vunpack.c.0.s8 %v5942
    %v5944 = vlaneseq
    %v5945 = vshrl.u32 %v5944, 7
    %v5946 = vsub.s32 %v5943, %v5945
    %v5947 = vrot.slane %v5939, %v5946
    %5948 = vrot.lane.b32.xlu0 %v5947, 64
    %v5949 = vpop.permute.xlu0 %5948
    %5951 = vst.msk [vmem:[#allocation3 + $0xe] sm:$0x3] %vm5662, %v5949
    %v5952 = vld [vmem:[#allocation2 + $0x3e] sm:$0x3]
    %v5955 = vunpack.c.l.s4 1983009808
    %v5956 = vunpack.c.0.s8 %v5955
    %v5957 = vlaneseq
    %v5958 = vshrl.u32 %v5957, 7
    %v5959 = vsub.s32 %v5956, %v5958
    %v5960 = vrot.slane %v5952, %v5959
    %5961 = vrot.lane.b32.xlu0 %v5960, 96
    %v5962 = vpop.permute.xlu0 %5961
    %5964 = vst.msk [vmem:[#allocation3 + $0xe] sm:$0x3] %vm5676, %v5962
    %v5965 = vld [vmem:[#allocation2 + $0x40] sm:$0x3]
    %5966 = vst.msk [vmem:[#allocation3 + $0x10] sm:$0x3] %vm5632, %v5965
    %v5967 = vld [vmem:[#allocation2 + $0x42] sm:$0x3]
    %v5970 = vunpack.c.l.s4 1983009808
    %v5971 = vunpack.c.0.s8 %v5970
    %v5972 = vlaneseq
    %v5973 = vshrl.u32 %v5972, 7
    %v5974 = vsub.s32 %v5971, %v5973
    %v5975 = vrot.slane %v5967, %v5974
    %5976 = vrot.lane.b32.xlu0 %v5975, 32
    %v5977 = vpop.permute.xlu0 %5976
    %5979 = vst.msk [vmem:[#allocation3 + $0x10] sm:$0x3] %vm5648, %v5977
    %v5980 = vld [vmem:[#allocation2 + $0x44] sm:$0x3]
    %v5983 = vunpack.c.l.s4 1983009808
    %v5984 = vunpack.c.0.s8 %v5983
    %v5985 = vlaneseq
    %v5986 = vshrl.u32 %v5985, 7
    %v5987 = vsub.s32 %v5984, %v5986
    %v5988 = vrot.slane %v5980, %v5987
    %5989 = vrot.lane.b32.xlu0 %v5988, 64
    %v5990 = vpop.permute.xlu0 %5989
    %5992 = vst.msk [vmem:[#allocation3 + $0x10] sm:$0x3] %vm5662, %v5990
    %v5993 = vld [vmem:[#allocation2 + $0x46] sm:$0x3]
    %v5996 = vunpack.c.l.s4 1983009808
    %v5997 = vunpack.c.0.s8 %v5996
    %v5998 = vlaneseq
    %v5999 = vshrl.u32 %v5998, 7
    %v6000 = vsub.s32 %v5997, %v5999
    %v6001 = vrot.slane %v5993, %v6000
    %6002 = vrot.lane.b32.xlu0 %v6001, 96
    %v6003 = vpop.permute.xlu0 %6002
    %6005 = vst.msk [vmem:[#allocation3 + $0x10] sm:$0x3] %vm5676, %v6003
    %v6006 = vld [vmem:[#allocation2 + $0x48] sm:$0x3]
    %6007 = vst.msk [vmem:[#allocation3 + $0x12] sm:$0x3] %vm5632, %v6006
    %v6008 = vld [vmem:[#allocation2 + $0x4a] sm:$0x3]
    %v6011 = vunpack.c.l.s4 1983009808
    %v6012 = vunpack.c.0.s8 %v6011
    %v6013 = vlaneseq
    %v6014 = vshrl.u32 %v6013, 7
    %v6015 = vsub.s32 %v6012, %v6014
    %v6016 = vrot.slane %v6008, %v6015
    %6017 = vrot.lane.b32.xlu0 %v6016, 32
    %v6018 = vpop.permute.xlu0 %6017
    %6020 = vst.msk [vmem:[#allocation3 + $0x12] sm:$0x3] %vm5648, %v6018
    %v6021 = vld [vmem:[#allocation2 + $0x4c] sm:$0x3]
    %v6024 = vunpack.c.l.s4 1983009808
    %v6025 = vunpack.c.0.s8 %v6024
    %v6026 = vlaneseq
    %v6027 = vshrl.u32 %v6026, 7
    %v6028 = vsub.s32 %v6025, %v6027
    %v6029 = vrot.slane %v6021, %v6028
    %6030 = vrot.lane.b32.xlu0 %v6029, 64
    %v6031 = vpop.permute.xlu0 %6030
    %6033 = vst.msk [vmem:[#allocation3 + $0x12] sm:$0x3] %vm5662, %v6031
    %v6034 = vld [vmem:[#allocation2 + $0x4e] sm:$0x3]
    %v6037 = vunpack.c.l.s4 1983009808
    %v6038 = vunpack.c.0.s8 %v6037
    %v6039 = vlaneseq
    %v6040 = vshrl.u32 %v6039, 7
    %v6041 = vsub.s32 %v6038, %v6040
    %v6042 = vrot.slane %v6034, %v6041
    %6043 = vrot.lane.b32.xlu0 %v6042, 96
    %v6044 = vpop.permute.xlu0 %6043
    %6046 = vst.msk [vmem:[#allocation3 + $0x12] sm:$0x3] %vm5676, %v6044
    %v6047 = vld [vmem:[#allocation2 + $0x50] sm:$0x3]
    %6048 = vst.msk [vmem:[#allocation3 + $0x14] sm:$0x3] %vm5632, %v6047
    %v6049 = vld [vmem:[#allocation2 + $0x52] sm:$0x3]
    %v6052 = vunpack.c.l.s4 1983009808
    %v6053 = vunpack.c.0.s8 %v6052
    %v6054 = vlaneseq
    %v6055 = vshrl.u32 %v6054, 7
    %v6056 = vsub.s32 %v6053, %v6055
    %v6057 = vrot.slane %v6049, %v6056
    %6058 = vrot.lane.b32.xlu0 %v6057, 32
    %v6059 = vpop.permute.xlu0 %6058
    %6061 = vst.msk [vmem:[#allocation3 + $0x14] sm:$0x3] %vm5648, %v6059
    %v6062 = vld [vmem:[#allocation2 + $0x54] sm:$0x3]
    %v6065 = vunpack.c.l.s4 1983009808
    %v6066 = vunpack.c.0.s8 %v6065
    %v6067 = vlaneseq
    %v6068 = vshrl.u32 %v6067, 7
    %v6069 = vsub.s32 %v6066, %v6068
    %v6070 = vrot.slane %v6062, %v6069
    %6071 = vrot.lane.b32.xlu0 %v6070, 64
    %v6072 = vpop.permute.xlu0 %6071
    %6074 = vst.msk [vmem:[#allocation3 + $0x14] sm:$0x3] %vm5662, %v6072
    %v6075 = vld [vmem:[#allocation2 + $0x56] sm:$0x3]
    %v6078 = vunpack.c.l.s4 1983009808
    %v6079 = vunpack.c.0.s8 %v6078
    %v6080 = vlaneseq
    %v6081 = vshrl.u32 %v6080, 7
    %v6082 = vsub.s32 %v6079, %v6081
    %v6083 = vrot.slane %v6075, %v6082
    %6084 = vrot.lane.b32.xlu0 %v6083, 96
    %v6085 = vpop.permute.xlu0 %6084
    %6087 = vst.msk [vmem:[#allocation3 + $0x14] sm:$0x3] %vm5676, %v6085
    %v6088 = vld [vmem:[#allocation2 + $0x58] sm:$0x3]
    %6089 = vst.msk [vmem:[#allocation3 + $0x16] sm:$0x3] %vm5632, %v6088
    %v6090 = vld [vmem:[#allocation2 + $0x5a] sm:$0x3]
    %v6093 = vunpack.c.l.s4 1983009808
    %v6094 = vunpack.c.0.s8 %v6093
    %v6095 = vlaneseq
    %v6096 = vshrl.u32 %v6095, 7
    %v6097 = vsub.s32 %v6094, %v6096
    %v6098 = vrot.slane %v6090, %v6097
    %6099 = vrot.lane.b32.xlu0 %v6098, 32
    %v6100 = vpop.permute.xlu0 %6099
    %6102 = vst.msk [vmem:[#allocation3 + $0x16] sm:$0x3] %vm5648, %v6100
    %v6103 = vld [vmem:[#allocation2 + $0x5c] sm:$0x3]
    %v6106 = vunpack.c.l.s4 1983009808
    %v6107 = vunpack.c.0.s8 %v6106
    %v6108 = vlaneseq
    %v6109 = vshrl.u32 %v6108, 7
    %v6110 = vsub.s32 %v6107, %v6109
    %v6111 = vrot.slane %v6103, %v6110
    %6112 = vrot.lane.b32.xlu0 %v6111, 64
    %v6113 = vpop.permute.xlu0 %6112
    %6115 = vst.msk [vmem:[#allocation3 + $0x16] sm:$0x3] %vm5662, %v6113
    %v6116 = vld [vmem:[#allocation2 + $0x5e] sm:$0x3]
    %v6119 = vunpack.c.l.s4 1983009808
    %v6120 = vunpack.c.0.s8 %v6119
    %v6121 = vlaneseq
    %v6122 = vshrl.u32 %v6121, 7
    %v6123 = vsub.s32 %v6120, %v6122
    %v6124 = vrot.slane %v6116, %v6123
    %6125 = vrot.lane.b32.xlu0 %v6124, 96
    %v6126 = vpop.permute.xlu0 %6125
    %6128 = vst.msk [vmem:[#allocation3 + $0x16] sm:$0x3] %vm5676, %v6126
    %v6129 = vld [vmem:[#allocation2 + $0x60] sm:$0x3]
    %6130 = vst.msk [vmem:[#allocation3 + $0x18] sm:$0x3] %vm5632, %v6129
    %v6131 = vld [vmem:[#allocation2 + $0x62] sm:$0x3]
    %v6134 = vunpack.c.l.s4 1983009808
    %v6135 = vunpack.c.0.s8 %v6134
    %v6136 = vlaneseq
    %v6137 = vshrl.u32 %v6136, 7
    %v6138 = vsub.s32 %v6135, %v6137
    %v6139 = vrot.slane %v6131, %v6138
    %6140 = vrot.lane.b32.xlu0 %v6139, 32
    %v6141 = vpop.permute.xlu0 %6140
    %6143 = vst.msk [vmem:[#allocation3 + $0x18] sm:$0x3] %vm5648, %v6141
    %v6144 = vld [vmem:[#allocation2 + $0x64] sm:$0x3]
    %v6147 = vunpack.c.l.s4 1983009808
    %v6148 = vunpack.c.0.s8 %v6147
    %v6149 = vlaneseq
    %v6150 = vshrl.u32 %v6149, 7
    %v6151 = vsub.s32 %v6148, %v6150
    %v6152 = vrot.slane %v6144, %v6151
    %6153 = vrot.lane.b32.xlu0 %v6152, 64
    %v6154 = vpop.permute.xlu0 %6153
    %6156 = vst.msk [vmem:[#allocation3 + $0x18] sm:$0x3] %vm5662, %v6154
    %v6157 = vld [vmem:[#allocation2 + $0x66] sm:$0x3]
    %v6160 = vunpack.c.l.s4 1983009808
    %v6161 = vunpack.c.0.s8 %v6160
    %v6162 = vlaneseq
    %v6163 = vshrl.u32 %v6162, 7
    %v6164 = vsub.s32 %v6161, %v6163
    %v6165 = vrot.slane %v6157, %v6164
    %6166 = vrot.lane.b32.xlu0 %v6165, 96
    %v6167 = vpop.permute.xlu0 %6166
    %6169 = vst.msk [vmem:[#allocation3 + $0x18] sm:$0x3] %vm5676, %v6167
    %v6170 = vld [vmem:[#allocation2 + $0x68] sm:$0x3]
    %6171 = vst.msk [vmem:[#allocation3 + $0x1a] sm:$0x3] %vm5632, %v6170
    %v6172 = vld [vmem:[#allocation2 + $0x6a] sm:$0x3]
    %v6175 = vunpack.c.l.s4 1983009808
    %v6176 = vunpack.c.0.s8 %v6175
    %v6177 = vlaneseq
    %v6178 = vshrl.u32 %v6177, 7
    %v6179 = vsub.s32 %v6176, %v6178
    %v6180 = vrot.slane %v6172, %v6179
    %6181 = vrot.lane.b32.xlu0 %v6180, 32
    %v6182 = vpop.permute.xlu0 %6181
    %6184 = vst.msk [vmem:[#allocation3 + $0x1a] sm:$0x3] %vm5648, %v6182
    %v6185 = vld [vmem:[#allocation2 + $0x6c] sm:$0x3]
    %v6188 = vunpack.c.l.s4 1983009808
    %v6189 = vunpack.c.0.s8 %v6188
    %v6190 = vlaneseq
    %v6191 = vshrl.u32 %v6190, 7
    %v6192 = vsub.s32 %v6189, %v6191
    %v6193 = vrot.slane %v6185, %v6192
    %6194 = vrot.lane.b32.xlu0 %v6193, 64
    %v6195 = vpop.permute.xlu0 %6194
    %6197 = vst.msk [vmem:[#allocation3 + $0x1a] sm:$0x3] %vm5662, %v6195
    %v6198 = vld [vmem:[#allocation2 + $0x6e] sm:$0x3]
    %v6201 = vunpack.c.l.s4 1983009808
    %v6202 = vunpack.c.0.s8 %v6201
    %v6203 = vlaneseq
    %v6204 = vshrl.u32 %v6203, 7
    %v6205 = vsub.s32 %v6202, %v6204
    %v6206 = vrot.slane %v6198, %v6205
    %6207 = vrot.lane.b32.xlu0 %v6206, 96
    %v6208 = vpop.permute.xlu0 %6207
    %6210 = vst.msk [vmem:[#allocation3 + $0x1a] sm:$0x3] %vm5676, %v6208
    %v6211 = vld [vmem:[#allocation2 + $0x70] sm:$0x3]
    %6212 = vst.msk [vmem:[#allocation3 + $0x1c] sm:$0x3] %vm5632, %v6211
    %v6213 = vld [vmem:[#allocation2 + $0x72] sm:$0x3]
    %v6216 = vunpack.c.l.s4 1983009808
    %v6217 = vunpack.c.0.s8 %v6216
    %v6218 = vlaneseq
    %v6219 = vshrl.u32 %v6218, 7
    %v6220 = vsub.s32 %v6217, %v6219
    %v6221 = vrot.slane %v6213, %v6220
    %6222 = vrot.lane.b32.xlu0 %v6221, 32
    %v6223 = vpop.permute.xlu0 %6222
    %6225 = vst.msk [vmem:[#allocation3 + $0x1c] sm:$0x3] %vm5648, %v6223
    %v6226 = vld [vmem:[#allocation2 + $0x74] sm:$0x3]
    %v6229 = vunpack.c.l.s4 1983009808
    %v6230 = vunpack.c.0.s8 %v6229
    %v6231 = vlaneseq
    %v6232 = vshrl.u32 %v6231, 7
    %v6233 = vsub.s32 %v6230, %v6232
    %v6234 = vrot.slane %v6226, %v6233
    %6235 = vrot.lane.b32.xlu0 %v6234, 64
    %v6236 = vpop.permute.xlu0 %6235
    %6238 = vst.msk [vmem:[#allocation3 + $0x1c] sm:$0x3] %vm5662, %v6236
    %v6239 = vld [vmem:[#allocation2 + $0x76] sm:$0x3]
    %v6242 = vunpack.c.l.s4 1983009808
    %v6243 = vunpack.c.0.s8 %v6242
    %v6244 = vlaneseq
    %v6245 = vshrl.u32 %v6244, 7
    %v6246 = vsub.s32 %v6243, %v6245
    %v6247 = vrot.slane %v6239, %v6246
    %6248 = vrot.lane.b32.xlu0 %v6247, 96
    %v6249 = vpop.permute.xlu0 %6248
    %6251 = vst.msk [vmem:[#allocation3 + $0x1c] sm:$0x3] %vm5676, %v6249
    %v6252 = vld [vmem:[#allocation2 + $0x78] sm:$0x3]
    %6253 = vst.msk [vmem:[#allocation3 + $0x1e] sm:$0x3] %vm5632, %v6252
    %v6254 = vld [vmem:[#allocation2 + $0x7a] sm:$0x3]
    %v6257 = vunpack.c.l.s4 1983009808
    %v6258 = vunpack.c.0.s8 %v6257
    %v6259 = vlaneseq
    %v6260 = vshrl.u32 %v6259, 7
    %v6261 = vsub.s32 %v6258, %v6260
    %v6262 = vrot.slane %v6254, %v6261
    %6263 = vrot.lane.b32.xlu0 %v6262, 32
    %v6264 = vpop.permute.xlu0 %6263
    %6266 = vst.msk [vmem:[#allocation3 + $0x1e] sm:$0x3] %vm5648, %v6264
    %v6267 = vld [vmem:[#allocation2 + $0x7c] sm:$0x3]
    %v6270 = vunpack.c.l.s4 1983009808
    %v6271 = vunpack.c.0.s8 %v6270
    %v6272 = vlaneseq
    %v6273 = vshrl.u32 %v6272, 7
    %v6274 = vsub.s32 %v6271, %v6273
    %v6275 = vrot.slane %v6267, %v6274
    %6276 = vrot.lane.b32.xlu0 %v6275, 64
    %v6277 = vpop.permute.xlu0 %6276
    %6279 = vst.msk [vmem:[#allocation3 + $0x1e] sm:$0x3] %vm5662, %v6277
    %v6280 = vld [vmem:[#allocation2 + $0x7e] sm:$0x3]
    %v6283 = vunpack.c.l.s4 1983009808
    %v6284 = vunpack.c.0.s8 %v6283
    %v6285 = vlaneseq
    %v6286 = vshrl.u32 %v6285, 7
    %v6287 = vsub.s32 %v6284, %v6286
    %v6288 = vrot.slane %v6280, %v6287
    %6289 = vrot.lane.b32.xlu0 %v6288, 96
    %v6290 = vpop.permute.xlu0 %6289
    %6292 = vst.msk [vmem:[#allocation3 + $0x1e] sm:$0x3] %vm5676, %v6290
    %v6293 = vld [vmem:[#allocation2 + $0x80] sm:$0x3]
    %6294 = vst.msk [vmem:[#allocation3 + $0x20] sm:$0x3] %vm5632, %v6293
    %v6295 = vld [vmem:[#allocation2 + $0x82] sm:$0x3]
    %v6298 = vunpack.c.l.s4 1983009808
    %v6299 = vunpack.c.0.s8 %v6298
    %v6300 = vlaneseq
    %v6301 = vshrl.u32 %v6300, 7
    %v6302 = vsub.s32 %v6299, %v6301
    %v6303 = vrot.slane %v6295, %v6302
    %6304 = vrot.lane.b32.xlu0 %v6303, 32
    %v6305 = vpop.permute.xlu0 %6304
    %6307 = vst.msk [vmem:[#allocation3 + $0x20] sm:$0x3] %vm5648, %v6305
    %v6308 = vld [vmem:[#allocation2 + $0x84] sm:$0x3]
    %v6311 = vunpack.c.l.s4 1983009808
    %v6312 = vunpack.c.0.s8 %v6311
    %v6313 = vlaneseq
    %v6314 = vshrl.u32 %v6313, 7
    %v6315 = vsub.s32 %v6312, %v6314
    %v6316 = vrot.slane %v6308, %v6315
    %6317 = vrot.lane.b32.xlu0 %v6316, 64
    %v6318 = vpop.permute.xlu0 %6317
    %6320 = vst.msk [vmem:[#allocation3 + $0x20] sm:$0x3] %vm5662, %v6318
    %v6321 = vld [vmem:[#allocation2 + $0x86] sm:$0x3]
    %v6324 = vunpack.c.l.s4 1983009808
    %v6325 = vunpack.c.0.s8 %v6324
    %v6326 = vlaneseq
    %v6327 = vshrl.u32 %v6326, 7
    %v6328 = vsub.s32 %v6325, %v6327
    %v6329 = vrot.slane %v6321, %v6328
    %6330 = vrot.lane.b32.xlu0 %v6329, 96
    %v6331 = vpop.permute.xlu0 %6330
    %6333 = vst.msk [vmem:[#allocation3 + $0x20] sm:$0x3] %vm5676, %v6331
    %v6334 = vld [vmem:[#allocation2 + $0x88] sm:$0x3]
    %6335 = vst.msk [vmem:[#allocation3 + $0x22] sm:$0x3] %vm5632, %v6334
    %v6336 = vld [vmem:[#allocation2 + $0x8a] sm:$0x3]
    %v6339 = vunpack.c.l.s4 1983009808
    %v6340 = vunpack.c.0.s8 %v6339
    %v6341 = vlaneseq
    %v6342 = vshrl.u32 %v6341, 7
    %v6343 = vsub.s32 %v6340, %v6342
    %v6344 = vrot.slane %v6336, %v6343
    %6345 = vrot.lane.b32.xlu0 %v6344, 32
    %v6346 = vpop.permute.xlu0 %6345
    %6348 = vst.msk [vmem:[#allocation3 + $0x22] sm:$0x3] %vm5648, %v6346
    %v6349 = vld [vmem:[#allocation2 + $0x8c] sm:$0x3]
    %v6352 = vunpack.c.l.s4 1983009808
    %v6353 = vunpack.c.0.s8 %v6352
    %v6354 = vlaneseq
    %v6355 = vshrl.u32 %v6354, 7
    %v6356 = vsub.s32 %v6353, %v6355
    %v6357 = vrot.slane %v6349, %v6356
    %6358 = vrot.lane.b32.xlu0 %v6357, 64
    %v6359 = vpop.permute.xlu0 %6358
    %6361 = vst.msk [vmem:[#allocation3 + $0x22] sm:$0x3] %vm5662, %v6359
    %v6362 = vld [vmem:[#allocation2 + $0x8e] sm:$0x3]
    %v6365 = vunpack.c.l.s4 1983009808
    %v6366 = vunpack.c.0.s8 %v6365
    %v6367 = vlaneseq
    %v6368 = vshrl.u32 %v6367, 7
    %v6369 = vsub.s32 %v6366, %v6368
    %v6370 = vrot.slane %v6362, %v6369
    %6371 = vrot.lane.b32.xlu0 %v6370, 96
    %v6372 = vpop.permute.xlu0 %6371
    %6374 = vst.msk [vmem:[#allocation3 + $0x22] sm:$0x3] %vm5676, %v6372
    %v6375 = vld [vmem:[#allocation2 + $0x90] sm:$0x3]
    %6376 = vst.msk [vmem:[#allocation3 + $0x24] sm:$0x3] %vm5632, %v6375
    %v6377 = vld [vmem:[#allocation2 + $0x92] sm:$0x3]
    %v6380 = vunpack.c.l.s4 1983009808
    %v6381 = vunpack.c.0.s8 %v6380
    %v6382 = vlaneseq
    %v6383 = vshrl.u32 %v6382, 7
    %v6384 = vsub.s32 %v6381, %v6383
    %v6385 = vrot.slane %v6377, %v6384
    %6386 = vrot.lane.b32.xlu0 %v6385, 32
    %v6387 = vpop.permute.xlu0 %6386
    %6389 = vst.msk [vmem:[#allocation3 + $0x24] sm:$0x3] %vm5648, %v6387
    %v6390 = vld [vmem:[#allocation2 + $0x94] sm:$0x3]
    %v6393 = vunpack.c.l.s4 1983009808
    %v6394 = vunpack.c.0.s8 %v6393
    %v6395 = vlaneseq
    %v6396 = vshrl.u32 %v6395, 7
    %v6397 = vsub.s32 %v6394, %v6396
    %v6398 = vrot.slane %v6390, %v6397
    %6399 = vrot.lane.b32.xlu0 %v6398, 64
    %v6400 = vpop.permute.xlu0 %6399
    %6402 = vst.msk [vmem:[#allocation3 + $0x24] sm:$0x3] %vm5662, %v6400
    %v6403 = vld [vmem:[#allocation2 + $0x96] sm:$0x3]
    %v6406 = vunpack.c.l.s4 1983009808
    %v6407 = vunpack.c.0.s8 %v6406
    %v6408 = vlaneseq
    %v6409 = vshrl.u32 %v6408, 7
    %v6410 = vsub.s32 %v6407, %v6409
    %v6411 = vrot.slane %v6403, %v6410
    %6412 = vrot.lane.b32.xlu0 %v6411, 96
    %v6413 = vpop.permute.xlu0 %6412
    %6415 = vst.msk [vmem:[#allocation3 + $0x24] sm:$0x3] %vm5676, %v6413
    %v6416 = vld [vmem:[#allocation2 + $0x98] sm:$0x3]
    %6417 = vst.msk [vmem:[#allocation3 + $0x26] sm:$0x3] %vm5632, %v6416
    %v6418 = vld [vmem:[#allocation2 + $0x9a] sm:$0x3]
    %v6421 = vunpack.c.l.s4 1983009808
    %v6422 = vunpack.c.0.s8 %v6421
    %v6423 = vlaneseq
    %v6424 = vshrl.u32 %v6423, 7
    %v6425 = vsub.s32 %v6422, %v6424
    %v6426 = vrot.slane %v6418, %v6425
    %6427 = vrot.lane.b32.xlu0 %v6426, 32
    %v6428 = vpop.permute.xlu0 %6427
    %6430 = vst.msk [vmem:[#allocation3 + $0x26] sm:$0x3] %vm5648, %v6428
    %v6431 = vld [vmem:[#allocation2 + $0x9c] sm:$0x3]
    %v6434 = vunpack.c.l.s4 1983009808
    %v6435 = vunpack.c.0.s8 %v6434
    %v6436 = vlaneseq
    %v6437 = vshrl.u32 %v6436, 7
    %v6438 = vsub.s32 %v6435, %v6437
    %v6439 = vrot.slane %v6431, %v6438
    %6440 = vrot.lane.b32.xlu0 %v6439, 64
    %v6441 = vpop.permute.xlu0 %6440
    %6443 = vst.msk [vmem:[#allocation3 + $0x26] sm:$0x3] %vm5662, %v6441
    %v6444 = vld [vmem:[#allocation2 + $0x9e] sm:$0x3]
    %v6447 = vunpack.c.l.s4 1983009808
    %v6448 = vunpack.c.0.s8 %v6447
    %v6449 = vlaneseq
    %v6450 = vshrl.u32 %v6449, 7
    %v6451 = vsub.s32 %v6448, %v6450
    %v6452 = vrot.slane %v6444, %v6451
    %6453 = vrot.lane.b32.xlu0 %v6452, 96
    %v6454 = vpop.permute.xlu0 %6453
    %6456 = vst.msk [vmem:[#allocation3 + $0x26] sm:$0x3] %vm5676, %v6454
    %v6457 = vld [vmem:[#allocation2 + $0xa0] sm:$0x3]
    %6458 = vst.msk [vmem:[#allocation3 + $0x28] sm:$0x3] %vm5632, %v6457
    %v6459 = vld [vmem:[#allocation3] sm:$0xff]
    %v6460 = vld [vmem:[#allocation3 + $0x8] sm:$0xff]
    %v6461 = vld [vmem:[#allocation3 + $0x10] sm:$0xff]
    %v6462 = vld [vmem:[#allocation3 + $0x18] sm:$0xff]
    %v6463 = vld [vmem:[#allocation3 + $0x20] sm:$0xff]
    %v6464 = vld [vmem:[#allocation3 + $0x28] sm:$0x3]
    %v6465 = vld [vmem:[%s4] sm:$0xff]
    %v6466 = vld [vmem:[%s4 + $0x8] sm:$0xff]
    %v6467 = vld [vmem:[%s4 + $0x10] sm:$0xff]
    %v6468 = vld [vmem:[%s4 + $0x18] sm:$0xff]
    %v6469 = vld [vmem:[%s4 + $0x20] sm:$0xff]
    %v6470 = vld [vmem:[%s4 + $0x28] sm:$0xff]
    %v6471 = vld [vmem:[%s4 + $0x30] sm:$0xff]
    %v6472 = vld [vmem:[%s4 + $0x38] sm:$0xff]
    %v6473 = vld [vmem:[%s4 + $0x40] sm:$0xff]
    %v6474 = vld [vmem:[%s4 + $0x48] sm:$0xff]
    %v6475 = vld [vmem:[%s4 + $0x50] sm:$0xff]
    %v6476 = vld [vmem:[%s4 + $0x58] sm:$0xff]
    %v6477 = vld [vmem:[%s4 + $0x60] sm:$0xff]
    %v6478 = vld [vmem:[%s4 + $0x68] sm:$0xff]
    %v6479 = vld [vmem:[%s4 + $0x70] sm:$0xff]
    %v6480 = vld [vmem:[%s4 + $0x78] sm:$0xff]
    %v6481 = vld [vmem:[%s4 + $0x80] sm:$0xff]
    %v6482 = vld [vmem:[%s4 + $0x88] sm:$0xff]
    %v6483 = vld [vmem:[%s4 + $0x90] sm:$0xff]
    %v6484 = vld [vmem:[%s4 + $0x98] sm:$0xff]
    %v6485 = vld [vmem:[%s4 + $0xa0] sm:$0xff]
    %v6486 = vld [vmem:[%s4 + $0xa8] sm:$0xff]
    %v6487 = vld [vmem:[%s4 + $0xb0] sm:$0xff]
    %v6488 = vld [vmem:[%s4 + $0xb8] sm:$0xff]
    %v6489 = vld [vmem:[%s4 + $0xc0] sm:$0xff]
    %v6490 = vld [vmem:[%s4 + $0xc8] sm:$0xff]
    %v6491 = vld [vmem:[%s4 + $0xd0] sm:$0xff]
    %v6492 = vld [vmem:[%s4 + $0xd8] sm:$0xff]
    %v6493 = vld [vmem:[%s4 + $0xe0] sm:$0xff]
    %v6494 = vld [vmem:[%s4 + $0xe8] sm:$0xff]
    %v6495 = vld [vmem:[%s4 + $0xf0] sm:$0xff]
    %v6496 = vld [vmem:[%s4 + $0xf8] sm:$0xff]
    %v6497 = vld [vmem:[%s4 + $0x100] sm:$0xff]
    %v6498 = vld [vmem:[%s4 + $0x108] sm:$0xff]
    %v6499 = vld [vmem:[%s4 + $0x110] sm:$0xff]
    %v6500 = vld [vmem:[%s4 + $0x118] sm:$0xff]
    %v6501 = vld [vmem:[%s4 + $0x120] sm:$0xff]
    %v6502 = vld [vmem:[%s4 + $0x128] sm:$0xff]
    %v6503 = vld [vmem:[%s4 + $0x130] sm:$0xff]
    %v6504 = vld [vmem:[%s4 + $0x138] sm:$0xff]
    %v6505 = vld [vmem:[%s4 + $0x140] sm:$0xff]
    %v6506 = vld [vmem:[%s4 + $0x148] sm:$0xff]
    %v6507 = vld [vmem:[%s4 + $0x150] sm:$0xff]
    %v6508 = vld [vmem:[%s4 + $0x158] sm:$0xff]
    %v6509 = vld [vmem:[%s4 + $0x160] sm:$0xff]
    %v6510 = vld [vmem:[%s4 + $0x168] sm:$0xff]
    %v6511 = vld [vmem:[%s4 + $0x170] sm:$0xff]
    %v6512 = vld [vmem:[%s4 + $0x178] sm:$0xff]
    %v6513 = vld [vmem:[%s4 + $0x180] sm:$0xff]
    %v6514 = vld [vmem:[%s4 + $0x188] sm:$0xff]
    %v6515 = vld [vmem:[%s4 + $0x190] sm:$0xff]
    %v6516 = vld [vmem:[%s4 + $0x198] sm:$0xff]
    %v6517 = vld [vmem:[%s4 + $0x1a0] sm:$0xff]
    %v6518 = vld [vmem:[%s4 + $0x1a8] sm:$0xff]
    %v6519 = vld [vmem:[%s4 + $0x1b0] sm:$0xff]
    %v6520 = vld [vmem:[%s4 + $0x1b8] sm:$0xff]
    %v6521 = vld [vmem:[%s4 + $0x1c0] sm:$0xff]
    %v6522 = vld [vmem:[%s4 + $0x1c8] sm:$0xff]
    %v6523 = vld [vmem:[%s4 + $0x1d0] sm:$0xff]
    %v6524 = vld [vmem:[%s4 + $0x1d8] sm:$0xff]
    %v6525 = vld [vmem:[%s4 + $0x1e0] sm:$0xff]
    %v6526 = vld [vmem:[%s4 + $0x1e8] sm:$0xff]
    %v6527 = vld [vmem:[%s4 + $0x1f0] sm:$0xff]
    %v6528 = vld [vmem:[%s4 + $0x1f8] sm:$0xff]
    %v6529 = vld [vmem:[%s4 + $0x200] sm:$0xff]
    %v6530 = vld [vmem:[%s4 + $0x208] sm:$0xff]
    %v6531 = vld [vmem:[%s4 + $0x210] sm:$0xff]
    %v6532 = vld [vmem:[%s4 + $0x218] sm:$0xff]
    %v6533 = vld [vmem:[%s4 + $0x220] sm:$0xff]
    %v6534 = vld [vmem:[%s4 + $0x228] sm:$0xff]
    %v6535 = vld [vmem:[%s4 + $0x230] sm:$0xff]
    %v6536 = vld [vmem:[%s4 + $0x238] sm:$0xff]
    %v6537 = vld [vmem:[%s4 + $0x240] sm:$0xff]
    %v6538 = vld [vmem:[%s4 + $0x248] sm:$0xff]
    %v6539 = vld [vmem:[%s4 + $0x250] sm:$0xff]
    %v6540 = vld [vmem:[%s4 + $0x258] sm:$0xff]
    %v6541 = vld [vmem:[%s4 + $0x260] sm:$0xff]
    %v6542 = vld [vmem:[%s4 + $0x268] sm:$0xff]
    %v6543 = vld [vmem:[%s4 + $0x270] sm:$0xff]
    %v6544 = vld [vmem:[%s4 + $0x278] sm:$0xff]
    %v6545 = vld [vmem:[%s4 + $0x280] sm:$0xff]
    %v6546 = vld [vmem:[%s4 + $0x288] sm:$0xff]
    %v6547 = vld [vmem:[%s4 + $0x290] sm:$0xff]
    %v6548 = vld [vmem:[%s4 + $0x298] sm:$0xff]
    %v6549 = vld [vmem:[%s4 + $0x2a0] sm:$0xff]
    %v6550 = vld [vmem:[%s4 + $0x2a8] sm:$0xff]
    %v6551 = vld [vmem:[%s4 + $0x2b0] sm:$0xff]
    %v6552 = vld [vmem:[%s4 + $0x2b8] sm:$0xff]
    %v6553 = vld [vmem:[%s4 + $0x2c0] sm:$0xff]
    %v6554 = vld [vmem:[%s4 + $0x2c8] sm:$0xff]
    %v6555 = vld [vmem:[%s4 + $0x2d0] sm:$0xff]
    %v6556 = vld [vmem:[%s4 + $0x2d8] sm:$0xff]
    %v6557 = vld [vmem:[%s4 + $0x2e0] sm:$0xff]
    %v6558 = vld [vmem:[%s4 + $0x2e8] sm:$0xff]
    %v6559 = vld [vmem:[%s4 + $0x2f0] sm:$0xff]
    %v6560 = vld [vmem:[%s4 + $0x2f8] sm:$0xff]
    %v6561 = vld [vmem:[%s4 + $0x300] sm:$0xff]
    %v6562 = vld [vmem:[%s4 + $0x308] sm:$0xff]
    %v6563 = vld [vmem:[%s4 + $0x310] sm:$0xff]
    %v6564 = vld [vmem:[%s4 + $0x318] sm:$0xff]
    %v6565 = vld [vmem:[%s4 + $0x320] sm:$0xff]
    %v6566 = vld [vmem:[%s4 + $0x328] sm:$0xff]
    %v6567 = vld [vmem:[%s4 + $0x330] sm:$0xff]
    %v6568 = vld [vmem:[%s4 + $0x338] sm:$0xff]
    %v6569 = vld [vmem:[%s4 + $0x340] sm:$0xff]
    %v6570 = vld [vmem:[%s4 + $0x348] sm:$0xff]
    %v6571 = vld [vmem:[%s4 + $0x350] sm:$0xff]
    %v6572 = vld [vmem:[%s4 + $0x358] sm:$0xff]
    %v6573 = vld [vmem:[%s4 + $0x360] sm:$0xff]
    %v6574 = vld [vmem:[%s4 + $0x368] sm:$0xff]
    %v6575 = vld [vmem:[%s4 + $0x370] sm:$0xff]
    %v6576 = vld [vmem:[%s4 + $0x378] sm:$0xff]
    %v6577 = vld [vmem:[%s4 + $0x380] sm:$0xff]
    %v6578 = vld [vmem:[%s4 + $0x388] sm:$0xff]
    %v6579 = vld [vmem:[%s4 + $0x390] sm:$0xff]
    %v6580 = vld [vmem:[%s4 + $0x398] sm:$0xff]
    %v6581 = vld [vmem:[%s4 + $0x3a0] sm:$0xff]
    %v6582 = vld [vmem:[%s4 + $0x3a8] sm:$0xff]
    %v6583 = vld [vmem:[%s4 + $0x3b0] sm:$0xff]
    %v6584 = vld [vmem:[%s4 + $0x3b8] sm:$0xff]
    %v6585 = vld [vmem:[%s4 + $0x3c0] sm:$0xff]
    %v6586 = vld [vmem:[%s4 + $0x3c8] sm:$0xff]
    %v6587 = vld [vmem:[%s4 + $0x3d0] sm:$0xff]
    %v6588 = vld [vmem:[%s4 + $0x3d8] sm:$0xff]
    %v6589 = vld [vmem:[%s4 + $0x3e0] sm:$0xff]
    %v6590 = vld [vmem:[%s4 + $0x3e8] sm:$0xff]
    %v6591 = vld [vmem:[%s4 + $0x3f0] sm:$0xff]
    %v6592 = vld [vmem:[%s4 + $0x3f8] sm:$0xff]
    %v6593 = vld [vmem:[%s4 + $0x400] sm:$0xff]
    %v6594 = vld [vmem:[%s4 + $0x408] sm:$0xff]
    %v6595 = vld [vmem:[%s4 + $0x410] sm:$0xff]
    %v6596 = vld [vmem:[%s4 + $0x418] sm:$0xff]
    %v6597 = vld [vmem:[%s4 + $0x420] sm:$0xff]
    %v6598 = vld [vmem:[%s4 + $0x428] sm:$0xff]
    %v6599 = vld [vmem:[%s4 + $0x430] sm:$0xff]
    %v6600 = vld [vmem:[%s4 + $0x438] sm:$0xff]
    %v6601 = vld [vmem:[%s4 + $0x440] sm:$0xff]
    %v6602 = vld [vmem:[%s4 + $0x448] sm:$0xff]
    %v6603 = vld [vmem:[%s4 + $0x450] sm:$0xff]
    %v6604 = vld [vmem:[%s4 + $0x458] sm:$0xff]
    %v6605 = vld [vmem:[%s4 + $0x460] sm:$0xff]
    %v6606 = vld [vmem:[%s4 + $0x468] sm:$0xff]
    %v6607 = vld [vmem:[%s4 + $0x470] sm:$0xff]
    %v6608 = vld [vmem:[%s4 + $0x478] sm:$0xff]
    %v6609 = vld [vmem:[%s4 + $0x480] sm:$0xff]
    %v6610 = vld [vmem:[%s4 + $0x488] sm:$0xff]
    %v6611 = vld [vmem:[%s4 + $0x490] sm:$0xff]
    %v6612 = vld [vmem:[%s4 + $0x498] sm:$0xff]
    %v6613 = vld [vmem:[%s4 + $0x4a0] sm:$0xff]
    %v6614 = vld [vmem:[%s4 + $0x4a8] sm:$0xff]
    %v6615 = vld [vmem:[%s4 + $0x4b0] sm:$0xff]
    %v6616 = vld [vmem:[%s4 + $0x4b8] sm:$0xff]
    %v6617 = vld [vmem:[%s4 + $0x4c0] sm:$0xff]
    %v6618 = vld [vmem:[%s4 + $0x4c8] sm:$0xff]
    %v6619 = vld [vmem:[%s4 + $0x4d0] sm:$0xff]
    %v6620 = vld [vmem:[%s4 + $0x4d8] sm:$0xff]
    %v6621 = vld [vmem:[%s4 + $0x4e0] sm:$0xff]
    %v6622 = vld [vmem:[%s4 + $0x4e8] sm:$0xff]
    %v6623 = vld [vmem:[%s4 + $0x4f0] sm:$0xff]
    %v6624 = vld [vmem:[%s4 + $0x4f8] sm:$0xff]
    %v6625 = vld [vmem:[%s4 + $0x500] sm:$0xff]
    %v6626 = vld [vmem:[%s4 + $0x508] sm:$0xff]
    %v6627 = vld [vmem:[%s4 + $0x510] sm:$0xff]
    %v6628 = vld [vmem:[%s4 + $0x518] sm:$0xff]
    %v6629 = vld [vmem:[%s4 + $0x520] sm:$0xff]
    %v6630 = vld [vmem:[%s4 + $0x528] sm:$0xff]
    %v6631 = vld [vmem:[%s4 + $0x530] sm:$0xff]
    %v6632 = vld [vmem:[%s4 + $0x538] sm:$0xff]
    %v6633 = vld [vmem:[%s4 + $0x540] sm:$0xff]
    %v6634 = vld [vmem:[%s4 + $0x548] sm:$0xff]
    %v6635 = vld [vmem:[%s4 + $0x550] sm:$0xff]
    %v6636 = vld [vmem:[%s4 + $0x558] sm:$0xff]
    %v6637 = vld [vmem:[%s4 + $0x560] sm:$0xff]
    %v6638 = vld [vmem:[%s4 + $0x568] sm:$0xff]
    %v6639 = vld [vmem:[%s4 + $0x570] sm:$0xff]
    %v6640 = vld [vmem:[%s4 + $0x578] sm:$0xff]
    %v6641 = vld [vmem:[%s4 + $0x580] sm:$0xff]
    %v6642 = vld [vmem:[%s4 + $0x588] sm:$0xff]
    %v6643 = vld [vmem:[%s4 + $0x590] sm:$0xff]
    %v6644 = vld [vmem:[%s4 + $0x598] sm:$0xff]
    %v6645 = vld [vmem:[%s4 + $0x5a0] sm:$0xff]
    %v6646 = vld [vmem:[%s4 + $0x5a8] sm:$0xff]
    %v6647 = vld [vmem:[%s4 + $0x5b0] sm:$0xff]
    %v6648 = vld [vmem:[%s4 + $0x5b8] sm:$0xff]
    %v6649 = vld [vmem:[%s4 + $0x5c0] sm:$0xff]
    %v6650 = vld [vmem:[%s4 + $0x5c8] sm:$0xff]
    %v6651 = vld [vmem:[%s4 + $0x5d0] sm:$0xff]
    %v6652 = vld [vmem:[%s4 + $0x5d8] sm:$0xff]
    %v6653 = vld [vmem:[%s4 + $0x5e0] sm:$0xff]
    %v6654 = vld [vmem:[%s4 + $0x5e8] sm:$0xff]
    %v6655 = vld [vmem:[%s4 + $0x5f0] sm:$0xff]
    %v6656 = vld [vmem:[%s4 + $0x5f8] sm:$0xff]
    %v6657 = vld [vmem:[%s4 + $0x600] sm:$0xff]
    %v6658 = vld [vmem:[%s4 + $0x608] sm:$0xff]
    %v6659 = vld [vmem:[%s4 + $0x610] sm:$0xff]
    %v6660 = vld [vmem:[%s4 + $0x618] sm:$0xff]
    %v6661 = vld [vmem:[%s4 + $0x620] sm:$0xff]
    %v6662 = vld [vmem:[%s4 + $0x628] sm:$0xff]
    %v6663 = vld [vmem:[%s4 + $0x630] sm:$0xff]
    %v6664 = vld [vmem:[%s4 + $0x638] sm:$0xff]
    %v6665 = vld [vmem:[%s4 + $0x640] sm:$0xff]
    %v6666 = vld [vmem:[%s4 + $0x648] sm:$0xff]
    %v6667 = vld [vmem:[%s4 + $0x650] sm:$0xff]
    %v6668 = vld [vmem:[%s4 + $0x658] sm:$0xff]
    %v6669 = vld [vmem:[%s4 + $0x660] sm:$0xff]
    %v6670 = vld [vmem:[%s4 + $0x668] sm:$0xff]
    %v6671 = vld [vmem:[%s4 + $0x670] sm:$0xff]
    %v6672 = vld [vmem:[%s4 + $0x678] sm:$0xff]
    %v6673 = vld [vmem:[%s4 + $0x680] sm:$0xff]
    %v6674 = vld [vmem:[%s4 + $0x688] sm:$0xff]
    %v6675 = vld [vmem:[%s4 + $0x690] sm:$0xff]
    %v6676 = vld [vmem:[%s4 + $0x698] sm:$0xff]
    %v6677 = vld [vmem:[%s4 + $0x6a0] sm:$0xff]
    %v6678 = vld [vmem:[%s4 + $0x6a8] sm:$0xff]
    %v6679 = vld [vmem:[%s4 + $0x6b0] sm:$0xff]
    %v6680 = vld [vmem:[%s4 + $0x6b8] sm:$0xff]
    %v6681 = vld [vmem:[%s4 + $0x6c0] sm:$0xff]
    %v6682 = vld [vmem:[%s4 + $0x6c8] sm:$0xff]
    %v6683 = vld [vmem:[%s4 + $0x6d0] sm:$0xff]
    %v6684 = vld [vmem:[%s4 + $0x6d8] sm:$0xff]
    %v6685 = vld [vmem:[%s4 + $0x6e0] sm:$0xff]
    %v6686 = vld [vmem:[%s4 + $0x6e8] sm:$0xff]
    %v6687 = vld [vmem:[%s4 + $0x6f0] sm:$0xff]
    %v6688 = vld [vmem:[%s4 + $0x6f8] sm:$0xff]
    %v6689 = vld [vmem:[%s4 + $0x700] sm:$0xff]
    %v6690 = vld [vmem:[%s4 + $0x708] sm:$0xff]
    %v6691 = vld [vmem:[%s4 + $0x710] sm:$0xff]
    %v6692 = vld [vmem:[%s4 + $0x718] sm:$0xff]
    %v6693 = vld [vmem:[%s4 + $0x720] sm:$0xff]
    %v6694 = vld [vmem:[%s4 + $0x728] sm:$0xff]
    %v6695 = vld [vmem:[%s4 + $0x730] sm:$0xff]
    %v6696 = vld [vmem:[%s4 + $0x738] sm:$0xff]
    %v6697 = vld [vmem:[%s4 + $0x740] sm:$0xff]
    %v6698 = vld [vmem:[%s4 + $0x748] sm:$0xff]
    %v6699 = vld [vmem:[%s4 + $0x750] sm:$0xff]
    %v6700 = vld [vmem:[%s4 + $0x758] sm:$0xff]
    %v6701 = vld [vmem:[%s4 + $0x760] sm:$0xff]
    %v6702 = vld [vmem:[%s4 + $0x768] sm:$0xff]
    %v6703 = vld [vmem:[%s4 + $0x770] sm:$0xff]
    %v6704 = vld [vmem:[%s4 + $0x778] sm:$0xff]
    %v6705 = vld [vmem:[%s4 + $0x780] sm:$0xff]
    %v6706 = vld [vmem:[%s4 + $0x788] sm:$0xff]
    %v6707 = vld [vmem:[%s4 + $0x790] sm:$0xff]
    %v6708 = vld [vmem:[%s4 + $0x798] sm:$0xff]
    %v6709 = vld [vmem:[%s4 + $0x7a0] sm:$0xff]
    %v6710 = vld [vmem:[%s4 + $0x7a8] sm:$0xff]
    %v6711 = vld [vmem:[%s4 + $0x7b0] sm:$0xff]
    %v6712 = vld [vmem:[%s4 + $0x7b8] sm:$0xff]
    %v6713 = vld [vmem:[%s4 + $0x7c0] sm:$0xff]
    %v6714 = vld [vmem:[%s4 + $0x7c8] sm:$0xff]
    %v6715 = vld [vmem:[%s4 + $0x7d0] sm:$0xff]
    %v6716 = vld [vmem:[%s4 + $0x7d8] sm:$0xff]
    %v6717 = vld [vmem:[%s4 + $0x7e0] sm:$0xff]
    %v6718 = vld [vmem:[%s4 + $0x7e8] sm:$0xff]
    %v6719 = vld [vmem:[%s4 + $0x7f0] sm:$0xff]
    %v6720 = vld [vmem:[%s4 + $0x7f8] sm:$0xff]
    %v6721 = vld [vmem:[%s4 + $0x800] sm:$0xff]
    %v6722 = vld [vmem:[%s4 + $0x808] sm:$0xff]
    %v6723 = vld [vmem:[%s4 + $0x810] sm:$0xff]
    %v6724 = vld [vmem:[%s4 + $0x818] sm:$0xff]
    %v6725 = vld [vmem:[%s4 + $0x820] sm:$0xff]
    %v6726 = vld [vmem:[%s4 + $0x828] sm:$0xff]
    %v6727 = vld [vmem:[%s4 + $0x830] sm:$0xff]
    %v6728 = vld [vmem:[%s4 + $0x838] sm:$0xff]
    %v6729 = vld [vmem:[%s4 + $0x840] sm:$0xff]
    %v6730 = vld [vmem:[%s4 + $0x848] sm:$0xff]
    %v6731 = vld [vmem:[%s4 + $0x850] sm:$0xff]
    %v6732 = vld [vmem:[%s4 + $0x858] sm:$0xff]
    %v6733 = vld [vmem:[%s4 + $0x860] sm:$0xff]
    %v6734 = vld [vmem:[%s4 + $0x868] sm:$0xff]
    %v6735 = vld [vmem:[%s4 + $0x870] sm:$0xff]
    %v6736 = vld [vmem:[%s4 + $0x878] sm:$0xff]
    %v6737 = vld [vmem:[%s4 + $0x880] sm:$0xff]
    %v6738 = vld [vmem:[%s4 + $0x888] sm:$0xff]
    %v6739 = vld [vmem:[%s4 + $0x890] sm:$0xff]
    %v6740 = vld [vmem:[%s4 + $0x898] sm:$0xff]
    %v6741 = vld [vmem:[%s4 + $0x8a0] sm:$0xff]
    %v6742 = vld [vmem:[%s4 + $0x8a8] sm:$0xff]
    %v6743 = vld [vmem:[%s4 + $0x8b0] sm:$0xff]
    %v6744 = vld [vmem:[%s4 + $0x8b8] sm:$0xff]
    %v6745 = vld [vmem:[%s4 + $0x8c0] sm:$0xff]
    %v6746 = vld [vmem:[%s4 + $0x8c8] sm:$0xff]
    %v6747 = vld [vmem:[%s4 + $0x8d0] sm:$0xff]
    %v6748 = vld [vmem:[%s4 + $0x8d8] sm:$0xff]
    %v6749 = vld [vmem:[%s4 + $0x8e0] sm:$0xff]
    %v6750 = vld [vmem:[%s4 + $0x8e8] sm:$0xff]
    %v6751 = vld [vmem:[%s4 + $0x8f0] sm:$0xff]
    %v6752 = vld [vmem:[%s4 + $0x8f8] sm:$0xff]
    %v6753 = vld [vmem:[%s4 + $0x900] sm:$0xff]
    %v6754 = vld [vmem:[%s4 + $0x908] sm:$0xff]
    %v6755 = vld [vmem:[%s4 + $0x910] sm:$0xff]
    %v6756 = vld [vmem:[%s4 + $0x918] sm:$0xff]
    %v6757 = vld [vmem:[%s4 + $0x920] sm:$0xff]
    %v6758 = vld [vmem:[%s4 + $0x928] sm:$0xff]
    %v6759 = vld [vmem:[%s4 + $0x930] sm:$0xff]
    %v6760 = vld [vmem:[%s4 + $0x938] sm:$0xff]
    %v6761 = vld [vmem:[%s4 + $0x940] sm:$0xff]
    %v6762 = vld [vmem:[%s4 + $0x948] sm:$0xff]
    %v6763 = vld [vmem:[%s4 + $0x950] sm:$0xff]
    %v6764 = vld [vmem:[%s4 + $0x958] sm:$0xff]
    %v6765 = vld [vmem:[%s4 + $0x960] sm:$0xff]
    %v6766 = vld [vmem:[%s4 + $0x968] sm:$0xff]
    %v6767 = vld [vmem:[%s4 + $0x970] sm:$0xff]
    %v6768 = vld [vmem:[%s4 + $0x978] sm:$0xff]
    %v6769 = vld [vmem:[%s4 + $0x980] sm:$0xff]
    %v6770 = vld [vmem:[%s4 + $0x988] sm:$0xff]
    %v6771 = vld [vmem:[%s4 + $0x990] sm:$0xff]
    %v6772 = vld [vmem:[%s4 + $0x998] sm:$0xff]
    %v6773 = vld [vmem:[%s4 + $0x9a0] sm:$0xff]
    %v6774 = vld [vmem:[%s4 + $0x9a8] sm:$0xff]
    %v6775 = vld [vmem:[%s4 + $0x9b0] sm:$0xff]
    %v6776 = vld [vmem:[%s4 + $0x9b8] sm:$0xff]
    %v6777 = vld [vmem:[%s4 + $0x9c0] sm:$0xff]
    %v6778 = vld [vmem:[%s4 + $0x9c8] sm:$0xff]
    %v6779 = vld [vmem:[%s4 + $0x9d0] sm:$0xff]
    %v6780 = vld [vmem:[%s4 + $0x9d8] sm:$0xff]
    %v6781 = vld [vmem:[%s4 + $0x9e0] sm:$0xff]
    %v6782 = vld [vmem:[%s4 + $0x9e8] sm:$0xff]
    %v6783 = vld [vmem:[%s4 + $0x9f0] sm:$0xff]
    %v6784 = vld [vmem:[%s4 + $0x9f8] sm:$0xff]
    %v6785 = vld [vmem:[%s4 + $0xa00] sm:$0xff]
    %v6786 = vld [vmem:[%s4 + $0xa08] sm:$0xff]
    %v6787 = vld [vmem:[%s4 + $0xa10] sm:$0xff]
    %v6788 = vld [vmem:[%s4 + $0xa18] sm:$0xff]
    %v6789 = vld [vmem:[%s5] sm:$0x1]
    %v6791 = vlaneseq
    %v6792 = vshrl.u32 %v6791, 7
    %v6793 = vsub.s32 0, %v6792
    %v6794 = vrot.slane %v6789, %v6793
    %v6802 = vcombine.high %v6459, %v6459
    %v6804 = vunpack.c.l.s4 1983009808
    %v6805 = vunpack.c.0.s8 %v6804
    %v6806 = vlaneseq
    %v6807 = vshrl.u32 %v6806, 7
    %v6808 = vsub.s32 %v6805, %v6807
    %v6809 = vrot.slane %v6459, %v6808
    %v6811 = vunpack.c.l.s4 1983009808
    %v6812 = vunpack.c.0.s8 %v6811
    %v6813 = vlaneseq
    %v6814 = vshrl.u32 %v6813, 7
    %v6815 = vsub.s32 %v6812, %v6814
    %v6816 = vrot.slane %v6802, %v6815
    %v6817 = vcombine.high %v6809, %v6809
    %v6818 = vcombine.high %v6816, %v6816
    %v6819 = vcombine.high %v6460, %v6460
    %v6821 = vunpack.c.l.s4 1983009808
    %v6822 = vunpack.c.0.s8 %v6821
    %v6823 = vlaneseq
    %v6824 = vshrl.u32 %v6823, 7
    %v6825 = vsub.s32 %v6822, %v6824
    %v6826 = vrot.slane %v6460, %v6825
    %v6828 = vunpack.c.l.s4 1983009808
    %v6829 = vunpack.c.0.s8 %v6828
    %v6830 = vlaneseq
    %v6831 = vshrl.u32 %v6830, 7
    %v6832 = vsub.s32 %v6829, %v6831
    %v6833 = vrot.slane %v6819, %v6832
    %v6834 = vcombine.high %v6826, %v6826
    %v6835 = vcombine.high %v6833, %v6833
    %v6836 = vcombine.high %v6461, %v6461
    %v6838 = vunpack.c.l.s4 1983009808
    %v6839 = vunpack.c.0.s8 %v6838
    %v6840 = vlaneseq
    %v6841 = vshrl.u32 %v6840, 7
    %v6842 = vsub.s32 %v6839, %v6841
    %v6843 = vrot.slane %v6461, %v6842
    %v6845 = vunpack.c.l.s4 1983009808
    %v6846 = vunpack.c.0.s8 %v6845
    %v6847 = vlaneseq
    %v6848 = vshrl.u32 %v6847, 7
    %v6849 = vsub.s32 %v6846, %v6848
    %v6850 = vrot.slane %v6836, %v6849
    %v6851 = vcombine.high %v6843, %v6843
    %v6852 = vcombine.high %v6850, %v6850
    %v6853 = vcombine.high %v6462, %v6462
    %v6855 = vunpack.c.l.s4 1983009808
    %v6856 = vunpack.c.0.s8 %v6855
    %v6857 = vlaneseq
    %v6858 = vshrl.u32 %v6857, 7
    %v6859 = vsub.s32 %v6856, %v6858
    %v6860 = vrot.slane %v6462, %v6859
    %v6862 = vunpack.c.l.s4 1983009808
    %v6863 = vunpack.c.0.s8 %v6862
    %v6864 = vlaneseq
    %v6865 = vshrl.u32 %v6864, 7
    %v6866 = vsub.s32 %v6863, %v6865
    %v6867 = vrot.slane %v6853, %v6866
    %v6868 = vcombine.high %v6860, %v6860
    %v6869 = vcombine.high %v6867, %v6867
    %v6870 = vcombine.high %v6463, %v6463
    %v6872 = vunpack.c.l.s4 1983009808
    %v6873 = vunpack.c.0.s8 %v6872
    %v6874 = vlaneseq
    %v6875 = vshrl.u32 %v6874, 7
    %v6876 = vsub.s32 %v6873, %v6875
    %v6877 = vrot.slane %v6463, %v6876
    %v6879 = vunpack.c.l.s4 1983009808
    %v6880 = vunpack.c.0.s8 %v6879
    %v6881 = vlaneseq
    %v6882 = vshrl.u32 %v6881, 7
    %v6883 = vsub.s32 %v6880, %v6882
    %v6884 = vrot.slane %v6870, %v6883
    %v6885 = vcombine.high %v6877, %v6877
    %v6886 = vcombine.high %v6884, %v6884
    %v6888 = vunpack.c.l.s4 1983009808
    %v6889 = vunpack.c.0.s8 %v6888
    %v6890 = vlaneseq
    %v6891 = vshrl.u32 %v6890, 7
    %v6892 = vsub.s32 %v6889, %v6891
    %v6893 = vrot.slane %v6464, %v6892
    %v6914 = vsel %vm5611, %v6893, 0
    %6916 = vmatprep.subr.mxu0 0.0
    %6917 = vmatpush1.msra.mxu0 %v6480
    %6918 = vmatprep.subr.mxu0 0.0
    %6919 = vmatpush1.msra.mxu0 %v6479
    %6920 = vmatprep.subr.mxu0 0.0
    %6921 = vmatpush1.msra.mxu0 %v6478
    %6922 = vmatprep.subr.mxu0 0.0
    %6923 = vmatpush1.msra.mxu0 %v6477
    %6924 = vmatprep.subr.mxu0 0.0
    %6925 = vmatpush1.msra.mxu0 %v6476
    %6926 = vmatprep.subr.mxu0 0.0
    %6927 = vmatpush1.msra.mxu0 %v6475
    %6928 = vmatprep.subr.mxu0 0.0
    %6929 = vmatpush1.msra.mxu0 %v6474
    %6930 = vmatprep.subr.mxu0 0.0
    %6931 = vmatpush1.msra.mxu0 %v6473
    %6932 = vmatprep.subr.mxu0 0.0
    %6933 = vmatpush1.msra.mxu0 %v6472
    %6934 = vmatprep.subr.mxu0 0.0
    %6935 = vmatpush1.msra.mxu0 %v6471
    %6936 = vmatprep.subr.mxu0 0.0
    %6937 = vmatpush1.msra.mxu0 %v6470
    %6938 = vmatprep.subr.mxu0 0.0
    %6939 = vmatpush1.msra.mxu0 %v6469
    %6940 = vmatprep.subr.mxu0 0.0
    %6941 = vmatpush1.msra.mxu0 %v6468
    %6942 = vmatprep.subr.mxu0 0.0
    %6943 = vmatpush1.msra.mxu0 %v6467
    %6944 = vmatprep.subr.mxu0 0.0
    %6945 = vmatpush1.msra.mxu0 %v6466
    %6946 = vmatprep.subr.mxu0 0.0
    %6947 = vmatpush1.msra.mxu0 %v6465
    %6948 = vmatprep.subr.mxu0 0.0
    %6949 = vmatpush2.msra.mxu0 %v6496
    %6950 = vmatprep.subr.mxu0 0.0
    %6951 = vmatpush2.msra.mxu0 %v6495
    %6952 = vmatprep.subr.mxu0 0.0
    %6953 = vmatpush2.msra.mxu0 %v6494
    %6954 = vmatprep.subr.mxu0 0.0
    %6955 = vmatpush2.msra.mxu0 %v6493
    %6956 = vmatprep.subr.mxu0 0.0
    %6957 = vmatpush2.msra.mxu0 %v6492
    %6958 = vmatprep.subr.mxu0 0.0
    %6959 = vmatpush2.msra.mxu0 %v6491
    %6960 = vmatprep.subr.mxu0 0.0
    %6961 = vmatpush2.msra.mxu0 %v6490
    %6962 = vmatprep.subr.mxu0 0.0
    %6963 = vmatpush2.msra.mxu0 %v6489
    %6964 = vmatprep.subr.mxu0 0.0
    %6965 = vmatpush2.msra.mxu0 %v6488
    %6966 = vmatprep.subr.mxu0 0.0
    %6967 = vmatpush2.msra.mxu0 %v6487
    %6968 = vmatprep.subr.mxu0 0.0
    %6969 = vmatpush2.msra.mxu0 %v6486
    %6970 = vmatprep.subr.mxu0 0.0
    %6971 = vmatpush2.msra.mxu0 %v6485
    %6972 = vmatprep.subr.mxu0 0.0
    %6973 = vmatpush2.msra.mxu0 %v6484
    %6974 = vmatprep.subr.mxu0 0.0
    %6975 = vmatpush2.msra.mxu0 %v6483
    %6976 = vmatprep.subr.mxu0 0.0
    %6977 = vmatpush2.msra.mxu0 %v6482
    %6978 = vmatprep.subr.mxu0 0.0
    %6979 = vmatpush2.msra.mxu0 %v6481
    %6980 = vmatprep.mubr.f32.mxu0 %v6817
    %6981 = vmatmul.mubr.f32.gmra.mxu0 %v6809
    %v6982 = vpop.f32.mrf.mxu0
    %v6983 = vadd.f32 %v6794, %v6982
    %v6984 = vpop.f32.mrf.mxu0
    %6985 = vdwg.mxu0
    %6986 = vmatprep.subr.mxu0 0.0
    %6987 = vmatpush1.msra.mxu0 %v6512
    %6988 = vmatprep.subr.mxu0 0.0
    %6989 = vmatpush1.msra.mxu0 %v6511
    %6990 = vmatprep.subr.mxu0 0.0
    %6991 = vmatpush1.msra.mxu0 %v6510
    %6992 = vmatprep.subr.mxu0 0.0
    %6993 = vmatpush1.msra.mxu0 %v6509
    %6994 = vmatprep.subr.mxu0 0.0
    %6995 = vmatpush1.msra.mxu0 %v6508
    %6996 = vmatprep.subr.mxu0 0.0
    %6997 = vmatpush1.msra.mxu0 %v6507
    %6998 = vmatprep.subr.mxu0 0.0
    %6999 = vmatpush1.msra.mxu0 %v6506
    %7000 = vmatprep.subr.mxu0 0.0
    %7001 = vmatpush1.msra.mxu0 %v6505
    %7002 = vmatprep.subr.mxu0 0.0
    %7003 = vmatpush1.msra.mxu0 %v6504
    %7004 = vmatprep.subr.mxu0 0.0
    %7005 = vmatpush1.msra.mxu0 %v6503
    %7006 = vmatprep.subr.mxu0 0.0
    %7007 = vmatpush1.msra.mxu0 %v6502
    %7008 = vmatprep.subr.mxu0 0.0
    %7009 = vmatpush1.msra.mxu0 %v6501
    %7010 = vmatprep.subr.mxu0 0.0
    %7011 = vmatpush1.msra.mxu0 %v6500
    %7012 = vmatprep.subr.mxu0 0.0
    %7013 = vmatpush1.msra.mxu0 %v6499
    %7014 = vmatprep.subr.mxu0 0.0
    %7015 = vmatpush1.msra.mxu0 %v6498
    %7016 = vmatprep.subr.mxu0 0.0
    %7017 = vmatpush1.msra.mxu0 %v6497
    %7018 = vmatprep.subr.mxu0 0.0
    %7019 = vmatpush2.msra.mxu0 %v6528
    %7020 = vmatprep.subr.mxu0 0.0
    %7021 = vmatpush2.msra.mxu0 %v6527
    %7022 = vmatprep.subr.mxu0 0.0
    %7023 = vmatpush2.msra.mxu0 %v6526
    %7024 = vmatprep.subr.mxu0 0.0
    %7025 = vmatpush2.msra.mxu0 %v6525
    %7026 = vmatprep.subr.mxu0 0.0
    %7027 = vmatpush2.msra.mxu0 %v6524
    %7028 = vmatprep.subr.mxu0 0.0
    %7029 = vmatpush2.msra.mxu0 %v6523
    %7030 = vmatprep.subr.mxu0 0.0
    %7031 = vmatpush2.msra.mxu0 %v6522
    %7032 = vmatprep.subr.mxu0 0.0
    %7033 = vmatpush2.msra.mxu0 %v6521
    %7034 = vmatprep.subr.mxu0 0.0
    %7035 = vmatpush2.msra.mxu0 %v6520
    %7036 = vmatprep.subr.mxu0 0.0
    %7037 = vmatpush2.msra.mxu0 %v6519
    %7038 = vmatprep.subr.mxu0 0.0
    %7039 = vmatpush2.msra.mxu0 %v6518
    %7040 = vmatprep.subr.mxu0 0.0
    %7041 = vmatpush2.msra.mxu0 %v6517
    %7042 = vmatprep.subr.mxu0 0.0
    %7043 = vmatpush2.msra.mxu0 %v6516
    %7044 = vmatprep.subr.mxu0 0.0
    %7045 = vmatpush2.msra.mxu0 %v6515
    %7046 = vmatprep.subr.mxu0 0.0
    %7047 = vmatpush2.msra.mxu0 %v6514
    %7048 = vmatprep.subr.mxu0 0.0
    %7049 = vmatpush2.msra.mxu0 %v6513
    %7050 = vmatprep.mubr.f32.mxu0 %v6818
    %7051 = vmatmul.mubr.f32.gmra.mxu0 %v6816
    %v7052 = vpop.f32.mrf.mxu0
    %v7053 = vadd.f32 %v6983, %v7052
    %v7054 = vpop.f32.mrf.mxu0
    %7055 = vdwg.mxu0
    %7056 = vmatprep.subr.mxu0 0.0
    %7057 = vmatpush1.msra.mxu0 %v6544
    %7058 = vmatprep.subr.mxu0 0.0
    %7059 = vmatpush1.msra.mxu0 %v6543
    %7060 = vmatprep.subr.mxu0 0.0
    %7061 = vmatpush1.msra.mxu0 %v6542
    %7062 = vmatprep.subr.mxu0 0.0
    %7063 = vmatpush1.msra.mxu0 %v6541
    %7064 = vmatprep.subr.mxu0 0.0
    %7065 = vmatpush1.msra.mxu0 %v6540
    %7066 = vmatprep.subr.mxu0 0.0
    %7067 = vmatpush1.msra.mxu0 %v6539
    %7068 = vmatprep.subr.mxu0 0.0
    %7069 = vmatpush1.msra.mxu0 %v6538
    %7070 = vmatprep.subr.mxu0 0.0
    %7071 = vmatpush1.msra.mxu0 %v6537
    %7072 = vmatprep.subr.mxu0 0.0
    %7073 = vmatpush1.msra.mxu0 %v6536
    %7074 = vmatprep.subr.mxu0 0.0
    %7075 = vmatpush1.msra.mxu0 %v6535
    %7076 = vmatprep.subr.mxu0 0.0
    %7077 = vmatpush1.msra.mxu0 %v6534
    %7078 = vmatprep.subr.mxu0 0.0
    %7079 = vmatpush1.msra.mxu0 %v6533
    %7080 = vmatprep.subr.mxu0 0.0
    %7081 = vmatpush1.msra.mxu0 %v6532
    %7082 = vmatprep.subr.mxu0 0.0
    %7083 = vmatpush1.msra.mxu0 %v6531
    %7084 = vmatprep.subr.mxu0 0.0
    %7085 = vmatpush1.msra.mxu0 %v6530
    %7086 = vmatprep.subr.mxu0 0.0
    %7087 = vmatpush1.msra.mxu0 %v6529
    %7088 = vmatprep.subr.mxu0 0.0
    %7089 = vmatpush2.msra.mxu0 %v6560
    %7090 = vmatprep.subr.mxu0 0.0
    %7091 = vmatpush2.msra.mxu0 %v6559
    %7092 = vmatprep.subr.mxu0 0.0
    %7093 = vmatpush2.msra.mxu0 %v6558
    %7094 = vmatprep.subr.mxu0 0.0
    %7095 = vmatpush2.msra.mxu0 %v6557
    %7096 = vmatprep.subr.mxu0 0.0
    %7097 = vmatpush2.msra.mxu0 %v6556
    %7098 = vmatprep.subr.mxu0 0.0
    %7099 = vmatpush2.msra.mxu0 %v6555
    %7100 = vmatprep.subr.mxu0 0.0
    %7101 = vmatpush2.msra.mxu0 %v6554
    %7102 = vmatprep.subr.mxu0 0.0
    %7103 = vmatpush2.msra.mxu0 %v6553
    %7104 = vmatprep.subr.mxu0 0.0
    %7105 = vmatpush2.msra.mxu0 %v6552
    %7106 = vmatprep.subr.mxu0 0.0
    %7107 = vmatpush2.msra.mxu0 %v6551
    %7108 = vmatprep.subr.mxu0 0.0
    %7109 = vmatpush2.msra.mxu0 %v6550
    %7110 = vmatprep.subr.mxu0 0.0
    %7111 = vmatpush2.msra.mxu0 %v6549
    %7112 = vmatprep.subr.mxu0 0.0
    %7113 = vmatpush2.msra.mxu0 %v6548
    %7114 = vmatprep.subr.mxu0 0.0
    %7115 = vmatpush2.msra.mxu0 %v6547
    %7116 = vmatprep.subr.mxu0 0.0
    %7117 = vmatpush2.msra.mxu0 %v6546
    %7118 = vmatprep.subr.mxu0 0.0
    %7119 = vmatpush2.msra.mxu0 %v6545
    %7120 = vmatprep.mubr.f32.mxu0 %v6834
    %7121 = vmatmul.mubr.f32.gmra.mxu0 %v6826
    %v7122 = vpop.f32.mrf.mxu0
    %v7123 = vadd.f32 %v7053, %v7122
    %v7124 = vpop.f32.mrf.mxu0
    %7125 = vdwg.mxu0
    %7126 = vmatprep.subr.mxu0 0.0
    %7127 = vmatpush1.msra.mxu0 %v6576
    %7128 = vmatprep.subr.mxu0 0.0
    %7129 = vmatpush1.msra.mxu0 %v6575
    %7130 = vmatprep.subr.mxu0 0.0
    %7131 = vmatpush1.msra.mxu0 %v6574
    %7132 = vmatprep.subr.mxu0 0.0
    %7133 = vmatpush1.msra.mxu0 %v6573
    %7134 = vmatprep.subr.mxu0 0.0
    %7135 = vmatpush1.msra.mxu0 %v6572
    %7136 = vmatprep.subr.mxu0 0.0
    %7137 = vmatpush1.msra.mxu0 %v6571
    %7138 = vmatprep.subr.mxu0 0.0
    %7139 = vmatpush1.msra.mxu0 %v6570
    %7140 = vmatprep.subr.mxu0 0.0
    %7141 = vmatpush1.msra.mxu0 %v6569
    %7142 = vmatprep.subr.mxu0 0.0
    %7143 = vmatpush1.msra.mxu0 %v6568
    %7144 = vmatprep.subr.mxu0 0.0
    %7145 = vmatpush1.msra.mxu0 %v6567
    %7146 = vmatprep.subr.mxu0 0.0
    %7147 = vmatpush1.msra.mxu0 %v6566
    %7148 = vmatprep.subr.mxu0 0.0
    %7149 = vmatpush1.msra.mxu0 %v6565
    %7150 = vmatprep.subr.mxu0 0.0
    %7151 = vmatpush1.msra.mxu0 %v6564
    %7152 = vmatprep.subr.mxu0 0.0
    %7153 = vmatpush1.msra.mxu0 %v6563
    %7154 = vmatprep.subr.mxu0 0.0
    %7155 = vmatpush1.msra.mxu0 %v6562
    %7156 = vmatprep.subr.mxu0 0.0
    %7157 = vmatpush1.msra.mxu0 %v6561
    %7158 = vmatprep.subr.mxu0 0.0
    %7159 = vmatpush2.msra.mxu0 %v6592
    %7160 = vmatprep.subr.mxu0 0.0
    %7161 = vmatpush2.msra.mxu0 %v6591
    %7162 = vmatprep.subr.mxu0 0.0
    %7163 = vmatpush2.msra.mxu0 %v6590
    %7164 = vmatprep.subr.mxu0 0.0
    %7165 = vmatpush2.msra.mxu0 %v6589
    %7166 = vmatprep.subr.mxu0 0.0
    %7167 = vmatpush2.msra.mxu0 %v6588
    %7168 = vmatprep.subr.mxu0 0.0
    %7169 = vmatpush2.msra.mxu0 %v6587
    %7170 = vmatprep.subr.mxu0 0.0
    %7171 = vmatpush2.msra.mxu0 %v6586
    %7172 = vmatprep.subr.mxu0 0.0
    %7173 = vmatpush2.msra.mxu0 %v6585
    %7174 = vmatprep.subr.mxu0 0.0
    %7175 = vmatpush2.msra.mxu0 %v6584
    %7176 = vmatprep.subr.mxu0 0.0
    %7177 = vmatpush2.msra.mxu0 %v6583
    %7178 = vmatprep.subr.mxu0 0.0
    %7179 = vmatpush2.msra.mxu0 %v6582
    %7180 = vmatprep.subr.mxu0 0.0
    %7181 = vmatpush2.msra.mxu0 %v6581
    %7182 = vmatprep.subr.mxu0 0.0
    %7183 = vmatpush2.msra.mxu0 %v6580
    %7184 = vmatprep.subr.mxu0 0.0
    %7185 = vmatpush2.msra.mxu0 %v6579
    %7186 = vmatprep.subr.mxu0 0.0
    %7187 = vmatpush2.msra.mxu0 %v6578
    %7188 = vmatprep.subr.mxu0 0.0
    %7189 = vmatpush2.msra.mxu0 %v6577
    %7190 = vmatprep.mubr.f32.mxu0 %v6835
    %7191 = vmatmul.mubr.f32.gmra.mxu0 %v6833
    %v7192 = vpop.f32.mrf.mxu0
    %v7193 = vadd.f32 %v7123, %v7192
    %v7194 = vpop.f32.mrf.mxu0
    %7195 = vdwg.mxu0
    %7196 = vmatprep.subr.mxu0 0.0
    %7197 = vmatpush1.msra.mxu0 %v6608
    %7198 = vmatprep.subr.mxu0 0.0
    %7199 = vmatpush1.msra.mxu0 %v6607
    %7200 = vmatprep.subr.mxu0 0.0
    %7201 = vmatpush1.msra.mxu0 %v6606
    %7202 = vmatprep.subr.mxu0 0.0
    %7203 = vmatpush1.msra.mxu0 %v6605
    %7204 = vmatprep.subr.mxu0 0.0
    %7205 = vmatpush1.msra.mxu0 %v6604
    %7206 = vmatprep.subr.mxu0 0.0
    %7207 = vmatpush1.msra.mxu0 %v6603
    %7208 = vmatprep.subr.mxu0 0.0
    %7209 = vmatpush1.msra.mxu0 %v6602
    %7210 = vmatprep.subr.mxu0 0.0
    %7211 = vmatpush1.msra.mxu0 %v6601
    %7212 = vmatprep.subr.mxu0 0.0
    %7213 = vmatpush1.msra.mxu0 %v6600
    %7214 = vmatprep.subr.mxu0 0.0
    %7215 = vmatpush1.msra.mxu0 %v6599
    %7216 = vmatprep.subr.mxu0 0.0
    %7217 = vmatpush1.msra.mxu0 %v6598
    %7218 = vmatprep.subr.mxu0 0.0
    %7219 = vmatpush1.msra.mxu0 %v6597
    %7220 = vmatprep.subr.mxu0 0.0
    %7221 = vmatpush1.msra.mxu0 %v6596
    %7222 = vmatprep.subr.mxu0 0.0
    %7223 = vmatpush1.msra.mxu0 %v6595
    %7224 = vmatprep.subr.mxu0 0.0
    %7225 = vmatpush1.msra.mxu0 %v6594
    %7226 = vmatprep.subr.mxu0 0.0
    %7227 = vmatpush1.msra.mxu0 %v6593
    %7228 = vmatprep.subr.mxu0 0.0
    %7229 = vmatpush2.msra.mxu0 %v6624
    %7230 = vmatprep.subr.mxu0 0.0
    %7231 = vmatpush2.msra.mxu0 %v6623
    %7232 = vmatprep.subr.mxu0 0.0
    %7233 = vmatpush2.msra.mxu0 %v6622
    %7234 = vmatprep.subr.mxu0 0.0
    %7235 = vmatpush2.msra.mxu0 %v6621
    %7236 = vmatprep.subr.mxu0 0.0
    %7237 = vmatpush2.msra.mxu0 %v6620
    %7238 = vmatprep.subr.mxu0 0.0
    %7239 = vmatpush2.msra.mxu0 %v6619
    %7240 = vmatprep.subr.mxu0 0.0
    %7241 = vmatpush2.msra.mxu0 %v6618
    %7242 = vmatprep.subr.mxu0 0.0
    %7243 = vmatpush2.msra.mxu0 %v6617
    %7244 = vmatprep.subr.mxu0 0.0
    %7245 = vmatpush2.msra.mxu0 %v6616
    %7246 = vmatprep.subr.mxu0 0.0
    %7247 = vmatpush2.msra.mxu0 %v6615
    %7248 = vmatprep.subr.mxu0 0.0
    %7249 = vmatpush2.msra.mxu0 %v6614
    %7250 = vmatprep.subr.mxu0 0.0
    %7251 = vmatpush2.msra.mxu0 %v6613
    %7252 = vmatprep.subr.mxu0 0.0
    %7253 = vmatpush2.msra.mxu0 %v6612
    %7254 = vmatprep.subr.mxu0 0.0
    %7255 = vmatpush2.msra.mxu0 %v6611
    %7256 = vmatprep.subr.mxu0 0.0
    %7257 = vmatpush2.msra.mxu0 %v6610
    %7258 = vmatprep.subr.mxu0 0.0
    %7259 = vmatpush2.msra.mxu0 %v6609
    %7260 = vmatprep.mubr.f32.mxu0 %v6851
    %7261 = vmatmul.mubr.f32.gmra.mxu0 %v6843
    %v7262 = vpop.f32.mrf.mxu0
    %v7263 = vadd.f32 %v7193, %v7262
    %v7264 = vpop.f32.mrf.mxu0
    %7265 = vdwg.mxu0
    %7266 = vmatprep.subr.mxu0 0.0
    %7267 = vmatpush1.msra.mxu0 %v6640
    %7268 = vmatprep.subr.mxu0 0.0
    %7269 = vmatpush1.msra.mxu0 %v6639
    %7270 = vmatprep.subr.mxu0 0.0
    %7271 = vmatpush1.msra.mxu0 %v6638
    %7272 = vmatprep.subr.mxu0 0.0
    %7273 = vmatpush1.msra.mxu0 %v6637
    %7274 = vmatprep.subr.mxu0 0.0
    %7275 = vmatpush1.msra.mxu0 %v6636
    %7276 = vmatprep.subr.mxu0 0.0
    %7277 = vmatpush1.msra.mxu0 %v6635
    %7278 = vmatprep.subr.mxu0 0.0
    %7279 = vmatpush1.msra.mxu0 %v6634
    %7280 = vmatprep.subr.mxu0 0.0
    %7281 = vmatpush1.msra.mxu0 %v6633
    %7282 = vmatprep.subr.mxu0 0.0
    %7283 = vmatpush1.msra.mxu0 %v6632
    %7284 = vmatprep.subr.mxu0 0.0
    %7285 = vmatpush1.msra.mxu0 %v6631
    %7286 = vmatprep.subr.mxu0 0.0
    %7287 = vmatpush1.msra.mxu0 %v6630
    %7288 = vmatprep.subr.mxu0 0.0
    %7289 = vmatpush1.msra.mxu0 %v6629
    %7290 = vmatprep.subr.mxu0 0.0
    %7291 = vmatpush1.msra.mxu0 %v6628
    %7292 = vmatprep.subr.mxu0 0.0
    %7293 = vmatpush1.msra.mxu0 %v6627
    %7294 = vmatprep.subr.mxu0 0.0
    %7295 = vmatpush1.msra.mxu0 %v6626
    %7296 = vmatprep.subr.mxu0 0.0
    %7297 = vmatpush1.msra.mxu0 %v6625
    %7298 = vmatprep.subr.mxu0 0.0
    %7299 = vmatpush2.msra.mxu0 %v6656
    %7300 = vmatprep.subr.mxu0 0.0
    %7301 = vmatpush2.msra.mxu0 %v6655
    %7302 = vmatprep.subr.mxu0 0.0
    %7303 = vmatpush2.msra.mxu0 %v6654
    %7304 = vmatprep.subr.mxu0 0.0
    %7305 = vmatpush2.msra.mxu0 %v6653
    %7306 = vmatprep.subr.mxu0 0.0
    %7307 = vmatpush2.msra.mxu0 %v6652
    %7308 = vmatprep.subr.mxu0 0.0
    %7309 = vmatpush2.msra.mxu0 %v6651
    %7310 = vmatprep.subr.mxu0 0.0
    %7311 = vmatpush2.msra.mxu0 %v6650
    %7312 = vmatprep.subr.mxu0 0.0
    %7313 = vmatpush2.msra.mxu0 %v6649
    %7314 = vmatprep.subr.mxu0 0.0
    %7315 = vmatpush2.msra.mxu0 %v6648
    %7316 = vmatprep.subr.mxu0 0.0
    %7317 = vmatpush2.msra.mxu0 %v6647
    %7318 = vmatprep.subr.mxu0 0.0
    %7319 = vmatpush2.msra.mxu0 %v6646
    %7320 = vmatprep.subr.mxu0 0.0
    %7321 = vmatpush2.msra.mxu0 %v6645
    %7322 = vmatprep.subr.mxu0 0.0
    %7323 = vmatpush2.msra.mxu0 %v6644
    %7324 = vmatprep.subr.mxu0 0.0
    %7325 = vmatpush2.msra.mxu0 %v6643
    %7326 = vmatprep.subr.mxu0 0.0
    %7327 = vmatpush2.msra.mxu0 %v6642
    %7328 = vmatprep.subr.mxu0 0.0
    %7329 = vmatpush2.msra.mxu0 %v6641
    %7330 = vmatprep.mubr.f32.mxu0 %v6852
    %7331 = vmatmul.mubr.f32.gmra.mxu0 %v6850
    %v7332 = vpop.f32.mrf.mxu0
    %v7333 = vadd.f32 %v7263, %v7332
    %v7334 = vpop.f32.mrf.mxu0
    %7335 = vdwg.mxu0
    %7336 = vmatprep.subr.mxu0 0.0
    %7337 = vmatpush1.msra.mxu0 %v6672
    %7338 = vmatprep.subr.mxu0 0.0
    %7339 = vmatpush1.msra.mxu0 %v6671
    %7340 = vmatprep.subr.mxu0 0.0
    %7341 = vmatpush1.msra.mxu0 %v6670
    %7342 = vmatprep.subr.mxu0 0.0
    %7343 = vmatpush1.msra.mxu0 %v6669
    %7344 = vmatprep.subr.mxu0 0.0
    %7345 = vmatpush1.msra.mxu0 %v6668
    %7346 = vmatprep.subr.mxu0 0.0
    %7347 = vmatpush1.msra.mxu0 %v6667
    %7348 = vmatprep.subr.mxu0 0.0
    %7349 = vmatpush1.msra.mxu0 %v6666
    %7350 = vmatprep.subr.mxu0 0.0
    %7351 = vmatpush1.msra.mxu0 %v6665
    %7352 = vmatprep.subr.mxu0 0.0
    %7353 = vmatpush1.msra.mxu0 %v6664
    %7354 = vmatprep.subr.mxu0 0.0
    %7355 = vmatpush1.msra.mxu0 %v6663
    %7356 = vmatprep.subr.mxu0 0.0
    %7357 = vmatpush1.msra.mxu0 %v6662
    %7358 = vmatprep.subr.mxu0 0.0
    %7359 = vmatpush1.msra.mxu0 %v6661
    %7360 = vmatprep.subr.mxu0 0.0
    %7361 = vmatpush1.msra.mxu0 %v6660
    %7362 = vmatprep.subr.mxu0 0.0
    %7363 = vmatpush1.msra.mxu0 %v6659
    %7364 = vmatprep.subr.mxu0 0.0
    %7365 = vmatpush1.msra.mxu0 %v6658
    %7366 = vmatprep.subr.mxu0 0.0
    %7367 = vmatpush1.msra.mxu0 %v6657
    %7368 = vmatprep.subr.mxu0 0.0
    %7369 = vmatpush2.msra.mxu0 %v6688
    %7370 = vmatprep.subr.mxu0 0.0
    %7371 = vmatpush2.msra.mxu0 %v6687
    %7372 = vmatprep.subr.mxu0 0.0
    %7373 = vmatpush2.msra.mxu0 %v6686
    %7374 = vmatprep.subr.mxu0 0.0
    %7375 = vmatpush2.msra.mxu0 %v6685
    %7376 = vmatprep.subr.mxu0 0.0
    %7377 = vmatpush2.msra.mxu0 %v6684
    %7378 = vmatprep.subr.mxu0 0.0
    %7379 = vmatpush2.msra.mxu0 %v6683
    %7380 = vmatprep.subr.mxu0 0.0
    %7381 = vmatpush2.msra.mxu0 %v6682
    %7382 = vmatprep.subr.mxu0 0.0
    %7383 = vmatpush2.msra.mxu0 %v6681
    %7384 = vmatprep.subr.mxu0 0.0
    %7385 = vmatpush2.msra.mxu0 %v6680
    %7386 = vmatprep.subr.mxu0 0.0
    %7387 = vmatpush2.msra.mxu0 %v6679
    %7388 = vmatprep.subr.mxu0 0.0
    %7389 = vmatpush2.msra.mxu0 %v6678
    %7390 = vmatprep.subr.mxu0 0.0
    %7391 = vmatpush2.msra.mxu0 %v6677
    %7392 = vmatprep.subr.mxu0 0.0
    %7393 = vmatpush2.msra.mxu0 %v6676
    %7394 = vmatprep.subr.mxu0 0.0
    %7395 = vmatpush2.msra.mxu0 %v6675
    %7396 = vmatprep.subr.mxu0 0.0
    %7397 = vmatpush2.msra.mxu0 %v6674
    %7398 = vmatprep.subr.mxu0 0.0
    %7399 = vmatpush2.msra.mxu0 %v6673
    %7400 = vmatprep.mubr.f32.mxu0 %v6868
    %7401 = vmatmul.mubr.f32.gmra.mxu0 %v6860
    %v7402 = vpop.f32.mrf.mxu0
    %v7403 = vadd.f32 %v7333, %v7402
    %v7404 = vpop.f32.mrf.mxu0
    %7405 = vdwg.mxu0
    %7406 = vmatprep.subr.mxu0 0.0
    %7407 = vmatpush1.msra.mxu0 %v6704
    %7408 = vmatprep.subr.mxu0 0.0
    %7409 = vmatpush1.msra.mxu0 %v6703
    %7410 = vmatprep.subr.mxu0 0.0
    %7411 = vmatpush1.msra.mxu0 %v6702
    %7412 = vmatprep.subr.mxu0 0.0
    %7413 = vmatpush1.msra.mxu0 %v6701
    %7414 = vmatprep.subr.mxu0 0.0
    %7415 = vmatpush1.msra.mxu0 %v6700
    %7416 = vmatprep.subr.mxu0 0.0
    %7417 = vmatpush1.msra.mxu0 %v6699
    %7418 = vmatprep.subr.mxu0 0.0
    %7419 = vmatpush1.msra.mxu0 %v6698
    %7420 = vmatprep.subr.mxu0 0.0
    %7421 = vmatpush1.msra.mxu0 %v6697
    %7422 = vmatprep.subr.mxu0 0.0
    %7423 = vmatpush1.msra.mxu0 %v6696
    %7424 = vmatprep.subr.mxu0 0.0
    %7425 = vmatpush1.msra.mxu0 %v6695
    %7426 = vmatprep.subr.mxu0 0.0
    %7427 = vmatpush1.msra.mxu0 %v6694
    %7428 = vmatprep.subr.mxu0 0.0
    %7429 = vmatpush1.msra.mxu0 %v6693
    %7430 = vmatprep.subr.mxu0 0.0
    %7431 = vmatpush1.msra.mxu0 %v6692
    %7432 = vmatprep.subr.mxu0 0.0
    %7433 = vmatpush1.msra.mxu0 %v6691
    %7434 = vmatprep.subr.mxu0 0.0
    %7435 = vmatpush1.msra.mxu0 %v6690
    %7436 = vmatprep.subr.mxu0 0.0
    %7437 = vmatpush1.msra.mxu0 %v6689
    %7438 = vmatprep.subr.mxu0 0.0
    %7439 = vmatpush2.msra.mxu0 %v6720
    %7440 = vmatprep.subr.mxu0 0.0
    %7441 = vmatpush2.msra.mxu0 %v6719
    %7442 = vmatprep.subr.mxu0 0.0
    %7443 = vmatpush2.msra.mxu0 %v6718
    %7444 = vmatprep.subr.mxu0 0.0
    %7445 = vmatpush2.msra.mxu0 %v6717
    %7446 = vmatprep.subr.mxu0 0.0
    %7447 = vmatpush2.msra.mxu0 %v6716
    %7448 = vmatprep.subr.mxu0 0.0
    %7449 = vmatpush2.msra.mxu0 %v6715
    %7450 = vmatprep.subr.mxu0 0.0
    %7451 = vmatpush2.msra.mxu0 %v6714
    %7452 = vmatprep.subr.mxu0 0.0
    %7453 = vmatpush2.msra.mxu0 %v6713
    %7454 = vmatprep.subr.mxu0 0.0
    %7455 = vmatpush2.msra.mxu0 %v6712
    %7456 = vmatprep.subr.mxu0 0.0
    %7457 = vmatpush2.msra.mxu0 %v6711
    %7458 = vmatprep.subr.mxu0 0.0
    %7459 = vmatpush2.msra.mxu0 %v6710
    %7460 = vmatprep.subr.mxu0 0.0
    %7461 = vmatpush2.msra.mxu0 %v6709
    %7462 = vmatprep.subr.mxu0 0.0
    %7463 = vmatpush2.msra.mxu0 %v6708
    %7464 = vmatprep.subr.mxu0 0.0
    %7465 = vmatpush2.msra.mxu0 %v6707
    %7466 = vmatprep.subr.mxu0 0.0
    %7467 = vmatpush2.msra.mxu0 %v6706
    %7468 = vmatprep.subr.mxu0 0.0
    %7469 = vmatpush2.msra.mxu0 %v6705
    %7470 = vmatprep.mubr.f32.mxu0 %v6869
    %7471 = vmatmul.mubr.f32.gmra.mxu0 %v6867
    %v7472 = vpop.f32.mrf.mxu0
    %v7473 = vadd.f32 %v7403, %v7472
    %v7474 = vpop.f32.mrf.mxu0
    %7475 = vdwg.mxu0
    %7476 = vmatprep.subr.mxu0 0.0
    %7477 = vmatpush1.msra.mxu0 %v6736
    %7478 = vmatprep.subr.mxu0 0.0
    %7479 = vmatpush1.msra.mxu0 %v6735
    %7480 = vmatprep.subr.mxu0 0.0
    %7481 = vmatpush1.msra.mxu0 %v6734
    %7482 = vmatprep.subr.mxu0 0.0
    %7483 = vmatpush1.msra.mxu0 %v6733
    %7484 = vmatprep.subr.mxu0 0.0
    %7485 = vmatpush1.msra.mxu0 %v6732
    %7486 = vmatprep.subr.mxu0 0.0
    %7487 = vmatpush1.msra.mxu0 %v6731
    %7488 = vmatprep.subr.mxu0 0.0
    %7489 = vmatpush1.msra.mxu0 %v6730
    %7490 = vmatprep.subr.mxu0 0.0
    %7491 = vmatpush1.msra.mxu0 %v6729
    %7492 = vmatprep.subr.mxu0 0.0
    %7493 = vmatpush1.msra.mxu0 %v6728
    %7494 = vmatprep.subr.mxu0 0.0
    %7495 = vmatpush1.msra.mxu0 %v6727
    %7496 = vmatprep.subr.mxu0 0.0
    %7497 = vmatpush1.msra.mxu0 %v6726
    %7498 = vmatprep.subr.mxu0 0.0
    %7499 = vmatpush1.msra.mxu0 %v6725
    %7500 = vmatprep.subr.mxu0 0.0
    %7501 = vmatpush1.msra.mxu0 %v6724
    %7502 = vmatprep.subr.mxu0 0.0
    %7503 = vmatpush1.msra.mxu0 %v6723
    %7504 = vmatprep.subr.mxu0 0.0
    %7505 = vmatpush1.msra.mxu0 %v6722
    %7506 = vmatprep.subr.mxu0 0.0
    %7507 = vmatpush1.msra.mxu0 %v6721
    %7508 = vmatprep.subr.mxu0 0.0
    %7509 = vmatpush2.msra.mxu0 %v6752
    %7510 = vmatprep.subr.mxu0 0.0
    %7511 = vmatpush2.msra.mxu0 %v6751
    %7512 = vmatprep.subr.mxu0 0.0
    %7513 = vmatpush2.msra.mxu0 %v6750
    %7514 = vmatprep.subr.mxu0 0.0
    %7515 = vmatpush2.msra.mxu0 %v6749
    %7516 = vmatprep.subr.mxu0 0.0
    %7517 = vmatpush2.msra.mxu0 %v6748
    %7518 = vmatprep.subr.mxu0 0.0
    %7519 = vmatpush2.msra.mxu0 %v6747
    %7520 = vmatprep.subr.mxu0 0.0
    %7521 = vmatpush2.msra.mxu0 %v6746
    %7522 = vmatprep.subr.mxu0 0.0
    %7523 = vmatpush2.msra.mxu0 %v6745
    %7524 = vmatprep.subr.mxu0 0.0
    %7525 = vmatpush2.msra.mxu0 %v6744
    %7526 = vmatprep.subr.mxu0 0.0
    %7527 = vmatpush2.msra.mxu0 %v6743
    %7528 = vmatprep.subr.mxu0 0.0
    %7529 = vmatpush2.msra.mxu0 %v6742
    %7530 = vmatprep.subr.mxu0 0.0
    %7531 = vmatpush2.msra.mxu0 %v6741
    %7532 = vmatprep.subr.mxu0 0.0
    %7533 = vmatpush2.msra.mxu0 %v6740
    %7534 = vmatprep.subr.mxu0 0.0
    %7535 = vmatpush2.msra.mxu0 %v6739
    %7536 = vmatprep.subr.mxu0 0.0
    %7537 = vmatpush2.msra.mxu0 %v6738
    %7538 = vmatprep.subr.mxu0 0.0
    %7539 = vmatpush2.msra.mxu0 %v6737
    %7540 = vmatprep.mubr.f32.mxu0 %v6885
    %7541 = vmatmul.mubr.f32.gmra.mxu0 %v6877
    %v7542 = vpop.f32.mrf.mxu0
    %v7543 = vadd.f32 %v7473, %v7542
    %v7544 = vpop.f32.mrf.mxu0
    %7545 = vdwg.mxu0
    %7546 = vmatprep.subr.mxu0 0.0
    %7547 = vmatpush1.msra.mxu0 %v6768
    %7548 = vmatprep.subr.mxu0 0.0
    %7549 = vmatpush1.msra.mxu0 %v6767
    %7550 = vmatprep.subr.mxu0 0.0
    %7551 = vmatpush1.msra.mxu0 %v6766
    %7552 = vmatprep.subr.mxu0 0.0
    %7553 = vmatpush1.msra.mxu0 %v6765
    %7554 = vmatprep.subr.mxu0 0.0
    %7555 = vmatpush1.msra.mxu0 %v6764
    %7556 = vmatprep.subr.mxu0 0.0
    %7557 = vmatpush1.msra.mxu0 %v6763
    %7558 = vmatprep.subr.mxu0 0.0
    %7559 = vmatpush1.msra.mxu0 %v6762
    %7560 = vmatprep.subr.mxu0 0.0
    %7561 = vmatpush1.msra.mxu0 %v6761
    %7562 = vmatprep.subr.mxu0 0.0
    %7563 = vmatpush1.msra.mxu0 %v6760
    %7564 = vmatprep.subr.mxu0 0.0
    %7565 = vmatpush1.msra.mxu0 %v6759
    %7566 = vmatprep.subr.mxu0 0.0
    %7567 = vmatpush1.msra.mxu0 %v6758
    %7568 = vmatprep.subr.mxu0 0.0
    %7569 = vmatpush1.msra.mxu0 %v6757
    %7570 = vmatprep.subr.mxu0 0.0
    %7571 = vmatpush1.msra.mxu0 %v6756
    %7572 = vmatprep.subr.mxu0 0.0
    %7573 = vmatpush1.msra.mxu0 %v6755
    %7574 = vmatprep.subr.mxu0 0.0
    %7575 = vmatpush1.msra.mxu0 %v6754
    %7576 = vmatprep.subr.mxu0 0.0
    %7577 = vmatpush1.msra.mxu0 %v6753
    %7578 = vmatprep.subr.mxu0 0.0
    %7579 = vmatpush2.msra.mxu0 %v6784
    %7580 = vmatprep.subr.mxu0 0.0
    %7581 = vmatpush2.msra.mxu0 %v6783
    %7582 = vmatprep.subr.mxu0 0.0
    %7583 = vmatpush2.msra.mxu0 %v6782
    %7584 = vmatprep.subr.mxu0 0.0
    %7585 = vmatpush2.msra.mxu0 %v6781
    %7586 = vmatprep.subr.mxu0 0.0
    %7587 = vmatpush2.msra.mxu0 %v6780
    %7588 = vmatprep.subr.mxu0 0.0
    %7589 = vmatpush2.msra.mxu0 %v6779
    %7590 = vmatprep.subr.mxu0 0.0
    %7591 = vmatpush2.msra.mxu0 %v6778
    %7592 = vmatprep.subr.mxu0 0.0
    %7593 = vmatpush2.msra.mxu0 %v6777
    %7594 = vmatprep.subr.mxu0 0.0
    %7595 = vmatpush2.msra.mxu0 %v6776
    %7596 = vmatprep.subr.mxu0 0.0
    %7597 = vmatpush2.msra.mxu0 %v6775
    %7598 = vmatprep.subr.mxu0 0.0
    %7599 = vmatpush2.msra.mxu0 %v6774
    %7600 = vmatprep.subr.mxu0 0.0
    %7601 = vmatpush2.msra.mxu0 %v6773
    %7602 = vmatprep.subr.mxu0 0.0
    %7603 = vmatpush2.msra.mxu0 %v6772
    %7604 = vmatprep.subr.mxu0 0.0
    %7605 = vmatpush2.msra.mxu0 %v6771
    %7606 = vmatprep.subr.mxu0 0.0
    %7607 = vmatpush2.msra.mxu0 %v6770
    %7608 = vmatprep.subr.mxu0 0.0
    %7609 = vmatpush2.msra.mxu0 %v6769
    %7610 = vmatprep.mubr.f32.mxu0 %v6886
    %7611 = vmatmul.mubr.f32.gmra.mxu0 %v6884
    %v7612 = vpop.f32.mrf.mxu0
    %v7613 = vadd.f32 %v7543, %v7612
    %v7614 = vpop.f32.mrf.mxu0
    %7615 = vdwg.mxu0
    %7616 = vmatprep.subr.mxu0 0.0
    %7617 = vmatpush1.msra.mxu0 0.0
    %7618 = vmatprep.subr.mxu0 0.0
    %7619 = vmatpush1.msra.mxu0 0.0
    %7620 = vmatprep.subr.mxu0 0.0
    %7621 = vmatpush1.msra.mxu0 0.0
    %7622 = vmatprep.subr.mxu0 0.0
    %7623 = vmatpush1.msra.mxu0 0.0
    %7624 = vmatprep.subr.mxu0 0.0
    %7625 = vmatpush1.msra.mxu0 0.0
    %7626 = vmatprep.subr.mxu0 0.0
    %7627 = vmatpush1.msra.mxu0 0.0
    %7628 = vmatprep.subr.mxu0 0.0
    %7629 = vmatpush1.msra.mxu0 0.0
    %7630 = vmatprep.subr.mxu0 0.0
    %7631 = vmatpush1.msra.mxu0 0.0
    %7632 = vmatprep.subr.mxu0 0.0
    %7633 = vmatpush1.msra.mxu0 0.0
    %7634 = vmatprep.subr.mxu0 0.0
    %7635 = vmatpush1.msra.mxu0 0.0
    %7636 = vmatprep.subr.mxu0 0.0
    %7637 = vmatpush1.msra.mxu0 0.0
    %7638 = vmatprep.subr.mxu0 0.0
    %7639 = vmatpush1.msra.mxu0 0.0
    %7640 = vmatprep.subr.mxu0 0.0
    %7641 = vmatpush1.msra.mxu0 %v6788
    %7642 = vmatprep.subr.mxu0 0.0
    %7643 = vmatpush1.msra.mxu0 %v6787
    %7644 = vmatprep.subr.mxu0 0.0
    %7645 = vmatpush1.msra.mxu0 %v6786
    %7646 = vmatprep.subr.mxu0 0.0
    %7647 = vmatpush1.msra.mxu0 %v6785
    %7648 = vmatprep.subr.mxu0 0.0
    %7649 = vmatpush2.msra.mxu0 0.0
    %7650 = vmatprep.subr.mxu0 0.0
    %7651 = vmatpush2.msra.mxu0 0.0
    %7652 = vmatprep.subr.mxu0 0.0
    %7653 = vmatpush2.msra.mxu0 0.0
    %7654 = vmatprep.subr.mxu0 0.0
    %7655 = vmatpush2.msra.mxu0 0.0
    %7656 = vmatprep.subr.mxu0 0.0
    %7657 = vmatpush2.msra.mxu0 0.0
    %7658 = vmatprep.subr.mxu0 0.0
    %7659 = vmatpush2.msra.mxu0 0.0
    %7660 = vmatprep.subr.mxu0 0.0
    %7661 = vmatpush2.msra.mxu0 0.0
    %7662 = vmatprep.subr.mxu0 0.0
    %7663 = vmatpush2.msra.mxu0 0.0
    %7664 = vmatprep.subr.mxu0 0.0
    %7665 = vmatpush2.msra.mxu0 0.0
    %7666 = vmatprep.subr.mxu0 0.0
    %7667 = vmatpush2.msra.mxu0 0.0
    %7668 = vmatprep.subr.mxu0 0.0
    %7669 = vmatpush2.msra.mxu0 0.0
    %7670 = vmatprep.subr.mxu0 0.0
    %7671 = vmatpush2.msra.mxu0 0.0
    %7672 = vmatprep.subr.mxu0 0.0
    %7673 = vmatpush2.msra.mxu0 0.0
    %7674 = vmatprep.subr.mxu0 0.0
    %7675 = vmatpush2.msra.mxu0 0.0
    %7676 = vmatprep.subr.mxu0 0.0
    %7677 = vmatpush2.msra.mxu0 0.0
    %7678 = vmatprep.subr.mxu0 0.0
    %7679 = vmatpush2.msra.mxu0 0.0
    %7680 = vmatprep.mubr.f32.mxu0 0.0
    %7681 = vmatmul.mubr.f32.gmra.mxu0 %v6914
    %v7682 = vpop.f32.mrf.mxu0
    %v7683 = vadd.f32 %v7613, %v7682
    %v7684 = vpop.f32.mrf.mxu0
    %7685 = vdwg.mxu0
    %v7686 = vmax.f32 %v7683, 0.0
    %v7687 = vld [vmem:[%s6] sm:$0xff]
    %v7688 = vld [vmem:[%s6 + $0x8] sm:$0xff]
    %v7689 = vld [vmem:[%s6 + $0x10] sm:$0xff]
    %v7690 = vld [vmem:[%s6 + $0x18] sm:$0xff]
    %v7691 = vld [vmem:[%s7] sm:$0x1]
    %v7693 = vlaneseq
    %v7694 = vshrl.u32 %v7693, 7
    %v7695 = vsub.s32 0, %v7694
    %v7696 = vrot.slane %v7691, %v7695
    %v7699 = vsel %vm5611, %v7686, 0
    %7701 = vmatprep.subr.mxu0 0.0
    %7702 = vmatpush1.msra.mxu0 0.0
    %7703 = vmatprep.subr.mxu0 0.0
    %7704 = vmatpush1.msra.mxu0 0.0
    %7705 = vmatprep.subr.mxu0 0.0
    %7706 = vmatpush1.msra.mxu0 0.0
    %7707 = vmatprep.subr.mxu0 0.0
    %7708 = vmatpush1.msra.mxu0 0.0
    %7709 = vmatprep.subr.mxu0 0.0
    %7710 = vmatpush1.msra.mxu0 0.0
    %7711 = vmatprep.subr.mxu0 0.0
    %7712 = vmatpush1.msra.mxu0 0.0
    %7713 = vmatprep.subr.mxu0 0.0
    %7714 = vmatpush1.msra.mxu0 0.0
    %7715 = vmatprep.subr.mxu0 0.0
    %7716 = vmatpush1.msra.mxu0 0.0
    %7717 = vmatprep.subr.mxu0 0.0
    %7718 = vmatpush1.msra.mxu0 0.0
    %7719 = vmatprep.subr.mxu0 0.0
    %7720 = vmatpush1.msra.mxu0 0.0
    %7721 = vmatprep.subr.mxu0 0.0
    %7722 = vmatpush1.msra.mxu0 0.0
    %7723 = vmatprep.subr.mxu0 0.0
    %7724 = vmatpush1.msra.mxu0 0.0
    %7725 = vmatprep.subr.mxu0 0.0
    %7726 = vmatpush1.msra.mxu0 %v7690
    %7727 = vmatprep.subr.mxu0 0.0
    %7728 = vmatpush1.msra.mxu0 %v7689
    %7729 = vmatprep.subr.mxu0 0.0
    %7730 = vmatpush1.msra.mxu0 %v7688
    %7731 = vmatprep.subr.mxu0 0.0
    %7732 = vmatpush1.msra.mxu0 %v7687
    %7733 = vmatprep.subr.mxu0 0.0
    %7734 = vmatpush2.msra.mxu0 0.0
    %7735 = vmatprep.subr.mxu0 0.0
    %7736 = vmatpush2.msra.mxu0 0.0
    %7737 = vmatprep.subr.mxu0 0.0
    %7738 = vmatpush2.msra.mxu0 0.0
    %7739 = vmatprep.subr.mxu0 0.0
    %7740 = vmatpush2.msra.mxu0 0.0
    %7741 = vmatprep.subr.mxu0 0.0
    %7742 = vmatpush2.msra.mxu0 0.0
    %7743 = vmatprep.subr.mxu0 0.0
    %7744 = vmatpush2.msra.mxu0 0.0
    %7745 = vmatprep.subr.mxu0 0.0
    %7746 = vmatpush2.msra.mxu0 0.0
    %7747 = vmatprep.subr.mxu0 0.0
    %7748 = vmatpush2.msra.mxu0 0.0
    %7749 = vmatprep.subr.mxu0 0.0
    %7750 = vmatpush2.msra.mxu0 0.0
    %7751 = vmatprep.subr.mxu0 0.0
    %7752 = vmatpush2.msra.mxu0 0.0
    %7753 = vmatprep.subr.mxu0 0.0
    %7754 = vmatpush2.msra.mxu0 0.0
    %7755 = vmatprep.subr.mxu0 0.0
    %7756 = vmatpush2.msra.mxu0 0.0
    %7757 = vmatprep.subr.mxu0 0.0
    %7758 = vmatpush2.msra.mxu0 0.0
    %7759 = vmatprep.subr.mxu0 0.0
    %7760 = vmatpush2.msra.mxu0 0.0
    %7761 = vmatprep.subr.mxu0 0.0
    %7762 = vmatpush2.msra.mxu0 0.0
    %7763 = vmatprep.subr.mxu0 0.0
    %7764 = vmatpush2.msra.mxu0 0.0
    %7765 = vmatprep.mubr.f32.mxu0 0.0
    %7766 = vmatmul.mubr.f32.gmra.mxu0 %v7699
    %v7767 = vpop.f32.mrf.mxu0
    %v7768 = vadd.f32 %v7696, %v7767
    %v7769 = vpop.f32.mrf.mxu0
    %7770 = vdwg.mxu0
    %7771 = vst [vmem:[#allocation4] sm:$0x3] %v7768
    // Predicated region
    $region34: #{forward.1} parent=1 // pred_check
      _
    $region35: #{forward.1} parent=1 // pred_check_branch
      %7773 = sbr.rel (0) target = $region37
    $region36: #{forward.1} parent=1 // pred_region
      %s7775 = ssub.s32 32, 32
      %7776 = vsyncadd [#allocation5], %s7775
      %s7778 = sshll.u32 [#allocation4], 4
      %s7779 = int_to_ptr.vmem [resolvable:$true] %s7778
      %7781 = dma.vmem_to_hbm [thread:$0]  %s7779, 32, %s8, [#allocation5]
    $region37: #{forward.1} parent=1 // pred_fallthru
      _
    // Predicated region
    $region38: #{forward.1} parent=1 // pred_check
      _
    $region39: #{forward.1} parent=1 // pred_check_branch
      %7783 = sbr.rel (0) target = $region41
    $region40: #{forward.1} parent=1 // pred_region
      %7784 = dma.done [#allocation5], 32
    $region41: #{forward.1} parent=1 // pred_fallthru
      _
    %7785 = vsyncpa [#allocation5], 1

</llo_original>
